<compile_context>
chip_gen: v5e
topology: v5e:2x2
jax: 0.10.0
libtpu: 0.0.40
codegen_flags: <defaults>
</compile_context>

<pallas_src>
import functools
import math

import jax
import jax.numpy as jnp
from jax.experimental import pallas as pl
from jax.experimental.pallas import tpu as pltpu


def _round_up(n, m):
    return ((n + m - 1) // m) * m


# --------------------------------------------------------------------------
# Fused ACBlock kernel: one grid step == Bt batch images.
# --------------------------------------------------------------------------

def _acblock_kernel(xp_ref, xres_ref, w0_ref, w1_ref, w2_ref, bconv_ref,
                    presel_ref, tile_ref, wf_ref, bf_ref, out_ref,
                    *, bt, h, offs0, offs1, offs2):
    kp = xp_ref.shape[-1]          # 128-aligned packed halo width
    wc = out_ref.shape[-1]         # packed output width (W*C)
    m = bt * h                     # MXU M dimension

    def window(oh):
        # Row window [oh, oh+h) of the padded activations, flattened to 2-D so
        # every band matmul is a plain (M=bt*h) x (K=kp) x (N=wc) MXU op.
        return xp_ref[:, oh:oh + h, :].reshape(m, kp)

    def group_conv(w_ref, offsets):
        acc = jnp.dot(window(offsets[0]), w_ref[0],
                      preferred_element_type=jnp.float32)
        for s in range(1, len(offsets)):
            acc = acc + jnp.dot(window(offsets[s]), w_ref[s],
                                preferred_element_type=jnp.float32)
        return acc                                                  # [m, wc] f32

    # Three branch outputs (group 0 = conv1x9, 1 = conv9x1, 2 = conv3x3),
    # each lane-packed as [m, W*C], bias included.
    buf0 = group_conv(w0_ref, offs0) + bconv_ref[0]
    buf1 = group_conv(w1_ref, offs1) + bconv_ref[1]
    buf2 = group_conv(w2_ref, offs2) + bconv_ref[2]

    # --- ECA: GAP -> k-tap 1-D conv -> sigmoid (all f32) --------------------
    def batch_sum(buf):                                             # [m,wc]->[bt,wc]
        return jnp.sum(buf.reshape(bt, h, wc), axis=1)

    att = (jnp.dot(batch_sum(buf0), presel_ref[0],
                   preferred_element_type=jnp.float32)
           + jnp.dot(batch_sum(buf1), presel_ref[1],
                     preferred_element_type=jnp.float32)
           + jnp.dot(batch_sum(buf2), presel_ref[2],
                     preferred_element_type=jnp.float32))           # [bt, 3C]
    scale = jax.nn.sigmoid(att)                                     # [bt, 3C]

    # --- per-channel scale + block-diagonal 1x1 fuse + bias + residual ------
    fused = None
    for g, buf in ((0, buf0), (1, buf1), (2, buf2)):
        sfull = jnp.dot(scale, tile_ref[g],
                        preferred_element_type=jnp.float32)         # [bt, wc]
        scaled = (buf.reshape(bt, h, wc) * sfull[:, None, :]).reshape(m, wc)
        part = jnp.dot(scaled.astype(jnp.bfloat16), wf_ref[g],
                       preferred_element_type=jnp.float32)
        fused = part if fused is None else fused + part

    fused = fused + bf_ref[...]                                     # [m, wc]
    out_ref[...] = (xres_ref[...]
                    + fused.reshape(bt, h, wc)).astype(out_ref.dtype)


# --------------------------------------------------------------------------
# Trace-time weight packing: fold each branch's taps into per-group banded
# matrices acting on lane-packed rows.
# --------------------------------------------------------------------------

def _pack_params(params, H, W, C, Kp):
    C3 = 3 * C
    WC = W * C
    eye_w = jnp.eye(W, dtype=jnp.float32)

    def band(taps):
        """taps: iterable of (ow, w_cc[Cin,Cout]) -> [Kp, W*C] banded matrix."""
        mat = jnp.zeros((Kp, WC), jnp.float32)
        for ow, w_cc in taps:
            mat = mat.at[ow * C: ow * C + WC, :].add(jnp.kron(eye_w, w_cc))
        return mat

    # group 0: conv1x9 (pad (0,4)) -> one band at padded-row offset 4.
    w0 = jnp.stack([band([(dj, params["w1x9"][dj]) for dj in range(9)])])
    offs0 = (4,)
    # group 1: conv9x1 (pad (4,0)) -> 9 bands at row offsets 0..8, col 4.
    w1 = jnp.stack([band([(4, params["w9x1"][di])]) for di in range(9)])
    offs1 = tuple(range(9))
    # group 2: conv3x3 (pad (1,1)) -> 3 bands at row offsets 3..5, cols 3..5.
    w2 = jnp.stack([band([(3 + dj, params["w3x3"][di, dj]) for dj in range(3)])
                    for di in range(3)])
    offs2 = (3, 4, 5)

    bconv = jnp.stack([jnp.tile(params["b1x9"], W)[None, :],
                       jnp.tile(params["b9x1"], W)[None, :],
                       jnp.tile(params["b3x3"], W)[None, :]])       # [3,1,WC]

    # ECA: GAP (1/(H*W) folded in) -> banded k-tap Conv1d, precombined so the
    # kernel does a single [bt,WC] x [WC,3C] matmul per group.
    k = params["eca_w"].shape[0]
    eca_mat = sum(params["eca_w"][i] * jnp.eye(C3, k=(k // 2 - i), dtype=jnp.float32)
                  for i in range(k))                                # [3C, 3C]
    e_groups = [jnp.eye(C3, dtype=jnp.float32)[g * C:(g + 1) * C]   # [C, 3C]
                for g in range(3)]
    presel = jnp.stack([(jnp.kron(jnp.ones((W, 1), jnp.float32), e) @ eca_mat)
                        / (H * W) for e in e_groups])               # [3, WC, 3C]
    # Replicate each group's per-channel scale across the W lane groups.
    tile_m = jnp.stack([jnp.kron(jnp.ones((1, W), jnp.float32), e.T)
                        for e in e_groups])                         # [3, 3C, WC]

    # 1x1 fuse conv, per input-channel group, block-diagonal over W.
    wf = jnp.stack([jnp.kron(eye_w, params["wfuse"][g * C:(g + 1) * C])
                    for g in range(3)])                             # [3, WC, WC]
    bf = jnp.tile(params["bfuse"], W)[None, :]                      # [1, WC]

    return (offs0, offs1, offs2), (w0, w1, w2, bconv, presel, tile_m, wf, bf)


def _choose_block_b(B, H, WC, target_rows=256, scratch_budget=6 * 2**20):
    """Pick Bt | B so MXU M = Bt*H is near target_rows, live f32 intermediates
    stay small, and (when possible) there are >= 2 grid steps (v7x megacore)."""
    divs = [d for d in range(1, B + 1) if B % d == 0]
    cands = [d for d in divs if 6 * d * H * WC * 4 <= scratch_budget] or [1]
    pref = [d for d in cands if B // d >= 2] or cands
    return min(pref, key=lambda d: (abs(d * H - target_rows), d))


# --------------------------------------------------------------------------
# Wrapper
# --------------------------------------------------------------------------

def acblock_pallas(x, params, *, block_b=None, single_buffer_weights=True):
    B, H, W, C = x.shape
    WC = W * C                                  # multiple of 128 -> lane-dense stores
    Wp = W + 8                                  # 4-pixel halo each side
    Kp = _round_up(Wp * C, 128)                 # 128-aligned packed halo width

    bt = block_b or _choose_block_b(B, H, WC)
    assert B % bt == 0

    (offs0, offs1, offs2), packed = _pack_params(params, H, W, C, Kp)
    w0, w1, w2, bconv, presel, tile_m, wf, bf = packed
    # bf16 MXU operands, f32 accumulation / bias / attention path.
    w0 = w0.astype(jnp.bfloat16)
    w1 = w1.astype(jnp.bfloat16)
    w2 = w2.astype(jnp.bfloat16)
    wf = wf.astype(jnp.bfloat16)

    # Lane-packed activations (last dim = 128-aligned packed halo width).
    xp = jnp.pad(x, ((0, 0), (4, 4), (4, 4), (0, 0))).reshape(B, H + 8, Wp * C)
    if Kp != Wp * C:
        xp = jnp.pad(xp, ((0, 0), (0, 0), (0, Kp - Wp * C)))
    xp = xp.astype(jnp.bfloat16)
    xres = x.reshape(B, H, WC)                  # residual (f32, exact)

    weights = (w0, w1, w2, bconv, presel, tile_m, wf, bf)
    weight_bytes = sum(a.size * a.dtype.itemsize for a in weights)
    act_bytes = bt * ((H + 8) * Kp * 2 + 2 * H * WC * 4)
    vmem_limit = int(min(100 * 2**20,
                         max(32 * 2**20,
                             2 * weight_bytes + 2 * act_bytes
                             + 8 * bt * H * WC * 4 + (4 << 20))))

    def const_spec(shape):
        nd = len(shape)
        if single_buffer_weights:
            # Constant index map + single buffer: weights are DMA'd once and
            # stay VMEM-resident without a second (wasted) buffer.
            return pl.BlockSpec(shape, lambda b: (0,) * nd,
                                pipeline_mode=pl.Buffered(1))
        return pl.BlockSpec(shape, lambda b: (0,) * nd)

    kernel = functools.partial(_acblock_kernel, bt=bt, h=H,
                               offs0=offs0, offs1=offs1, offs2=offs2)

    out_flat = pl.pallas_call(
        kernel,
        grid=(B // bt,),
        in_specs=[
            pl.BlockSpec((bt, H + 8, Kp), lambda b: (b, 0, 0)),   # padded input
            pl.BlockSpec((bt, H, WC), lambda b: (b, 0, 0)),       # residual input
            const_spec(w0.shape),
            const_spec(w1.shape),
            const_spec(w2.shape),
            const_spec(bconv.shape),
            const_spec(presel.shape),
            const_spec(tile_m.shape),
            const_spec(wf.shape),
            const_spec(bf.shape),
        ],
        out_specs=pl.BlockSpec((bt, H, WC), lambda b: (b, 0, 0)),
        out_shape=jax.ShapeDtypeStruct((B, H, WC), x.dtype),
        input_output_aliases={1: 0},            # residual buffer reused for output
        compiler_params=pltpu.CompilerParams(
            dimension_semantics=("parallel",),
            vmem_limit_bytes=vmem_limit),
    )(xp, xres, *weights)

    return out_flat.reshape(B, H, W, C)


# --------------------------------------------------------------------------
# Parameters / pure-JAX reference
# --------------------------------------------------------------------------

def _eca_kernel_size(c, b=1, gamma=2):
    t = int(abs((math.log(c, 2) + b) / gamma))
    return t if t % 2 else t + 1


def init_params(key, channels):
    C = channels
    C3 = 3 * C
    k_eca = _eca_kernel_size(C3)
    ks = jax.random.split(key, 9)

    def w(kk, shape, fan_in):
        return jax.random.normal(kk, shape, jnp.float32) / math.sqrt(fan_in)

    return {
        "w1x9": w(ks[0], (9, C, C), 9 * C),      # [kw, cin, cout]
        "b1x9": 0.05 * jax.random.normal(ks[1], (C,), jnp.float32),
        "w9x1": w(ks[2], (9, C, C), 9 * C),      # [kh, cin, cout]
        "b9x1": 0.05 * jax.random.normal(ks[3], (C,), jnp.float32),
        "w3x3": w(ks[4], (3, 3, C, C), 9 * C),   # [kh, kw, cin, cout]
        "b3x3": 0.05 * jax.random.normal(ks[5], (C,), jnp.float32),
        "wfuse": w(ks[6], (C3, C), C3),          # 1x1 fuse: [cin=3C, cout]
        "bfuse": 0.05 * jax.random.normal(ks[7], (C,), jnp.float32),
        "eca_w": w(ks[8], (k_eca,), k_eca),      # Conv1d(1,1,k, bias=False)
    }


def _conv_ref(x, w_hwio, b, pad):
    y = jax.lax.conv_general_dilated(
        x, w_hwio, window_strides=(1, 1), padding=pad,
        dimension_numbers=("NHWC", "HWIO", "NHWC"),
        precision=jax.lax.Precision.HIGHEST)
    return y + b


def acblock_reference(x, params):
    C = x.shape[-1]
    C3 = 3 * C
    c1x9 = _conv_ref(x, params["w1x9"][None], params["b1x9"], [(0, 0), (4, 4)])
    c9x1 = _conv_ref(x, params["w9x1"][:, None], params["b9x1"], [(4, 4), (0, 0)])
    c3x3 = _conv_ref(x, params["w3x3"], params["b3x3"], [(1, 1), (1, 1)])
    buf = jnp.concatenate([c1x9, c9x1, c3x3], axis=-1)   # cat(1x9, 9x1, 3x3)
    k = params["eca_w"].shape[0]
    gap = jnp.mean(buf, axis=(1, 2))                     # [B, 3C]
    gp = jnp.pad(gap, ((0, 0), (k // 2, k // 2)))
    att = sum(params["eca_w"][i] * gp[:, i:i + C3] for i in range(k))
    scale = jax.nn.sigmoid(att)
    buf = buf * scale[:, None, None, :]
    fused = _conv_ref(buf, params["wfuse"][None, None], params["bfuse"],
                      [(0, 0), (0, 0)])
    return x + fused


# --------------------------------------------------------------------------

if __name__ == "__main__":
    key = jax.random.PRNGKey(0)
    kx, kp = jax.random.split(key)

    # NHWC; in_channels == out_channels is required by the module's residual.
    B, H, W, C = 2, 16, 16, 8
    x = jax.random.normal(kx, (B, H, W, C), jnp.float32)
    params = init_params(kp, C)

    fwd = jax.jit(functools.partial(acblock_pallas, single_buffer_weights=True))
    try:
        y = fwd(x, params)
        jax.block_until_ready(y)
    except Exception:
        # Fallback for jax/Mosaic versions without BlockSpec pipeline_mode /
        # pl.Buffered(1): default (double-buffered) constant-weight operands.
        fwd = jax.jit(functools.partial(acblock_pallas,
                                        single_buffer_weights=False))
        y = fwd(x, params)
        jax.block_until_ready(y)

    assert y.shape == (B, H, W, C), y.shape
    assert bool(jnp.all(jnp.isfinite(y)))

    # Pure-JAX reference check (bf16 MXU operands, f32 accumulation).
    y_ref = acblock_reference(x, params)
    err = float(jnp.max(jnp.abs(y - y_ref)))
    assert err < 8e-2, err

    print("KERNEL_OK")
</pallas_src>

<mosaic_0001>
module attributes {stable_mosaic.version = 11 : i64} {
  func.func @_acblock_kernel(%arg0: i32, %arg1: memref<1x24x256xbf16, #tpu.memory_space<vmem>>, %arg2: memref<1x16x128xf32, #tpu.memory_space<vmem>>, %arg3: memref<1x256x128xbf16, #tpu.memory_space<vmem>>, %arg4: memref<9x256x128xbf16, #tpu.memory_space<vmem>>, %arg5: memref<3x256x128xbf16, #tpu.memory_space<vmem>>, %arg6: memref<3x1x128xf32, #tpu.memory_space<vmem>>, %arg7: memref<3x128x24xf32, #tpu.memory_space<vmem>>, %arg8: memref<3x24x128xf32, #tpu.memory_space<vmem>>, %arg9: memref<3x128x128xbf16, #tpu.memory_space<vmem>>, %arg10: memref<1x128xf32, #tpu.memory_space<vmem>>, %arg11: memref<1x16x128xf32, #tpu.memory_space<vmem>>) attributes {dimension_semantics = [#tpu.dimension_semantics<parallel>], iteration_bounds = array<i64: 2>, scalar_prefetch = 0 : i64, scratch_operands = 0 : i64, tpu.core_type = #tpu.core_type<tc>, window_params = [{transform_indices = @transform_0, window_bounds = array<i64: 1, 24, 256>}, {transform_indices = @transform_1, window_bounds = array<i64: 1, 16, 128>}, {pipeline_mode = #tpu.pipeline_mode<synchronous>, transform_indices = @transform_2, window_bounds = array<i64: 1, 256, 128>}, {pipeline_mode = #tpu.pipeline_mode<synchronous>, transform_indices = @transform_3, window_bounds = array<i64: 9, 256, 128>}, {pipeline_mode = #tpu.pipeline_mode<synchronous>, transform_indices = @transform_4, window_bounds = array<i64: 3, 256, 128>}, {pipeline_mode = #tpu.pipeline_mode<synchronous>, transform_indices = @transform_5, window_bounds = array<i64: 3, 1, 128>}, {pipeline_mode = #tpu.pipeline_mode<synchronous>, transform_indices = @transform_6, window_bounds = array<i64: 3, 128, 24>}, {pipeline_mode = #tpu.pipeline_mode<synchronous>, transform_indices = @transform_7, window_bounds = array<i64: 3, 24, 128>}, {pipeline_mode = #tpu.pipeline_mode<synchronous>, transform_indices = @transform_8, window_bounds = array<i64: 3, 128, 128>}, {pipeline_mode = #tpu.pipeline_mode<synchronous>, transform_indices = @transform_9, window_bounds = array<i64: 1, 128>}, {transform_indices = @transform_10, window_bounds = array<i64: 1, 16, 128>}]} {
    %c0 = arith.constant 0 : index
    %c4 = arith.constant 4 : index
    %c0_0 = arith.constant 0 : index
    %0 = vector.load %arg1[%c0, %c4, %c0_0] : memref<1x24x256xbf16, #tpu.memory_space<vmem>>, vector<1x16x256xbf16>
    %1 = vector.shape_cast %0 : vector<1x16x256xbf16> to vector<16x256xbf16>
    %c0_1 = arith.constant 0 : index
    %c0_2 = arith.constant 0 : index
    %c0_3 = arith.constant 0 : index
    %2 = vector.load %arg3[%c0_1, %c0_2, %c0_3] : memref<1x256x128xbf16, #tpu.memory_space<vmem>>, vector<1x256x128xbf16>
    %3 = vector.shape_cast %2 : vector<1x256x128xbf16> to vector<256x128xbf16>
    %cst = arith.constant dense<0.000000e+00> : vector<16x128xf32>
    %4 = tpu.matmul %1, %3, %cst {dimension_numbers = #tpu.dot_dimension_numbers<[1], [0], [0], [1], [0, 0, 1, 1], [], []>} : vector<16x256xbf16>, vector<256x128xbf16>, vector<16x128xf32> -> vector<16x128xf32>
    %c0_4 = arith.constant 0 : index
    %c0_5 = arith.constant 0 : index
    %c0_6 = arith.constant 0 : index
    %5 = vector.load %arg6[%c0_4, %c0_5, %c0_6] : memref<3x1x128xf32, #tpu.memory_space<vmem>>, vector<1x1x128xf32>
    %6 = vector.shape_cast %5 : vector<1x1x128xf32> to vector<1x128xf32>
    %7 = vector.broadcast %6 : vector<1x128xf32> to vector<16x128xf32>
    %8 = arith.addf %4, %7 : vector<16x128xf32>
    %c0_7 = arith.constant 0 : index
    %c0_8 = arith.constant 0 : index
    %c0_9 = arith.constant 0 : index
    %9 = vector.load %arg1[%c0_7, %c0_8, %c0_9] : memref<1x24x256xbf16, #tpu.memory_space<vmem>>, vector<1x16x256xbf16>
    %10 = vector.shape_cast %9 : vector<1x16x256xbf16> to vector<16x256xbf16>
    %c0_10 = arith.constant 0 : index
    %c0_11 = arith.constant 0 : index
    %c0_12 = arith.constant 0 : index
    %11 = vector.load %arg4[%c0_10, %c0_11, %c0_12] : memref<9x256x128xbf16, #tpu.memory_space<vmem>>, vector<1x256x128xbf16>
    %12 = vector.shape_cast %11 : vector<1x256x128xbf16> to vector<256x128xbf16>
    %cst_13 = arith.constant dense<0.000000e+00> : vector<16x128xf32>
    %13 = tpu.matmul %10, %12, %cst_13 {dimension_numbers = #tpu.dot_dimension_numbers<[1], [0], [0], [1], [0, 0, 1, 1], [], []>} : vector<16x256xbf16>, vector<256x128xbf16>, vector<16x128xf32> -> vector<16x128xf32>
    %c0_14 = arith.constant 0 : index
    %c1 = arith.constant 1 : index
    %c0_15 = arith.constant 0 : index
    %14 = vector.load %arg1[%c0_14, %c1, %c0_15] : memref<1x24x256xbf16, #tpu.memory_space<vmem>>, vector<1x16x256xbf16>
    %15 = vector.shape_cast %14 : vector<1x16x256xbf16> to vector<16x256xbf16>
    %c1_16 = arith.constant 1 : index
    %c0_17 = arith.constant 0 : index
    %c0_18 = arith.constant 0 : index
    %16 = vector.load %arg4[%c1_16, %c0_17, %c0_18] : memref<9x256x128xbf16, #tpu.memory_space<vmem>>, vector<1x256x128xbf16>
    %17 = vector.shape_cast %16 : vector<1x256x128xbf16> to vector<256x128xbf16>
    %cst_19 = arith.constant dense<0.000000e+00> : vector<16x128xf32>
    %18 = tpu.matmul %15, %17, %cst_19 {dimension_numbers = #tpu.dot_dimension_numbers<[1], [0], [0], [1], [0, 0, 1, 1], [], []>} : vector<16x256xbf16>, vector<256x128xbf16>, vector<16x128xf32> -> vector<16x128xf32>
    %19 = arith.addf %13, %18 : vector<16x128xf32>
    %c0_20 = arith.constant 0 : index
    %c2 = arith.constant 2 : index
    %c0_21 = arith.constant 0 : index
    %20 = vector.load %arg1[%c0_20, %c2, %c0_21] : memref<1x24x256xbf16, #tpu.memory_space<vmem>>, vector<1x16x256xbf16>
    %21 = vector.shape_cast %20 : vector<1x16x256xbf16> to vector<16x256xbf16>
    %c2_22 = arith.constant 2 : index
    %c0_23 = arith.constant 0 : index
    %c0_24 = arith.constant 0 : index
    %22 = vector.load %arg4[%c2_22, %c0_23, %c0_24] : memref<9x256x128xbf16, #tpu.memory_space<vmem>>, vector<1x256x128xbf16>
    %23 = vector.shape_cast %22 : vector<1x256x128xbf16> to vector<256x128xbf16>
    %cst_25 = arith.constant dense<0.000000e+00> : vector<16x128xf32>
    %24 = tpu.matmul %21, %23, %cst_25 {dimension_numbers = #tpu.dot_dimension_numbers<[1], [0], [0], [1], [0, 0, 1, 1], [], []>} : vector<16x256xbf16>, vector<256x128xbf16>, vector<16x128xf32> -> vector<16x128xf32>
    %25 = arith.addf %19, %24 : vector<16x128xf32>
    %c0_26 = arith.constant 0 : index
    %c3 = arith.constant 3 : index
    %c0_27 = arith.constant 0 : index
    %26 = vector.load %arg1[%c0_26, %c3, %c0_27] : memref<1x24x256xbf16, #tpu.memory_space<vmem>>, vector<1x16x256xbf16>
    %27 = vector.shape_cast %26 : vector<1x16x256xbf16> to vector<16x256xbf16>
    %c3_28 = arith.constant 3 : index
    %c0_29 = arith.constant 0 : index
    %c0_30 = arith.constant 0 : index
    %28 = vector.load %arg4[%c3_28, %c0_29, %c0_30] : memref<9x256x128xbf16, #tpu.memory_space<vmem>>, vector<1x256x128xbf16>
    %29 = vector.shape_cast %28 : vector<1x256x128xbf16> to vector<256x128xbf16>
    %cst_31 = arith.constant dense<0.000000e+00> : vector<16x128xf32>
    %30 = tpu.matmul %27, %29, %cst_31 {dimension_numbers = #tpu.dot_dimension_numbers<[1], [0], [0], [1], [0, 0, 1, 1], [], []>} : vector<16x256xbf16>, vector<256x128xbf16>, vector<16x128xf32> -> vector<16x128xf32>
    %31 = arith.addf %25, %30 : vector<16x128xf32>
    %c0_32 = arith.constant 0 : index
    %c4_33 = arith.constant 4 : index
    %c0_34 = arith.constant 0 : index
    %32 = vector.load %arg1[%c0_32, %c4_33, %c0_34] : memref<1x24x256xbf16, #tpu.memory_space<vmem>>, vector<1x16x256xbf16>
    %33 = vector.shape_cast %32 : vector<1x16x256xbf16> to vector<16x256xbf16>
    %c4_35 = arith.constant 4 : index
    %c0_36 = arith.constant 0 : index
    %c0_37 = arith.constant 0 : index
    %34 = vector.load %arg4[%c4_35, %c0_36, %c0_37] : memref<9x256x128xbf16, #tpu.memory_space<vmem>>, vector<1x256x128xbf16>
    %35 = vector.shape_cast %34 : vector<1x256x128xbf16> to vector<256x128xbf16>
    %cst_38 = arith.constant dense<0.000000e+00> : vector<16x128xf32>
    %36 = tpu.matmul %33, %35, %cst_38 {dimension_numbers = #tpu.dot_dimension_numbers<[1], [0], [0], [1], [0, 0, 1, 1], [], []>} : vector<16x256xbf16>, vector<256x128xbf16>, vector<16x128xf32> -> vector<16x128xf32>
    %37 = arith.addf %31, %36 : vector<16x128xf32>
    %c0_39 = arith.constant 0 : index
    %c5 = arith.constant 5 : index
    %c0_40 = arith.constant 0 : index
    %38 = vector.load %arg1[%c0_39, %c5, %c0_40] : memref<1x24x256xbf16, #tpu.memory_space<vmem>>, vector<1x16x256xbf16>
    %39 = vector.shape_cast %38 : vector<1x16x256xbf16> to vector<16x256xbf16>
    %c5_41 = arith.constant 5 : index
    %c0_42 = arith.constant 0 : index
    %c0_43 = arith.constant 0 : index
    %40 = vector.load %arg4[%c5_41, %c0_42, %c0_43] : memref<9x256x128xbf16, #tpu.memory_space<vmem>>, vector<1x256x128xbf16>
    %41 = vector.shape_cast %40 : vector<1x256x128xbf16> to vector<256x128xbf16>
    %cst_44 = arith.constant dense<0.000000e+00> : vector<16x128xf32>
    %42 = tpu.matmul %39, %41, %cst_44 {dimension_numbers = #tpu.dot_dimension_numbers<[1], [0], [0], [1], [0, 0, 1, 1], [], []>} : vector<16x256xbf16>, vector<256x128xbf16>, vector<16x128xf32> -> vector<16x128xf32>
    %43 = arith.addf %37, %42 : vector<16x128xf32>
    %c0_45 = arith.constant 0 : index
    %c6 = arith.constant 6 : index
    %c0_46 = arith.constant 0 : index
    %44 = vector.load %arg1[%c0_45, %c6, %c0_46] : memref<1x24x256xbf16, #tpu.memory_space<vmem>>, vector<1x16x256xbf16>
    %45 = vector.shape_cast %44 : vector<1x16x256xbf16> to vector<16x256xbf16>
    %c6_47 = arith.constant 6 : index
    %c0_48 = arith.constant 0 : index
    %c0_49 = arith.constant 0 : index
    %46 = vector.load %arg4[%c6_47, %c0_48, %c0_49] : memref<9x256x128xbf16, #tpu.memory_space<vmem>>, vector<1x256x128xbf16>
    %47 = vector.shape_cast %46 : vector<1x256x128xbf16> to vector<256x128xbf16>
    %cst_50 = arith.constant dense<0.000000e+00> : vector<16x128xf32>
    %48 = tpu.matmul %45, %47, %cst_50 {dimension_numbers = #tpu.dot_dimension_numbers<[1], [0], [0], [1], [0, 0, 1, 1], [], []>} : vector<16x256xbf16>, vector<256x128xbf16>, vector<16x128xf32> -> vector<16x128xf32>
    %49 = arith.addf %43, %48 : vector<16x128xf32>
    %c0_51 = arith.constant 0 : index
    %c7 = arith.constant 7 : index
    %c0_52 = arith.constant 0 : index
    %50 = vector.load %arg1[%c0_51, %c7, %c0_52] : memref<1x24x256xbf16, #tpu.memory_space<vmem>>, vector<1x16x256xbf16>
    %51 = vector.shape_cast %50 : vector<1x16x256xbf16> to vector<16x256xbf16>
    %c7_53 = arith.constant 7 : index
    %c0_54 = arith.constant 0 : index
    %c0_55 = arith.constant 0 : index
    %52 = vector.load %arg4[%c7_53, %c0_54, %c0_55] : memref<9x256x128xbf16, #tpu.memory_space<vmem>>, vector<1x256x128xbf16>
    %53 = vector.shape_cast %52 : vector<1x256x128xbf16> to vector<256x128xbf16>
    %cst_56 = arith.constant dense<0.000000e+00> : vector<16x128xf32>
    %54 = tpu.matmul %51, %53, %cst_56 {dimension_numbers = #tpu.dot_dimension_numbers<[1], [0], [0], [1], [0, 0, 1, 1], [], []>} : vector<16x256xbf16>, vector<256x128xbf16>, vector<16x128xf32> -> vector<16x128xf32>
    %55 = arith.addf %49, %54 : vector<16x128xf32>
    %c0_57 = arith.constant 0 : index
    %c8 = arith.constant 8 : index
    %c0_58 = arith.constant 0 : index
    %56 = vector.load %arg1[%c0_57, %c8, %c0_58] : memref<1x24x256xbf16, #tpu.memory_space<vmem>>, vector<1x16x256xbf16>
    %57 = vector.shape_cast %56 : vector<1x16x256xbf16> to vector<16x256xbf16>
    %c8_59 = arith.constant 8 : index
    %c0_60 = arith.constant 0 : index
    %c0_61 = arith.constant 0 : index
    %58 = vector.load %arg4[%c8_59, %c0_60, %c0_61] : memref<9x256x128xbf16, #tpu.memory_space<vmem>>, vector<1x256x128xbf16>
    %59 = vector.shape_cast %58 : vector<1x256x128xbf16> to vector<256x128xbf16>
    %cst_62 = arith.constant dense<0.000000e+00> : vector<16x128xf32>
    %60 = tpu.matmul %57, %59, %cst_62 {dimension_numbers = #tpu.dot_dimension_numbers<[1], [0], [0], [1], [0, 0, 1, 1], [], []>} : vector<16x256xbf16>, vector<256x128xbf16>, vector<16x128xf32> -> vector<16x128xf32>
    %61 = arith.addf %55, %60 : vector<16x128xf32>
    %c1_63 = arith.constant 1 : index
    %c0_64 = arith.constant 0 : index
    %c0_65 = arith.constant 0 : index
    %62 = vector.load %arg6[%c1_63, %c0_64, %c0_65] : memref<3x1x128xf32, #tpu.memory_space<vmem>>, vector<1x1x128xf32>
    %63 = vector.shape_cast %62 : vector<1x1x128xf32> to vector<1x128xf32>
    %64 = vector.broadcast %63 : vector<1x128xf32> to vector<16x128xf32>
    %65 = arith.addf %61, %64 : vector<16x128xf32>
    %c0_66 = arith.constant 0 : index
    %c3_67 = arith.constant 3 : index
    %c0_68 = arith.constant 0 : index
    %66 = vector.load %arg1[%c0_66, %c3_67, %c0_68] : memref<1x24x256xbf16, #tpu.memory_space<vmem>>, vector<1x16x256xbf16>
    %67 = vector.shape_cast %66 : vector<1x16x256xbf16> to vector<16x256xbf16>
    %c0_69 = arith.constant 0 : index
    %c0_70 = arith.constant 0 : index
    %c0_71 = arith.constant 0 : index
    %68 = vector.load %arg5[%c0_69, %c0_70, %c0_71] : memref<3x256x128xbf16, #tpu.memory_space<vmem>>, vector<1x256x128xbf16>
    %69 = vector.shape_cast %68 : vector<1x256x128xbf16> to vector<256x128xbf16>
    %cst_72 = arith.constant dense<0.000000e+00> : vector<16x128xf32>
    %70 = tpu.matmul %67, %69, %cst_72 {dimension_numbers = #tpu.dot_dimension_numbers<[1], [0], [0], [1], [0, 0, 1, 1], [], []>} : vector<16x256xbf16>, vector<256x128xbf16>, vector<16x128xf32> -> vector<16x128xf32>
    %c0_73 = arith.constant 0 : index
    %c4_74 = arith.constant 4 : index
    %c0_75 = arith.constant 0 : index
    %71 = vector.load %arg1[%c0_73, %c4_74, %c0_75] : memref<1x24x256xbf16, #tpu.memory_space<vmem>>, vector<1x16x256xbf16>
    %72 = vector.shape_cast %71 : vector<1x16x256xbf16> to vector<16x256xbf16>
    %c1_76 = arith.constant 1 : index
    %c0_77 = arith.constant 0 : index
    %c0_78 = arith.constant 0 : index
    %73 = vector.load %arg5[%c1_76, %c0_77, %c0_78] : memref<3x256x128xbf16, #tpu.memory_space<vmem>>, vector<1x256x128xbf16>
    %74 = vector.shape_cast %73 : vector<1x256x128xbf16> to vector<256x128xbf16>
    %cst_79 = arith.constant dense<0.000000e+00> : vector<16x128xf32>
    %75 = tpu.matmul %72, %74, %cst_79 {dimension_numbers = #tpu.dot_dimension_numbers<[1], [0], [0], [1], [0, 0, 1, 1], [], []>} : vector<16x256xbf16>, vector<256x128xbf16>, vector<16x128xf32> -> vector<16x128xf32>
    %76 = arith.addf %70, %75 : vector<16x128xf32>
    %c0_80 = arith.constant 0 : index
    %c5_81 = arith.constant 5 : index
    %c0_82 = arith.constant 0 : index
    %77 = vector.load %arg1[%c0_80, %c5_81, %c0_82] : memref<1x24x256xbf16, #tpu.memory_space<vmem>>, vector<1x16x256xbf16>
    %78 = vector.shape_cast %77 : vector<1x16x256xbf16> to vector<16x256xbf16>
    %c2_83 = arith.constant 2 : index
    %c0_84 = arith.constant 0 : index
    %c0_85 = arith.constant 0 : index
    %79 = vector.load %arg5[%c2_83, %c0_84, %c0_85] : memref<3x256x128xbf16, #tpu.memory_space<vmem>>, vector<1x256x128xbf16>
    %80 = vector.shape_cast %79 : vector<1x256x128xbf16> to vector<256x128xbf16>
    %cst_86 = arith.constant dense<0.000000e+00> : vector<16x128xf32>
    %81 = tpu.matmul %78, %80, %cst_86 {dimension_numbers = #tpu.dot_dimension_numbers<[1], [0], [0], [1], [0, 0, 1, 1], [], []>} : vector<16x256xbf16>, vector<256x128xbf16>, vector<16x128xf32> -> vector<16x128xf32>
    %82 = arith.addf %76, %81 : vector<16x128xf32>
    %c2_87 = arith.constant 2 : index
    %c0_88 = arith.constant 0 : index
    %c0_89 = arith.constant 0 : index
    %83 = vector.load %arg6[%c2_87, %c0_88, %c0_89] : memref<3x1x128xf32, #tpu.memory_space<vmem>>, vector<1x1x128xf32>
    %84 = vector.shape_cast %83 : vector<1x1x128xf32> to vector<1x128xf32>
    %85 = vector.broadcast %84 : vector<1x128xf32> to vector<16x128xf32>
    %86 = arith.addf %82, %85 : vector<16x128xf32>
    %87 = vector.shape_cast %8 : vector<16x128xf32> to vector<1x16x128xf32>
    %cst_90 = arith.constant dense<0.000000e+00> : vector<1x128xf32>
    %88 = vector.multi_reduction <add>, %87, %cst_90 [1] : vector<1x16x128xf32> to vector<1x128xf32>
    %c0_91 = arith.constant 0 : index
    %c0_92 = arith.constant 0 : index
    %c0_93 = arith.constant 0 : index
    %89 = vector.load %arg7[%c0_91, %c0_92, %c0_93] : memref<3x128x24xf32, #tpu.memory_space<vmem>>, vector<1x128x24xf32>
    %90 = vector.shape_cast %89 : vector<1x128x24xf32> to vector<128x24xf32>
    %cst_94 = arith.constant dense<0.000000e+00> : vector<1x24xf32>
    %91 = tpu.matmul %88, %90, %cst_94 {dimension_numbers = #tpu.dot_dimension_numbers<[1], [0], [0], [1], [0, 0, 1, 1], [], []>} : vector<1x128xf32>, vector<128x24xf32>, vector<1x24xf32> -> vector<1x24xf32>
    %92 = vector.shape_cast %65 : vector<16x128xf32> to vector<1x16x128xf32>
    %cst_95 = arith.constant dense<0.000000e+00> : vector<1x128xf32>
    %93 = vector.multi_reduction <add>, %92, %cst_95 [1] : vector<1x16x128xf32> to vector<1x128xf32>
    %c1_96 = arith.constant 1 : index
    %c0_97 = arith.constant 0 : index
    %c0_98 = arith.constant 0 : index
    %94 = vector.load %arg7[%c1_96, %c0_97, %c0_98] : memref<3x128x24xf32, #tpu.memory_space<vmem>>, vector<1x128x24xf32>
    %95 = vector.shape_cast %94 : vector<1x128x24xf32> to vector<128x24xf32>
    %cst_99 = arith.constant dense<0.000000e+00> : vector<1x24xf32>
    %96 = tpu.matmul %93, %95, %cst_99 {dimension_numbers = #tpu.dot_dimension_numbers<[1], [0], [0], [1], [0, 0, 1, 1], [], []>} : vector<1x128xf32>, vector<128x24xf32>, vector<1x24xf32> -> vector<1x24xf32>
    %97 = arith.addf %91, %96 : vector<1x24xf32>
    %98 = vector.shape_cast %86 : vector<16x128xf32> to vector<1x16x128xf32>
    %cst_100 = arith.constant dense<0.000000e+00> : vector<1x128xf32>
    %99 = vector.multi_reduction <add>, %98, %cst_100 [1] : vector<1x16x128xf32> to vector<1x128xf32>
    %c2_101 = arith.constant 2 : index
    %c0_102 = arith.constant 0 : index
    %c0_103 = arith.constant 0 : index
    %100 = vector.load %arg7[%c2_101, %c0_102, %c0_103] : memref<3x128x24xf32, #tpu.memory_space<vmem>>, vector<1x128x24xf32>
    %101 = vector.shape_cast %100 : vector<1x128x24xf32> to vector<128x24xf32>
    %cst_104 = arith.constant dense<0.000000e+00> : vector<1x24xf32>
    %102 = tpu.matmul %99, %101, %cst_104 {dimension_numbers = #tpu.dot_dimension_numbers<[1], [0], [0], [1], [0, 0, 1, 1], [], []>} : vector<1x128xf32>, vector<128x24xf32>, vector<1x24xf32> -> vector<1x24xf32>
    %103 = arith.addf %97, %102 : vector<1x24xf32>
    %104 = arith.negf %103 : vector<1x24xf32>
    %105 = math.exp %104 : vector<1x24xf32>
    %cst_105 = arith.constant 1.000000e+00 : f32
    %106 = vector.broadcast %cst_105 : f32 to vector<1x24xf32>
    %107 = arith.addf %106, %105 : vector<1x24xf32>
    %108 = arith.divf %106, %107 : vector<1x24xf32>
    %c0_106 = arith.constant 0 : index
    %c0_107 = arith.constant 0 : index
    %c0_108 = arith.constant 0 : index
    %109 = vector.load %arg8[%c0_106, %c0_107, %c0_108] : memref<3x24x128xf32, #tpu.memory_space<vmem>>, vector<1x24x128xf32>
    %110 = vector.shape_cast %109 : vector<1x24x128xf32> to vector<24x128xf32>
    %cst_109 = arith.constant dense<0.000000e+00> : vector<1x128xf32>
    %111 = tpu.matmul %108, %110, %cst_109 {dimension_numbers = #tpu.dot_dimension_numbers<[1], [0], [0], [1], [0, 0, 1, 1], [], []>} : vector<1x24xf32>, vector<24x128xf32>, vector<1x128xf32> -> vector<1x128xf32>
    %112 = vector.shape_cast %8 : vector<16x128xf32> to vector<1x16x128xf32>
    %113 = vector.shape_cast %111 : vector<1x128xf32> to vector<1x1x128xf32>
    %114 = vector.broadcast %113 : vector<1x1x128xf32> to vector<1x16x128xf32>
    %115 = arith.mulf %112, %114 : vector<1x16x128xf32>
    %116 = vector.shape_cast %115 : vector<1x16x128xf32> to vector<16x128xf32>
    %117 = arith.truncf %116 : vector<16x128xf32> to vector<16x128xbf16>
    %c0_110 = arith.constant 0 : index
    %c0_111 = arith.constant 0 : index
    %c0_112 = arith.constant 0 : index
    %118 = vector.load %arg9[%c0_110, %c0_111, %c0_112] : memref<3x128x128xbf16, #tpu.memory_space<vmem>>, vector<1x128x128xbf16>
    %119 = vector.shape_cast %118 : vector<1x128x128xbf16> to vector<128x128xbf16>
    %cst_113 = arith.constant dense<0.000000e+00> : vector<16x128xf32>
    %120 = tpu.matmul %117, %119, %cst_113 {dimension_numbers = #tpu.dot_dimension_numbers<[1], [0], [0], [1], [0, 0, 1, 1], [], []>} : vector<16x128xbf16>, vector<128x128xbf16>, vector<16x128xf32> -> vector<16x128xf32>
    %c1_114 = arith.constant 1 : index
    %c0_115 = arith.constant 0 : index
    %c0_116 = arith.constant 0 : index
    %121 = vector.load %arg8[%c1_114, %c0_115, %c0_116] : memref<3x24x128xf32, #tpu.memory_space<vmem>>, vector<1x24x128xf32>
    %122 = vector.shape_cast %121 : vector<1x24x128xf32> to vector<24x128xf32>
    %cst_117 = arith.constant dense<0.000000e+00> : vector<1x128xf32>
    %123 = tpu.matmul %108, %122, %cst_117 {dimension_numbers = #tpu.dot_dimension_numbers<[1], [0], [0], [1], [0, 0, 1, 1], [], []>} : vector<1x24xf32>, vector<24x128xf32>, vector<1x128xf32> -> vector<1x128xf32>
    %124 = vector.shape_cast %65 : vector<16x128xf32> to vector<1x16x128xf32>
    %125 = vector.shape_cast %123 : vector<1x128xf32> to vector<1x1x128xf32>
    %126 = vector.broadcast %125 : vector<1x1x128xf32> to vector<1x16x128xf32>
    %127 = arith.mulf %124, %126 : vector<1x16x128xf32>
    %128 = vector.shape_cast %127 : vector<1x16x128xf32> to vector<16x128xf32>
    %129 = arith.truncf %128 : vector<16x128xf32> to vector<16x128xbf16>
    %c1_118 = arith.constant 1 : index
    %c0_119 = arith.constant 0 : index
    %c0_120 = arith.constant 0 : index
    %130 = vector.load %arg9[%c1_118, %c0_119, %c0_120] : memref<3x128x128xbf16, #tpu.memory_space<vmem>>, vector<1x128x128xbf16>
    %131 = vector.shape_cast %130 : vector<1x128x128xbf16> to vector<128x128xbf16>
    %cst_121 = arith.constant dense<0.000000e+00> : vector<16x128xf32>
    %132 = tpu.matmul %129, %131, %cst_121 {dimension_numbers = #tpu.dot_dimension_numbers<[1], [0], [0], [1], [0, 0, 1, 1], [], []>} : vector<16x128xbf16>, vector<128x128xbf16>, vector<16x128xf32> -> vector<16x128xf32>
    %133 = arith.addf %120, %132 : vector<16x128xf32>
    %c2_122 = arith.constant 2 : index
    %c0_123 = arith.constant 0 : index
    %c0_124 = arith.constant 0 : index
    %134 = vector.load %arg8[%c2_122, %c0_123, %c0_124] : memref<3x24x128xf32, #tpu.memory_space<vmem>>, vector<1x24x128xf32>
    %135 = vector.shape_cast %134 : vector<1x24x128xf32> to vector<24x128xf32>
    %cst_125 = arith.constant dense<0.000000e+00> : vector<1x128xf32>
    %136 = tpu.matmul %108, %135, %cst_125 {dimension_numbers = #tpu.dot_dimension_numbers<[1], [0], [0], [1], [0, 0, 1, 1], [], []>} : vector<1x24xf32>, vector<24x128xf32>, vector<1x128xf32> -> vector<1x128xf32>
    %137 = vector.shape_cast %86 : vector<16x128xf32> to vector<1x16x128xf32>
    %138 = vector.shape_cast %136 : vector<1x128xf32> to vector<1x1x128xf32>
    %139 = vector.broadcast %138 : vector<1x1x128xf32> to vector<1x16x128xf32>
    %140 = arith.mulf %137, %139 : vector<1x16x128xf32>
    %141 = vector.shape_cast %140 : vector<1x16x128xf32> to vector<16x128xf32>
    %142 = arith.truncf %141 : vector<16x128xf32> to vector<16x128xbf16>
    %c2_126 = arith.constant 2 : index
    %c0_127 = arith.constant 0 : index
    %c0_128 = arith.constant 0 : index
    %143 = vector.load %arg9[%c2_126, %c0_127, %c0_128] : memref<3x128x128xbf16, #tpu.memory_space<vmem>>, vector<1x128x128xbf16>
    %144 = vector.shape_cast %143 : vector<1x128x128xbf16> to vector<128x128xbf16>
    %cst_129 = arith.constant dense<0.000000e+00> : vector<16x128xf32>
    %145 = tpu.matmul %142, %144, %cst_129 {dimension_numbers = #tpu.dot_dimension_numbers<[1], [0], [0], [1], [0, 0, 1, 1], [], []>} : vector<16x128xbf16>, vector<128x128xbf16>, vector<16x128xf32> -> vector<16x128xf32>
    %146 = arith.addf %133, %145 : vector<16x128xf32>
    %c0_130 = arith.constant 0 : index
    %c0_131 = arith.constant 0 : index
    %147 = vector.load %arg10[%c0_130, %c0_131] : memref<1x128xf32, #tpu.memory_space<vmem>>, vector<1x128xf32>
    %148 = vector.broadcast %147 : vector<1x128xf32> to vector<16x128xf32>
    %149 = arith.addf %146, %148 : vector<16x128xf32>
    %c0_132 = arith.constant 0 : index
    %c0_133 = arith.constant 0 : index
    %c0_134 = arith.constant 0 : index
    %150 = vector.load %arg2[%c0_132, %c0_133, %c0_134] : memref<1x16x128xf32, #tpu.memory_space<vmem>>, vector<1x16x128xf32>
    %151 = vector.shape_cast %149 : vector<16x128xf32> to vector<1x16x128xf32>
    %152 = arith.addf %150, %151 : vector<1x16x128xf32>
    %c0_135 = arith.constant 0 : index
    %c0_136 = arith.constant 0 : index
    %c0_137 = arith.constant 0 : index
    %153 = vector.load %arg11[%c0_135, %c0_136, %c0_137] : memref<1x16x128xf32, #tpu.memory_space<vmem>>, vector<1x16x128xf32>
    tpu.vector_store %arg11[%c0_135, %c0_136, %c0_137], %152 {strides = array<i32>} : memref<1x16x128xf32, #tpu.memory_space<vmem>>, vector<1x16x128xf32>,
    return
  }
  func.func @transform_0(%arg0: i32) -> (i32, i32, i32) {
    %c0_i32 = arith.constant 0 : i32
    %c0_i32_0 = arith.constant 0 : i32
    %c0_i32_1 = arith.constant 0 : i32
    return %arg0, %c0_i32, %c0_i32_0 : i32, i32, i32
  }
  func.func @transform_1(%arg0: i32) -> (i32, i32, i32) {
    %c0_i32 = arith.constant 0 : i32
    %c0_i32_0 = arith.constant 0 : i32
    %c0_i32_1 = arith.constant 0 : i32
    return %arg0, %c0_i32, %c0_i32_0 : i32, i32, i32
  }
  func.func @transform_2(%arg0: i32) -> (i32, i32, i32) {
    %c0_i32 = arith.constant 0 : i32
    %c0_i32_0 = arith.constant 0 : i32
    %c0_i32_1 = arith.constant 0 : i32
    %c0_i32_2 = arith.constant 0 : i32
    return %c0_i32, %c0_i32_0, %c0_i32_1 : i32, i32, i32
  }
  func.func @transform_3(%arg0: i32) -> (i32, i32, i32) {
    %c0_i32 = arith.constant 0 : i32
    %c0_i32_0 = arith.constant 0 : i32
    %c0_i32_1 = arith.constant 0 : i32
    %c0_i32_2 = arith.constant 0 : i32
    return %c0_i32, %c0_i32_0, %c0_i32_1 : i32, i32, i32
  }
  func.func @transform_4(%arg0: i32) -> (i32, i32, i32) {
    %c0_i32 = arith.constant 0 : i32
    %c0_i32_0 = arith.constant 0 : i32
    %c0_i32_1 = arith.constant 0 : i32
    %c0_i32_2 = arith.constant 0 : i32
    return %c0_i32, %c0_i32_0, %c0_i32_1 : i32, i32, i32
  }
  func.func @transform_5(%arg0: i32) -> (i32, i32, i32) {
    %c0_i32 = arith.constant 0 : i32
    %c0_i32_0 = arith.constant 0 : i32
    %c0_i32_1 = arith.constant 0 : i32
    %c0_i32_2 = arith.constant 0 : i32
    return %c0_i32, %c0_i32_0, %c0_i32_1 : i32, i32, i32
  }
  func.func @transform_6(%arg0: i32) -> (i32, i32, i32) {
    %c0_i32 = arith.constant 0 : i32
    %c0_i32_0 = arith.constant 0 : i32
    %c0_i32_1 = arith.constant 0 : i32
    %c0_i32_2 = arith.constant 0 : i32
    return %c0_i32, %c0_i32_0, %c0_i32_1 : i32, i32, i32
  }
  func.func @transform_7(%arg0: i32) -> (i32, i32, i32) {
    %c0_i32 = arith.constant 0 : i32
    %c0_i32_0 = arith.constant 0 : i32
    %c0_i32_1 = arith.constant 0 : i32
    %c0_i32_2 = arith.constant 0 : i32
    return %c0_i32, %c0_i32_0, %c0_i32_1 : i32, i32, i32
  }
  func.func @transform_8(%arg0: i32) -> (i32, i32, i32) {
    %c0_i32 = arith.constant 0 : i32
    %c0_i32_0 = arith.constant 0 : i32
    %c0_i32_1 = arith.constant 0 : i32
    %c0_i32_2 = arith.constant 0 : i32
    return %c0_i32, %c0_i32_0, %c0_i32_1 : i32, i32, i32
  }
  func.func @transform_9(%arg0: i32) -> (i32, i32) {
    %c0_i32 = arith.constant 0 : i32
    %c0_i32_0 = arith.constant 0 : i32
    %c0_i32_1 = arith.constant 0 : i32
    return %c0_i32, %c0_i32_0 : i32, i32
  }
  func.func @transform_10(%arg0: i32) -> (i32, i32, i32) {
    %c0_i32 = arith.constant 0 : i32
    %c0_i32_0 = arith.constant 0 : i32
    %c0_i32_1 = arith.constant 0 : i32
    return %arg0, %c0_i32, %c0_i32_0 : i32, i32, i32
  }
}

module attributes {stable_mosaic.version = 11 : i64} {
  func.func @_acblock_kernel(%arg0: i32, %arg1: memref<1x24x256xbf16, #tpu.memory_space<vmem>>, %arg2: memref<1x16x128xf32, #tpu.memory_space<vmem>>, %arg3: memref<1x256x128xbf16, #tpu.memory_space<vmem>>, %arg4: memref<9x256x128xbf16, #tpu.memory_space<vmem>>, %arg5: memref<3x256x128xbf16, #tpu.memory_space<vmem>>, %arg6: memref<3x1x128xf32, #tpu.memory_space<vmem>>, %arg7: memref<3x128x24xf32, #tpu.memory_space<vmem>>, %arg8: memref<3x24x128xf32, #tpu.memory_space<vmem>>, %arg9: memref<3x128x128xbf16, #tpu.memory_space<vmem>>, %arg10: memref<1x128xf32, #tpu.memory_space<vmem>>, %arg11: memref<1x16x128xf32, #tpu.memory_space<vmem>>) attributes {dimension_semantics = [#tpu.dimension_semantics<parallel>], iteration_bounds = array<i64: 2>, scalar_prefetch = 0 : i64, scratch_operands = 0 : i64, tpu.core_type = #tpu.core_type<tc>, window_params = [{transform_indices = @transform_0, window_bounds = array<i64: 1, 24, 256>}, {transform_indices = @transform_1, window_bounds = array<i64: 1, 16, 128>}, {pipeline_mode = #tpu.pipeline_mode<synchronous>, transform_indices = @transform_2, window_bounds = array<i64: 1, 256, 128>}, {pipeline_mode = #tpu.pipeline_mode<synchronous>, transform_indices = @transform_3, window_bounds = array<i64: 9, 256, 128>}, {pipeline_mode = #tpu.pipeline_mode<synchronous>, transform_indices = @transform_4, window_bounds = array<i64: 3, 256, 128>}, {pipeline_mode = #tpu.pipeline_mode<synchronous>, transform_indices = @transform_5, window_bounds = array<i64: 3, 1, 128>}, {pipeline_mode = #tpu.pipeline_mode<synchronous>, transform_indices = @transform_6, window_bounds = array<i64: 3, 128, 24>}, {pipeline_mode = #tpu.pipeline_mode<synchronous>, transform_indices = @transform_7, window_bounds = array<i64: 3, 24, 128>}, {pipeline_mode = #tpu.pipeline_mode<synchronous>, transform_indices = @transform_8, window_bounds = array<i64: 3, 128, 128>}, {pipeline_mode = #tpu.pipeline_mode<synchronous>, transform_indices = @transform_9, window_bounds = array<i64: 1, 128>}, {transform_indices = @transform_10, window_bounds = array<i64: 1, 16, 128>}]} {
    %c0 = arith.constant 0 : index
    %c4 = arith.constant 4 : index
    %c0_0 = arith.constant 0 : index
    %0 = vector.load %arg1[%c0, %c4, %c0_0] : memref<1x24x256xbf16, #tpu.memory_space<vmem>>, vector<1x16x256xbf16>
    %1 = vector.shape_cast %0 : vector<1x16x256xbf16> to vector<16x256xbf16>
    %c0_1 = arith.constant 0 : index
    %c0_2 = arith.constant 0 : index
    %c0_3 = arith.constant 0 : index
    %2 = vector.load %arg3[%c0_1, %c0_2, %c0_3] : memref<1x256x128xbf16, #tpu.memory_space<vmem>>, vector<1x256x128xbf16>
    %3 = vector.shape_cast %2 : vector<1x256x128xbf16> to vector<256x128xbf16>
    %cst = arith.constant dense<0.000000e+00> : vector<16x128xf32>
    %4 = tpu.matmul %1, %3, %cst {dimension_numbers = #tpu.dot_dimension_numbers<[1], [0], [0], [1], [0, 0, 1, 1], [], []>} : vector<16x256xbf16>, vector<256x128xbf16>, vector<16x128xf32> -> vector<16x128xf32>
    %c0_4 = arith.constant 0 : index
    %c0_5 = arith.constant 0 : index
    %c0_6 = arith.constant 0 : index
    %5 = vector.load %arg6[%c0_4, %c0_5, %c0_6] : memref<3x1x128xf32, #tpu.memory_space<vmem>>, vector<1x1x128xf32>
    %6 = vector.shape_cast %5 : vector<1x1x128xf32> to vector<1x128xf32>
    %7 = vector.broadcast %6 : vector<1x128xf32> to vector<16x128xf32>
    %8 = arith.addf %4, %7 : vector<16x128xf32>
    %c0_7 = arith.constant 0 : index
    %c0_8 = arith.constant 0 : index
    %c0_9 = arith.constant 0 : index
    %9 = vector.load %arg1[%c0_7, %c0_8, %c0_9] : memref<1x24x256xbf16, #tpu.memory_space<vmem>>, vector<1x16x256xbf16>
    %10 = vector.shape_cast %9 : vector<1x16x256xbf16> to vector<16x256xbf16>
    %c0_10 = arith.constant 0 : index
    %c0_11 = arith.constant 0 : index
    %c0_12 = arith.constant 0 : index
    %11 = vector.load %arg4[%c0_10, %c0_11, %c0_12] : memref<9x256x128xbf16, #tpu.memory_space<vmem>>, vector<1x256x128xbf16>
    %12 = vector.shape_cast %11 : vector<1x256x128xbf16> to vector<256x128xbf16>
    %cst_13 = arith.constant dense<0.000000e+00> : vector<16x128xf32>
    %13 = tpu.matmul %10, %12, %cst_13 {dimension_numbers = #tpu.dot_dimension_numbers<[1], [0], [0], [1], [0, 0, 1, 1], [], []>} : vector<16x256xbf16>, vector<256x128xbf16>, vector<16x128xf32> -> vector<16x128xf32>
    %c0_14 = arith.constant 0 : index
    %c1 = arith.constant 1 : index
    %c0_15 = arith.constant 0 : index
    %14 = vector.load %arg1[%c0_14, %c1, %c0_15] : memref<1x24x256xbf16, #tpu.memory_space<vmem>>, vector<1x16x256xbf16>
    %15 = vector.shape_cast %14 : vector<1x16x256xbf16> to vector<16x256xbf16>
    %c1_16 = arith.constant 1 : index
    %c0_17 = arith.constant 0 : index
    %c0_18 = arith.constant 0 : index
    %16 = vector.load %arg4[%c1_16, %c0_17, %c0_18] : memref<9x256x128xbf16, #tpu.memory_space<vmem>>, vector<1x256x128xbf16>
    %17 = vector.shape_cast %16 : vector<1x256x128xbf16> to vector<256x128xbf16>
    %cst_19 = arith.constant dense<0.000000e+00> : vector<16x128xf32>
    %18 = tpu.matmul %15, %17, %cst_19 {dimension_numbers = #tpu.dot_dimension_numbers<[1], [0], [0], [1], [0, 0, 1, 1], [], []>} : vector<16x256xbf16>, vector<256x128xbf16>, vector<16x128xf32> -> vector<16x128xf32>
    %19 = arith.addf %13, %18 : vector<16x128xf32>
    %c0_20 = arith.constant 0 : index
    %c2 = arith.constant 2 : index
    %c0_21 = arith.constant 0 : index
    %20 = vector.load %arg1[%c0_20, %c2, %c0_21] : memref<1x24x256xbf16, #tpu.memory_space<vmem>>, vector<1x16x256xbf16>
    %21 = vector.shape_cast %20 : vector<1x16x256xbf16> to vector<16x256xbf16>
    %c2_22 = arith.constant 2 : index
    %c0_23 = arith.constant 0 : index
    %c0_24 = arith.constant 0 : index
    %22 = vector.load %arg4[%c2_22, %c0_23, %c0_24] : memref<9x256x128xbf16, #tpu.memory_space<vmem>>, vector<1x256x128xbf16>
    %23 = vector.shape_cast %22 : vector<1x256x128xbf16> to vector<256x128xbf16>
    %cst_25 = arith.constant dense<0.000000e+00> : vector<16x128xf32>
    %24 = tpu.matmul %21, %23, %cst_25 {dimension_numbers = #tpu.dot_dimension_numbers<[1], [0], [0], [1], [0, 0, 1, 1], [], []>} : vector<16x256xbf16>, vector<256x128xbf16>, vector<16x128xf32> -> vector<16x128xf32>
    %25 = arith.addf %19, %24 : vector<16x128xf32>
    %c0_26 = arith.constant 0 : index
    %c3 = arith.constant 3 : index
    %c0_27 = arith.constant 0 : index
    %26 = vector.load %arg1[%c0_26, %c3, %c0_27] : memref<1x24x256xbf16, #tpu.memory_space<vmem>>, vector<1x16x256xbf16>
    %27 = vector.shape_cast %26 : vector<1x16x256xbf16> to vector<16x256xbf16>
    %c3_28 = arith.constant 3 : index
    %c0_29 = arith.constant 0 : index
    %c0_30 = arith.constant 0 : index
    %28 = vector.load %arg4[%c3_28, %c0_29, %c0_30] : memref<9x256x128xbf16, #tpu.memory_space<vmem>>, vector<1x256x128xbf16>
    %29 = vector.shape_cast %28 : vector<1x256x128xbf16> to vector<256x128xbf16>
    %cst_31 = arith.constant dense<0.000000e+00> : vector<16x128xf32>
    %30 = tpu.matmul %27, %29, %cst_31 {dimension_numbers = #tpu.dot_dimension_numbers<[1], [0], [0], [1], [0, 0, 1, 1], [], []>} : vector<16x256xbf16>, vector<256x128xbf16>, vector<16x128xf32> -> vector<16x128xf32>
    %31 = arith.addf %25, %30 : vector<16x128xf32>
    %c0_32 = arith.constant 0 : index
    %c4_33 = arith.constant 4 : index
    %c0_34 = arith.constant 0 : index
    %32 = vector.load %arg1[%c0_32, %c4_33, %c0_34] : memref<1x24x256xbf16, #tpu.memory_space<vmem>>, vector<1x16x256xbf16>
    %33 = vector.shape_cast %32 : vector<1x16x256xbf16> to vector<16x256xbf16>
    %c4_35 = arith.constant 4 : index
    %c0_36 = arith.constant 0 : index
    %c0_37 = arith.constant 0 : index
    %34 = vector.load %arg4[%c4_35, %c0_36, %c0_37] : memref<9x256x128xbf16, #tpu.memory_space<vmem>>, vector<1x256x128xbf16>
    %35 = vector.shape_cast %34 : vector<1x256x128xbf16> to vector<256x128xbf16>
    %cst_38 = arith.constant dense<0.000000e+00> : vector<16x128xf32>
    %36 = tpu.matmul %33, %35, %cst_38 {dimension_numbers = #tpu.dot_dimension_numbers<[1], [0], [0], [1], [0, 0, 1, 1], [], []>} : vector<16x256xbf16>, vector<256x128xbf16>, vector<16x128xf32> -> vector<16x128xf32>
    %37 = arith.addf %31, %36 : vector<16x128xf32>
    %c0_39 = arith.constant 0 : index
    %c5 = arith.constant 5 : index
    %c0_40 = arith.constant 0 : index
    %38 = vector.load %arg1[%c0_39, %c5, %c0_40] : memref<1x24x256xbf16, #tpu.memory_space<vmem>>, vector<1x16x256xbf16>
    %39 = vector.shape_cast %38 : vector<1x16x256xbf16> to vector<16x256xbf16>
    %c5_41 = arith.constant 5 : index
    %c0_42 = arith.constant 0 : index
    %c0_43 = arith.constant 0 : index
    %40 = vector.load %arg4[%c5_41, %c0_42, %c0_43] : memref<9x256x128xbf16, #tpu.memory_space<vmem>>, vector<1x256x128xbf16>
    %41 = vector.shape_cast %40 : vector<1x256x128xbf16> to vector<256x128xbf16>
    %cst_44 = arith.constant dense<0.000000e+00> : vector<16x128xf32>
    %42 = tpu.matmul %39, %41, %cst_44 {dimension_numbers = #tpu.dot_dimension_numbers<[1], [0], [0], [1], [0, 0, 1, 1], [], []>} : vector<16x256xbf16>, vector<256x128xbf16>, vector<16x128xf32> -> vector<16x128xf32>
    %43 = arith.addf %37, %42 : vector<16x128xf32>
    %c0_45 = arith.constant 0 : index
    %c6 = arith.constant 6 : index
    %c0_46 = arith.constant 0 : index
    %44 = vector.load %arg1[%c0_45, %c6, %c0_46] : memref<1x24x256xbf16, #tpu.memory_space<vmem>>, vector<1x16x256xbf16>
    %45 = vector.shape_cast %44 : vector<1x16x256xbf16> to vector<16x256xbf16>
    %c6_47 = arith.constant 6 : index
    %c0_48 = arith.constant 0 : index
    %c0_49 = arith.constant 0 : index
    %46 = vector.load %arg4[%c6_47, %c0_48, %c0_49] : memref<9x256x128xbf16, #tpu.memory_space<vmem>>, vector<1x256x128xbf16>
    %47 = vector.shape_cast %46 : vector<1x256x128xbf16> to vector<256x128xbf16>
    %cst_50 = arith.constant dense<0.000000e+00> : vector<16x128xf32>
    %48 = tpu.matmul %45, %47, %cst_50 {dimension_numbers = #tpu.dot_dimension_numbers<[1], [0], [0], [1], [0, 0, 1, 1], [], []>} : vector<16x256xbf16>, vector<256x128xbf16>, vector<16x128xf32> -> vector<16x128xf32>
    %49 = arith.addf %43, %48 : vector<16x128xf32>
    %c0_51 = arith.constant 0 : index
    %c7 = arith.constant 7 : index
    %c0_52 = arith.constant 0 : index
    %50 = vector.load %arg1[%c0_51, %c7, %c0_52] : memref<1x24x256xbf16, #tpu.memory_space<vmem>>, vector<1x16x256xbf16>
    %51 = vector.shape_cast %50 : vector<1x16x256xbf16> to vector<16x256xbf16>
    %c7_53 = arith.constant 7 : index
    %c0_54 = arith.constant 0 : index
    %c0_55 = arith.constant 0 : index
    %52 = vector.load %arg4[%c7_53, %c0_54, %c0_55] : memref<9x256x128xbf16, #tpu.memory_space<vmem>>, vector<1x256x128xbf16>
    %53 = vector.shape_cast %52 : vector<1x256x128xbf16> to vector<256x128xbf16>
    %cst_56 = arith.constant dense<0.000000e+00> : vector<16x128xf32>
    %54 = tpu.matmul %51, %53, %cst_56 {dimension_numbers = #tpu.dot_dimension_numbers<[1], [0], [0], [1], [0, 0, 1, 1], [], []>} : vector<16x256xbf16>, vector<256x128xbf16>, vector<16x128xf32> -> vector<16x128xf32>
    %55 = arith.addf %49, %54 : vector<16x128xf32>
    %c0_57 = arith.constant 0 : index
    %c8 = arith.constant 8 : index
    %c0_58 = arith.constant 0 : index
    %56 = vector.load %arg1[%c0_57, %c8, %c0_58] : memref<1x24x256xbf16, #tpu.memory_space<vmem>>, vector<1x16x256xbf16>
    %57 = vector.shape_cast %56 : vector<1x16x256xbf16> to vector<16x256xbf16>
    %c8_59 = arith.constant 8 : index
    %c0_60 = arith.constant 0 : index
    %c0_61 = arith.constant 0 : index
    %58 = vector.load %arg4[%c8_59, %c0_60, %c0_61] : memref<9x256x128xbf16, #tpu.memory_space<vmem>>, vector<1x256x128xbf16>
    %59 = vector.shape_cast %58 : vector<1x256x128xbf16> to vector<256x128xbf16>
    %cst_62 = arith.constant dense<0.000000e+00> : vector<16x128xf32>
    %60 = tpu.matmul %57, %59, %cst_62 {dimension_numbers = #tpu.dot_dimension_numbers<[1], [0], [0], [1], [0, 0, 1, 1], [], []>} : vector<16x256xbf16>, vector<256x128xbf16>, vector<16x128xf32> -> vector<16x128xf32>
    %61 = arith.addf %55, %60 : vector<16x128xf32>
    %c1_63 = arith.constant 1 : index
    %c0_64 = arith.constant 0 : index
    %c0_65 = arith.constant 0 : index
    %62 = vector.load %arg6[%c1_63, %c0_64, %c0_65] : memref<3x1x128xf32, #tpu.memory_space<vmem>>, vector<1x1x128xf32>
    %63 = vector.shape_cast %62 : vector<1x1x128xf32> to vector<1x128xf32>
    %64 = vector.broadcast %63 : vector<1x128xf32> to vector<16x128xf32>
    %65 = arith.addf %61, %64 : vector<16x128xf32>
    %c0_66 = arith.constant 0 : index
    %c3_67 = arith.constant 3 : index
    %c0_68 = arith.constant 0 : index
    %66 = vector.load %arg1[%c0_66, %c3_67, %c0_68] : memref<1x24x256xbf16, #tpu.memory_space<vmem>>, vector<1x16x256xbf16>
    %67 = vector.shape_cast %66 : vector<1x16x256xbf16> to vector<16x256xbf16>
    %c0_69 = arith.constant 0 : index
    %c0_70 = arith.constant 0 : index
    %c0_71 = arith.constant 0 : index
    %68 = vector.load %arg5[%c0_69, %c0_70, %c0_71] : memref<3x256x128xbf16, #tpu.memory_space<vmem>>, vector<1x256x128xbf16>
    %69 = vector.shape_cast %68 : vector<1x256x128xbf16> to vector<256x128xbf16>
    %cst_72 = arith.constant dense<0.000000e+00> : vector<16x128xf32>
    %70 = tpu.matmul %67, %69, %cst_72 {dimension_numbers = #tpu.dot_dimension_numbers<[1], [0], [0], [1], [0, 0, 1, 1], [], []>} : vector<16x256xbf16>, vector<256x128xbf16>, vector<16x128xf32> -> vector<16x128xf32>
    %c0_73 = arith.constant 0 : index
    %c4_74 = arith.constant 4 : index
    %c0_75 = arith.constant 0 : index
    %71 = vector.load %arg1[%c0_73, %c4_74, %c0_75] : memref<1x24x256xbf16, #tpu.memory_space<vmem>>, vector<1x16x256xbf16>
    %72 = vector.shape_cast %71 : vector<1x16x256xbf16> to vector<16x256xbf16>
    %c1_76 = arith.constant 1 : index
    %c0_77 = arith.constant 0 : index
    %c0_78 = arith.constant 0 : index
    %73 = vector.load %arg5[%c1_76, %c0_77, %c0_78] : memref<3x256x128xbf16, #tpu.memory_space<vmem>>, vector<1x256x128xbf16>
    %74 = vector.shape_cast %73 : vector<1x256x128xbf16> to vector<256x128xbf16>
    %cst_79 = arith.constant dense<0.000000e+00> : vector<16x128xf32>
    %75 = tpu.matmul %72, %74, %cst_79 {dimension_numbers = #tpu.dot_dimension_numbers<[1], [0], [0], [1], [0, 0, 1, 1], [], []>} : vector<16x256xbf16>, vector<256x128xbf16>, vector<16x128xf32> -> vector<16x128xf32>
    %76 = arith.addf %70, %75 : vector<16x128xf32>
    %c0_80 = arith.constant 0 : index
    %c5_81 = arith.constant 5 : index
    %c0_82 = arith.constant 0 : index
    %77 = vector.load %arg1[%c0_80, %c5_81, %c0_82] : memref<1x24x256xbf16, #tpu.memory_space<vmem>>, vector<1x16x256xbf16>
    %78 = vector.shape_cast %77 : vector<1x16x256xbf16> to vector<16x256xbf16>
    %c2_83 = arith.constant 2 : index
    %c0_84 = arith.constant 0 : index
    %c0_85 = arith.constant 0 : index
    %79 = vector.load %arg5[%c2_83, %c0_84, %c0_85] : memref<3x256x128xbf16, #tpu.memory_space<vmem>>, vector<1x256x128xbf16>
    %80 = vector.shape_cast %79 : vector<1x256x128xbf16> to vector<256x128xbf16>
    %cst_86 = arith.constant dense<0.000000e+00> : vector<16x128xf32>
    %81 = tpu.matmul %78, %80, %cst_86 {dimension_numbers = #tpu.dot_dimension_numbers<[1], [0], [0], [1], [0, 0, 1, 1], [], []>} : vector<16x256xbf16>, vector<256x128xbf16>, vector<16x128xf32> -> vector<16x128xf32>
    %82 = arith.addf %76, %81 : vector<16x128xf32>
    %c2_87 = arith.constant 2 : index
    %c0_88 = arith.constant 0 : index
    %c0_89 = arith.constant 0 : index
    %83 = vector.load %arg6[%c2_87, %c0_88, %c0_89] : memref<3x1x128xf32, #tpu.memory_space<vmem>>, vector<1x1x128xf32>
    %84 = vector.shape_cast %83 : vector<1x1x128xf32> to vector<1x128xf32>
    %85 = vector.broadcast %84 : vector<1x128xf32> to vector<16x128xf32>
    %86 = arith.addf %82, %85 : vector<16x128xf32>
    %87 = vector.shape_cast %8 : vector<16x128xf32> to vector<1x16x128xf32>
    %cst_90 = arith.constant dense<0.000000e+00> : vector<1x128xf32>
    %88 = vector.multi_reduction <add>, %87, %cst_90 [1] : vector<1x16x128xf32> to vector<1x128xf32>
    %c0_91 = arith.constant 0 : index
    %c0_92 = arith.constant 0 : index
    %c0_93 = arith.constant 0 : index
    %89 = vector.load %arg7[%c0_91, %c0_92, %c0_93] : memref<3x128x24xf32, #tpu.memory_space<vmem>>, vector<1x128x24xf32>
    %90 = vector.shape_cast %89 : vector<1x128x24xf32> to vector<128x24xf32>
    %cst_94 = arith.constant dense<0.000000e+00> : vector<1x24xf32>
    %91 = tpu.matmul %88, %90, %cst_94 {dimension_numbers = #tpu.dot_dimension_numbers<[1], [0], [0], [1], [0, 0, 1, 1], [], []>} : vector<1x128xf32>, vector<128x24xf32>, vector<1x24xf32> -> vector<1x24xf32>
    %92 = vector.shape_cast %65 : vector<16x128xf32> to vector<1x16x128xf32>
    %cst_95 = arith.constant dense<0.000000e+00> : vector<1x128xf32>
    %93 = vector.multi_reduction <add>, %92, %cst_95 [1] : vector<1x16x128xf32> to vector<1x128xf32>
    %c1_96 = arith.constant 1 : index
    %c0_97 = arith.constant 0 : index
    %c0_98 = arith.constant 0 : index
    %94 = vector.load %arg7[%c1_96, %c0_97, %c0_98] : memref<3x128x24xf32, #tpu.memory_space<vmem>>, vector<1x128x24xf32>
    %95 = vector.shape_cast %94 : vector<1x128x24xf32> to vector<128x24xf32>
    %cst_99 = arith.constant dense<0.000000e+00> : vector<1x24xf32>
    %96 = tpu.matmul %93, %95, %cst_99 {dimension_numbers = #tpu.dot_dimension_numbers<[1], [0], [0], [1], [0, 0, 1, 1], [], []>} : vector<1x128xf32>, vector<128x24xf32>, vector<1x24xf32> -> vector<1x24xf32>
    %97 = arith.addf %91, %96 : vector<1x24xf32>
    %98 = vector.shape_cast %86 : vector<16x128xf32> to vector<1x16x128xf32>
    %cst_100 = arith.constant dense<0.000000e+00> : vector<1x128xf32>
    %99 = vector.multi_reduction <add>, %98, %cst_100 [1] : vector<1x16x128xf32> to vector<1x128xf32>
    %c2_101 = arith.constant 2 : index
    %c0_102 = arith.constant 0 : index
    %c0_103 = arith.constant 0 : index
    %100 = vector.load %arg7[%c2_101, %c0_102, %c0_103] : memref<3x128x24xf32, #tpu.memory_space<vmem>>, vector<1x128x24xf32>
    %101 = vector.shape_cast %100 : vector<1x128x24xf32> to vector<128x24xf32>
    %cst_104 = arith.constant dense<0.000000e+00> : vector<1x24xf32>
    %102 = tpu.matmul %99, %101, %cst_104 {dimension_numbers = #tpu.dot_dimension_numbers<[1], [0], [0], [1], [0, 0, 1, 1], [], []>} : vector<1x128xf32>, vector<128x24xf32>, vector<1x24xf32> -> vector<1x24xf32>
    %103 = arith.addf %97, %102 : vector<1x24xf32>
    %104 = arith.negf %103 : vector<1x24xf32>
    %105 = math.exp %104 : vector<1x24xf32>
    %cst_105 = arith.constant 1.000000e+00 : f32
    %106 = vector.broadcast %cst_105 : f32 to vector<1x24xf32>
    %107 = arith.addf %106, %105 : vector<1x24xf32>
    %108 = arith.divf %106, %107 : vector<1x24xf32>
    %c0_106 = arith.constant 0 : index
    %c0_107 = arith.constant 0 : index
    %c0_108 = arith.constant 0 : index
    %109 = vector.load %arg8[%c0_106, %c0_107, %c0_108] : memref<3x24x128xf32, #tpu.memory_space<vmem>>, vector<1x24x128xf32>
    %110 = vector.shape_cast %109 : vector<1x24x128xf32> to vector<24x128xf32>
    %cst_109 = arith.constant dense<0.000000e+00> : vector<1x128xf32>
    %111 = tpu.matmul %108, %110, %cst_109 {dimension_numbers = #tpu.dot_dimension_numbers<[1], [0], [0], [1], [0, 0, 1, 1], [], []>} : vector<1x24xf32>, vector<24x128xf32>, vector<1x128xf32> -> vector<1x128xf32>
    %112 = vector.shape_cast %8 : vector<16x128xf32> to vector<1x16x128xf32>
    %113 = vector.shape_cast %111 : vector<1x128xf32> to vector<1x1x128xf32>
    %114 = vector.broadcast %113 : vector<1x1x128xf32> to vector<1x16x128xf32>
    %115 = arith.mulf %112, %114 : vector<1x16x128xf32>
    %116 = vector.shape_cast %115 : vector<1x16x128xf32> to vector<16x128xf32>
    %117 = arith.truncf %116 : vector<16x128xf32> to vector<16x128xbf16>
    %c0_110 = arith.constant 0 : index
    %c0_111 = arith.constant 0 : index
    %c0_112 = arith.constant 0 : index
    %118 = vector.load %arg9[%c0_110, %c0_111, %c0_112] : memref<3x128x128xbf16, #tpu.memory_space<vmem>>, vector<1x128x128xbf16>
    %119 = vector.shape_cast %118 : vector<1x128x128xbf16> to vector<128x128xbf16>
    %cst_113 = arith.constant dense<0.000000e+00> : vector<16x128xf32>
    %120 = tpu.matmul %117, %119, %cst_113 {dimension_numbers = #tpu.dot_dimension_numbers<[1], [0], [0], [1], [0, 0, 1, 1], [], []>} : vector<16x128xbf16>, vector<128x128xbf16>, vector<16x128xf32> -> vector<16x128xf32>
    %c1_114 = arith.constant 1 : index
    %c0_115 = arith.constant 0 : index
    %c0_116 = arith.constant 0 : index
    %121 = vector.load %arg8[%c1_114, %c0_115, %c0_116] : memref<3x24x128xf32, #tpu.memory_space<vmem>>, vector<1x24x128xf32>
    %122 = vector.shape_cast %121 : vector<1x24x128xf32> to vector<24x128xf32>
    %cst_117 = arith.constant dense<0.000000e+00> : vector<1x128xf32>
    %123 = tpu.matmul %108, %122, %cst_117 {dimension_numbers = #tpu.dot_dimension_numbers<[1], [0], [0], [1], [0, 0, 1, 1], [], []>} : vector<1x24xf32>, vector<24x128xf32>, vector<1x128xf32> -> vector<1x128xf32>
    %124 = vector.shape_cast %65 : vector<16x128xf32> to vector<1x16x128xf32>
    %125 = vector.shape_cast %123 : vector<1x128xf32> to vector<1x1x128xf32>
    %126 = vector.broadcast %125 : vector<1x1x128xf32> to vector<1x16x128xf32>
    %127 = arith.mulf %124, %126 : vector<1x16x128xf32>
    %128 = vector.shape_cast %127 : vector<1x16x128xf32> to vector<16x128xf32>
    %129 = arith.truncf %128 : vector<16x128xf32> to vector<16x128xbf16>
    %c1_118 = arith.constant 1 : index
    %c0_119 = arith.constant 0 : index
    %c0_120 = arith.constant 0 : index
    %130 = vector.load %arg9[%c1_118, %c0_119, %c0_120] : memref<3x128x128xbf16, #tpu.memory_space<vmem>>, vector<1x128x128xbf16>
    %131 = vector.shape_cast %130 : vector<1x128x128xbf16> to vector<128x128xbf16>
    %cst_121 = arith.constant dense<0.000000e+00> : vector<16x128xf32>
    %132 = tpu.matmul %129, %131, %cst_121 {dimension_numbers = #tpu.dot_dimension_numbers<[1], [0], [0], [1], [0, 0, 1, 1], [], []>} : vector<16x128xbf16>, vector<128x128xbf16>, vector<16x128xf32> -> vector<16x128xf32>
    %133 = arith.addf %120, %132 : vector<16x128xf32>
    %c2_122 = arith.constant 2 : index
    %c0_123 = arith.constant 0 : index
    %c0_124 = arith.constant 0 : index
    %134 = vector.load %arg8[%c2_122, %c0_123, %c0_124] : memref<3x24x128xf32, #tpu.memory_space<vmem>>, vector<1x24x128xf32>
    %135 = vector.shape_cast %134 : vector<1x24x128xf32> to vector<24x128xf32>
    %cst_125 = arith.constant dense<0.000000e+00> : vector<1x128xf32>
    %136 = tpu.matmul %108, %135, %cst_125 {dimension_numbers = #tpu.dot_dimension_numbers<[1], [0], [0], [1], [0, 0, 1, 1], [], []>} : vector<1x24xf32>, vector<24x128xf32>, vector<1x128xf32> -> vector<1x128xf32>
    %137 = vector.shape_cast %86 : vector<16x128xf32> to vector<1x16x128xf32>
    %138 = vector.shape_cast %136 : vector<1x128xf32> to vector<1x1x128xf32>
    %139 = vector.broadcast %138 : vector<1x1x128xf32> to vector<1x16x128xf32>
    %140 = arith.mulf %137, %139 : vector<1x16x128xf32>
    %141 = vector.shape_cast %140 : vector<1x16x128xf32> to vector<16x128xf32>
    %142 = arith.truncf %141 : vector<16x128xf32> to vector<16x128xbf16>
    %c2_126 = arith.constant 2 : index
    %c0_127 = arith.constant 0 : index
    %c0_128 = arith.constant 0 : index
    %143 = vector.load %arg9[%c2_126, %c0_127, %c0_128] : memref<3x128x128xbf16, #tpu.memory_space<vmem>>, vector<1x128x128xbf16>
    %144 = vector.shape_cast %143 : vector<1x128x128xbf16> to vector<128x128xbf16>
    %cst_129 = arith.constant dense<0.000000e+00> : vector<16x128xf32>
    %145 = tpu.matmul %142, %144, %cst_129 {dimension_numbers = #tpu.dot_dimension_numbers<[1], [0], [0], [1], [0, 0, 1, 1], [], []>} : vector<16x128xbf16>, vector<128x128xbf16>, vector<16x128xf32> -> vector<16x128xf32>
    %146 = arith.addf %133, %145 : vector<16x128xf32>
    %c0_130 = arith.constant 0 : index
    %c0_131 = arith.constant 0 : index
    %147 = vector.load %arg10[%c0_130, %c0_131] : memref<1x128xf32, #tpu.memory_space<vmem>>, vector<1x128xf32>
    %148 = vector.broadcast %147 : vector<1x128xf32> to vector<16x128xf32>
    %149 = arith.addf %146, %148 : vector<16x128xf32>
    %c0_132 = arith.constant 0 : index
    %c0_133 = arith.constant 0 : index
    %c0_134 = arith.constant 0 : index
    %150 = vector.load %arg2[%c0_132, %c0_133, %c0_134] : memref<1x16x128xf32, #tpu.memory_space<vmem>>, vector<1x16x128xf32>
    %151 = vector.shape_cast %149 : vector<16x128xf32> to vector<1x16x128xf32>
    %152 = arith.addf %150, %151 : vector<1x16x128xf32>
    %c0_135 = arith.constant 0 : index
    %c0_136 = arith.constant 0 : index
    %c0_137 = arith.constant 0 : index
    %153 = vector.load %arg11[%c0_135, %c0_136, %c0_137] : memref<1x16x128xf32, #tpu.memory_space<vmem>>, vector<1x16x128xf32>
    tpu.vector_store %arg11[%c0_135, %c0_136, %c0_137], %152 {strides = array<i32>} : memref<1x16x128xf32, #tpu.memory_space<vmem>>, vector<1x16x128xf32>,
    return
  }
  func.func @transform_0(%arg0: i32) -> (i32, i32, i32) {
    %c0_i32 = arith.constant 0 : i32
    %c0_i32_0 = arith.constant 0 : i32
    %c0_i32_1 = arith.constant 0 : i32
    return %arg0, %c0_i32, %c0_i32_0 : i32, i32, i32
  }
  func.func @transform_1(%arg0: i32) -> (i32, i32, i32) {
    %c0_i32 = arith.constant 0 : i32
    %c0_i32_0 = arith.constant 0 : i32
    %c0_i32_1 = arith.constant 0 : i32
    return %arg0, %c0_i32, %c0_i32_0 : i32, i32, i32
  }
  func.func @transform_2(%arg0: i32) -> (i32, i32, i32) {
    %c0_i32 = arith.constant 0 : i32
    %c0_i32_0 = arith.constant 0 : i32
    %c0_i32_1 = arith.constant 0 : i32
    %c0_i32_2 = arith.constant 0 : i32
    return %c0_i32, %c0_i32_0, %c0_i32_1 : i32, i32, i32
  }
  func.func @transform_3(%arg0: i32) -> (i32, i32, i32) {
    %c0_i32 = arith.constant 0 : i32
    %c0_i32_0 = arith.constant 0 : i32
    %c0_i32_1 = arith.constant 0 : i32
    %c0_i32_2 = arith.constant 0 : i32
    return %c0_i32, %c0_i32_0, %c0_i32_1 : i32, i32, i32
  }
  func.func @transform_4(%arg0: i32) -> (i32, i32, i32) {
    %c0_i32 = arith.constant 0 : i32
    %c0_i32_0 = arith.constant 0 : i32
    %c0_i32_1 = arith.constant 0 : i32
    %c0_i32_2 = arith.constant 0 : i32
    return %c0_i32, %c0_i32_0, %c0_i32_1 : i32, i32, i32
  }
  func.func @transform_5(%arg0: i32) -> (i32, i32, i32) {
    %c0_i32 = arith.constant 0 : i32
    %c0_i32_0 = arith.constant 0 : i32
    %c0_i32_1 = arith.constant 0 : i32
    %c0_i32_2 = arith.constant 0 : i32
    return %c0_i32, %c0_i32_0, %c0_i32_1 : i32, i32, i32
  }
  func.func @transform_6(%arg0: i32) -> (i32, i32, i32) {
    %c0_i32 = arith.constant 0 : i32
    %c0_i32_0 = arith.constant 0 : i32
    %c0_i32_1 = arith.constant 0 : i32
    %c0_i32_2 = arith.constant 0 : i32
    return %c0_i32, %c0_i32_0, %c0_i32_1 : i32, i32, i32
  }
  func.func @transform_7(%arg0: i32) -> (i32, i32, i32) {
    %c0_i32 = arith.constant 0 : i32
    %c0_i32_0 = arith.constant 0 : i32
    %c0_i32_1 = arith.constant 0 : i32
    %c0_i32_2 = arith.constant 0 : i32
    return %c0_i32, %c0_i32_0, %c0_i32_1 : i32, i32, i32
  }
  func.func @transform_8(%arg0: i32) -> (i32, i32, i32) {
    %c0_i32 = arith.constant 0 : i32
    %c0_i32_0 = arith.constant 0 : i32
    %c0_i32_1 = arith.constant 0 : i32
    %c0_i32_2 = arith.constant 0 : i32
    return %c0_i32, %c0_i32_0, %c0_i32_1 : i32, i32, i32
  }
  func.func @transform_9(%arg0: i32) -> (i32, i32) {
    %c0_i32 = arith.constant 0 : i32
    %c0_i32_0 = arith.constant 0 : i32
    %c0_i32_1 = arith.constant 0 : i32
    return %c0_i32, %c0_i32_0 : i32, i32
  }
  func.func @transform_10(%arg0: i32) -> (i32, i32, i32) {
    %c0_i32 = arith.constant 0 : i32
    %c0_i32_0 = arith.constant 0 : i32
    %c0_i32_1 = arith.constant 0 : i32
    return %arg0, %c0_i32, %c0_i32_0 : i32, i32, i32
  }
}

</mosaic_0001>

<llo_original>
// kernel: tile.31
$region0: #{tile.31}
  #allocation0 [shape = 's32[1]{0}', space=sflag, size = 0x4, scoped, tag = 'scoped memory for tile.31']
  %s0 = inlined_call_operand.vmem [shape: f32[8], index: 0, kind: input, shape index: {}]
  %s1 = inlined_call_operand.vmem [shape: f32[16,8], index: 1, kind: output, shape index: {}]
  // Predicated region
  $region2: #{tile.31} parent=0 // pred_check
    _
  $region3: #{tile.31} parent=0 // pred_check_branch
    %3 = sbr.rel (0) target = $region5
  $region4: #{tile.31} parent=0 // pred_region
    _
  $region5: #{tile.31} parent=0 // pred_fallthru
    _
  %v4 = vld [vmem:[%s0] ss:$0 sm:$0xff]
  %5 = vst [vmem:[%s1] sm:$0xff] %v4
  %s6 = scalar_lea.vmem %s1, 8
  %7 = vst [vmem:[%s6] sm:$0xff] %v4

// kernel: tile.34
$region0: #{tile.34}
  %s0 = inlined_call_operand.vmem [shape: f32[16,8], index: 0, kind: input, shape index: {}]
  %s1 = inlined_call_operand.vmem [shape: f32[1,1,128], index: 1, kind: output, shape index: {}]
  $region1: #{tile.34} parent=0
    #allocation0 [shape = 'u8[4096]{0}', space=vmem, size = 0x1000, scoped, tag = 'scoped mem for output reshape']
    %v2 = vld [vmem:[%s0] sm:$0x1]
    %vm3 = vcmask 64512
    %4 = vst.msk [vmem:[#allocation0] sm:$0x1] %vm3, %v2
    %s5 = scalar_lea.vmem %s0, 15
    %v6 = vld [vmem:[%s5] sm:$0x1]
    %7 = vrot.lane.b32.xlu0 %v6, 120
    %v8 = vpop.permute.xlu0 %7
    %vm9 = vcmask 1048512
    %10 = vst.msk [vmem:[#allocation0] sm:$0x1] %vm9, %v8
    %s11 = scalar_lea.vmem %s0, 14
    %v12 = vld [vmem:[%s11] sm:$0x1]
    %13 = vrot.lane.b32.xlu0 %v12, 112
    %v14 = vpop.permute.xlu0 %13
    %vm15 = vcmask 982912
    %16 = vst.msk [vmem:[#allocation0] sm:$0x1] %vm15, %v14
    %s17 = scalar_lea.vmem %s0, 13
    %v18 = vld [vmem:[%s17] sm:$0x1]
    %19 = vrot.lane.b32.xlu0 %v18, 104
    %v20 = vpop.permute.xlu0 %19
    %vm21 = vcmask 917312
    %22 = vst.msk [vmem:[#allocation0] sm:$0x1] %vm21, %v20
    %s23 = scalar_lea.vmem %s0, 12
    %v24 = vld [vmem:[%s23] sm:$0x1]
    %25 = vrot.lane.b32.xlu0 %v24, 96
    %v26 = vpop.permute.xlu0 %25
    %vm27 = vcmask 851712
    %28 = vst.msk [vmem:[#allocation0] sm:$0x1] %vm27, %v26
    %s29 = scalar_lea.vmem %s0, 11
    %v30 = vld [vmem:[%s29] sm:$0x1]
    %31 = vrot.lane.b32.xlu0 %v30, 88
    %v32 = vpop.permute.xlu0 %31
    %vm33 = vcmask 786112
    %34 = vst.msk [vmem:[#allocation0] sm:$0x1] %vm33, %v32
    %s35 = scalar_lea.vmem %s0, 10
    %v36 = vld [vmem:[%s35] sm:$0x1]
    %37 = vrot.lane.b32.xlu0 %v36, 80
    %v38 = vpop.permute.xlu0 %37
    %vm39 = vcmask 720512
    %40 = vst.msk [vmem:[#allocation0] sm:$0x1] %vm39, %v38
    %s41 = scalar_lea.vmem %s0, 9
    %v42 = vld [vmem:[%s41] sm:$0x1]
    %43 = vrot.lane.b32.xlu0 %v42, 72
    %v44 = vpop.permute.xlu0 %43
    %vm45 = vcmask 654912
    %46 = vst.msk [vmem:[#allocation0] sm:$0x1] %vm45, %v44
    %s47 = scalar_lea.vmem %s0, 8
    %v48 = vld [vmem:[%s47] sm:$0x1]
    %49 = vrot.lane.b32.xlu0 %v48, 64
    %v50 = vpop.permute.xlu0 %49
    %vm51 = vcmask 589312
    %52 = vst.msk [vmem:[#allocation0] sm:$0x1] %vm51, %v50
    %s53 = scalar_lea.vmem %s0, 7
    %v54 = vld [vmem:[%s53] sm:$0x1]
    %55 = vrot.lane.b32.xlu0 %v54, 56
    %v56 = vpop.permute.xlu0 %55
    %vm57 = vcmask 523712
    %58 = vst.msk [vmem:[#allocation0] sm:$0x1] %vm57, %v56
    %s59 = scalar_lea.vmem %s0, 6
    %v60 = vld [vmem:[%s59] sm:$0x1]
    %61 = vrot.lane.b32.xlu0 %v60, 48
    %v62 = vpop.permute.xlu0 %61
    %vm63 = vcmask 458112
    %64 = vst.msk [vmem:[#allocation0] sm:$0x1] %vm63, %v62
    %s65 = scalar_lea.vmem %s0, 5
    %v66 = vld [vmem:[%s65] sm:$0x1]
    %67 = vrot.lane.b32.xlu0 %v66, 40
    %v68 = vpop.permute.xlu0 %67
    %vm69 = vcmask 392512
    %70 = vst.msk [vmem:[#allocation0] sm:$0x1] %vm69, %v68
    %s71 = scalar_lea.vmem %s0, 4
    %v72 = vld [vmem:[%s71] sm:$0x1]
    %73 = vrot.lane.b32.xlu0 %v72, 32
    %v74 = vpop.permute.xlu0 %73
    %vm75 = vcmask 326912
    %76 = vst.msk [vmem:[#allocation0] sm:$0x1] %vm75, %v74
    %s77 = scalar_lea.vmem %s0, 3
    %v78 = vld [vmem:[%s77] sm:$0x1]
    %79 = vrot.lane.b32.xlu0 %v78, 24
    %v80 = vpop.permute.xlu0 %79
    %vm81 = vcmask 261312
    %82 = vst.msk [vmem:[#allocation0] sm:$0x1] %vm81, %v80
    %s83 = scalar_lea.vmem %s0, 2
    %v84 = vld [vmem:[%s83] sm:$0x1]
    %85 = vrot.lane.b32.xlu0 %v84, 16
    %v86 = vpop.permute.xlu0 %85
    %vm87 = vcmask 195712
    %88 = vst.msk [vmem:[#allocation0] sm:$0x1] %vm87, %v86
    %s89 = scalar_lea.vmem %s0, 1
    %v90 = vld [vmem:[%s89] sm:$0x1]
    %91 = vrot.lane.b32.xlu0 %v90, 8
    %v92 = vpop.permute.xlu0 %91
    %vm93 = vcmask 130112
    %94 = vst.msk [vmem:[#allocation0] sm:$0x1] %vm93, %v92
    %s96 = ssub.s32 2, 1
    %v97 = vld [vmem:[#allocation0] sm:%s96]
    %s99 = ssub.s32 2, 1
    %100 = vst [vmem:[%s1] sm:%s99] %v97

// kernel: tile.39
$region0: #{tile.39}
  %s0 = inlined_call_operand.vmem [shape: f32[16,8], index: 0, kind: input, shape index: {}]
  %s1 = inlined_call_operand.vmem [shape: f32[1,128], index: 1, kind: output, shape index: {}]
  $region1: #{tile.39} parent=0
    #allocation0 [shape = 'u8[4096]{0}', space=vmem, size = 0x1000, scoped, tag = 'scoped mem for output reshape']
    %v2 = vld [vmem:[%s0] sm:$0x1]
    %vm3 = vcmask 64512
    %4 = vst.msk [vmem:[#allocation0] sm:$0x1] %vm3, %v2
    %s5 = scalar_lea.vmem %s0, 15
    %v6 = vld [vmem:[%s5] sm:$0x1]
    %7 = vrot.lane.b32.xlu0 %v6, 120
    %v8 = vpop.permute.xlu0 %7
    %vm9 = vcmask 1048512
    %10 = vst.msk [vmem:[#allocation0] sm:$0x1] %vm9, %v8
    %s11 = scalar_lea.vmem %s0, 14
    %v12 = vld [vmem:[%s11] sm:$0x1]
    %13 = vrot.lane.b32.xlu0 %v12, 112
    %v14 = vpop.permute.xlu0 %13
    %vm15 = vcmask 982912
    %16 = vst.msk [vmem:[#allocation0] sm:$0x1] %vm15, %v14
    %s17 = scalar_lea.vmem %s0, 13
    %v18 = vld [vmem:[%s17] sm:$0x1]
    %19 = vrot.lane.b32.xlu0 %v18, 104
    %v20 = vpop.permute.xlu0 %19
    %vm21 = vcmask 917312
    %22 = vst.msk [vmem:[#allocation0] sm:$0x1] %vm21, %v20
    %s23 = scalar_lea.vmem %s0, 12
    %v24 = vld [vmem:[%s23] sm:$0x1]
    %25 = vrot.lane.b32.xlu0 %v24, 96
    %v26 = vpop.permute.xlu0 %25
    %vm27 = vcmask 851712
    %28 = vst.msk [vmem:[#allocation0] sm:$0x1] %vm27, %v26
    %s29 = scalar_lea.vmem %s0, 11
    %v30 = vld [vmem:[%s29] sm:$0x1]
    %31 = vrot.lane.b32.xlu0 %v30, 88
    %v32 = vpop.permute.xlu0 %31
    %vm33 = vcmask 786112
    %34 = vst.msk [vmem:[#allocation0] sm:$0x1] %vm33, %v32
    %s35 = scalar_lea.vmem %s0, 10
    %v36 = vld [vmem:[%s35] sm:$0x1]
    %37 = vrot.lane.b32.xlu0 %v36, 80
    %v38 = vpop.permute.xlu0 %37
    %vm39 = vcmask 720512
    %40 = vst.msk [vmem:[#allocation0] sm:$0x1] %vm39, %v38
    %s41 = scalar_lea.vmem %s0, 9
    %v42 = vld [vmem:[%s41] sm:$0x1]
    %43 = vrot.lane.b32.xlu0 %v42, 72
    %v44 = vpop.permute.xlu0 %43
    %vm45 = vcmask 654912
    %46 = vst.msk [vmem:[#allocation0] sm:$0x1] %vm45, %v44
    %s47 = scalar_lea.vmem %s0, 8
    %v48 = vld [vmem:[%s47] sm:$0x1]
    %49 = vrot.lane.b32.xlu0 %v48, 64
    %v50 = vpop.permute.xlu0 %49
    %vm51 = vcmask 589312
    %52 = vst.msk [vmem:[#allocation0] sm:$0x1] %vm51, %v50
    %s53 = scalar_lea.vmem %s0, 7
    %v54 = vld [vmem:[%s53] sm:$0x1]
    %55 = vrot.lane.b32.xlu0 %v54, 56
    %v56 = vpop.permute.xlu0 %55
    %vm57 = vcmask 523712
    %58 = vst.msk [vmem:[#allocation0] sm:$0x1] %vm57, %v56
    %s59 = scalar_lea.vmem %s0, 6
    %v60 = vld [vmem:[%s59] sm:$0x1]
    %61 = vrot.lane.b32.xlu0 %v60, 48
    %v62 = vpop.permute.xlu0 %61
    %vm63 = vcmask 458112
    %64 = vst.msk [vmem:[#allocation0] sm:$0x1] %vm63, %v62
    %s65 = scalar_lea.vmem %s0, 5
    %v66 = vld [vmem:[%s65] sm:$0x1]
    %67 = vrot.lane.b32.xlu0 %v66, 40
    %v68 = vpop.permute.xlu0 %67
    %vm69 = vcmask 392512
    %70 = vst.msk [vmem:[#allocation0] sm:$0x1] %vm69, %v68
    %s71 = scalar_lea.vmem %s0, 4
    %v72 = vld [vmem:[%s71] sm:$0x1]
    %73 = vrot.lane.b32.xlu0 %v72, 32
    %v74 = vpop.permute.xlu0 %73
    %vm75 = vcmask 326912
    %76 = vst.msk [vmem:[#allocation0] sm:$0x1] %vm75, %v74
    %s77 = scalar_lea.vmem %s0, 3
    %v78 = vld [vmem:[%s77] sm:$0x1]
    %79 = vrot.lane.b32.xlu0 %v78, 24
    %v80 = vpop.permute.xlu0 %79
    %vm81 = vcmask 261312
    %82 = vst.msk [vmem:[#allocation0] sm:$0x1] %vm81, %v80
    %s83 = scalar_lea.vmem %s0, 2
    %v84 = vld [vmem:[%s83] sm:$0x1]
    %85 = vrot.lane.b32.xlu0 %v84, 16
    %v86 = vpop.permute.xlu0 %85
    %vm87 = vcmask 195712
    %88 = vst.msk [vmem:[#allocation0] sm:$0x1] %vm87, %v86
    %s89 = scalar_lea.vmem %s0, 1
    %v90 = vld [vmem:[%s89] sm:$0x1]
    %91 = vrot.lane.b32.xlu0 %v90, 8
    %v92 = vpop.permute.xlu0 %91
    %vm93 = vcmask 130112
    %94 = vst.msk [vmem:[#allocation0] sm:$0x1] %vm93, %v92
    %s96 = ssub.s32 2, 1
    %v97 = vld [vmem:[#allocation0] sm:%s96]
    %s99 = ssub.s32 2, 1
    %100 = vst [vmem:[%s1] sm:%s99] %v97

// kernel: acblock_pallas.1
$region0: #{acblock_pallas.1}
  #allocation0 [shape = 'u32[]', space=smem, size = 0x4, offset = 0x4, fixed_abs, tag = 'smem constant byte address 0x4 - core index']
  #allocation1 [shape = 'u32[72,128]{1,0:T(1,128)}', space=vmem, size = 0x9000, scoped, tag = 'internal scratch']
  %s0 = inlined_call_operand.vmem [shape: bf16[2,24,256], index: 0, kind: input, shape index: {}]
  %s1 = inlined_call_operand.vmem [shape: f32[2,16,128], index: 1, kind: input, shape index: {}, may-alias: {1,10}]
  %s2 = inlined_call_operand.vmem [shape: bf16[1,256,128], index: 2, kind: input, shape index: {}]
  %s3 = inlined_call_operand.vmem [shape: bf16[9,256,128], index: 3, kind: input, shape index: {}]
  %s4 = inlined_call_operand.vmem [shape: bf16[3,256,128], index: 4, kind: input, shape index: {}]
  %s5 = inlined_call_operand.vmem [shape: f32[3,1,128], index: 5, kind: input, shape index: {}]
  %s6 = inlined_call_operand.vmem [shape: f32[3,128,24], index: 6, kind: input, shape index: {}]
  %s7 = inlined_call_operand.vmem [shape: f32[3,24,128], index: 7, kind: input, shape index: {}]
  %s8 = inlined_call_operand.vmem [shape: bf16[3,128,128], index: 8, kind: input, shape index: {}]
  %s9 = inlined_call_operand.vmem [shape: f32[1,128], index: 9, kind: input, shape index: {}]
  %s10 = inlined_call_operand.vmem [shape: f32[2,16,128], index: 10, kind: output, shape index: {}, may-alias: {1,10}]
  %s11 = sld [smem:[#allocation0]]
  $region73: #{acblock_pallas.1} parent=0
    _
  %s13 = ssub.s32 1, %s11
  %s14 = scalar_select 0, %s13, %s11
  loop: start=0, step=1, limit=4
  $region2: #{acblock_pallas.1} parent=0 // loop_pre_header
    _
  $region3: #{acblock_pallas.1} parent=0 // loop_header
    %s16 = sphi 0, %s20
    %p17 = scmp.ge.s32.totalorder %s16, 4
    %s26 = sphi 0, %s28
    %s29 = sphi 0, %s26
    %s30 = sphi 0, %s29
    %s46 = sphi 0, %s30
    %s52 = sphi 0, %s54
    %s55 = sphi 0, %s52
    %s56 = sphi 0, %s55
    %s72 = sphi 0, %s56
    %s76 = sphi 0, %s76
    %s78 = sphi 0, %s76
    %s79 = sphi 0, %s78
    %s93 = sphi 0, %s79
    %s97 = sphi 0, %s97
    %s99 = sphi 0, %s97
    %s100 = sphi 0, %s99
    %s114 = sphi 0, %s100
    %s118 = sphi 0, %s118
    %s120 = sphi 0, %s118
    %s121 = sphi 0, %s120
    %s135 = sphi 0, %s121
    %s139 = sphi 0, %s139
    %s141 = sphi 0, %s139
    %s142 = sphi 0, %s141
    %s156 = sphi 0, %s142
    %s160 = sphi 0, %s160
    %s162 = sphi 0, %s160
    %s163 = sphi 0, %s162
    %s177 = sphi 0, %s163
    %s181 = sphi 0, %s181
    %s183 = sphi 0, %s181
    %s184 = sphi 0, %s183
    %s198 = sphi 0, %s184
    %s202 = sphi 0, %s202
    %s204 = sphi 0, %s202
    %s205 = sphi 0, %s204
    %s219 = sphi 0, %s205
    %s223 = sphi 0, %s223
    %s225 = sphi 0, %s223
    %s226 = sphi 0, %s225
    %s240 = sphi 0, %s226
    %s246 = sphi 0, %s248
    %s249 = sphi 0, %s246
    %s250 = sphi 0, %s249
    %s266 = sphi 0, %s250
  $region4: #{acblock_pallas.1} parent=0 // loop_header_branch
    %19 = sbr.rel (%p17) target = $region8
  $region5: #{acblock_pallas.1} parent=0 // loop_body
    %s21 = ssub.s32 %s16, 1
    %s22 = ssub.s32 %s16, 2
    %s23 = sadd.s32 %s16, 1
    %s24 = ssub.s32 %s16, %s23
    %p25 = scmp.eq.s32.totalorder %s24, 0
    %s27 = sadd.s32 %s26, 1
    %s28 = scalar_select %p25, %s26, %s27
    %p31 = pneg %p25
    %p32 = scmp.eq.s32.totalorder %s16, 1
    %p33 = por %p31, %p32
    %p34 = scmp.ne.s32.totalorder %s26, %s29
    %p35 = scmp.eq.s32.totalorder %s16, 0
    %p36 = por %p34, %p35
    %p37 = scmp.ne.s32.totalorder %s26, %s29
    %p38 = scmp.eq.s32.totalorder %s21, 1
    %p39 = por %p37, %p38
    %p40 = scmp.ne.s32.totalorder %s29, %s30
    %p41 = scmp.eq.s32.totalorder %s21, 0
    %p42 = por %p40, %p41
    %p43 = scmp.ne.s32.totalorder %s29, %s30
    %p44 = scmp.eq.s32.totalorder %s22, 1
    %p45 = por %p43, %p44
    %p47 = scmp.ne.s32.totalorder %s30, %s46
    %p48 = scmp.eq.s32.totalorder %s22, 0
    %p49 = por %p47, %p48
    %s50 = ssub.s32 %s16, %s23
    %p51 = scmp.eq.s32.totalorder %s50, 0
    %s53 = sadd.s32 %s52, 1
    %s54 = scalar_select %p51, %s52, %s53
    %p57 = pneg %p51
    %p58 = scmp.eq.s32.totalorder %s16, 1
    %p59 = por %p57, %p58
    %p60 = scmp.ne.s32.totalorder %s52, %s55
    %p61 = scmp.eq.s32.totalorder %s16, 0
    %p62 = por %p60, %p61
    %p63 = scmp.ne.s32.totalorder %s52, %s55
    %p64 = scmp.eq.s32.totalorder %s21, 1
    %p65 = por %p63, %p64
    %p66 = scmp.ne.s32.totalorder %s55, %s56
    %p67 = scmp.eq.s32.totalorder %s21, 0
    %p68 = por %p66, %p67
    %p69 = scmp.ne.s32.totalorder %s55, %s56
    %p70 = scmp.eq.s32.totalorder %s22, 1
    %p71 = por %p69, %p70
    %p73 = scmp.ne.s32.totalorder %s56, %s72
    %p74 = scmp.eq.s32.totalorder %s22, 0
    %p75 = por %p73, %p74
    %s77 = sadd.s32 %s76, 1
    %p80 = scmp.eq.s32.totalorder %s16, 1
    %p81 = scmp.ne.s32.totalorder %s76, %s78
    %p82 = scmp.eq.s32.totalorder %s16, 0
    %p83 = por %p81, %p82
    %p84 = scmp.ne.s32.totalorder %s76, %s78
    %p85 = scmp.eq.s32.totalorder %s21, 1
    %p86 = por %p84, %p85
    %p87 = scmp.ne.s32.totalorder %s78, %s79
    %p88 = scmp.eq.s32.totalorder %s21, 0
    %p89 = por %p87, %p88
    %p90 = scmp.ne.s32.totalorder %s78, %s79
    %p91 = scmp.eq.s32.totalorder %s22, 1
    %p92 = por %p90, %p91
    %p94 = scmp.ne.s32.totalorder %s79, %s93
    %p95 = scmp.eq.s32.totalorder %s22, 0
    %p96 = por %p94, %p95
    %s98 = sadd.s32 %s97, 1
    %p101 = scmp.eq.s32.totalorder %s16, 1
    %p102 = scmp.ne.s32.totalorder %s97, %s99
    %p103 = scmp.eq.s32.totalorder %s16, 0
    %p104 = por %p102, %p103
    %p105 = scmp.ne.s32.totalorder %s97, %s99
    %p106 = scmp.eq.s32.totalorder %s21, 1
    %p107 = por %p105, %p106
    %p108 = scmp.ne.s32.totalorder %s99, %s100
    %p109 = scmp.eq.s32.totalorder %s21, 0
    %p110 = por %p108, %p109
    %p111 = scmp.ne.s32.totalorder %s99, %s100
    %p112 = scmp.eq.s32.totalorder %s22, 1
    %p113 = por %p111, %p112
    %p115 = scmp.ne.s32.totalorder %s100, %s114
    %p116 = scmp.eq.s32.totalorder %s22, 0
    %p117 = por %p115, %p116
    %s119 = sadd.s32 %s118, 1
    %p122 = scmp.eq.s32.totalorder %s16, 1
    %p123 = scmp.ne.s32.totalorder %s118, %s120
    %p124 = scmp.eq.s32.totalorder %s16, 0
    %p125 = por %p123, %p124
    %p126 = scmp.ne.s32.totalorder %s118, %s120
    %p127 = scmp.eq.s32.totalorder %s21, 1
    %p128 = por %p126, %p127
    %p129 = scmp.ne.s32.totalorder %s120, %s121
    %p130 = scmp.eq.s32.totalorder %s21, 0
    %p131 = por %p129, %p130
    %p132 = scmp.ne.s32.totalorder %s120, %s121
    %p133 = scmp.eq.s32.totalorder %s22, 1
    %p134 = por %p132, %p133
    %p136 = scmp.ne.s32.totalorder %s121, %s135
    %p137 = scmp.eq.s32.totalorder %s22, 0
    %p138 = por %p136, %p137
    %s140 = sadd.s32 %s139, 1
    %p143 = scmp.eq.s32.totalorder %s16, 1
    %p144 = scmp.ne.s32.totalorder %s139, %s141
    %p145 = scmp.eq.s32.totalorder %s16, 0
    %p146 = por %p144, %p145
    %p147 = scmp.ne.s32.totalorder %s139, %s141
    %p148 = scmp.eq.s32.totalorder %s21, 1
    %p149 = por %p147, %p148
    %p150 = scmp.ne.s32.totalorder %s141, %s142
    %p151 = scmp.eq.s32.totalorder %s21, 0
    %p152 = por %p150, %p151
    %p153 = scmp.ne.s32.totalorder %s141, %s142
    %p154 = scmp.eq.s32.totalorder %s22, 1
    %p155 = por %p153, %p154
    %p157 = scmp.ne.s32.totalorder %s142, %s156
    %p158 = scmp.eq.s32.totalorder %s22, 0
    %p159 = por %p157, %p158
    %s161 = sadd.s32 %s160, 1
    %p164 = scmp.eq.s32.totalorder %s16, 1
    %p165 = scmp.ne.s32.totalorder %s160, %s162
    %p166 = scmp.eq.s32.totalorder %s16, 0
    %p167 = por %p165, %p166
    %p168 = scmp.ne.s32.totalorder %s160, %s162
    %p169 = scmp.eq.s32.totalorder %s21, 1
    %p170 = por %p168, %p169
    %p171 = scmp.ne.s32.totalorder %s162, %s163
    %p172 = scmp.eq.s32.totalorder %s21, 0
    %p173 = por %p171, %p172
    %p174 = scmp.ne.s32.totalorder %s162, %s163
    %p175 = scmp.eq.s32.totalorder %s22, 1
    %p176 = por %p174, %p175
    %p178 = scmp.ne.s32.totalorder %s163, %s177
    %p179 = scmp.eq.s32.totalorder %s22, 0
    %p180 = por %p178, %p179
    %s182 = sadd.s32 %s181, 1
    %p185 = scmp.eq.s32.totalorder %s16, 1
    %p186 = scmp.ne.s32.totalorder %s181, %s183
    %p187 = scmp.eq.s32.totalorder %s16, 0
    %p188 = por %p186, %p187
    %p189 = scmp.ne.s32.totalorder %s181, %s183
    %p190 = scmp.eq.s32.totalorder %s21, 1
    %p191 = por %p189, %p190
    %p192 = scmp.ne.s32.totalorder %s183, %s184
    %p193 = scmp.eq.s32.totalorder %s21, 0
    %p194 = por %p192, %p193
    %p195 = scmp.ne.s32.totalorder %s183, %s184
    %p196 = scmp.eq.s32.totalorder %s22, 1
    %p197 = por %p195, %p196
    %p199 = scmp.ne.s32.totalorder %s184, %s198
    %p200 = scmp.eq.s32.totalorder %s22, 0
    %p201 = por %p199, %p200
    %s203 = sadd.s32 %s202, 1
    %p206 = scmp.eq.s32.totalorder %s16, 1
    %p207 = scmp.ne.s32.totalorder %s202, %s204
    %p208 = scmp.eq.s32.totalorder %s16, 0
    %p209 = por %p207, %p208
    %p210 = scmp.ne.s32.totalorder %s202, %s204
    %p211 = scmp.eq.s32.totalorder %s21, 1
    %p212 = por %p210, %p211
    %p213 = scmp.ne.s32.totalorder %s204, %s205
    %p214 = scmp.eq.s32.totalorder %s21, 0
    %p215 = por %p213, %p214
    %p216 = scmp.ne.s32.totalorder %s204, %s205
    %p217 = scmp.eq.s32.totalorder %s22, 1
    %p218 = por %p216, %p217
    %p220 = scmp.ne.s32.totalorder %s205, %s219
    %p221 = scmp.eq.s32.totalorder %s22, 0
    %p222 = por %p220, %p221
    %s224 = sadd.s32 %s223, 1
    %p227 = scmp.eq.s32.totalorder %s16, 1
    %p228 = scmp.ne.s32.totalorder %s223, %s225
    %p229 = scmp.eq.s32.totalorder %s16, 0
    %p230 = por %p228, %p229
    %p231 = scmp.ne.s32.totalorder %s223, %s225
    %p232 = scmp.eq.s32.totalorder %s21, 1
    %p233 = por %p231, %p232
    %p234 = scmp.ne.s32.totalorder %s225, %s226
    %p235 = scmp.eq.s32.totalorder %s21, 0
    %p236 = por %p234, %p235
    %p237 = scmp.ne.s32.totalorder %s225, %s226
    %p238 = scmp.eq.s32.totalorder %s22, 1
    %p239 = por %p237, %p238
    %p241 = scmp.ne.s32.totalorder %s226, %s240
    %p242 = scmp.eq.s32.totalorder %s22, 0
    %p243 = por %p241, %p242
    %s244 = ssub.s32 %s16, %s23
    %p245 = scmp.eq.s32.totalorder %s244, 0
    %s247 = sadd.s32 %s246, 1
    %s248 = scalar_select %p245, %s246, %s247
    %p251 = pneg %p245
    %p252 = scmp.eq.s32.totalorder %s16, 1
    %p253 = por %p251, %p252
    %p254 = scmp.ne.s32.totalorder %s246, %s249
    %p255 = scmp.eq.s32.totalorder %s16, 0
    %p256 = por %p254, %p255
    %p257 = scmp.ne.s32.totalorder %s246, %s249
    %p258 = scmp.eq.s32.totalorder %s21, 1
    %p259 = por %p257, %p258
    %p260 = scmp.ne.s32.totalorder %s249, %s250
    %p261 = scmp.eq.s32.totalorder %s21, 0
    %p262 = por %p260, %p261
    %p263 = scmp.ne.s32.totalorder %s249, %s250
    %p264 = scmp.eq.s32.totalorder %s22, 1
    %p265 = por %p263, %p264
    %p267 = scmp.ne.s32.totalorder %s250, %s266
    %p268 = scmp.eq.s32.totalorder %s22, 0
    %p269 = por %p267, %p268
    %p270 = scmp.le.s32.totalorder 1, %s16
    %p271 = scmp.lt.s32.totalorder %s16, 3
    %p272 = pnand %p270, %p271
    %p273 = pneg %p272
    // Predicated region
    $region9: #{acblock_pallas.1} parent=5 // pred_check
      _
    $region10: #{acblock_pallas.1} parent=5 // pred_check_branch
      %275 = sbr.rel (%p272) target = $region12
    $region11: #{acblock_pallas.1} parent=5 // pred_region
      %s276 = ssub.s32 %s16, 1
      // Predicated region
      $region13: #{acblock_pallas.1} parent=11 // pred_check
        %p277 = pneg %p89
      $region14: #{acblock_pallas.1} parent=11 // pred_check_branch
        %279 = sbr.rel (%p277) target = $region16
      $region15: #{acblock_pallas.1} parent=11 // pred_region
        _
      $region16: #{acblock_pallas.1} parent=11 // pred_fallthru
        _
      // Predicated region
      $region17: #{acblock_pallas.1} parent=11 // pred_check
        %p280 = pneg %p110
      $region18: #{acblock_pallas.1} parent=11 // pred_check_branch
        %282 = sbr.rel (%p280) target = $region20
      $region19: #{acblock_pallas.1} parent=11 // pred_region
        _
      $region20: #{acblock_pallas.1} parent=11 // pred_fallthru
        _
      // Predicated region
      $region21: #{acblock_pallas.1} parent=11 // pred_check
        %p283 = pneg %p131
      $region22: #{acblock_pallas.1} parent=11 // pred_check_branch
        %285 = sbr.rel (%p283) target = $region24
      $region23: #{acblock_pallas.1} parent=11 // pred_region
        _
      $region24: #{acblock_pallas.1} parent=11 // pred_fallthru
        _
      // Predicated region
      $region25: #{acblock_pallas.1} parent=11 // pred_check
        %p286 = pneg %p152
      $region26: #{acblock_pallas.1} parent=11 // pred_check_branch
        %288 = sbr.rel (%p286) target = $region28
      $region27: #{acblock_pallas.1} parent=11 // pred_region
        _
      $region28: #{acblock_pallas.1} parent=11 // pred_fallthru
        _
      // Predicated region
      $region29: #{acblock_pallas.1} parent=11 // pred_check
        %p289 = pneg %p173
      $region30: #{acblock_pallas.1} parent=11 // pred_check_branch
        %291 = sbr.rel (%p289) target = $region32
      $region31: #{acblock_pallas.1} parent=11 // pred_region
        _
      $region32: #{acblock_pallas.1} parent=11 // pred_fallthru
        _
      // Predicated region
      $region33: #{acblock_pallas.1} parent=11 // pred_check
        %p292 = pneg %p194
      $region34: #{acblock_pallas.1} parent=11 // pred_check_branch
        %294 = sbr.rel (%p292) target = $region36
      $region35: #{acblock_pallas.1} parent=11 // pred_region
        _
      $region36: #{acblock_pallas.1} parent=11 // pred_fallthru
        _
      // Predicated region
      $region37: #{acblock_pallas.1} parent=11 // pred_check
        %p295 = pneg %p215
      $region38: #{acblock_pallas.1} parent=11 // pred_check_branch
        %297 = sbr.rel (%p295) target = $region40
      $region39: #{acblock_pallas.1} parent=11 // pred_region
        _
      $region40: #{acblock_pallas.1} parent=11 // pred_fallthru
        _
      // Predicated region
      $region41: #{acblock_pallas.1} parent=11 // pred_check
        %p298 = pneg %p236
      $region42: #{acblock_pallas.1} parent=11 // pred_check_branch
        %300 = sbr.rel (%p298) target = $region44
      $region43: #{acblock_pallas.1} parent=11 // pred_region
        _
      $region44: #{acblock_pallas.1} parent=11 // pred_fallthru
        _
    $region12: #{acblock_pallas.1} parent=5 // pred_fallthru
      _
    %p301 = scmp.lt.s32.totalorder %s16, 2
    // Predicated region
    $region45: #{acblock_pallas.1} parent=5 // pred_check
      %p302 = pneg %p301
    $region46: #{acblock_pallas.1} parent=5 // pred_check_branch
      %304 = sbr.rel (%p302) target = $region48
    $region47: #{acblock_pallas.1} parent=5 // pred_region
      // Predicated region
      $region49: #{acblock_pallas.1} parent=47 // pred_check
        %p305 = pneg %p36
      $region50: #{acblock_pallas.1} parent=47 // pred_check_branch
        %307 = sbr.rel (%p305) target = $region52
      $region51: #{acblock_pallas.1} parent=47 // pred_region
        %p308 = scmp.lt.s32.totalorder %s16, 1
        %s309 = scalar_select %p308, %s16, 1
        %s310 = smul.addr %s309, 6
        %s311 = smul.addr %s310, 4
        %s312 = scalar_lea.vmem %s0, %s311
      $region52: #{acblock_pallas.1} parent=47 // pred_fallthru
        _
      // Predicated region
      $region53: #{acblock_pallas.1} parent=47 // pred_check
        %p313 = pneg %p62
      $region54: #{acblock_pallas.1} parent=47 // pred_check_branch
        %315 = sbr.rel (%p313) target = $region56
      $region55: #{acblock_pallas.1} parent=47 // pred_region
        %p316 = scmp.lt.s32.totalorder %s16, 1
        %s317 = scalar_select %p316, %s16, 1
        %s318 = smul.addr %s317, 2
        %s319 = smul.addr %s318, 8
        %s320 = scalar_lea.vmem %s1, %s319
      $region56: #{acblock_pallas.1} parent=47 // pred_fallthru
        _
    $region48: #{acblock_pallas.1} parent=5 // pred_fallthru
      _
    %p321 = scmp.le.s32.totalorder 1, %s16
    %p322 = scmp.lt.s32.totalorder %s16, 3
    %p323 = pnand %p321, %p322
    %p324 = pneg %p323
    // Predicated region
    $region57: #{acblock_pallas.1} parent=5 // pred_check
      _
    $region58: #{acblock_pallas.1} parent=5 // pred_check_branch
      %326 = sbr.rel (%p323) target = $region60
    $region59: #{acblock_pallas.1} parent=5 // pred_region
      %s327 = ssub.s32 %s16, 1
      %p328 = scmp.lt.s32.totalorder %s21, 1
      %s329 = scalar_select %p328, %s21, 1
      %s330 = smul.addr %s329, 6
      %s331 = smul.addr %s330, 4
      %s332 = scalar_lea.vmem %s0, %s331
      %p333 = pneg %p42
      %p334 = pneg %p39
      %p335 = scmp.lt.s32.totalorder %s21, 1
      %s336 = scalar_select %p335, %s21, 1
      %s337 = smul.addr %s336, 2
      %s338 = smul.addr %s337, 8
      %s339 = scalar_lea.vmem %s1, %s338
      %p340 = pneg %p68
      %p341 = pneg %p65
      %p342 = pneg %p89
      %p343 = pneg %p86
      %p344 = pneg %p110
      %p345 = pneg %p107
      %p346 = pneg %p131
      %p347 = pneg %p128
      %p348 = pneg %p152
      %p349 = pneg %p149
      %p350 = pneg %p173
      %p351 = pneg %p170
      %p352 = pneg %p194
      %p353 = pneg %p191
      %p354 = pneg %p215
      %p355 = pneg %p212
      %p356 = pneg %p236
      %p357 = pneg %p233
      %p358 = pneg %p262
      %p359 = pneg %p259
      %p360 = scmp.lt.s32.totalorder %s21, 1
      %s361 = scalar_select %p360, %s21, 1
      %s362 = smul.addr %s361, 2
      %s363 = smul.addr %s362, 8
      %s364 = scalar_lea.vmem %s10, %s363
      %p365 = scmp.lt.s32.totalorder %s21, 1
      %s366 = scalar_select %p365, %s21, 1
      %s367 = smul.addr %s366, 6
      %s368 = smul.addr %s367, 4
      %s369 = scalar_lea.vmem %s0, %s368
      %p370 = scmp.lt.s32.totalorder %s21, 1
      %s371 = scalar_select %p370, %s21, 1
      %s372 = smul.addr %s371, 2
      %s373 = smul.addr %s372, 8
      %s374 = scalar_lea.vmem %s1, %s373
      %p375 = scmp.lt.s32.totalorder %s21, 1
      %s376 = scalar_select %p375, %s21, 1
      %s377 = smul.addr %s376, 2
      %s378 = smul.addr %s377, 8
      %s379 = scalar_lea.vmem %s10, %s378
      %v380 = vld [vmem:[%s369] sm:$0xcc]
      %v381 = vld [vmem:[%s369 + $0x8] sm:$0xff]
      %v382 = vld [vmem:[%s369 + $0x10] sm:$0x33]
      %v383 = vld [vmem:[%s2] sm:$0xf]
      %v384 = vld [vmem:[%s2 + $0x4] sm:$0xf]
      %v385 = vld [vmem:[%s2 + $0x8] sm:$0xf]
      %v386 = vld [vmem:[%s2 + $0xc] sm:$0xf]
      %v387 = vld [vmem:[%s2 + $0x10] sm:$0xf]
      %v388 = vld [vmem:[%s2 + $0x14] sm:$0xf]
      %v389 = vld [vmem:[%s2 + $0x18] sm:$0xf]
      %v390 = vld [vmem:[%s2 + $0x1c] sm:$0xf]
      %v391 = vld [vmem:[%s2 + $0x20] sm:$0xf]
      %v392 = vld [vmem:[%s2 + $0x24] sm:$0xf]
      %v393 = vld [vmem:[%s2 + $0x28] sm:$0xf]
      %v394 = vld [vmem:[%s2 + $0x2c] sm:$0xf]
      %v395 = vld [vmem:[%s2 + $0x30] sm:$0xf]
      %v396 = vld [vmem:[%s2 + $0x34] sm:$0xf]
      %v397 = vld [vmem:[%s2 + $0x38] sm:$0xf]
      %v398 = vld [vmem:[%s2 + $0x3c] sm:$0xf]
      %v399 = vld [vmem:[%s2 + $0x40] sm:$0xf]
      %v400 = vld [vmem:[%s2 + $0x44] sm:$0xf]
      %v401 = vld [vmem:[%s2 + $0x48] sm:$0xf]
      %v402 = vld [vmem:[%s2 + $0x4c] sm:$0xf]
      %v403 = vld [vmem:[%s2 + $0x50] sm:$0xf]
      %v404 = vld [vmem:[%s2 + $0x54] sm:$0xf]
      %v405 = vld [vmem:[%s2 + $0x58] sm:$0xf]
      %v406 = vld [vmem:[%s2 + $0x5c] sm:$0xf]
      %v407 = vld [vmem:[%s2 + $0x60] sm:$0xf]
      %v408 = vld [vmem:[%s2 + $0x64] sm:$0xf]
      %v409 = vld [vmem:[%s2 + $0x68] sm:$0xf]
      %v410 = vld [vmem:[%s2 + $0x6c] sm:$0xf]
      %v411 = vld [vmem:[%s2 + $0x70] sm:$0xf]
      %v412 = vld [vmem:[%s2 + $0x74] sm:$0xf]
      %v413 = vld [vmem:[%s2 + $0x78] sm:$0xf]
      %v414 = vld [vmem:[%s2 + $0x7c] sm:$0xf]
      %v415 = vld [vmem:[%s5] sm:$0x1]
      %v417 = vperm.slane %v415, 0
      %v422 = vunpack.c.l.b16 %v380
      %v423 = vunpack.c.h.b16 %v380
      %v424 = vunpack.c.l.b16 %v381
      %v425 = vunpack.c.h.b16 %v381
      %v426 = vunpack.c.l.b16 %v382
      %v427 = vunpack.c.h.b16 %v382
      %v428 = vpack.c.b16 %v424, %v422
      %v429 = vpack.c.b16 %v425, %v423
      %v430 = vpack.c.b16 %v426, %v426
      %v431 = vpack.c.b16 %v427, %v427
      %vm432 = vcmask 1045504
      %v433 = vrot.slane %v428, 2
      %v434 = vrot.slane %v430, 2
      %v435 = vsel %vm432, %v433, %v434
      %v436 = vrot.slane %v429, 2
      %v437 = vrot.slane %v431, 2
      %v438 = vsel %vm432, %v436, %v437
      %v473 = vunpack.c.l.b16 %v383
      %v474 = vunpack.c.l.b16 %v384
      %v475 = vunpack.c.l.b16 %v385
      %v476 = vunpack.c.l.b16 %v386
      %v477 = vunpack.c.l.b16 %v387
      %v478 = vunpack.c.l.b16 %v388
      %v479 = vunpack.c.l.b16 %v389
      %v480 = vunpack.c.l.b16 %v390
      %v481 = vunpack.c.l.b16 %v391
      %v482 = vunpack.c.l.b16 %v392
      %v483 = vunpack.c.l.b16 %v393
      %v484 = vunpack.c.l.b16 %v394
      %v485 = vunpack.c.l.b16 %v395
      %v486 = vunpack.c.l.b16 %v396
      %v487 = vunpack.c.l.b16 %v397
      %v488 = vunpack.c.l.b16 %v398
      %v489 = vunpack.c.l.b16 %v399
      %v490 = vunpack.c.l.b16 %v400
      %v491 = vunpack.c.l.b16 %v401
      %v492 = vunpack.c.l.b16 %v402
      %v493 = vunpack.c.l.b16 %v403
      %v494 = vunpack.c.l.b16 %v404
      %v495 = vunpack.c.l.b16 %v405
      %v496 = vunpack.c.l.b16 %v406
      %v497 = vunpack.c.l.b16 %v407
      %v498 = vunpack.c.l.b16 %v408
      %v499 = vunpack.c.l.b16 %v409
      %v500 = vunpack.c.l.b16 %v410
      %v501 = vunpack.c.l.b16 %v411
      %v502 = vunpack.c.l.b16 %v412
      %v503 = vunpack.c.l.b16 %v413
      %v504 = vunpack.c.l.b16 %v414
      %v505 = vpack.c.b16 %v474, %v473
      %v506 = vpack.c.b16 %v476, %v475
      %v507 = vpack.c.b16 %v478, %v477
      %v508 = vpack.c.b16 %v480, %v479
      %v509 = vpack.c.b16 %v482, %v481
      %v510 = vpack.c.b16 %v484, %v483
      %v511 = vpack.c.b16 %v486, %v485
      %v512 = vpack.c.b16 %v488, %v487
      %v513 = vpack.c.b16 %v490, %v489
      %v514 = vpack.c.b16 %v492, %v491
      %v515 = vpack.c.b16 %v494, %v493
      %v516 = vpack.c.b16 %v496, %v495
      %v517 = vpack.c.b16 %v498, %v497
      %v518 = vpack.c.b16 %v500, %v499
      %v519 = vpack.c.b16 %v502, %v501
      %v520 = vpack.c.b16 %v504, %v503
      %537 = vmatpush.bf16.msra.mxu0 %v512
      %538 = vmatpush.bf16.msra.mxu0 %v511
      %539 = vmatpush.bf16.msra.mxu0 %v510
      %540 = vmatpush.bf16.msra.mxu0 %v509
      %541 = vmatpush.bf16.msra.mxu0 %v508
      %542 = vmatpush.bf16.msra.mxu0 %v507
      %543 = vmatpush.bf16.msra.mxu0 %v506
      %544 = vmatpush.bf16.msra.mxu0 %v505
      %545 = vmatmul.bf16.gmra.mxu0 %v435
      %v546 = vpop.f32.mrf.mxu0
      %v547 = vadd.f32 %v417, %v546
      %v548 = vpop.f32.mrf.mxu0
      %v549 = vadd.f32 %v417, %v548
      %550 = vdwg.mxu0
      %551 = vmatpush.bf16.msra.mxu0 %v520
      %552 = vmatpush.bf16.msra.mxu0 %v519
      %553 = vmatpush.bf16.msra.mxu0 %v518
      %554 = vmatpush.bf16.msra.mxu0 %v517
      %555 = vmatpush.bf16.msra.mxu0 %v516
      %556 = vmatpush.bf16.msra.mxu0 %v515
      %557 = vmatpush.bf16.msra.mxu0 %v514
      %558 = vmatpush.bf16.msra.mxu0 %v513
      %559 = vmatmul.bf16.gmra.mxu0 %v438
      %v560 = vpop.f32.mrf.mxu0
      %v561 = vadd.f32 %v547, %v560
      %v562 = vpop.f32.mrf.mxu0
      %v563 = vadd.f32 %v549, %v562
      %564 = vdwg.mxu0
      %v565 = vld [vmem:[%s369] sm:$0xff]
      %v566 = vld [vmem:[%s369 + $0x8] sm:$0xff]
      %v567 = vld [vmem:[%s3] sm:$0xf]
      %v568 = vld [vmem:[%s3 + $0x4] sm:$0xf]
      %v569 = vld [vmem:[%s3 + $0x8] sm:$0xf]
      %v570 = vld [vmem:[%s3 + $0xc] sm:$0xf]
      %v571 = vld [vmem:[%s3 + $0x10] sm:$0xf]
      %v572 = vld [vmem:[%s3 + $0x14] sm:$0xf]
      %v573 = vld [vmem:[%s3 + $0x18] sm:$0xf]
      %v574 = vld [vmem:[%s3 + $0x1c] sm:$0xf]
      %v575 = vld [vmem:[%s3 + $0x20] sm:$0xf]
      %v576 = vld [vmem:[%s3 + $0x24] sm:$0xf]
      %v577 = vld [vmem:[%s3 + $0x28] sm:$0xf]
      %v578 = vld [vmem:[%s3 + $0x2c] sm:$0xf]
      %v579 = vld [vmem:[%s3 + $0x30] sm:$0xf]
      %v580 = vld [vmem:[%s3 + $0x34] sm:$0xf]
      %v581 = vld [vmem:[%s3 + $0x38] sm:$0xf]
      %v582 = vld [vmem:[%s3 + $0x3c] sm:$0xf]
      %v583 = vld [vmem:[%s3 + $0x40] sm:$0xf]
      %v584 = vld [vmem:[%s3 + $0x44] sm:$0xf]
      %v585 = vld [vmem:[%s3 + $0x48] sm:$0xf]
      %v586 = vld [vmem:[%s3 + $0x4c] sm:$0xf]
      %v587 = vld [vmem:[%s3 + $0x50] sm:$0xf]
      %v588 = vld [vmem:[%s3 + $0x54] sm:$0xf]
      %v589 = vld [vmem:[%s3 + $0x58] sm:$0xf]
      %v590 = vld [vmem:[%s3 + $0x5c] sm:$0xf]
      %v591 = vld [vmem:[%s3 + $0x60] sm:$0xf]
      %v592 = vld [vmem:[%s3 + $0x64] sm:$0xf]
      %v593 = vld [vmem:[%s3 + $0x68] sm:$0xf]
      %v594 = vld [vmem:[%s3 + $0x6c] sm:$0xf]
      %v595 = vld [vmem:[%s3 + $0x70] sm:$0xf]
      %v596 = vld [vmem:[%s3 + $0x74] sm:$0xf]
      %v597 = vld [vmem:[%s3 + $0x78] sm:$0xf]
      %v598 = vld [vmem:[%s3 + $0x7c] sm:$0xf]
      %v599 = vld [vmem:[%s369] sm:$0xff]
      %v600 = vld [vmem:[%s369 + $0x10] sm:$0x11]
      %s601 = scalar_lea.vmem %s3, 128
      %v602 = vld [vmem:[%s601] sm:$0xf]
      %v603 = vld [vmem:[%s601 + $0x4] sm:$0xf]
      %v604 = vld [vmem:[%s601 + $0x8] sm:$0xf]
      %v605 = vld [vmem:[%s601 + $0xc] sm:$0xf]
      %v606 = vld [vmem:[%s601 + $0x10] sm:$0xf]
      %v607 = vld [vmem:[%s601 + $0x14] sm:$0xf]
      %v608 = vld [vmem:[%s601 + $0x18] sm:$0xf]
      %v609 = vld [vmem:[%s601 + $0x1c] sm:$0xf]
      %v610 = vld [vmem:[%s601 + $0x20] sm:$0xf]
      %v611 = vld [vmem:[%s601 + $0x24] sm:$0xf]
      %v612 = vld [vmem:[%s601 + $0x28] sm:$0xf]
      %v613 = vld [vmem:[%s601 + $0x2c] sm:$0xf]
      %v614 = vld [vmem:[%s601 + $0x30] sm:$0xf]
      %v615 = vld [vmem:[%s601 + $0x34] sm:$0xf]
      %v616 = vld [vmem:[%s601 + $0x38] sm:$0xf]
      %v617 = vld [vmem:[%s601 + $0x3c] sm:$0xf]
      %v618 = vld [vmem:[%s601 + $0x40] sm:$0xf]
      %v619 = vld [vmem:[%s601 + $0x44] sm:$0xf]
      %v620 = vld [vmem:[%s601 + $0x48] sm:$0xf]
      %v621 = vld [vmem:[%s601 + $0x4c] sm:$0xf]
      %v622 = vld [vmem:[%s601 + $0x50] sm:$0xf]
      %v623 = vld [vmem:[%s601 + $0x54] sm:$0xf]
      %v624 = vld [vmem:[%s601 + $0x58] sm:$0xf]
      %v625 = vld [vmem:[%s601 + $0x5c] sm:$0xf]
      %v626 = vld [vmem:[%s601 + $0x60] sm:$0xf]
      %v627 = vld [vmem:[%s601 + $0x64] sm:$0xf]
      %v628 = vld [vmem:[%s601 + $0x68] sm:$0xf]
      %v629 = vld [vmem:[%s601 + $0x6c] sm:$0xf]
      %v630 = vld [vmem:[%s601 + $0x70] sm:$0xf]
      %v631 = vld [vmem:[%s601 + $0x74] sm:$0xf]
      %v632 = vld [vmem:[%s601 + $0x78] sm:$0xf]
      %v633 = vld [vmem:[%s601 + $0x7c] sm:$0xf]
      %v636 = vunpack.c.l.b16 %v599
      %v637 = vunpack.c.h.b16 %v599
      %v638 = vunpack.c.l.b16 %v600
      %v639 = vunpack.c.h.b16 %v600
      %v640 = vpack.c.b16 %v424, %v636
      %v641 = vpack.c.b16 %v425, %v637
      %v642 = vpack.c.b16 %v638, %v638
      %v643 = vpack.c.b16 %v639, %v639
      %vm644 = vsmask.f32 7424
      %v646 = vshrl.u32 %v640, 16
      %v648 = vshll.u32 %v640, 16
      %v650 = vrot.slane %v648, 1
      %v651 = vor.u32 %v646, %v650
      %v653 = vshll.u32 %v642, 16
      %v655 = vrot.slane %v653, 1
      %v656 = vsel %vm644, %v651, %v655
      %v658 = vshrl.u32 %v641, 16
      %v660 = vshll.u32 %v641, 16
      %v662 = vrot.slane %v660, 1
      %v663 = vor.u32 %v658, %v662
      %v665 = vshll.u32 %v643, 16
      %v667 = vrot.slane %v665, 1
      %v668 = vsel %vm644, %v663, %v667
      %v703 = vunpack.c.l.b16 %v602
      %v704 = vunpack.c.l.b16 %v603
      %v705 = vunpack.c.l.b16 %v604
      %v706 = vunpack.c.l.b16 %v605
      %v707 = vunpack.c.l.b16 %v606
      %v708 = vunpack.c.l.b16 %v607
      %v709 = vunpack.c.l.b16 %v608
      %v710 = vunpack.c.l.b16 %v609
      %v711 = vunpack.c.l.b16 %v610
      %v712 = vunpack.c.l.b16 %v611
      %v713 = vunpack.c.l.b16 %v612
      %v714 = vunpack.c.l.b16 %v613
      %v715 = vunpack.c.l.b16 %v614
      %v716 = vunpack.c.l.b16 %v615
      %v717 = vunpack.c.l.b16 %v616
      %v718 = vunpack.c.l.b16 %v617
      %v719 = vunpack.c.l.b16 %v618
      %v720 = vunpack.c.l.b16 %v619
      %v721 = vunpack.c.l.b16 %v620
      %v722 = vunpack.c.l.b16 %v621
      %v723 = vunpack.c.l.b16 %v622
      %v724 = vunpack.c.l.b16 %v623
      %v725 = vunpack.c.l.b16 %v624
      %v726 = vunpack.c.l.b16 %v625
      %v727 = vunpack.c.l.b16 %v626
      %v728 = vunpack.c.l.b16 %v627
      %v729 = vunpack.c.l.b16 %v628
      %v730 = vunpack.c.l.b16 %v629
      %v731 = vunpack.c.l.b16 %v630
      %v732 = vunpack.c.l.b16 %v631
      %v733 = vunpack.c.l.b16 %v632
      %v734 = vunpack.c.l.b16 %v633
      %v735 = vpack.c.b16 %v704, %v703
      %v736 = vpack.c.b16 %v706, %v705
      %v737 = vpack.c.b16 %v708, %v707
      %v738 = vpack.c.b16 %v710, %v709
      %v739 = vpack.c.b16 %v712, %v711
      %v740 = vpack.c.b16 %v714, %v713
      %v741 = vpack.c.b16 %v716, %v715
      %v742 = vpack.c.b16 %v718, %v717
      %v743 = vpack.c.b16 %v720, %v719
      %v744 = vpack.c.b16 %v722, %v721
      %v745 = vpack.c.b16 %v724, %v723
      %v746 = vpack.c.b16 %v726, %v725
      %v747 = vpack.c.b16 %v728, %v727
      %v748 = vpack.c.b16 %v730, %v729
      %v749 = vpack.c.b16 %v732, %v731
      %v750 = vpack.c.b16 %v734, %v733
      %767 = vmatpush.bf16.msra.mxu0 %v742
      %768 = vmatpush.bf16.msra.mxu0 %v741
      %769 = vmatpush.bf16.msra.mxu0 %v740
      %770 = vmatpush.bf16.msra.mxu0 %v739
      %771 = vmatpush.bf16.msra.mxu0 %v738
      %772 = vmatpush.bf16.msra.mxu0 %v737
      %773 = vmatpush.bf16.msra.mxu0 %v736
      %774 = vmatpush.bf16.msra.mxu0 %v735
      %775 = vmatmul.bf16.gmra.mxu0 %v656
      %v776 = vpop.f32.mrf.mxu0
      %v777 = vadd.f32 0.0, %v776
      %v778 = vpop.f32.mrf.mxu0
      %v779 = vadd.f32 0.0, %v778
      %780 = vdwg.mxu0
      %781 = vmatpush.bf16.msra.mxu0 %v750
      %782 = vmatpush.bf16.msra.mxu0 %v749
      %783 = vmatpush.bf16.msra.mxu0 %v748
      %784 = vmatpush.bf16.msra.mxu0 %v747
      %785 = vmatpush.bf16.msra.mxu0 %v746
      %786 = vmatpush.bf16.msra.mxu0 %v745
      %787 = vmatpush.bf16.msra.mxu0 %v744
      %788 = vmatpush.bf16.msra.mxu0 %v743
      %789 = vmatmul.bf16.gmra.mxu0 %v668
      %v790 = vpop.f32.mrf.mxu0
      %v791 = vadd.f32 %v777, %v790
      %v792 = vpop.f32.mrf.mxu0
      %v793 = vadd.f32 %v779, %v792
      %794 = vdwg.mxu0
      %v797 = vunpack.c.l.b16 %v565
      %v798 = vunpack.c.h.b16 %v565
      %v799 = vunpack.c.l.b16 %v566
      %v800 = vunpack.c.h.b16 %v566
      %v801 = vpack.c.b16 %v799, %v797
      %v802 = vpack.c.b16 %v800, %v798
      %v837 = vunpack.c.l.b16 %v567
      %v838 = vunpack.c.l.b16 %v568
      %v839 = vunpack.c.l.b16 %v569
      %v840 = vunpack.c.l.b16 %v570
      %v841 = vunpack.c.l.b16 %v571
      %v842 = vunpack.c.l.b16 %v572
      %v843 = vunpack.c.l.b16 %v573
      %v844 = vunpack.c.l.b16 %v574
      %v845 = vunpack.c.l.b16 %v575
      %v846 = vunpack.c.l.b16 %v576
      %v847 = vunpack.c.l.b16 %v577
      %v848 = vunpack.c.l.b16 %v578
      %v849 = vunpack.c.l.b16 %v579
      %v850 = vunpack.c.l.b16 %v580
      %v851 = vunpack.c.l.b16 %v581
      %v852 = vunpack.c.l.b16 %v582
      %v853 = vunpack.c.l.b16 %v583
      %v854 = vunpack.c.l.b16 %v584
      %v855 = vunpack.c.l.b16 %v585
      %v856 = vunpack.c.l.b16 %v586
      %v857 = vunpack.c.l.b16 %v587
      %v858 = vunpack.c.l.b16 %v588
      %v859 = vunpack.c.l.b16 %v589
      %v860 = vunpack.c.l.b16 %v590
      %v861 = vunpack.c.l.b16 %v591
      %v862 = vunpack.c.l.b16 %v592
      %v863 = vunpack.c.l.b16 %v593
      %v864 = vunpack.c.l.b16 %v594
      %v865 = vunpack.c.l.b16 %v595
      %v866 = vunpack.c.l.b16 %v596
      %v867 = vunpack.c.l.b16 %v597
      %v868 = vunpack.c.l.b16 %v598
      %v869 = vpack.c.b16 %v838, %v837
      %v870 = vpack.c.b16 %v840, %v839
      %v871 = vpack.c.b16 %v842, %v841
      %v872 = vpack.c.b16 %v844, %v843
      %v873 = vpack.c.b16 %v846, %v845
      %v874 = vpack.c.b16 %v848, %v847
      %v875 = vpack.c.b16 %v850, %v849
      %v876 = vpack.c.b16 %v852, %v851
      %v877 = vpack.c.b16 %v854, %v853
      %v878 = vpack.c.b16 %v856, %v855
      %v879 = vpack.c.b16 %v858, %v857
      %v880 = vpack.c.b16 %v860, %v859
      %v881 = vpack.c.b16 %v862, %v861
      %v882 = vpack.c.b16 %v864, %v863
      %v883 = vpack.c.b16 %v866, %v865
      %v884 = vpack.c.b16 %v868, %v867
      %901 = vmatpush.bf16.msra.mxu0 %v876
      %902 = vmatpush.bf16.msra.mxu0 %v875
      %903 = vmatpush.bf16.msra.mxu0 %v874
      %904 = vmatpush.bf16.msra.mxu0 %v873
      %905 = vmatpush.bf16.msra.mxu0 %v872
      %906 = vmatpush.bf16.msra.mxu0 %v871
      %907 = vmatpush.bf16.msra.mxu0 %v870
      %908 = vmatpush.bf16.msra.mxu0 %v869
      %909 = vmatmul.bf16.gmra.mxu0 %v801
      %v910 = vpop.f32.mrf.mxu0
      %v911 = vadd.f32 %v791, %v910
      %v912 = vpop.f32.mrf.mxu0
      %v913 = vadd.f32 %v793, %v912
      %914 = vdwg.mxu0
      %915 = vmatpush.bf16.msra.mxu0 %v884
      %916 = vmatpush.bf16.msra.mxu0 %v883
      %917 = vmatpush.bf16.msra.mxu0 %v882
      %918 = vmatpush.bf16.msra.mxu0 %v881
      %919 = vmatpush.bf16.msra.mxu0 %v880
      %920 = vmatpush.bf16.msra.mxu0 %v879
      %921 = vmatpush.bf16.msra.mxu0 %v878
      %922 = vmatpush.bf16.msra.mxu0 %v877
      %923 = vmatmul.bf16.gmra.mxu0 %v802
      %v924 = vpop.f32.mrf.mxu0
      %v925 = vadd.f32 %v911, %v924
      %v926 = vpop.f32.mrf.mxu0
      %v927 = vadd.f32 %v913, %v926
      %928 = vdwg.mxu0
      %v929 = vld [vmem:[%s369] sm:$0xee]
      %s930 = scalar_lea.vmem %s3, 256
      %v931 = vld [vmem:[%s930] sm:$0xf]
      %v932 = vld [vmem:[%s930 + $0x4] sm:$0xf]
      %v933 = vld [vmem:[%s930 + $0x8] sm:$0xf]
      %v934 = vld [vmem:[%s930 + $0xc] sm:$0xf]
      %v935 = vld [vmem:[%s930 + $0x10] sm:$0xf]
      %v936 = vld [vmem:[%s930 + $0x14] sm:$0xf]
      %v937 = vld [vmem:[%s930 + $0x18] sm:$0xf]
      %v938 = vld [vmem:[%s930 + $0x1c] sm:$0xf]
      %v939 = vld [vmem:[%s930 + $0x20] sm:$0xf]
      %v940 = vld [vmem:[%s930 + $0x24] sm:$0xf]
      %v941 = vld [vmem:[%s930 + $0x28] sm:$0xf]
      %v942 = vld [vmem:[%s930 + $0x2c] sm:$0xf]
      %v943 = vld [vmem:[%s930 + $0x30] sm:$0xf]
      %v944 = vld [vmem:[%s930 + $0x34] sm:$0xf]
      %v945 = vld [vmem:[%s930 + $0x38] sm:$0xf]
      %v946 = vld [vmem:[%s930 + $0x3c] sm:$0xf]
      %v947 = vld [vmem:[%s930 + $0x40] sm:$0xf]
      %v948 = vld [vmem:[%s930 + $0x44] sm:$0xf]
      %v949 = vld [vmem:[%s930 + $0x48] sm:$0xf]
      %v950 = vld [vmem:[%s930 + $0x4c] sm:$0xf]
      %v951 = vld [vmem:[%s930 + $0x50] sm:$0xf]
      %v952 = vld [vmem:[%s930 + $0x54] sm:$0xf]
      %v953 = vld [vmem:[%s930 + $0x58] sm:$0xf]
      %v954 = vld [vmem:[%s930 + $0x5c] sm:$0xf]
      %v955 = vld [vmem:[%s930 + $0x60] sm:$0xf]
      %v956 = vld [vmem:[%s930 + $0x64] sm:$0xf]
      %v957 = vld [vmem:[%s930 + $0x68] sm:$0xf]
      %v958 = vld [vmem:[%s930 + $0x6c] sm:$0xf]
      %v959 = vld [vmem:[%s930 + $0x70] sm:$0xf]
      %v960 = vld [vmem:[%s930 + $0x74] sm:$0xf]
      %v961 = vld [vmem:[%s930 + $0x78] sm:$0xf]
      %v962 = vld [vmem:[%s930 + $0x7c] sm:$0xf]
      %v964 = vunpack.c.l.b16 %v929
      %v965 = vunpack.c.h.b16 %v929
      %v966 = vpack.c.b16 %v424, %v964
      %v967 = vpack.c.b16 %v425, %v965
      %vm968 = vcmask 1046528
      %v969 = vrot.slane %v966, 1
      %v970 = vrot.slane %v642, 1
      %v971 = vsel %vm968, %v969, %v970
      %v972 = vrot.slane %v967, 1
      %v973 = vrot.slane %v643, 1
      %v974 = vsel %vm968, %v972, %v973
      %v1009 = vunpack.c.l.b16 %v931
      %v1010 = vunpack.c.l.b16 %v932
      %v1011 = vunpack.c.l.b16 %v933
      %v1012 = vunpack.c.l.b16 %v934
      %v1013 = vunpack.c.l.b16 %v935
      %v1014 = vunpack.c.l.b16 %v936
      %v1015 = vunpack.c.l.b16 %v937
      %v1016 = vunpack.c.l.b16 %v938
      %v1017 = vunpack.c.l.b16 %v939
      %v1018 = vunpack.c.l.b16 %v940
      %v1019 = vunpack.c.l.b16 %v941
      %v1020 = vunpack.c.l.b16 %v942
      %v1021 = vunpack.c.l.b16 %v943
      %v1022 = vunpack.c.l.b16 %v944
      %v1023 = vunpack.c.l.b16 %v945
      %v1024 = vunpack.c.l.b16 %v946
      %v1025 = vunpack.c.l.b16 %v947
      %v1026 = vunpack.c.l.b16 %v948
      %v1027 = vunpack.c.l.b16 %v949
      %v1028 = vunpack.c.l.b16 %v950
      %v1029 = vunpack.c.l.b16 %v951
      %v1030 = vunpack.c.l.b16 %v952
      %v1031 = vunpack.c.l.b16 %v953
      %v1032 = vunpack.c.l.b16 %v954
      %v1033 = vunpack.c.l.b16 %v955
      %v1034 = vunpack.c.l.b16 %v956
      %v1035 = vunpack.c.l.b16 %v957
      %v1036 = vunpack.c.l.b16 %v958
      %v1037 = vunpack.c.l.b16 %v959
      %v1038 = vunpack.c.l.b16 %v960
      %v1039 = vunpack.c.l.b16 %v961
      %v1040 = vunpack.c.l.b16 %v962
      %v1041 = vpack.c.b16 %v1010, %v1009
      %v1042 = vpack.c.b16 %v1012, %v1011
      %v1043 = vpack.c.b16 %v1014, %v1013
      %v1044 = vpack.c.b16 %v1016, %v1015
      %v1045 = vpack.c.b16 %v1018, %v1017
      %v1046 = vpack.c.b16 %v1020, %v1019
      %v1047 = vpack.c.b16 %v1022, %v1021
      %v1048 = vpack.c.b16 %v1024, %v1023
      %v1049 = vpack.c.b16 %v1026, %v1025
      %v1050 = vpack.c.b16 %v1028, %v1027
      %v1051 = vpack.c.b16 %v1030, %v1029
      %v1052 = vpack.c.b16 %v1032, %v1031
      %v1053 = vpack.c.b16 %v1034, %v1033
      %v1054 = vpack.c.b16 %v1036, %v1035
      %v1055 = vpack.c.b16 %v1038, %v1037
      %v1056 = vpack.c.b16 %v1040, %v1039
      %1073 = vmatpush.bf16.msra.mxu0 %v1048
      %1074 = vmatpush.bf16.msra.mxu0 %v1047
      %1075 = vmatpush.bf16.msra.mxu0 %v1046
      %1076 = vmatpush.bf16.msra.mxu0 %v1045
      %1077 = vmatpush.bf16.msra.mxu0 %v1044
      %1078 = vmatpush.bf16.msra.mxu0 %v1043
      %1079 = vmatpush.bf16.msra.mxu0 %v1042
      %1080 = vmatpush.bf16.msra.mxu0 %v1041
      %1081 = vmatmul.bf16.gmra.mxu0 %v971
      %v1082 = vpop.f32.mrf.mxu0
      %v1083 = vadd.f32 0.0, %v1082
      %v1084 = vpop.f32.mrf.mxu0
      %v1085 = vadd.f32 0.0, %v1084
      %1086 = vdwg.mxu0
      %1087 = vmatpush.bf16.msra.mxu0 %v1056
      %1088 = vmatpush.bf16.msra.mxu0 %v1055
      %1089 = vmatpush.bf16.msra.mxu0 %v1054
      %1090 = vmatpush.bf16.msra.mxu0 %v1053
      %1091 = vmatpush.bf16.msra.mxu0 %v1052
      %1092 = vmatpush.bf16.msra.mxu0 %v1051
      %1093 = vmatpush.bf16.msra.mxu0 %v1050
      %1094 = vmatpush.bf16.msra.mxu0 %v1049
      %1095 = vmatmul.bf16.gmra.mxu0 %v974
      %v1096 = vpop.f32.mrf.mxu0
      %v1097 = vadd.f32 %v1083, %v1096
      %v1098 = vpop.f32.mrf.mxu0
      %v1099 = vadd.f32 %v1085, %v1098
      %1100 = vdwg.mxu0
      %v1101 = vadd.f32 %v925, %v1097
      %v1102 = vadd.f32 %v927, %v1099
      %s1103 = scalar_lea.vmem %s3, 384
      %v1104 = vld [vmem:[%s1103] sm:$0xf]
      %v1105 = vld [vmem:[%s1103 + $0x4] sm:$0xf]
      %v1106 = vld [vmem:[%s1103 + $0x8] sm:$0xf]
      %v1107 = vld [vmem:[%s1103 + $0xc] sm:$0xf]
      %v1108 = vld [vmem:[%s1103 + $0x10] sm:$0xf]
      %v1109 = vld [vmem:[%s1103 + $0x14] sm:$0xf]
      %v1110 = vld [vmem:[%s1103 + $0x18] sm:$0xf]
      %v1111 = vld [vmem:[%s1103 + $0x1c] sm:$0xf]
      %v1112 = vld [vmem:[%s1103 + $0x20] sm:$0xf]
      %v1113 = vld [vmem:[%s1103 + $0x24] sm:$0xf]
      %v1114 = vld [vmem:[%s1103 + $0x28] sm:$0xf]
      %v1115 = vld [vmem:[%s1103 + $0x2c] sm:$0xf]
      %v1116 = vld [vmem:[%s1103 + $0x30] sm:$0xf]
      %v1117 = vld [vmem:[%s1103 + $0x34] sm:$0xf]
      %v1118 = vld [vmem:[%s1103 + $0x38] sm:$0xf]
      %v1119 = vld [vmem:[%s1103 + $0x3c] sm:$0xf]
      %v1120 = vld [vmem:[%s1103 + $0x40] sm:$0xf]
      %v1121 = vld [vmem:[%s1103 + $0x44] sm:$0xf]
      %v1122 = vld [vmem:[%s1103 + $0x48] sm:$0xf]
      %v1123 = vld [vmem:[%s1103 + $0x4c] sm:$0xf]
      %v1124 = vld [vmem:[%s1103 + $0x50] sm:$0xf]
      %v1125 = vld [vmem:[%s1103 + $0x54] sm:$0xf]
      %v1126 = vld [vmem:[%s1103 + $0x58] sm:$0xf]
      %v1127 = vld [vmem:[%s1103 + $0x5c] sm:$0xf]
      %v1128 = vld [vmem:[%s1103 + $0x60] sm:$0xf]
      %v1129 = vld [vmem:[%s1103 + $0x64] sm:$0xf]
      %v1130 = vld [vmem:[%s1103 + $0x68] sm:$0xf]
      %v1131 = vld [vmem:[%s1103 + $0x6c] sm:$0xf]
      %v1132 = vld [vmem:[%s1103 + $0x70] sm:$0xf]
      %v1133 = vld [vmem:[%s1103 + $0x74] sm:$0xf]
      %v1134 = vld [vmem:[%s1103 + $0x78] sm:$0xf]
      %v1135 = vld [vmem:[%s1103 + $0x7c] sm:$0xf]
      %vm1136 = vsmask.f32 6400
      %v1138 = vshrl.u32 %v966, 16
      %v1140 = vrot.slane %v1138, 1
      %v1141 = vshll.u32 %v966, 16
      %v1143 = vrot.slane %v1141, 2
      %v1144 = vor.u32 %v1140, %v1143
      %v1146 = vshrl.u32 %v430, 16
      %v1148 = vrot.slane %v1146, 1
      %v1149 = vshll.u32 %v430, 16
      %v1151 = vrot.slane %v1149, 2
      %v1152 = vor.u32 %v1148, %v1151
      %v1153 = vsel %vm1136, %v1144, %v1152
      %v1155 = vshrl.u32 %v967, 16
      %v1157 = vrot.slane %v1155, 1
      %v1158 = vshll.u32 %v967, 16
      %v1160 = vrot.slane %v1158, 2
      %v1161 = vor.u32 %v1157, %v1160
      %v1163 = vshrl.u32 %v431, 16
      %v1165 = vrot.slane %v1163, 1
      %v1166 = vshll.u32 %v431, 16
      %v1168 = vrot.slane %v1166, 2
      %v1169 = vor.u32 %v1165, %v1168
      %v1170 = vsel %vm1136, %v1161, %v1169
      %v1205 = vunpack.c.l.b16 %v1104
      %v1206 = vunpack.c.l.b16 %v1105
      %v1207 = vunpack.c.l.b16 %v1106
      %v1208 = vunpack.c.l.b16 %v1107
      %v1209 = vunpack.c.l.b16 %v1108
      %v1210 = vunpack.c.l.b16 %v1109
      %v1211 = vunpack.c.l.b16 %v1110
      %v1212 = vunpack.c.l.b16 %v1111
      %v1213 = vunpack.c.l.b16 %v1112
      %v1214 = vunpack.c.l.b16 %v1113
      %v1215 = vunpack.c.l.b16 %v1114
      %v1216 = vunpack.c.l.b16 %v1115
      %v1217 = vunpack.c.l.b16 %v1116
      %v1218 = vunpack.c.l.b16 %v1117
      %v1219 = vunpack.c.l.b16 %v1118
      %v1220 = vunpack.c.l.b16 %v1119
      %v1221 = vunpack.c.l.b16 %v1120
      %v1222 = vunpack.c.l.b16 %v1121
      %v1223 = vunpack.c.l.b16 %v1122
      %v1224 = vunpack.c.l.b16 %v1123
      %v1225 = vunpack.c.l.b16 %v1124
      %v1226 = vunpack.c.l.b16 %v1125
      %v1227 = vunpack.c.l.b16 %v1126
      %v1228 = vunpack.c.l.b16 %v1127
      %v1229 = vunpack.c.l.b16 %v1128
      %v1230 = vunpack.c.l.b16 %v1129
      %v1231 = vunpack.c.l.b16 %v1130
      %v1232 = vunpack.c.l.b16 %v1131
      %v1233 = vunpack.c.l.b16 %v1132
      %v1234 = vunpack.c.l.b16 %v1133
      %v1235 = vunpack.c.l.b16 %v1134
      %v1236 = vunpack.c.l.b16 %v1135
      %v1237 = vpack.c.b16 %v1206, %v1205
      %v1238 = vpack.c.b16 %v1208, %v1207
      %v1239 = vpack.c.b16 %v1210, %v1209
      %v1240 = vpack.c.b16 %v1212, %v1211
      %v1241 = vpack.c.b16 %v1214, %v1213
      %v1242 = vpack.c.b16 %v1216, %v1215
      %v1243 = vpack.c.b16 %v1218, %v1217
      %v1244 = vpack.c.b16 %v1220, %v1219
      %v1245 = vpack.c.b16 %v1222, %v1221
      %v1246 = vpack.c.b16 %v1224, %v1223
      %v1247 = vpack.c.b16 %v1226, %v1225
      %v1248 = vpack.c.b16 %v1228, %v1227
      %v1249 = vpack.c.b16 %v1230, %v1229
      %v1250 = vpack.c.b16 %v1232, %v1231
      %v1251 = vpack.c.b16 %v1234, %v1233
      %v1252 = vpack.c.b16 %v1236, %v1235
      %1269 = vmatpush.bf16.msra.mxu0 %v1244
      %1270 = vmatpush.bf16.msra.mxu0 %v1243
      %1271 = vmatpush.bf16.msra.mxu0 %v1242
      %1272 = vmatpush.bf16.msra.mxu0 %v1241
      %1273 = vmatpush.bf16.msra.mxu0 %v1240
      %1274 = vmatpush.bf16.msra.mxu0 %v1239
      %1275 = vmatpush.bf16.msra.mxu0 %v1238
      %1276 = vmatpush.bf16.msra.mxu0 %v1237
      %1277 = vmatmul.bf16.gmra.mxu0 %v1153
      %v1278 = vpop.f32.mrf.mxu0
      %v1279 = vadd.f32 0.0, %v1278
      %v1280 = vpop.f32.mrf.mxu0
      %v1281 = vadd.f32 0.0, %v1280
      %1282 = vdwg.mxu0
      %1283 = vmatpush.bf16.msra.mxu0 %v1252
      %1284 = vmatpush.bf16.msra.mxu0 %v1251
      %1285 = vmatpush.bf16.msra.mxu0 %v1250
      %1286 = vmatpush.bf16.msra.mxu0 %v1249
      %1287 = vmatpush.bf16.msra.mxu0 %v1248
      %1288 = vmatpush.bf16.msra.mxu0 %v1247
      %1289 = vmatpush.bf16.msra.mxu0 %v1246
      %1290 = vmatpush.bf16.msra.mxu0 %v1245
      %1291 = vmatmul.bf16.gmra.mxu0 %v1170
      %v1292 = vpop.f32.mrf.mxu0
      %v1293 = vadd.f32 %v1279, %v1292
      %v1294 = vpop.f32.mrf.mxu0
      %v1295 = vadd.f32 %v1281, %v1294
      %1296 = vdwg.mxu0
      %v1297 = vadd.f32 %v1101, %v1293
      %v1298 = vadd.f32 %v1102, %v1295
      %s1299 = scalar_lea.vmem %s3, 512
      %v1300 = vld [vmem:[%s1299] sm:$0xf]
      %v1301 = vld [vmem:[%s1299 + $0x4] sm:$0xf]
      %v1302 = vld [vmem:[%s1299 + $0x8] sm:$0xf]
      %v1303 = vld [vmem:[%s1299 + $0xc] sm:$0xf]
      %v1304 = vld [vmem:[%s1299 + $0x10] sm:$0xf]
      %v1305 = vld [vmem:[%s1299 + $0x14] sm:$0xf]
      %v1306 = vld [vmem:[%s1299 + $0x18] sm:$0xf]
      %v1307 = vld [vmem:[%s1299 + $0x1c] sm:$0xf]
      %v1308 = vld [vmem:[%s1299 + $0x20] sm:$0xf]
      %v1309 = vld [vmem:[%s1299 + $0x24] sm:$0xf]
      %v1310 = vld [vmem:[%s1299 + $0x28] sm:$0xf]
      %v1311 = vld [vmem:[%s1299 + $0x2c] sm:$0xf]
      %v1312 = vld [vmem:[%s1299 + $0x30] sm:$0xf]
      %v1313 = vld [vmem:[%s1299 + $0x34] sm:$0xf]
      %v1314 = vld [vmem:[%s1299 + $0x38] sm:$0xf]
      %v1315 = vld [vmem:[%s1299 + $0x3c] sm:$0xf]
      %v1316 = vld [vmem:[%s1299 + $0x40] sm:$0xf]
      %v1317 = vld [vmem:[%s1299 + $0x44] sm:$0xf]
      %v1318 = vld [vmem:[%s1299 + $0x48] sm:$0xf]
      %v1319 = vld [vmem:[%s1299 + $0x4c] sm:$0xf]
      %v1320 = vld [vmem:[%s1299 + $0x50] sm:$0xf]
      %v1321 = vld [vmem:[%s1299 + $0x54] sm:$0xf]
      %v1322 = vld [vmem:[%s1299 + $0x58] sm:$0xf]
      %v1323 = vld [vmem:[%s1299 + $0x5c] sm:$0xf]
      %v1324 = vld [vmem:[%s1299 + $0x60] sm:$0xf]
      %v1325 = vld [vmem:[%s1299 + $0x64] sm:$0xf]
      %v1326 = vld [vmem:[%s1299 + $0x68] sm:$0xf]
      %v1327 = vld [vmem:[%s1299 + $0x6c] sm:$0xf]
      %v1328 = vld [vmem:[%s1299 + $0x70] sm:$0xf]
      %v1329 = vld [vmem:[%s1299 + $0x74] sm:$0xf]
      %v1330 = vld [vmem:[%s1299 + $0x78] sm:$0xf]
      %v1331 = vld [vmem:[%s1299 + $0x7c] sm:$0xf]
      %v1364 = vunpack.c.l.b16 %v1300
      %v1365 = vunpack.c.l.b16 %v1301
      %v1366 = vunpack.c.l.b16 %v1302
      %v1367 = vunpack.c.l.b16 %v1303
      %v1368 = vunpack.c.l.b16 %v1304
      %v1369 = vunpack.c.l.b16 %v1305
      %v1370 = vunpack.c.l.b16 %v1306
      %v1371 = vunpack.c.l.b16 %v1307
      %v1372 = vunpack.c.l.b16 %v1308
      %v1373 = vunpack.c.l.b16 %v1309
      %v1374 = vunpack.c.l.b16 %v1310
      %v1375 = vunpack.c.l.b16 %v1311
      %v1376 = vunpack.c.l.b16 %v1312
      %v1377 = vunpack.c.l.b16 %v1313
      %v1378 = vunpack.c.l.b16 %v1314
      %v1379 = vunpack.c.l.b16 %v1315
      %v1380 = vunpack.c.l.b16 %v1316
      %v1381 = vunpack.c.l.b16 %v1317
      %v1382 = vunpack.c.l.b16 %v1318
      %v1383 = vunpack.c.l.b16 %v1319
      %v1384 = vunpack.c.l.b16 %v1320
      %v1385 = vunpack.c.l.b16 %v1321
      %v1386 = vunpack.c.l.b16 %v1322
      %v1387 = vunpack.c.l.b16 %v1323
      %v1388 = vunpack.c.l.b16 %v1324
      %v1389 = vunpack.c.l.b16 %v1325
      %v1390 = vunpack.c.l.b16 %v1326
      %v1391 = vunpack.c.l.b16 %v1327
      %v1392 = vunpack.c.l.b16 %v1328
      %v1393 = vunpack.c.l.b16 %v1329
      %v1394 = vunpack.c.l.b16 %v1330
      %v1395 = vunpack.c.l.b16 %v1331
      %v1396 = vpack.c.b16 %v1365, %v1364
      %v1397 = vpack.c.b16 %v1367, %v1366
      %v1398 = vpack.c.b16 %v1369, %v1368
      %v1399 = vpack.c.b16 %v1371, %v1370
      %v1400 = vpack.c.b16 %v1373, %v1372
      %v1401 = vpack.c.b16 %v1375, %v1374
      %v1402 = vpack.c.b16 %v1377, %v1376
      %v1403 = vpack.c.b16 %v1379, %v1378
      %v1404 = vpack.c.b16 %v1381, %v1380
      %v1405 = vpack.c.b16 %v1383, %v1382
      %v1406 = vpack.c.b16 %v1385, %v1384
      %v1407 = vpack.c.b16 %v1387, %v1386
      %v1408 = vpack.c.b16 %v1389, %v1388
      %v1409 = vpack.c.b16 %v1391, %v1390
      %v1410 = vpack.c.b16 %v1393, %v1392
      %v1411 = vpack.c.b16 %v1395, %v1394
      %1428 = vmatpush.bf16.msra.mxu0 %v1403
      %1429 = vmatpush.bf16.msra.mxu0 %v1402
      %1430 = vmatpush.bf16.msra.mxu0 %v1401
      %1431 = vmatpush.bf16.msra.mxu0 %v1400
      %1432 = vmatpush.bf16.msra.mxu0 %v1399
      %1433 = vmatpush.bf16.msra.mxu0 %v1398
      %1434 = vmatpush.bf16.msra.mxu0 %v1397
      %1435 = vmatpush.bf16.msra.mxu0 %v1396
      %1436 = vmatmul.bf16.gmra.mxu0 %v435
      %v1437 = vpop.f32.mrf.mxu0
      %v1438 = vadd.f32 0.0, %v1437
      %v1439 = vpop.f32.mrf.mxu0
      %v1440 = vadd.f32 0.0, %v1439
      %1441 = vdwg.mxu0
      %1442 = vmatpush.bf16.msra.mxu0 %v1411
      %1443 = vmatpush.bf16.msra.mxu0 %v1410
      %1444 = vmatpush.bf16.msra.mxu0 %v1409
      %1445 = vmatpush.bf16.msra.mxu0 %v1408
      %1446 = vmatpush.bf16.msra.mxu0 %v1407
      %1447 = vmatpush.bf16.msra.mxu0 %v1406
      %1448 = vmatpush.bf16.msra.mxu0 %v1405
      %1449 = vmatpush.bf16.msra.mxu0 %v1404
      %1450 = vmatmul.bf16.gmra.mxu0 %v438
      %v1451 = vpop.f32.mrf.mxu0
      %v1452 = vadd.f32 %v1438, %v1451
      %v1453 = vpop.f32.mrf.mxu0
      %v1454 = vadd.f32 %v1440, %v1453
      %1455 = vdwg.mxu0
      %v1456 = vadd.f32 %v1297, %v1452
      %v1457 = vadd.f32 %v1298, %v1454
      %v1458 = vld [vmem:[%s369 + $0x10] sm:$0x77]
      %s1459 = scalar_lea.vmem %s3, 640
      %v1460 = vld [vmem:[%s1459] sm:$0xf]
      %v1461 = vld [vmem:[%s1459 + $0x4] sm:$0xf]
      %v1462 = vld [vmem:[%s1459 + $0x8] sm:$0xf]
      %v1463 = vld [vmem:[%s1459 + $0xc] sm:$0xf]
      %v1464 = vld [vmem:[%s1459 + $0x10] sm:$0xf]
      %v1465 = vld [vmem:[%s1459 + $0x14] sm:$0xf]
      %v1466 = vld [vmem:[%s1459 + $0x18] sm:$0xf]
      %v1467 = vld [vmem:[%s1459 + $0x1c] sm:$0xf]
      %v1468 = vld [vmem:[%s1459 + $0x20] sm:$0xf]
      %v1469 = vld [vmem:[%s1459 + $0x24] sm:$0xf]
      %v1470 = vld [vmem:[%s1459 + $0x28] sm:$0xf]
      %v1471 = vld [vmem:[%s1459 + $0x2c] sm:$0xf]
      %v1472 = vld [vmem:[%s1459 + $0x30] sm:$0xf]
      %v1473 = vld [vmem:[%s1459 + $0x34] sm:$0xf]
      %v1474 = vld [vmem:[%s1459 + $0x38] sm:$0xf]
      %v1475 = vld [vmem:[%s1459 + $0x3c] sm:$0xf]
      %v1476 = vld [vmem:[%s1459 + $0x40] sm:$0xf]
      %v1477 = vld [vmem:[%s1459 + $0x44] sm:$0xf]
      %v1478 = vld [vmem:[%s1459 + $0x48] sm:$0xf]
      %v1479 = vld [vmem:[%s1459 + $0x4c] sm:$0xf]
      %v1480 = vld [vmem:[%s1459 + $0x50] sm:$0xf]
      %v1481 = vld [vmem:[%s1459 + $0x54] sm:$0xf]
      %v1482 = vld [vmem:[%s1459 + $0x58] sm:$0xf]
      %v1483 = vld [vmem:[%s1459 + $0x5c] sm:$0xf]
      %v1484 = vld [vmem:[%s1459 + $0x60] sm:$0xf]
      %v1485 = vld [vmem:[%s1459 + $0x64] sm:$0xf]
      %v1486 = vld [vmem:[%s1459 + $0x68] sm:$0xf]
      %v1487 = vld [vmem:[%s1459 + $0x6c] sm:$0xf]
      %v1488 = vld [vmem:[%s1459 + $0x70] sm:$0xf]
      %v1489 = vld [vmem:[%s1459 + $0x74] sm:$0xf]
      %v1490 = vld [vmem:[%s1459 + $0x78] sm:$0xf]
      %v1491 = vld [vmem:[%s1459 + $0x7c] sm:$0xf]
      %v1493 = vunpack.c.l.b16 %v1458
      %v1494 = vunpack.c.h.b16 %v1458
      %v1495 = vpack.c.b16 %v1493, %v1493
      %v1496 = vpack.c.b16 %v1494, %v1494
      %vm1497 = vsmask.f32 5376
      %v1499 = vshrl.u32 %v428, 16
      %v1501 = vrot.slane %v1499, 2
      %v1502 = vshll.u32 %v428, 16
      %v1504 = vrot.slane %v1502, 3
      %v1505 = vor.u32 %v1501, %v1504
      %v1507 = vshrl.u32 %v1495, 16
      %v1509 = vrot.slane %v1507, 2
      %v1510 = vshll.u32 %v1495, 16
      %v1512 = vrot.slane %v1510, 3
      %v1513 = vor.u32 %v1509, %v1512
      %v1514 = vsel %vm1497, %v1505, %v1513
      %v1516 = vshrl.u32 %v429, 16
      %v1518 = vrot.slane %v1516, 2
      %v1519 = vshll.u32 %v429, 16
      %v1521 = vrot.slane %v1519, 3
      %v1522 = vor.u32 %v1518, %v1521
      %v1524 = vshrl.u32 %v1496, 16
      %v1526 = vrot.slane %v1524, 2
      %v1527 = vshll.u32 %v1496, 16
      %v1529 = vrot.slane %v1527, 3
      %v1530 = vor.u32 %v1526, %v1529
      %v1531 = vsel %vm1497, %v1522, %v1530
      %v1566 = vunpack.c.l.b16 %v1460
      %v1567 = vunpack.c.l.b16 %v1461
      %v1568 = vunpack.c.l.b16 %v1462
      %v1569 = vunpack.c.l.b16 %v1463
      %v1570 = vunpack.c.l.b16 %v1464
      %v1571 = vunpack.c.l.b16 %v1465
      %v1572 = vunpack.c.l.b16 %v1466
      %v1573 = vunpack.c.l.b16 %v1467
      %v1574 = vunpack.c.l.b16 %v1468
      %v1575 = vunpack.c.l.b16 %v1469
      %v1576 = vunpack.c.l.b16 %v1470
      %v1577 = vunpack.c.l.b16 %v1471
      %v1578 = vunpack.c.l.b16 %v1472
      %v1579 = vunpack.c.l.b16 %v1473
      %v1580 = vunpack.c.l.b16 %v1474
      %v1581 = vunpack.c.l.b16 %v1475
      %v1582 = vunpack.c.l.b16 %v1476
      %v1583 = vunpack.c.l.b16 %v1477
      %v1584 = vunpack.c.l.b16 %v1478
      %v1585 = vunpack.c.l.b16 %v1479
      %v1586 = vunpack.c.l.b16 %v1480
      %v1587 = vunpack.c.l.b16 %v1481
      %v1588 = vunpack.c.l.b16 %v1482
      %v1589 = vunpack.c.l.b16 %v1483
      %v1590 = vunpack.c.l.b16 %v1484
      %v1591 = vunpack.c.l.b16 %v1485
      %v1592 = vunpack.c.l.b16 %v1486
      %v1593 = vunpack.c.l.b16 %v1487
      %v1594 = vunpack.c.l.b16 %v1488
      %v1595 = vunpack.c.l.b16 %v1489
      %v1596 = vunpack.c.l.b16 %v1490
      %v1597 = vunpack.c.l.b16 %v1491
      %v1598 = vpack.c.b16 %v1567, %v1566
      %v1599 = vpack.c.b16 %v1569, %v1568
      %v1600 = vpack.c.b16 %v1571, %v1570
      %v1601 = vpack.c.b16 %v1573, %v1572
      %v1602 = vpack.c.b16 %v1575, %v1574
      %v1603 = vpack.c.b16 %v1577, %v1576
      %v1604 = vpack.c.b16 %v1579, %v1578
      %v1605 = vpack.c.b16 %v1581, %v1580
      %v1606 = vpack.c.b16 %v1583, %v1582
      %v1607 = vpack.c.b16 %v1585, %v1584
      %v1608 = vpack.c.b16 %v1587, %v1586
      %v1609 = vpack.c.b16 %v1589, %v1588
      %v1610 = vpack.c.b16 %v1591, %v1590
      %v1611 = vpack.c.b16 %v1593, %v1592
      %v1612 = vpack.c.b16 %v1595, %v1594
      %v1613 = vpack.c.b16 %v1597, %v1596
      %1630 = vmatpush.bf16.msra.mxu0 %v1605
      %1631 = vmatpush.bf16.msra.mxu0 %v1604
      %1632 = vmatpush.bf16.msra.mxu0 %v1603
      %1633 = vmatpush.bf16.msra.mxu0 %v1602
      %1634 = vmatpush.bf16.msra.mxu0 %v1601
      %1635 = vmatpush.bf16.msra.mxu0 %v1600
      %1636 = vmatpush.bf16.msra.mxu0 %v1599
      %1637 = vmatpush.bf16.msra.mxu0 %v1598
      %1638 = vmatmul.bf16.gmra.mxu0 %v1514
      %v1639 = vpop.f32.mrf.mxu0
      %v1640 = vadd.f32 0.0, %v1639
      %v1641 = vpop.f32.mrf.mxu0
      %v1642 = vadd.f32 0.0, %v1641
      %1643 = vdwg.mxu0
      %1644 = vmatpush.bf16.msra.mxu0 %v1613
      %1645 = vmatpush.bf16.msra.mxu0 %v1612
      %1646 = vmatpush.bf16.msra.mxu0 %v1611
      %1647 = vmatpush.bf16.msra.mxu0 %v1610
      %1648 = vmatpush.bf16.msra.mxu0 %v1609
      %1649 = vmatpush.bf16.msra.mxu0 %v1608
      %1650 = vmatpush.bf16.msra.mxu0 %v1607
      %1651 = vmatpush.bf16.msra.mxu0 %v1606
      %1652 = vmatmul.bf16.gmra.mxu0 %v1531
      %v1653 = vpop.f32.mrf.mxu0
      %v1654 = vadd.f32 %v1640, %v1653
      %v1655 = vpop.f32.mrf.mxu0
      %v1656 = vadd.f32 %v1642, %v1655
      %1657 = vdwg.mxu0
      %v1658 = vadd.f32 %v1456, %v1654
      %v1659 = vadd.f32 %v1457, %v1656
      %v1660 = vld [vmem:[%s369] sm:$0x88]
      %s1661 = scalar_lea.vmem %s3, 768
      %v1662 = vld [vmem:[%s1661] sm:$0xf]
      %v1663 = vld [vmem:[%s1661 + $0x4] sm:$0xf]
      %v1664 = vld [vmem:[%s1661 + $0x8] sm:$0xf]
      %v1665 = vld [vmem:[%s1661 + $0xc] sm:$0xf]
      %v1666 = vld [vmem:[%s1661 + $0x10] sm:$0xf]
      %v1667 = vld [vmem:[%s1661 + $0x14] sm:$0xf]
      %v1668 = vld [vmem:[%s1661 + $0x18] sm:$0xf]
      %v1669 = vld [vmem:[%s1661 + $0x1c] sm:$0xf]
      %v1670 = vld [vmem:[%s1661 + $0x20] sm:$0xf]
      %v1671 = vld [vmem:[%s1661 + $0x24] sm:$0xf]
      %v1672 = vld [vmem:[%s1661 + $0x28] sm:$0xf]
      %v1673 = vld [vmem:[%s1661 + $0x2c] sm:$0xf]
      %v1674 = vld [vmem:[%s1661 + $0x30] sm:$0xf]
      %v1675 = vld [vmem:[%s1661 + $0x34] sm:$0xf]
      %v1676 = vld [vmem:[%s1661 + $0x38] sm:$0xf]
      %v1677 = vld [vmem:[%s1661 + $0x3c] sm:$0xf]
      %v1678 = vld [vmem:[%s1661 + $0x40] sm:$0xf]
      %v1679 = vld [vmem:[%s1661 + $0x44] sm:$0xf]
      %v1680 = vld [vmem:[%s1661 + $0x48] sm:$0xf]
      %v1681 = vld [vmem:[%s1661 + $0x4c] sm:$0xf]
      %v1682 = vld [vmem:[%s1661 + $0x50] sm:$0xf]
      %v1683 = vld [vmem:[%s1661 + $0x54] sm:$0xf]
      %v1684 = vld [vmem:[%s1661 + $0x58] sm:$0xf]
      %v1685 = vld [vmem:[%s1661 + $0x5c] sm:$0xf]
      %v1686 = vld [vmem:[%s1661 + $0x60] sm:$0xf]
      %v1687 = vld [vmem:[%s1661 + $0x64] sm:$0xf]
      %v1688 = vld [vmem:[%s1661 + $0x68] sm:$0xf]
      %v1689 = vld [vmem:[%s1661 + $0x6c] sm:$0xf]
      %v1690 = vld [vmem:[%s1661 + $0x70] sm:$0xf]
      %v1691 = vld [vmem:[%s1661 + $0x74] sm:$0xf]
      %v1692 = vld [vmem:[%s1661 + $0x78] sm:$0xf]
      %v1693 = vld [vmem:[%s1661 + $0x7c] sm:$0xf]
      %v1695 = vunpack.c.l.b16 %v1660
      %v1696 = vunpack.c.h.b16 %v1660
      %v1697 = vpack.c.b16 %v424, %v1695
      %v1698 = vpack.c.b16 %v425, %v1696
      %vm1699 = vcmask 1044480
      %v1700 = vrot.slane %v1697, 3
      %v1701 = vrot.slane %v1495, 3
      %v1702 = vsel %vm1699, %v1700, %v1701
      %v1703 = vrot.slane %v1698, 3
      %v1704 = vrot.slane %v1496, 3
      %v1705 = vsel %vm1699, %v1703, %v1704
      %v1740 = vunpack.c.l.b16 %v1662
      %v1741 = vunpack.c.l.b16 %v1663
      %v1742 = vunpack.c.l.b16 %v1664
      %v1743 = vunpack.c.l.b16 %v1665
      %v1744 = vunpack.c.l.b16 %v1666
      %v1745 = vunpack.c.l.b16 %v1667
      %v1746 = vunpack.c.l.b16 %v1668
      %v1747 = vunpack.c.l.b16 %v1669
      %v1748 = vunpack.c.l.b16 %v1670
      %v1749 = vunpack.c.l.b16 %v1671
      %v1750 = vunpack.c.l.b16 %v1672
      %v1751 = vunpack.c.l.b16 %v1673
      %v1752 = vunpack.c.l.b16 %v1674
      %v1753 = vunpack.c.l.b16 %v1675
      %v1754 = vunpack.c.l.b16 %v1676
      %v1755 = vunpack.c.l.b16 %v1677
      %v1756 = vunpack.c.l.b16 %v1678
      %v1757 = vunpack.c.l.b16 %v1679
      %v1758 = vunpack.c.l.b16 %v1680
      %v1759 = vunpack.c.l.b16 %v1681
      %v1760 = vunpack.c.l.b16 %v1682
      %v1761 = vunpack.c.l.b16 %v1683
      %v1762 = vunpack.c.l.b16 %v1684
      %v1763 = vunpack.c.l.b16 %v1685
      %v1764 = vunpack.c.l.b16 %v1686
      %v1765 = vunpack.c.l.b16 %v1687
      %v1766 = vunpack.c.l.b16 %v1688
      %v1767 = vunpack.c.l.b16 %v1689
      %v1768 = vunpack.c.l.b16 %v1690
      %v1769 = vunpack.c.l.b16 %v1691
      %v1770 = vunpack.c.l.b16 %v1692
      %v1771 = vunpack.c.l.b16 %v1693
      %v1772 = vpack.c.b16 %v1741, %v1740
      %v1773 = vpack.c.b16 %v1743, %v1742
      %v1774 = vpack.c.b16 %v1745, %v1744
      %v1775 = vpack.c.b16 %v1747, %v1746
      %v1776 = vpack.c.b16 %v1749, %v1748
      %v1777 = vpack.c.b16 %v1751, %v1750
      %v1778 = vpack.c.b16 %v1753, %v1752
      %v1779 = vpack.c.b16 %v1755, %v1754
      %v1780 = vpack.c.b16 %v1757, %v1756
      %v1781 = vpack.c.b16 %v1759, %v1758
      %v1782 = vpack.c.b16 %v1761, %v1760
      %v1783 = vpack.c.b16 %v1763, %v1762
      %v1784 = vpack.c.b16 %v1765, %v1764
      %v1785 = vpack.c.b16 %v1767, %v1766
      %v1786 = vpack.c.b16 %v1769, %v1768
      %v1787 = vpack.c.b16 %v1771, %v1770
      %1804 = vmatpush.bf16.msra.mxu0 %v1779
      %1805 = vmatpush.bf16.msra.mxu0 %v1778
      %1806 = vmatpush.bf16.msra.mxu0 %v1777
      %1807 = vmatpush.bf16.msra.mxu0 %v1776
      %1808 = vmatpush.bf16.msra.mxu0 %v1775
      %1809 = vmatpush.bf16.msra.mxu0 %v1774
      %1810 = vmatpush.bf16.msra.mxu0 %v1773
      %1811 = vmatpush.bf16.msra.mxu0 %v1772
      %1812 = vmatmul.bf16.gmra.mxu0 %v1702
      %v1813 = vpop.f32.mrf.mxu0
      %v1814 = vadd.f32 0.0, %v1813
      %v1815 = vpop.f32.mrf.mxu0
      %v1816 = vadd.f32 0.0, %v1815
      %1817 = vdwg.mxu0
      %1818 = vmatpush.bf16.msra.mxu0 %v1787
      %1819 = vmatpush.bf16.msra.mxu0 %v1786
      %1820 = vmatpush.bf16.msra.mxu0 %v1785
      %1821 = vmatpush.bf16.msra.mxu0 %v1784
      %1822 = vmatpush.bf16.msra.mxu0 %v1783
      %1823 = vmatpush.bf16.msra.mxu0 %v1782
      %1824 = vmatpush.bf16.msra.mxu0 %v1781
      %1825 = vmatpush.bf16.msra.mxu0 %v1780
      %1826 = vmatmul.bf16.gmra.mxu0 %v1705
      %v1827 = vpop.f32.mrf.mxu0
      %v1828 = vadd.f32 %v1814, %v1827
      %v1829 = vpop.f32.mrf.mxu0
      %v1830 = vadd.f32 %v1816, %v1829
      %1831 = vdwg.mxu0
      %v1832 = vadd.f32 %v1658, %v1828
      %v1833 = vadd.f32 %v1659, %v1830
      %v1834 = vld [vmem:[%s369 + $0x10] sm:$0xff]
      %s1835 = scalar_lea.vmem %s3, 896
      %v1836 = vld [vmem:[%s1835] sm:$0xf]
      %v1837 = vld [vmem:[%s1835 + $0x4] sm:$0xf]
      %v1838 = vld [vmem:[%s1835 + $0x8] sm:$0xf]
      %v1839 = vld [vmem:[%s1835 + $0xc] sm:$0xf]
      %v1840 = vld [vmem:[%s1835 + $0x10] sm:$0xf]
      %v1841 = vld [vmem:[%s1835 + $0x14] sm:$0xf]
      %v1842 = vld [vmem:[%s1835 + $0x18] sm:$0xf]
      %v1843 = vld [vmem:[%s1835 + $0x1c] sm:$0xf]
      %v1844 = vld [vmem:[%s1835 + $0x20] sm:$0xf]
      %v1845 = vld [vmem:[%s1835 + $0x24] sm:$0xf]
      %v1846 = vld [vmem:[%s1835 + $0x28] sm:$0xf]
      %v1847 = vld [vmem:[%s1835 + $0x2c] sm:$0xf]
      %v1848 = vld [vmem:[%s1835 + $0x30] sm:$0xf]
      %v1849 = vld [vmem:[%s1835 + $0x34] sm:$0xf]
      %v1850 = vld [vmem:[%s1835 + $0x38] sm:$0xf]
      %v1851 = vld [vmem:[%s1835 + $0x3c] sm:$0xf]
      %v1852 = vld [vmem:[%s1835 + $0x40] sm:$0xf]
      %v1853 = vld [vmem:[%s1835 + $0x44] sm:$0xf]
      %v1854 = vld [vmem:[%s1835 + $0x48] sm:$0xf]
      %v1855 = vld [vmem:[%s1835 + $0x4c] sm:$0xf]
      %v1856 = vld [vmem:[%s1835 + $0x50] sm:$0xf]
      %v1857 = vld [vmem:[%s1835 + $0x54] sm:$0xf]
      %v1858 = vld [vmem:[%s1835 + $0x58] sm:$0xf]
      %v1859 = vld [vmem:[%s1835 + $0x5c] sm:$0xf]
      %v1860 = vld [vmem:[%s1835 + $0x60] sm:$0xf]
      %v1861 = vld [vmem:[%s1835 + $0x64] sm:$0xf]
      %v1862 = vld [vmem:[%s1835 + $0x68] sm:$0xf]
      %v1863 = vld [vmem:[%s1835 + $0x6c] sm:$0xf]
      %v1864 = vld [vmem:[%s1835 + $0x70] sm:$0xf]
      %v1865 = vld [vmem:[%s1835 + $0x74] sm:$0xf]
      %v1866 = vld [vmem:[%s1835 + $0x78] sm:$0xf]
      %v1867 = vld [vmem:[%s1835 + $0x7c] sm:$0xf]
      %v1869 = vunpack.c.l.b16 %v1834
      %v1870 = vunpack.c.h.b16 %v1834
      %v1871 = vpack.c.b16 %v1869, %v1869
      %v1872 = vpack.c.b16 %v1870, %v1870
      %vm1873 = vsmask.f32 4352
      %v1875 = vshrl.u32 %v1697, 16
      %v1877 = vrot.slane %v1875, 3
      %v1878 = vshll.u32 %v1697, 16
      %v1880 = vrot.slane %v1878, 4
      %v1881 = vor.u32 %v1877, %v1880
      %v1883 = vshrl.u32 %v1871, 16
      %v1885 = vrot.slane %v1883, 3
      %v1886 = vshll.u32 %v1871, 16
      %v1888 = vrot.slane %v1886, 4
      %v1889 = vor.u32 %v1885, %v1888
      %v1890 = vsel %vm1873, %v1881, %v1889
      %v1892 = vshrl.u32 %v1698, 16
      %v1894 = vrot.slane %v1892, 3
      %v1895 = vshll.u32 %v1698, 16
      %v1897 = vrot.slane %v1895, 4
      %v1898 = vor.u32 %v1894, %v1897
      %v1900 = vshrl.u32 %v1872, 16
      %v1902 = vrot.slane %v1900, 3
      %v1903 = vshll.u32 %v1872, 16
      %v1905 = vrot.slane %v1903, 4
      %v1906 = vor.u32 %v1902, %v1905
      %v1907 = vsel %vm1873, %v1898, %v1906
      %v1942 = vunpack.c.l.b16 %v1836
      %v1943 = vunpack.c.l.b16 %v1837
      %v1944 = vunpack.c.l.b16 %v1838
      %v1945 = vunpack.c.l.b16 %v1839
      %v1946 = vunpack.c.l.b16 %v1840
      %v1947 = vunpack.c.l.b16 %v1841
      %v1948 = vunpack.c.l.b16 %v1842
      %v1949 = vunpack.c.l.b16 %v1843
      %v1950 = vunpack.c.l.b16 %v1844
      %v1951 = vunpack.c.l.b16 %v1845
      %v1952 = vunpack.c.l.b16 %v1846
      %v1953 = vunpack.c.l.b16 %v1847
      %v1954 = vunpack.c.l.b16 %v1848
      %v1955 = vunpack.c.l.b16 %v1849
      %v1956 = vunpack.c.l.b16 %v1850
      %v1957 = vunpack.c.l.b16 %v1851
      %v1958 = vunpack.c.l.b16 %v1852
      %v1959 = vunpack.c.l.b16 %v1853
      %v1960 = vunpack.c.l.b16 %v1854
      %v1961 = vunpack.c.l.b16 %v1855
      %v1962 = vunpack.c.l.b16 %v1856
      %v1963 = vunpack.c.l.b16 %v1857
      %v1964 = vunpack.c.l.b16 %v1858
      %v1965 = vunpack.c.l.b16 %v1859
      %v1966 = vunpack.c.l.b16 %v1860
      %v1967 = vunpack.c.l.b16 %v1861
      %v1968 = vunpack.c.l.b16 %v1862
      %v1969 = vunpack.c.l.b16 %v1863
      %v1970 = vunpack.c.l.b16 %v1864
      %v1971 = vunpack.c.l.b16 %v1865
      %v1972 = vunpack.c.l.b16 %v1866
      %v1973 = vunpack.c.l.b16 %v1867
      %v1974 = vpack.c.b16 %v1943, %v1942
      %v1975 = vpack.c.b16 %v1945, %v1944
      %v1976 = vpack.c.b16 %v1947, %v1946
      %v1977 = vpack.c.b16 %v1949, %v1948
      %v1978 = vpack.c.b16 %v1951, %v1950
      %v1979 = vpack.c.b16 %v1953, %v1952
      %v1980 = vpack.c.b16 %v1955, %v1954
      %v1981 = vpack.c.b16 %v1957, %v1956
      %v1982 = vpack.c.b16 %v1959, %v1958
      %v1983 = vpack.c.b16 %v1961, %v1960
      %v1984 = vpack.c.b16 %v1963, %v1962
      %v1985 = vpack.c.b16 %v1965, %v1964
      %v1986 = vpack.c.b16 %v1967, %v1966
      %v1987 = vpack.c.b16 %v1969, %v1968
      %v1988 = vpack.c.b16 %v1971, %v1970
      %v1989 = vpack.c.b16 %v1973, %v1972
      %2006 = vmatpush.bf16.msra.mxu0 %v1981
      %2007 = vmatpush.bf16.msra.mxu0 %v1980
      %2008 = vmatpush.bf16.msra.mxu0 %v1979
      %2009 = vmatpush.bf16.msra.mxu0 %v1978
      %2010 = vmatpush.bf16.msra.mxu0 %v1977
      %2011 = vmatpush.bf16.msra.mxu0 %v1976
      %2012 = vmatpush.bf16.msra.mxu0 %v1975
      %2013 = vmatpush.bf16.msra.mxu0 %v1974
      %2014 = vmatmul.bf16.gmra.mxu0 %v1890
      %v2015 = vpop.f32.mrf.mxu0
      %v2016 = vadd.f32 0.0, %v2015
      %v2017 = vpop.f32.mrf.mxu0
      %v2018 = vadd.f32 0.0, %v2017
      %2019 = vdwg.mxu0
      %2020 = vmatpush.bf16.msra.mxu0 %v1989
      %2021 = vmatpush.bf16.msra.mxu0 %v1988
      %2022 = vmatpush.bf16.msra.mxu0 %v1987
      %2023 = vmatpush.bf16.msra.mxu0 %v1986
      %2024 = vmatpush.bf16.msra.mxu0 %v1985
      %2025 = vmatpush.bf16.msra.mxu0 %v1984
      %2026 = vmatpush.bf16.msra.mxu0 %v1983
      %2027 = vmatpush.bf16.msra.mxu0 %v1982
      %2028 = vmatmul.bf16.gmra.mxu0 %v1907
      %v2029 = vpop.f32.mrf.mxu0
      %v2030 = vadd.f32 %v2016, %v2029
      %v2031 = vpop.f32.mrf.mxu0
      %v2032 = vadd.f32 %v2018, %v2031
      %2033 = vdwg.mxu0
      %v2034 = vadd.f32 %v1832, %v2030
      %v2035 = vadd.f32 %v1833, %v2032
      %s2036 = scalar_lea.vmem %s3, 1024
      %v2037 = vld [vmem:[%s2036] sm:$0xf]
      %v2038 = vld [vmem:[%s2036 + $0x4] sm:$0xf]
      %v2039 = vld [vmem:[%s2036 + $0x8] sm:$0xf]
      %v2040 = vld [vmem:[%s2036 + $0xc] sm:$0xf]
      %v2041 = vld [vmem:[%s2036 + $0x10] sm:$0xf]
      %v2042 = vld [vmem:[%s2036 + $0x14] sm:$0xf]
      %v2043 = vld [vmem:[%s2036 + $0x18] sm:$0xf]
      %v2044 = vld [vmem:[%s2036 + $0x1c] sm:$0xf]
      %v2045 = vld [vmem:[%s2036 + $0x20] sm:$0xf]
      %v2046 = vld [vmem:[%s2036 + $0x24] sm:$0xf]
      %v2047 = vld [vmem:[%s2036 + $0x28] sm:$0xf]
      %v2048 = vld [vmem:[%s2036 + $0x2c] sm:$0xf]
      %v2049 = vld [vmem:[%s2036 + $0x30] sm:$0xf]
      %v2050 = vld [vmem:[%s2036 + $0x34] sm:$0xf]
      %v2051 = vld [vmem:[%s2036 + $0x38] sm:$0xf]
      %v2052 = vld [vmem:[%s2036 + $0x3c] sm:$0xf]
      %v2053 = vld [vmem:[%s2036 + $0x40] sm:$0xf]
      %v2054 = vld [vmem:[%s2036 + $0x44] sm:$0xf]
      %v2055 = vld [vmem:[%s2036 + $0x48] sm:$0xf]
      %v2056 = vld [vmem:[%s2036 + $0x4c] sm:$0xf]
      %v2057 = vld [vmem:[%s2036 + $0x50] sm:$0xf]
      %v2058 = vld [vmem:[%s2036 + $0x54] sm:$0xf]
      %v2059 = vld [vmem:[%s2036 + $0x58] sm:$0xf]
      %v2060 = vld [vmem:[%s2036 + $0x5c] sm:$0xf]
      %v2061 = vld [vmem:[%s2036 + $0x60] sm:$0xf]
      %v2062 = vld [vmem:[%s2036 + $0x64] sm:$0xf]
      %v2063 = vld [vmem:[%s2036 + $0x68] sm:$0xf]
      %v2064 = vld [vmem:[%s2036 + $0x6c] sm:$0xf]
      %v2065 = vld [vmem:[%s2036 + $0x70] sm:$0xf]
      %v2066 = vld [vmem:[%s2036 + $0x74] sm:$0xf]
      %v2067 = vld [vmem:[%s2036 + $0x78] sm:$0xf]
      %v2068 = vld [vmem:[%s2036 + $0x7c] sm:$0xf]
      %v2069 = vpack.c.b16 %v1869, %v424
      %v2070 = vpack.c.b16 %v1870, %v425
      %v2105 = vunpack.c.l.b16 %v2037
      %v2106 = vunpack.c.l.b16 %v2038
      %v2107 = vunpack.c.l.b16 %v2039
      %v2108 = vunpack.c.l.b16 %v2040
      %v2109 = vunpack.c.l.b16 %v2041
      %v2110 = vunpack.c.l.b16 %v2042
      %v2111 = vunpack.c.l.b16 %v2043
      %v2112 = vunpack.c.l.b16 %v2044
      %v2113 = vunpack.c.l.b16 %v2045
      %v2114 = vunpack.c.l.b16 %v2046
      %v2115 = vunpack.c.l.b16 %v2047
      %v2116 = vunpack.c.l.b16 %v2048
      %v2117 = vunpack.c.l.b16 %v2049
      %v2118 = vunpack.c.l.b16 %v2050
      %v2119 = vunpack.c.l.b16 %v2051
      %v2120 = vunpack.c.l.b16 %v2052
      %v2121 = vunpack.c.l.b16 %v2053
      %v2122 = vunpack.c.l.b16 %v2054
      %v2123 = vunpack.c.l.b16 %v2055
      %v2124 = vunpack.c.l.b16 %v2056
      %v2125 = vunpack.c.l.b16 %v2057
      %v2126 = vunpack.c.l.b16 %v2058
      %v2127 = vunpack.c.l.b16 %v2059
      %v2128 = vunpack.c.l.b16 %v2060
      %v2129 = vunpack.c.l.b16 %v2061
      %v2130 = vunpack.c.l.b16 %v2062
      %v2131 = vunpack.c.l.b16 %v2063
      %v2132 = vunpack.c.l.b16 %v2064
      %v2133 = vunpack.c.l.b16 %v2065
      %v2134 = vunpack.c.l.b16 %v2066
      %v2135 = vunpack.c.l.b16 %v2067
      %v2136 = vunpack.c.l.b16 %v2068
      %v2137 = vpack.c.b16 %v2106, %v2105
      %v2138 = vpack.c.b16 %v2108, %v2107
      %v2139 = vpack.c.b16 %v2110, %v2109
      %v2140 = vpack.c.b16 %v2112, %v2111
      %v2141 = vpack.c.b16 %v2114, %v2113
      %v2142 = vpack.c.b16 %v2116, %v2115
      %v2143 = vpack.c.b16 %v2118, %v2117
      %v2144 = vpack.c.b16 %v2120, %v2119
      %v2145 = vpack.c.b16 %v2122, %v2121
      %v2146 = vpack.c.b16 %v2124, %v2123
      %v2147 = vpack.c.b16 %v2126, %v2125
      %v2148 = vpack.c.b16 %v2128, %v2127
      %v2149 = vpack.c.b16 %v2130, %v2129
      %v2150 = vpack.c.b16 %v2132, %v2131
      %v2151 = vpack.c.b16 %v2134, %v2133
      %v2152 = vpack.c.b16 %v2136, %v2135
      %2169 = vmatpush.bf16.msra.mxu0 %v2144
      %2170 = vmatpush.bf16.msra.mxu0 %v2143
      %2171 = vmatpush.bf16.msra.mxu0 %v2142
      %2172 = vmatpush.bf16.msra.mxu0 %v2141
      %2173 = vmatpush.bf16.msra.mxu0 %v2140
      %2174 = vmatpush.bf16.msra.mxu0 %v2139
      %2175 = vmatpush.bf16.msra.mxu0 %v2138
      %2176 = vmatpush.bf16.msra.mxu0 %v2137
      %2177 = vmatmul.bf16.gmra.mxu0 %v2069
      %v2178 = vpop.f32.mrf.mxu0
      %v2179 = vadd.f32 0.0, %v2178
      %v2180 = vpop.f32.mrf.mxu0
      %v2181 = vadd.f32 0.0, %v2180
      %2182 = vdwg.mxu0
      %2183 = vmatpush.bf16.msra.mxu0 %v2152
      %2184 = vmatpush.bf16.msra.mxu0 %v2151
      %2185 = vmatpush.bf16.msra.mxu0 %v2150
      %2186 = vmatpush.bf16.msra.mxu0 %v2149
      %2187 = vmatpush.bf16.msra.mxu0 %v2148
      %2188 = vmatpush.bf16.msra.mxu0 %v2147
      %2189 = vmatpush.bf16.msra.mxu0 %v2146
      %2190 = vmatpush.bf16.msra.mxu0 %v2145
      %2191 = vmatmul.bf16.gmra.mxu0 %v2070
      %v2192 = vpop.f32.mrf.mxu0
      %v2193 = vadd.f32 %v2179, %v2192
      %v2194 = vpop.f32.mrf.mxu0
      %v2195 = vadd.f32 %v2181, %v2194
      %2196 = vdwg.mxu0
      %v2197 = vadd.f32 %v2034, %v2193
      %v2198 = vadd.f32 %v2035, %v2195
      %s2199 = scalar_lea.vmem %s5, 1
      %v2200 = vld [vmem:[%s2199] sm:$0x1]
      %v2202 = vperm.slane %v2200, 0
      %v2204 = vadd.f32 %v2197, %v2202
      %v2205 = vadd.f32 %v2198, %v2202
      %v2206 = vld [vmem:[%s4] sm:$0xf]
      %v2207 = vld [vmem:[%s4 + $0x4] sm:$0xf]
      %v2208 = vld [vmem:[%s4 + $0x8] sm:$0xf]
      %v2209 = vld [vmem:[%s4 + $0xc] sm:$0xf]
      %v2210 = vld [vmem:[%s4 + $0x10] sm:$0xf]
      %v2211 = vld [vmem:[%s4 + $0x14] sm:$0xf]
      %v2212 = vld [vmem:[%s4 + $0x18] sm:$0xf]
      %v2213 = vld [vmem:[%s4 + $0x1c] sm:$0xf]
      %v2214 = vld [vmem:[%s4 + $0x20] sm:$0xf]
      %v2215 = vld [vmem:[%s4 + $0x24] sm:$0xf]
      %v2216 = vld [vmem:[%s4 + $0x28] sm:$0xf]
      %v2217 = vld [vmem:[%s4 + $0x2c] sm:$0xf]
      %v2218 = vld [vmem:[%s4 + $0x30] sm:$0xf]
      %v2219 = vld [vmem:[%s4 + $0x34] sm:$0xf]
      %v2220 = vld [vmem:[%s4 + $0x38] sm:$0xf]
      %v2221 = vld [vmem:[%s4 + $0x3c] sm:$0xf]
      %v2222 = vld [vmem:[%s4 + $0x40] sm:$0xf]
      %v2223 = vld [vmem:[%s4 + $0x44] sm:$0xf]
      %v2224 = vld [vmem:[%s4 + $0x48] sm:$0xf]
      %v2225 = vld [vmem:[%s4 + $0x4c] sm:$0xf]
      %v2226 = vld [vmem:[%s4 + $0x50] sm:$0xf]
      %v2227 = vld [vmem:[%s4 + $0x54] sm:$0xf]
      %v2228 = vld [vmem:[%s4 + $0x58] sm:$0xf]
      %v2229 = vld [vmem:[%s4 + $0x5c] sm:$0xf]
      %v2230 = vld [vmem:[%s4 + $0x60] sm:$0xf]
      %v2231 = vld [vmem:[%s4 + $0x64] sm:$0xf]
      %v2232 = vld [vmem:[%s4 + $0x68] sm:$0xf]
      %v2233 = vld [vmem:[%s4 + $0x6c] sm:$0xf]
      %v2234 = vld [vmem:[%s4 + $0x70] sm:$0xf]
      %v2235 = vld [vmem:[%s4 + $0x74] sm:$0xf]
      %v2236 = vld [vmem:[%s4 + $0x78] sm:$0xf]
      %v2237 = vld [vmem:[%s4 + $0x7c] sm:$0xf]
      %s2238 = scalar_lea.vmem %s4, 128
      %v2239 = vld [vmem:[%s2238] sm:$0xf]
      %v2240 = vld [vmem:[%s2238 + $0x4] sm:$0xf]
      %v2241 = vld [vmem:[%s2238 + $0x8] sm:$0xf]
      %v2242 = vld [vmem:[%s2238 + $0xc] sm:$0xf]
      %v2243 = vld [vmem:[%s2238 + $0x10] sm:$0xf]
      %v2244 = vld [vmem:[%s2238 + $0x14] sm:$0xf]
      %v2245 = vld [vmem:[%s2238 + $0x18] sm:$0xf]
      %v2246 = vld [vmem:[%s2238 + $0x1c] sm:$0xf]
      %v2247 = vld [vmem:[%s2238 + $0x20] sm:$0xf]
      %v2248 = vld [vmem:[%s2238 + $0x24] sm:$0xf]
      %v2249 = vld [vmem:[%s2238 + $0x28] sm:$0xf]
      %v2250 = vld [vmem:[%s2238 + $0x2c] sm:$0xf]
      %v2251 = vld [vmem:[%s2238 + $0x30] sm:$0xf]
      %v2252 = vld [vmem:[%s2238 + $0x34] sm:$0xf]
      %v2253 = vld [vmem:[%s2238 + $0x38] sm:$0xf]
      %v2254 = vld [vmem:[%s2238 + $0x3c] sm:$0xf]
      %v2255 = vld [vmem:[%s2238 + $0x40] sm:$0xf]
      %v2256 = vld [vmem:[%s2238 + $0x44] sm:$0xf]
      %v2257 = vld [vmem:[%s2238 + $0x48] sm:$0xf]
      %v2258 = vld [vmem:[%s2238 + $0x4c] sm:$0xf]
      %v2259 = vld [vmem:[%s2238 + $0x50] sm:$0xf]
      %v2260 = vld [vmem:[%s2238 + $0x54] sm:$0xf]
      %v2261 = vld [vmem:[%s2238 + $0x58] sm:$0xf]
      %v2262 = vld [vmem:[%s2238 + $0x5c] sm:$0xf]
      %v2263 = vld [vmem:[%s2238 + $0x60] sm:$0xf]
      %v2264 = vld [vmem:[%s2238 + $0x64] sm:$0xf]
      %v2265 = vld [vmem:[%s2238 + $0x68] sm:$0xf]
      %v2266 = vld [vmem:[%s2238 + $0x6c] sm:$0xf]
      %v2267 = vld [vmem:[%s2238 + $0x70] sm:$0xf]
      %v2268 = vld [vmem:[%s2238 + $0x74] sm:$0xf]
      %v2269 = vld [vmem:[%s2238 + $0x78] sm:$0xf]
      %v2270 = vld [vmem:[%s2238 + $0x7c] sm:$0xf]
      %v2303 = vunpack.c.l.b16 %v2239
      %v2304 = vunpack.c.l.b16 %v2240
      %v2305 = vunpack.c.l.b16 %v2241
      %v2306 = vunpack.c.l.b16 %v2242
      %v2307 = vunpack.c.l.b16 %v2243
      %v2308 = vunpack.c.l.b16 %v2244
      %v2309 = vunpack.c.l.b16 %v2245
      %v2310 = vunpack.c.l.b16 %v2246
      %v2311 = vunpack.c.l.b16 %v2247
      %v2312 = vunpack.c.l.b16 %v2248
      %v2313 = vunpack.c.l.b16 %v2249
      %v2314 = vunpack.c.l.b16 %v2250
      %v2315 = vunpack.c.l.b16 %v2251
      %v2316 = vunpack.c.l.b16 %v2252
      %v2317 = vunpack.c.l.b16 %v2253
      %v2318 = vunpack.c.l.b16 %v2254
      %v2319 = vunpack.c.l.b16 %v2255
      %v2320 = vunpack.c.l.b16 %v2256
      %v2321 = vunpack.c.l.b16 %v2257
      %v2322 = vunpack.c.l.b16 %v2258
      %v2323 = vunpack.c.l.b16 %v2259
      %v2324 = vunpack.c.l.b16 %v2260
      %v2325 = vunpack.c.l.b16 %v2261
      %v2326 = vunpack.c.l.b16 %v2262
      %v2327 = vunpack.c.l.b16 %v2263
      %v2328 = vunpack.c.l.b16 %v2264
      %v2329 = vunpack.c.l.b16 %v2265
      %v2330 = vunpack.c.l.b16 %v2266
      %v2331 = vunpack.c.l.b16 %v2267
      %v2332 = vunpack.c.l.b16 %v2268
      %v2333 = vunpack.c.l.b16 %v2269
      %v2334 = vunpack.c.l.b16 %v2270
      %v2335 = vpack.c.b16 %v2304, %v2303
      %v2336 = vpack.c.b16 %v2306, %v2305
      %v2337 = vpack.c.b16 %v2308, %v2307
      %v2338 = vpack.c.b16 %v2310, %v2309
      %v2339 = vpack.c.b16 %v2312, %v2311
      %v2340 = vpack.c.b16 %v2314, %v2313
      %v2341 = vpack.c.b16 %v2316, %v2315
      %v2342 = vpack.c.b16 %v2318, %v2317
      %v2343 = vpack.c.b16 %v2320, %v2319
      %v2344 = vpack.c.b16 %v2322, %v2321
      %v2345 = vpack.c.b16 %v2324, %v2323
      %v2346 = vpack.c.b16 %v2326, %v2325
      %v2347 = vpack.c.b16 %v2328, %v2327
      %v2348 = vpack.c.b16 %v2330, %v2329
      %v2349 = vpack.c.b16 %v2332, %v2331
      %v2350 = vpack.c.b16 %v2334, %v2333
      %2367 = vmatpush.bf16.msra.mxu0 %v2342
      %2368 = vmatpush.bf16.msra.mxu0 %v2341
      %2369 = vmatpush.bf16.msra.mxu0 %v2340
      %2370 = vmatpush.bf16.msra.mxu0 %v2339
      %2371 = vmatpush.bf16.msra.mxu0 %v2338
      %2372 = vmatpush.bf16.msra.mxu0 %v2337
      %2373 = vmatpush.bf16.msra.mxu0 %v2336
      %2374 = vmatpush.bf16.msra.mxu0 %v2335
      %2375 = vmatmul.bf16.gmra.mxu0 %v435
      %v2376 = vpop.f32.mrf.mxu0
      %v2377 = vadd.f32 0.0, %v2376
      %v2378 = vpop.f32.mrf.mxu0
      %v2379 = vadd.f32 0.0, %v2378
      %2380 = vdwg.mxu0
      %2381 = vmatpush.bf16.msra.mxu0 %v2350
      %2382 = vmatpush.bf16.msra.mxu0 %v2349
      %2383 = vmatpush.bf16.msra.mxu0 %v2348
      %2384 = vmatpush.bf16.msra.mxu0 %v2347
      %2385 = vmatpush.bf16.msra.mxu0 %v2346
      %2386 = vmatpush.bf16.msra.mxu0 %v2345
      %2387 = vmatpush.bf16.msra.mxu0 %v2344
      %2388 = vmatpush.bf16.msra.mxu0 %v2343
      %2389 = vmatmul.bf16.gmra.mxu0 %v438
      %v2390 = vpop.f32.mrf.mxu0
      %v2391 = vadd.f32 %v2377, %v2390
      %v2392 = vpop.f32.mrf.mxu0
      %v2393 = vadd.f32 %v2379, %v2392
      %2394 = vdwg.mxu0
      %v2427 = vunpack.c.l.b16 %v2206
      %v2428 = vunpack.c.l.b16 %v2207
      %v2429 = vunpack.c.l.b16 %v2208
      %v2430 = vunpack.c.l.b16 %v2209
      %v2431 = vunpack.c.l.b16 %v2210
      %v2432 = vunpack.c.l.b16 %v2211
      %v2433 = vunpack.c.l.b16 %v2212
      %v2434 = vunpack.c.l.b16 %v2213
      %v2435 = vunpack.c.l.b16 %v2214
      %v2436 = vunpack.c.l.b16 %v2215
      %v2437 = vunpack.c.l.b16 %v2216
      %v2438 = vunpack.c.l.b16 %v2217
      %v2439 = vunpack.c.l.b16 %v2218
      %v2440 = vunpack.c.l.b16 %v2219
      %v2441 = vunpack.c.l.b16 %v2220
      %v2442 = vunpack.c.l.b16 %v2221
      %v2443 = vunpack.c.l.b16 %v2222
      %v2444 = vunpack.c.l.b16 %v2223
      %v2445 = vunpack.c.l.b16 %v2224
      %v2446 = vunpack.c.l.b16 %v2225
      %v2447 = vunpack.c.l.b16 %v2226
      %v2448 = vunpack.c.l.b16 %v2227
      %v2449 = vunpack.c.l.b16 %v2228
      %v2450 = vunpack.c.l.b16 %v2229
      %v2451 = vunpack.c.l.b16 %v2230
      %v2452 = vunpack.c.l.b16 %v2231
      %v2453 = vunpack.c.l.b16 %v2232
      %v2454 = vunpack.c.l.b16 %v2233
      %v2455 = vunpack.c.l.b16 %v2234
      %v2456 = vunpack.c.l.b16 %v2235
      %v2457 = vunpack.c.l.b16 %v2236
      %v2458 = vunpack.c.l.b16 %v2237
      %v2459 = vpack.c.b16 %v2428, %v2427
      %v2460 = vpack.c.b16 %v2430, %v2429
      %v2461 = vpack.c.b16 %v2432, %v2431
      %v2462 = vpack.c.b16 %v2434, %v2433
      %v2463 = vpack.c.b16 %v2436, %v2435
      %v2464 = vpack.c.b16 %v2438, %v2437
      %v2465 = vpack.c.b16 %v2440, %v2439
      %v2466 = vpack.c.b16 %v2442, %v2441
      %v2467 = vpack.c.b16 %v2444, %v2443
      %v2468 = vpack.c.b16 %v2446, %v2445
      %v2469 = vpack.c.b16 %v2448, %v2447
      %v2470 = vpack.c.b16 %v2450, %v2449
      %v2471 = vpack.c.b16 %v2452, %v2451
      %v2472 = vpack.c.b16 %v2454, %v2453
      %v2473 = vpack.c.b16 %v2456, %v2455
      %v2474 = vpack.c.b16 %v2458, %v2457
      %2491 = vmatpush.bf16.msra.mxu0 %v2466
      %2492 = vmatpush.bf16.msra.mxu0 %v2465
      %2493 = vmatpush.bf16.msra.mxu0 %v2464
      %2494 = vmatpush.bf16.msra.mxu0 %v2463
      %2495 = vmatpush.bf16.msra.mxu0 %v2462
      %2496 = vmatpush.bf16.msra.mxu0 %v2461
      %2497 = vmatpush.bf16.msra.mxu0 %v2460
      %2498 = vmatpush.bf16.msra.mxu0 %v2459
      %2499 = vmatmul.bf16.gmra.mxu0 %v1153
      %v2500 = vpop.f32.mrf.mxu0
      %v2501 = vadd.f32 %v2391, %v2500
      %v2502 = vpop.f32.mrf.mxu0
      %v2503 = vadd.f32 %v2393, %v2502
      %2504 = vdwg.mxu0
      %2505 = vmatpush.bf16.msra.mxu0 %v2474
      %2506 = vmatpush.bf16.msra.mxu0 %v2473
      %2507 = vmatpush.bf16.msra.mxu0 %v2472
      %2508 = vmatpush.bf16.msra.mxu0 %v2471
      %2509 = vmatpush.bf16.msra.mxu0 %v2470
      %2510 = vmatpush.bf16.msra.mxu0 %v2469
      %2511 = vmatpush.bf16.msra.mxu0 %v2468
      %2512 = vmatpush.bf16.msra.mxu0 %v2467
      %2513 = vmatmul.bf16.gmra.mxu0 %v1170
      %v2514 = vpop.f32.mrf.mxu0
      %v2515 = vadd.f32 %v2501, %v2514
      %v2516 = vpop.f32.mrf.mxu0
      %v2517 = vadd.f32 %v2503, %v2516
      %2518 = vdwg.mxu0
      %s2519 = scalar_lea.vmem %s4, 256
      %v2520 = vld [vmem:[%s2519] sm:$0xf]
      %v2521 = vld [vmem:[%s2519 + $0x4] sm:$0xf]
      %v2522 = vld [vmem:[%s2519 + $0x8] sm:$0xf]
      %v2523 = vld [vmem:[%s2519 + $0xc] sm:$0xf]
      %v2524 = vld [vmem:[%s2519 + $0x10] sm:$0xf]
      %v2525 = vld [vmem:[%s2519 + $0x14] sm:$0xf]
      %v2526 = vld [vmem:[%s2519 + $0x18] sm:$0xf]
      %v2527 = vld [vmem:[%s2519 + $0x1c] sm:$0xf]
      %v2528 = vld [vmem:[%s2519 + $0x20] sm:$0xf]
      %v2529 = vld [vmem:[%s2519 + $0x24] sm:$0xf]
      %v2530 = vld [vmem:[%s2519 + $0x28] sm:$0xf]
      %v2531 = vld [vmem:[%s2519 + $0x2c] sm:$0xf]
      %v2532 = vld [vmem:[%s2519 + $0x30] sm:$0xf]
      %v2533 = vld [vmem:[%s2519 + $0x34] sm:$0xf]
      %v2534 = vld [vmem:[%s2519 + $0x38] sm:$0xf]
      %v2535 = vld [vmem:[%s2519 + $0x3c] sm:$0xf]
      %v2536 = vld [vmem:[%s2519 + $0x40] sm:$0xf]
      %v2537 = vld [vmem:[%s2519 + $0x44] sm:$0xf]
      %v2538 = vld [vmem:[%s2519 + $0x48] sm:$0xf]
      %v2539 = vld [vmem:[%s2519 + $0x4c] sm:$0xf]
      %v2540 = vld [vmem:[%s2519 + $0x50] sm:$0xf]
      %v2541 = vld [vmem:[%s2519 + $0x54] sm:$0xf]
      %v2542 = vld [vmem:[%s2519 + $0x58] sm:$0xf]
      %v2543 = vld [vmem:[%s2519 + $0x5c] sm:$0xf]
      %v2544 = vld [vmem:[%s2519 + $0x60] sm:$0xf]
      %v2545 = vld [vmem:[%s2519 + $0x64] sm:$0xf]
      %v2546 = vld [vmem:[%s2519 + $0x68] sm:$0xf]
      %v2547 = vld [vmem:[%s2519 + $0x6c] sm:$0xf]
      %v2548 = vld [vmem:[%s2519 + $0x70] sm:$0xf]
      %v2549 = vld [vmem:[%s2519 + $0x74] sm:$0xf]
      %v2550 = vld [vmem:[%s2519 + $0x78] sm:$0xf]
      %v2551 = vld [vmem:[%s2519 + $0x7c] sm:$0xf]
      %v2584 = vunpack.c.l.b16 %v2520
      %v2585 = vunpack.c.l.b16 %v2521
      %v2586 = vunpack.c.l.b16 %v2522
      %v2587 = vunpack.c.l.b16 %v2523
      %v2588 = vunpack.c.l.b16 %v2524
      %v2589 = vunpack.c.l.b16 %v2525
      %v2590 = vunpack.c.l.b16 %v2526
      %v2591 = vunpack.c.l.b16 %v2527
      %v2592 = vunpack.c.l.b16 %v2528
      %v2593 = vunpack.c.l.b16 %v2529
      %v2594 = vunpack.c.l.b16 %v2530
      %v2595 = vunpack.c.l.b16 %v2531
      %v2596 = vunpack.c.l.b16 %v2532
      %v2597 = vunpack.c.l.b16 %v2533
      %v2598 = vunpack.c.l.b16 %v2534
      %v2599 = vunpack.c.l.b16 %v2535
      %v2600 = vunpack.c.l.b16 %v2536
      %v2601 = vunpack.c.l.b16 %v2537
      %v2602 = vunpack.c.l.b16 %v2538
      %v2603 = vunpack.c.l.b16 %v2539
      %v2604 = vunpack.c.l.b16 %v2540
      %v2605 = vunpack.c.l.b16 %v2541
      %v2606 = vunpack.c.l.b16 %v2542
      %v2607 = vunpack.c.l.b16 %v2543
      %v2608 = vunpack.c.l.b16 %v2544
      %v2609 = vunpack.c.l.b16 %v2545
      %v2610 = vunpack.c.l.b16 %v2546
      %v2611 = vunpack.c.l.b16 %v2547
      %v2612 = vunpack.c.l.b16 %v2548
      %v2613 = vunpack.c.l.b16 %v2549
      %v2614 = vunpack.c.l.b16 %v2550
      %v2615 = vunpack.c.l.b16 %v2551
      %v2616 = vpack.c.b16 %v2585, %v2584
      %v2617 = vpack.c.b16 %v2587, %v2586
      %v2618 = vpack.c.b16 %v2589, %v2588
      %v2619 = vpack.c.b16 %v2591, %v2590
      %v2620 = vpack.c.b16 %v2593, %v2592
      %v2621 = vpack.c.b16 %v2595, %v2594
      %v2622 = vpack.c.b16 %v2597, %v2596
      %v2623 = vpack.c.b16 %v2599, %v2598
      %v2624 = vpack.c.b16 %v2601, %v2600
      %v2625 = vpack.c.b16 %v2603, %v2602
      %v2626 = vpack.c.b16 %v2605, %v2604
      %v2627 = vpack.c.b16 %v2607, %v2606
      %v2628 = vpack.c.b16 %v2609, %v2608
      %v2629 = vpack.c.b16 %v2611, %v2610
      %v2630 = vpack.c.b16 %v2613, %v2612
      %v2631 = vpack.c.b16 %v2615, %v2614
      %2648 = vmatpush.bf16.msra.mxu0 %v2623
      %2649 = vmatpush.bf16.msra.mxu0 %v2622
      %2650 = vmatpush.bf16.msra.mxu0 %v2621
      %2651 = vmatpush.bf16.msra.mxu0 %v2620
      %2652 = vmatpush.bf16.msra.mxu0 %v2619
      %2653 = vmatpush.bf16.msra.mxu0 %v2618
      %2654 = vmatpush.bf16.msra.mxu0 %v2617
      %2655 = vmatpush.bf16.msra.mxu0 %v2616
      %2656 = vmatmul.bf16.gmra.mxu0 %v1514
      %v2657 = vpop.f32.mrf.mxu0
      %v2658 = vadd.f32 0.0, %v2657
      %v2659 = vpop.f32.mrf.mxu0
      %v2660 = vadd.f32 0.0, %v2659
      %2661 = vdwg.mxu0
      %2662 = vmatpush.bf16.msra.mxu0 %v2631
      %2663 = vmatpush.bf16.msra.mxu0 %v2630
      %2664 = vmatpush.bf16.msra.mxu0 %v2629
      %2665 = vmatpush.bf16.msra.mxu0 %v2628
      %2666 = vmatpush.bf16.msra.mxu0 %v2627
      %2667 = vmatpush.bf16.msra.mxu0 %v2626
      %2668 = vmatpush.bf16.msra.mxu0 %v2625
      %2669 = vmatpush.bf16.msra.mxu0 %v2624
      %2670 = vmatmul.bf16.gmra.mxu0 %v1531
      %v2671 = vpop.f32.mrf.mxu0
      %v2672 = vadd.f32 %v2658, %v2671
      %v2673 = vpop.f32.mrf.mxu0
      %v2674 = vadd.f32 %v2660, %v2673
      %2675 = vdwg.mxu0
      %v2676 = vadd.f32 %v2515, %v2672
      %v2677 = vadd.f32 %v2517, %v2674
      %s2678 = scalar_lea.vmem %s5, 2
      %v2679 = vld [vmem:[%s2678] sm:$0x1]
      %v2681 = vperm.slane %v2679, 0
      %v2683 = vadd.f32 %v2676, %v2681
      %v2684 = vadd.f32 %v2677, %v2681
      %v2685 = vadd.f32 %v561, %v563
      %v2686 = vrot.slane %v2685, 4
      %v2687 = vadd.f32 %v2685, %v2686
      %v2688 = vrot.slane %v2687, 2
      %v2689 = vadd.f32 %v2687, %v2688
      %v2690 = vrot.slane %v2689, 1
      %v2691 = vadd.f32 %v2689, %v2690
      %v2692 = vld [vmem:[%s6] sm:$0xff]
      %v2693 = vld [vmem:[%s6 + $0x8] sm:$0xff]
      %v2694 = vld [vmem:[%s6 + $0x10] sm:$0xff]
      %v2695 = vld [vmem:[%s6 + $0x18] sm:$0xff]
      %v2696 = vld [vmem:[%s6 + $0x20] sm:$0xff]
      %v2697 = vld [vmem:[%s6 + $0x28] sm:$0xff]
      %v2698 = vld [vmem:[%s6 + $0x30] sm:$0xff]
      %v2699 = vld [vmem:[%s6 + $0x38] sm:$0xff]
      %v2700 = vld [vmem:[%s6 + $0x40] sm:$0xff]
      %v2701 = vld [vmem:[%s6 + $0x48] sm:$0xff]
      %v2702 = vld [vmem:[%s6 + $0x50] sm:$0xff]
      %v2703 = vld [vmem:[%s6 + $0x58] sm:$0xff]
      %v2704 = vld [vmem:[%s6 + $0x60] sm:$0xff]
      %v2705 = vld [vmem:[%s6 + $0x68] sm:$0xff]
      %v2706 = vld [vmem:[%s6 + $0x70] sm:$0xff]
      %v2707 = vld [vmem:[%s6 + $0x78] sm:$0xff]
      %v2708 = vadd.f32 %v2204, %v2205
      %v2709 = vrot.slane %v2708, 4
      %v2710 = vadd.f32 %v2708, %v2709
      %v2711 = vrot.slane %v2710, 2
      %v2712 = vadd.f32 %v2710, %v2711
      %v2713 = vrot.slane %v2712, 1
      %v2714 = vadd.f32 %v2712, %v2713
      %s2715 = scalar_lea.vmem %s6, 128
      %v2716 = vld [vmem:[%s2715] sm:$0xff]
      %v2717 = vld [vmem:[%s2715 + $0x8] sm:$0xff]
      %v2718 = vld [vmem:[%s2715 + $0x10] sm:$0xff]
      %v2719 = vld [vmem:[%s2715 + $0x18] sm:$0xff]
      %v2720 = vld [vmem:[%s2715 + $0x20] sm:$0xff]
      %v2721 = vld [vmem:[%s2715 + $0x28] sm:$0xff]
      %v2722 = vld [vmem:[%s2715 + $0x30] sm:$0xff]
      %v2723 = vld [vmem:[%s2715 + $0x38] sm:$0xff]
      %v2724 = vld [vmem:[%s2715 + $0x40] sm:$0xff]
      %v2725 = vld [vmem:[%s2715 + $0x48] sm:$0xff]
      %v2726 = vld [vmem:[%s2715 + $0x50] sm:$0xff]
      %v2727 = vld [vmem:[%s2715 + $0x58] sm:$0xff]
      %v2728 = vld [vmem:[%s2715 + $0x60] sm:$0xff]
      %v2729 = vld [vmem:[%s2715 + $0x68] sm:$0xff]
      %v2730 = vld [vmem:[%s2715 + $0x70] sm:$0xff]
      %v2731 = vld [vmem:[%s2715 + $0x78] sm:$0xff]
      %2732 = vmatpush.msra.mxu0 %v2731
      %2733 = vmatpush.msra.mxu0 %v2730
      %2734 = vmatpush.msra.mxu0 %v2729
      %2735 = vmatpush.msra.mxu0 %v2728
      %2736 = vmatpush.msra.mxu0 %v2727
      %2737 = vmatpush.msra.mxu0 %v2726
      %2738 = vmatpush.msra.mxu0 %v2725
      %2739 = vmatpush.msra.mxu0 %v2724
      %2740 = vmatpush.msra.mxu0 %v2723
      %2741 = vmatpush.msra.mxu0 %v2722
      %2742 = vmatpush.msra.mxu0 %v2721
      %2743 = vmatpush.msra.mxu0 %v2720
      %2744 = vmatpush.msra.mxu0 %v2719
      %2745 = vmatpush.msra.mxu0 %v2718
      %2746 = vmatpush.msra.mxu0 %v2717
      %2747 = vmatpush.msra.mxu0 %v2716
      %2748 = vmatmul.f32.gmra.mxu0 %v2714
      %v2749 = vpop.f32.mrf.mxu0
      %v2750 = vadd.f32 0.0, %v2749
      %2751 = vdwg.mxu0
      %2752 = vmatpush.msra.mxu0 %v2707
      %2753 = vmatpush.msra.mxu0 %v2706
      %2754 = vmatpush.msra.mxu0 %v2705
      %2755 = vmatpush.msra.mxu0 %v2704
      %2756 = vmatpush.msra.mxu0 %v2703
      %2757 = vmatpush.msra.mxu0 %v2702
      %2758 = vmatpush.msra.mxu0 %v2701
      %2759 = vmatpush.msra.mxu0 %v2700
      %2760 = vmatpush.msra.mxu0 %v2699
      %2761 = vmatpush.msra.mxu0 %v2698
      %2762 = vmatpush.msra.mxu0 %v2697
      %2763 = vmatpush.msra.mxu0 %v2696
      %2764 = vmatpush.msra.mxu0 %v2695
      %2765 = vmatpush.msra.mxu0 %v2694
      %2766 = vmatpush.msra.mxu0 %v2693
      %2767 = vmatpush.msra.mxu0 %v2692
      %2768 = vmatmul.f32.gmra.mxu0 %v2691
      %v2769 = vpop.f32.mrf.mxu0
      %v2770 = vadd.f32 %v2750, %v2769
      %2771 = vdwg.mxu0
      %v2772 = vadd.f32 %v2683, %v2684
      %v2773 = vrot.slane %v2772, 4
      %v2774 = vadd.f32 %v2772, %v2773
      %v2775 = vrot.slane %v2774, 2
      %v2776 = vadd.f32 %v2774, %v2775
      %v2777 = vrot.slane %v2776, 1
      %v2778 = vadd.f32 %v2776, %v2777
      %s2779 = scalar_lea.vmem %s6, 256
      %v2780 = vld [vmem:[%s2779] sm:$0xff]
      %v2781 = vld [vmem:[%s2779 + $0x8] sm:$0xff]
      %v2782 = vld [vmem:[%s2779 + $0x10] sm:$0xff]
      %v2783 = vld [vmem:[%s2779 + $0x18] sm:$0xff]
      %v2784 = vld [vmem:[%s2779 + $0x20] sm:$0xff]
      %v2785 = vld [vmem:[%s2779 + $0x28] sm:$0xff]
      %v2786 = vld [vmem:[%s2779 + $0x30] sm:$0xff]
      %v2787 = vld [vmem:[%s2779 + $0x38] sm:$0xff]
      %v2788 = vld [vmem:[%s2779 + $0x40] sm:$0xff]
      %v2789 = vld [vmem:[%s2779 + $0x48] sm:$0xff]
      %v2790 = vld [vmem:[%s2779 + $0x50] sm:$0xff]
      %v2791 = vld [vmem:[%s2779 + $0x58] sm:$0xff]
      %v2792 = vld [vmem:[%s2779 + $0x60] sm:$0xff]
      %v2793 = vld [vmem:[%s2779 + $0x68] sm:$0xff]
      %v2794 = vld [vmem:[%s2779 + $0x70] sm:$0xff]
      %v2795 = vld [vmem:[%s2779 + $0x78] sm:$0xff]
      %2796 = vmatpush.msra.mxu0 %v2795
      %2797 = vmatpush.msra.mxu0 %v2794
      %2798 = vmatpush.msra.mxu0 %v2793
      %2799 = vmatpush.msra.mxu0 %v2792
      %2800 = vmatpush.msra.mxu0 %v2791
      %2801 = vmatpush.msra.mxu0 %v2790
      %2802 = vmatpush.msra.mxu0 %v2789
      %2803 = vmatpush.msra.mxu0 %v2788
      %2804 = vmatpush.msra.mxu0 %v2787
      %2805 = vmatpush.msra.mxu0 %v2786
      %2806 = vmatpush.msra.mxu0 %v2785
      %2807 = vmatpush.msra.mxu0 %v2784
      %2808 = vmatpush.msra.mxu0 %v2783
      %2809 = vmatpush.msra.mxu0 %v2782
      %2810 = vmatpush.msra.mxu0 %v2781
      %2811 = vmatpush.msra.mxu0 %v2780
      %2812 = vmatmul.f32.gmra.mxu0 %v2778
      %v2813 = vpop.f32.mrf.mxu0
      %v2814 = vadd.f32 0.0, %v2813
      %2815 = vdwg.mxu0
      %v2816 = vadd.f32 %v2770, %v2814
      %v2817 = vxor.u32 %v2816, 2147483648
      %v2818 = vmul.f32 %v2817, 1.442695
      %v2819 = vpow.pop %v2818
      %v2820 = vadd.f32 %v2819, 1.0
      %v2821 = vrcp.pop %v2820
      %v2822 = vmul.f32 %v2820, %v2821
      %v2823 = vsub.f32 1.0, %v2822
      %v2824 = vmul.f32 %v2821, %v2823
      %v2825 = vadd.f32 %v2821, %v2824
      %vm2826 = vweird.f32 %v2820
      %vm2827 = vweird.f32 %v2821
      %vm2828 = vmor %vm2826, %vm2827
      %v2829 = vsel %vm2828, %v2821, %v2825
      %v2830 = vand.u32 2147483647, %v2820
      %vm2831 = vcmp.eq.f32.partialorder %v2830, 8.507059e+37
      %v2832 = vand.u32 %v2820, 2147483648
      %v2833 = vor.u32 1.1754944e-38, %v2832
      %v2834 = vsel %vm2831, %v2833, %v2829
      %v2835 = vmul.f32 1.0, %v2834
      %v2836 = vld [vmem:[%s7] sm:$0xff]
      %v2837 = vld [vmem:[%s7 + $0x8] sm:$0xff]
      %v2838 = vld [vmem:[%s7 + $0x10] sm:$0xff]
      %vm2839 = vcmask 195584
      %v2841 = vsel %vm2839, %v2835, 0
      %2843 = vmatpush.msra.mxu0 0.0
      %2844 = vmatpush.msra.mxu0 0.0
      %2845 = vmatpush.msra.mxu0 0.0
      %2846 = vmatpush.msra.mxu0 0.0
      %2847 = vmatpush.msra.mxu0 0.0
      %2848 = vmatpush.msra.mxu0 0.0
      %2849 = vmatpush.msra.mxu0 0.0
      %2850 = vmatpush.msra.mxu0 0.0
      %2851 = vmatpush.msra.mxu0 0.0
      %2852 = vmatpush.msra.mxu0 0.0
      %2853 = vmatpush.msra.mxu0 0.0
      %2854 = vmatpush.msra.mxu0 0.0
      %2855 = vmatpush.msra.mxu0 0.0
      %2856 = vmatpush.msra.mxu0 %v2838
      %2857 = vmatpush.msra.mxu0 %v2837
      %2858 = vmatpush.msra.mxu0 %v2836
      %2859 = vmatmul.f32.gmra.mxu0 %v2841
      %v2860 = vpop.f32.mrf.mxu0
      %v2861 = vadd.f32 0.0, %v2860
      %2862 = vdwg.mxu0
      %v2863 = vperm.slane %v2861, 0
      %v2864 = vmul.f32 %v561, %v2863
      %v2865 = vmul.f32 %v563, %v2863
      %v2866 = vpack.c.bf16 %v2865, %v2864
      %v2867 = vld [vmem:[%s8] sm:$0xf]
      %v2868 = vld [vmem:[%s8 + $0x4] sm:$0xf]
      %v2869 = vld [vmem:[%s8 + $0x8] sm:$0xf]
      %v2870 = vld [vmem:[%s8 + $0xc] sm:$0xf]
      %v2871 = vld [vmem:[%s8 + $0x10] sm:$0xf]
      %v2872 = vld [vmem:[%s8 + $0x14] sm:$0xf]
      %v2873 = vld [vmem:[%s8 + $0x18] sm:$0xf]
      %v2874 = vld [vmem:[%s8 + $0x1c] sm:$0xf]
      %v2875 = vld [vmem:[%s8 + $0x20] sm:$0xf]
      %v2876 = vld [vmem:[%s8 + $0x24] sm:$0xf]
      %v2877 = vld [vmem:[%s8 + $0x28] sm:$0xf]
      %v2878 = vld [vmem:[%s8 + $0x2c] sm:$0xf]
      %v2879 = vld [vmem:[%s8 + $0x30] sm:$0xf]
      %v2880 = vld [vmem:[%s8 + $0x34] sm:$0xf]
      %v2881 = vld [vmem:[%s8 + $0x38] sm:$0xf]
      %v2882 = vld [vmem:[%s8 + $0x3c] sm:$0xf]
      %s2883 = scalar_lea.vmem %s7, 24
      %v2884 = vld [vmem:[%s2883] sm:$0xff]
      %v2885 = vld [vmem:[%s2883 + $0x8] sm:$0xff]
      %v2886 = vld [vmem:[%s2883 + $0x10] sm:$0xff]
      %2887 = vmatpush.msra.mxu0 0.0
      %2888 = vmatpush.msra.mxu0 0.0
      %2889 = vmatpush.msra.mxu0 0.0
      %2890 = vmatpush.msra.mxu0 0.0
      %2891 = vmatpush.msra.mxu0 0.0
      %2892 = vmatpush.msra.mxu0 0.0
      %2893 = vmatpush.msra.mxu0 0.0
      %2894 = vmatpush.msra.mxu0 0.0
      %2895 = vmatpush.msra.mxu0 0.0
      %2896 = vmatpush.msra.mxu0 0.0
      %2897 = vmatpush.msra.mxu0 0.0
      %2898 = vmatpush.msra.mxu0 0.0
      %2899 = vmatpush.msra.mxu0 0.0
      %2900 = vmatpush.msra.mxu0 %v2886
      %2901 = vmatpush.msra.mxu0 %v2885
      %2902 = vmatpush.msra.mxu0 %v2884
      %2903 = vmatmul.f32.gmra.mxu0 %v2841
      %v2904 = vpop.f32.mrf.mxu0
      %v2905 = vadd.f32 0.0, %v2904
      %2906 = vdwg.mxu0
      %v2907 = vperm.slane %v2905, 0
      %v2908 = vmul.f32 %v2204, %v2907
      %v2909 = vmul.f32 %v2205, %v2907
      %v2910 = vpack.c.bf16 %v2909, %v2908
      %s2911 = scalar_lea.vmem %s8, 64
      %v2912 = vld [vmem:[%s2911] sm:$0xf]
      %v2913 = vld [vmem:[%s2911 + $0x4] sm:$0xf]
      %v2914 = vld [vmem:[%s2911 + $0x8] sm:$0xf]
      %v2915 = vld [vmem:[%s2911 + $0xc] sm:$0xf]
      %v2916 = vld [vmem:[%s2911 + $0x10] sm:$0xf]
      %v2917 = vld [vmem:[%s2911 + $0x14] sm:$0xf]
      %v2918 = vld [vmem:[%s2911 + $0x18] sm:$0xf]
      %v2919 = vld [vmem:[%s2911 + $0x1c] sm:$0xf]
      %v2920 = vld [vmem:[%s2911 + $0x20] sm:$0xf]
      %v2921 = vld [vmem:[%s2911 + $0x24] sm:$0xf]
      %v2922 = vld [vmem:[%s2911 + $0x28] sm:$0xf]
      %v2923 = vld [vmem:[%s2911 + $0x2c] sm:$0xf]
      %v2924 = vld [vmem:[%s2911 + $0x30] sm:$0xf]
      %v2925 = vld [vmem:[%s2911 + $0x34] sm:$0xf]
      %v2926 = vld [vmem:[%s2911 + $0x38] sm:$0xf]
      %v2927 = vld [vmem:[%s2911 + $0x3c] sm:$0xf]
      %v2944 = vunpack.c.l.b16 %v2912
      %v2945 = vunpack.c.l.b16 %v2913
      %v2946 = vunpack.c.l.b16 %v2914
      %v2947 = vunpack.c.l.b16 %v2915
      %v2948 = vunpack.c.l.b16 %v2916
      %v2949 = vunpack.c.l.b16 %v2917
      %v2950 = vunpack.c.l.b16 %v2918
      %v2951 = vunpack.c.l.b16 %v2919
      %v2952 = vunpack.c.l.b16 %v2920
      %v2953 = vunpack.c.l.b16 %v2921
      %v2954 = vunpack.c.l.b16 %v2922
      %v2955 = vunpack.c.l.b16 %v2923
      %v2956 = vunpack.c.l.b16 %v2924
      %v2957 = vunpack.c.l.b16 %v2925
      %v2958 = vunpack.c.l.b16 %v2926
      %v2959 = vunpack.c.l.b16 %v2927
      %v2960 = vpack.c.b16 %v2945, %v2944
      %v2961 = vpack.c.b16 %v2947, %v2946
      %v2962 = vpack.c.b16 %v2949, %v2948
      %v2963 = vpack.c.b16 %v2951, %v2950
      %v2964 = vpack.c.b16 %v2953, %v2952
      %v2965 = vpack.c.b16 %v2955, %v2954
      %v2966 = vpack.c.b16 %v2957, %v2956
      %v2967 = vpack.c.b16 %v2959, %v2958
      %2976 = vmatpush.bf16.msra.mxu0 %v2967
      %2977 = vmatpush.bf16.msra.mxu0 %v2966
      %2978 = vmatpush.bf16.msra.mxu0 %v2965
      %2979 = vmatpush.bf16.msra.mxu0 %v2964
      %2980 = vmatpush.bf16.msra.mxu0 %v2963
      %2981 = vmatpush.bf16.msra.mxu0 %v2962
      %2982 = vmatpush.bf16.msra.mxu0 %v2961
      %2983 = vmatpush.bf16.msra.mxu0 %v2960
      %2984 = vmatmul.bf16.gmra.mxu0 %v2910
      %v2985 = vpop.f32.mrf.mxu0
      %v2986 = vadd.f32 0.0, %v2985
      %v2987 = vpop.f32.mrf.mxu0
      %v2988 = vadd.f32 0.0, %v2987
      %2989 = vdwg.mxu0
      %v3006 = vunpack.c.l.b16 %v2867
      %v3007 = vunpack.c.l.b16 %v2868
      %v3008 = vunpack.c.l.b16 %v2869
      %v3009 = vunpack.c.l.b16 %v2870
      %v3010 = vunpack.c.l.b16 %v2871
      %v3011 = vunpack.c.l.b16 %v2872
      %v3012 = vunpack.c.l.b16 %v2873
      %v3013 = vunpack.c.l.b16 %v2874
      %v3014 = vunpack.c.l.b16 %v2875
      %v3015 = vunpack.c.l.b16 %v2876
      %v3016 = vunpack.c.l.b16 %v2877
      %v3017 = vunpack.c.l.b16 %v2878
      %v3018 = vunpack.c.l.b16 %v2879
      %v3019 = vunpack.c.l.b16 %v2880
      %v3020 = vunpack.c.l.b16 %v2881
      %v3021 = vunpack.c.l.b16 %v2882
      %v3022 = vpack.c.b16 %v3007, %v3006
      %v3023 = vpack.c.b16 %v3009, %v3008
      %v3024 = vpack.c.b16 %v3011, %v3010
      %v3025 = vpack.c.b16 %v3013, %v3012
      %v3026 = vpack.c.b16 %v3015, %v3014
      %v3027 = vpack.c.b16 %v3017, %v3016
      %v3028 = vpack.c.b16 %v3019, %v3018
      %v3029 = vpack.c.b16 %v3021, %v3020
      %3038 = vmatpush.bf16.msra.mxu0 %v3029
      %3039 = vmatpush.bf16.msra.mxu0 %v3028
      %3040 = vmatpush.bf16.msra.mxu0 %v3027
      %3041 = vmatpush.bf16.msra.mxu0 %v3026
      %3042 = vmatpush.bf16.msra.mxu0 %v3025
      %3043 = vmatpush.bf16.msra.mxu0 %v3024
      %3044 = vmatpush.bf16.msra.mxu0 %v3023
      %3045 = vmatpush.bf16.msra.mxu0 %v3022
      %3046 = vmatmul.bf16.gmra.mxu0 %v2866
      %v3047 = vpop.f32.mrf.mxu0
      %v3048 = vadd.f32 %v2986, %v3047
      %v3049 = vpop.f32.mrf.mxu0
      %v3050 = vadd.f32 %v2988, %v3049
      %3051 = vdwg.mxu0
      %s3052 = scalar_lea.vmem %s7, 48
      %v3053 = vld [vmem:[%s3052] sm:$0xff]
      %v3054 = vld [vmem:[%s3052 + $0x8] sm:$0xff]
      %v3055 = vld [vmem:[%s3052 + $0x10] sm:$0xff]
      %3056 = vmatpush.msra.mxu0 0.0
      %3057 = vmatpush.msra.mxu0 0.0
      %3058 = vmatpush.msra.mxu0 0.0
      %3059 = vmatpush.msra.mxu0 0.0
      %3060 = vmatpush.msra.mxu0 0.0
      %3061 = vmatpush.msra.mxu0 0.0
      %3062 = vmatpush.msra.mxu0 0.0
      %3063 = vmatpush.msra.mxu0 0.0
      %3064 = vmatpush.msra.mxu0 0.0
      %3065 = vmatpush.msra.mxu0 0.0
      %3066 = vmatpush.msra.mxu0 0.0
      %3067 = vmatpush.msra.mxu0 0.0
      %3068 = vmatpush.msra.mxu0 0.0
      %3069 = vmatpush.msra.mxu0 %v3055
      %3070 = vmatpush.msra.mxu0 %v3054
      %3071 = vmatpush.msra.mxu0 %v3053
      %3072 = vmatmul.f32.gmra.mxu0 %v2841
      %v3073 = vpop.f32.mrf.mxu0
      %v3074 = vadd.f32 0.0, %v3073
      %3075 = vdwg.mxu0
      %v3076 = vperm.slane %v3074, 0
      %v3077 = vmul.f32 %v2683, %v3076
      %v3078 = vmul.f32 %v2684, %v3076
      %v3079 = vpack.c.bf16 %v3078, %v3077
      %s3080 = scalar_lea.vmem %s8, 128
      %v3081 = vld [vmem:[%s3080] sm:$0xf]
      %v3082 = vld [vmem:[%s3080 + $0x4] sm:$0xf]
      %v3083 = vld [vmem:[%s3080 + $0x8] sm:$0xf]
      %v3084 = vld [vmem:[%s3080 + $0xc] sm:$0xf]
      %v3085 = vld [vmem:[%s3080 + $0x10] sm:$0xf]
      %v3086 = vld [vmem:[%s3080 + $0x14] sm:$0xf]
      %v3087 = vld [vmem:[%s3080 + $0x18] sm:$0xf]
      %v3088 = vld [vmem:[%s3080 + $0x1c] sm:$0xf]
      %v3089 = vld [vmem:[%s3080 + $0x20] sm:$0xf]
      %v3090 = vld [vmem:[%s3080 + $0x24] sm:$0xf]
      %v3091 = vld [vmem:[%s3080 + $0x28] sm:$0xf]
      %v3092 = vld [vmem:[%s3080 + $0x2c] sm:$0xf]
      %v3093 = vld [vmem:[%s3080 + $0x30] sm:$0xf]
      %v3094 = vld [vmem:[%s3080 + $0x34] sm:$0xf]
      %v3095 = vld [vmem:[%s3080 + $0x38] sm:$0xf]
      %v3096 = vld [vmem:[%s3080 + $0x3c] sm:$0xf]
      %v3113 = vunpack.c.l.b16 %v3081
      %v3114 = vunpack.c.l.b16 %v3082
      %v3115 = vunpack.c.l.b16 %v3083
      %v3116 = vunpack.c.l.b16 %v3084
      %v3117 = vunpack.c.l.b16 %v3085
      %v3118 = vunpack.c.l.b16 %v3086
      %v3119 = vunpack.c.l.b16 %v3087
      %v3120 = vunpack.c.l.b16 %v3088
      %v3121 = vunpack.c.l.b16 %v3089
      %v3122 = vunpack.c.l.b16 %v3090
      %v3123 = vunpack.c.l.b16 %v3091
      %v3124 = vunpack.c.l.b16 %v3092
      %v3125 = vunpack.c.l.b16 %v3093
      %v3126 = vunpack.c.l.b16 %v3094
      %v3127 = vunpack.c.l.b16 %v3095
      %v3128 = vunpack.c.l.b16 %v3096
      %v3129 = vpack.c.b16 %v3114, %v3113
      %v3130 = vpack.c.b16 %v3116, %v3115
      %v3131 = vpack.c.b16 %v3118, %v3117
      %v3132 = vpack.c.b16 %v3120, %v3119
      %v3133 = vpack.c.b16 %v3122, %v3121
      %v3134 = vpack.c.b16 %v3124, %v3123
      %v3135 = vpack.c.b16 %v3126, %v3125
      %v3136 = vpack.c.b16 %v3128, %v3127
      %3145 = vmatpush.bf16.msra.mxu0 %v3136
      %3146 = vmatpush.bf16.msra.mxu0 %v3135
      %3147 = vmatpush.bf16.msra.mxu0 %v3134
      %3148 = vmatpush.bf16.msra.mxu0 %v3133
      %3149 = vmatpush.bf16.msra.mxu0 %v3132
      %3150 = vmatpush.bf16.msra.mxu0 %v3131
      %3151 = vmatpush.bf16.msra.mxu0 %v3130
      %3152 = vmatpush.bf16.msra.mxu0 %v3129
      %3153 = vmatmul.bf16.gmra.mxu0 %v3079
      %v3154 = vpop.f32.mrf.mxu0
      %v3155 = vadd.f32 0.0, %v3154
      %v3156 = vpop.f32.mrf.mxu0
      %v3157 = vadd.f32 0.0, %v3156
      %3158 = vdwg.mxu0
      %v3159 = vadd.f32 %v3048, %v3155
      %v3160 = vadd.f32 %v3050, %v3157
      %v3161 = vld [vmem:[%s9] sm:$0x1]
      %v3163 = vperm.slane %v3161, 0
      %v3165 = vadd.f32 %v3159, %v3163
      %v3166 = vadd.f32 %v3160, %v3163
      %v3167 = vld [vmem:[%s374] sm:$0xff]
      %v3168 = vld [vmem:[%s374 + $0x8] sm:$0xff]
      %v3169 = vadd.f32 %v3167, %v3165
      %v3170 = vadd.f32 %v3168, %v3166
      %3171 = vst [vmem:[%s379] sm:$0xff] %v3169
      %3172 = vst [vmem:[%s379 + $0x8] sm:$0xff] %v3170
      %p3173 = scmp.lt.s32.totalorder %s21, 1
      %s3174 = scalar_select %p3173, %s21, 1
      %s3175 = smul.addr %s3174, 2
      %s3176 = smul.addr %s3175, 8
      %s3177 = scalar_lea.vmem %s10, %s3176
      // Predicated region
      $region61: #{acblock_pallas.1} parent=59 // pred_check
        %p3178 = pneg %p259
      $region62: #{acblock_pallas.1} parent=59 // pred_check_branch
        %3180 = sbr.rel (%p3178) target = $region64
      $region63: #{acblock_pallas.1} parent=59 // pred_region
        _
      $region64: #{acblock_pallas.1} parent=59 // pred_fallthru
        _
    $region60: #{acblock_pallas.1} parent=5 // pred_fallthru
      _
    %p3181 = scmp.le.s32.totalorder 2, %s16
    // Predicated region
    $region65: #{acblock_pallas.1} parent=5 // pred_check
      %p3182 = pneg %p3181
    $region66: #{acblock_pallas.1} parent=5 // pred_check_branch
      %3184 = sbr.rel (%p3182) target = $region68
    $region67: #{acblock_pallas.1} parent=5 // pred_region
      %s3185 = ssub.s32 %s16, 2
      // Predicated region
      $region69: #{acblock_pallas.1} parent=67 // pred_check
        %p3186 = pneg %p265
      $region70: #{acblock_pallas.1} parent=67 // pred_check_branch
        %3188 = sbr.rel (%p3186) target = $region72
      $region71: #{acblock_pallas.1} parent=67 // pred_region
        %p3189 = scmp.lt.s32.totalorder %s22, 1
        %s3190 = scalar_select %p3189, %s22, 1
        %s3191 = smul.addr %s3190, 2
        %s3192 = smul.addr %s3191, 8
        %s3193 = scalar_lea.vmem %s10, %s3192
      $region72: #{acblock_pallas.1} parent=67 // pred_fallthru
        _
    $region68: #{acblock_pallas.1} parent=5 // pred_fallthru
      _
  $region6: #{acblock_pallas.1} parent=0 // loop_footer
    %s20 = sadd.s32 1, %s16
  $region7: #{acblock_pallas.1} parent=0 // loop_footer_branch
    %15 = sbr.rel target = $region3
  $region8: #{acblock_pallas.1} parent=0 // loop_exit
    _

// kernel: tile.31
$region0: #{tile.31}
  #allocation0 [shape = 's32[1]{0}', space=sflag, size = 0x4, scoped, tag = 'scoped memory for tile.31']
  %s0 = inlined_call_operand.vmem [shape: f32[8], index: 0, kind: input, shape index: {}]
  %s1 = inlined_call_operand.vmem [shape: f32[16,8], index: 1, kind: output, shape index: {}]
  // Predicated region
  $region2: #{tile.31} parent=0 // pred_check
    _
  $region3: #{tile.31} parent=0 // pred_check_branch
    %3 = sbr.rel (0) target = $region5
  $region4: #{tile.31} parent=0 // pred_region
    _
  $region5: #{tile.31} parent=0 // pred_fallthru
    _
  %v4 = vld [vmem:[%s0] ss:$0 sm:$0xff]
  %5 = vst [vmem:[%s1] sm:$0xff] %v4
  %s6 = scalar_lea.vmem %s1, 8
  %7 = vst [vmem:[%s6] sm:$0xff] %v4

// kernel: tile.34
$region0: #{tile.34}
  %s0 = inlined_call_operand.vmem [shape: f32[16,8], index: 0, kind: input, shape index: {}]
  %s1 = inlined_call_operand.vmem [shape: f32[1,1,128], index: 1, kind: output, shape index: {}]
  $region1: #{tile.34} parent=0
    #allocation0 [shape = 'u8[4096]{0}', space=vmem, size = 0x1000, scoped, tag = 'scoped mem for output reshape']
    %v2 = vld [vmem:[%s0] sm:$0x1]
    %vm3 = vcmask 64512
    %4 = vst.msk [vmem:[#allocation0] sm:$0x1] %vm3, %v2
    %s5 = scalar_lea.vmem %s0, 15
    %v6 = vld [vmem:[%s5] sm:$0x1]
    %7 = vrot.lane.b32.xlu0 %v6, 120
    %v8 = vpop.permute.xlu0 %7
    %vm9 = vcmask 1048512
    %10 = vst.msk [vmem:[#allocation0] sm:$0x1] %vm9, %v8
    %s11 = scalar_lea.vmem %s0, 14
    %v12 = vld [vmem:[%s11] sm:$0x1]
    %13 = vrot.lane.b32.xlu0 %v12, 112
    %v14 = vpop.permute.xlu0 %13
    %vm15 = vcmask 982912
    %16 = vst.msk [vmem:[#allocation0] sm:$0x1] %vm15, %v14
    %s17 = scalar_lea.vmem %s0, 13
    %v18 = vld [vmem:[%s17] sm:$0x1]
    %19 = vrot.lane.b32.xlu0 %v18, 104
    %v20 = vpop.permute.xlu0 %19
    %vm21 = vcmask 917312
    %22 = vst.msk [vmem:[#allocation0] sm:$0x1] %vm21, %v20
    %s23 = scalar_lea.vmem %s0, 12
    %v24 = vld [vmem:[%s23] sm:$0x1]
    %25 = vrot.lane.b32.xlu0 %v24, 96
    %v26 = vpop.permute.xlu0 %25
    %vm27 = vcmask 851712
    %28 = vst.msk [vmem:[#allocation0] sm:$0x1] %vm27, %v26
    %s29 = scalar_lea.vmem %s0, 11
    %v30 = vld [vmem:[%s29] sm:$0x1]
    %31 = vrot.lane.b32.xlu0 %v30, 88
    %v32 = vpop.permute.xlu0 %31
    %vm33 = vcmask 786112
    %34 = vst.msk [vmem:[#allocation0] sm:$0x1] %vm33, %v32
    %s35 = scalar_lea.vmem %s0, 10
    %v36 = vld [vmem:[%s35] sm:$0x1]
    %37 = vrot.lane.b32.xlu0 %v36, 80
    %v38 = vpop.permute.xlu0 %37
    %vm39 = vcmask 720512
    %40 = vst.msk [vmem:[#allocation0] sm:$0x1] %vm39, %v38
    %s41 = scalar_lea.vmem %s0, 9
    %v42 = vld [vmem:[%s41] sm:$0x1]
    %43 = vrot.lane.b32.xlu0 %v42, 72
    %v44 = vpop.permute.xlu0 %43
    %vm45 = vcmask 654912
    %46 = vst.msk [vmem:[#allocation0] sm:$0x1] %vm45, %v44
    %s47 = scalar_lea.vmem %s0, 8
    %v48 = vld [vmem:[%s47] sm:$0x1]
    %49 = vrot.lane.b32.xlu0 %v48, 64
    %v50 = vpop.permute.xlu0 %49
    %vm51 = vcmask 589312
    %52 = vst.msk [vmem:[#allocation0] sm:$0x1] %vm51, %v50
    %s53 = scalar_lea.vmem %s0, 7
    %v54 = vld [vmem:[%s53] sm:$0x1]
    %55 = vrot.lane.b32.xlu0 %v54, 56
    %v56 = vpop.permute.xlu0 %55
    %vm57 = vcmask 523712
    %58 = vst.msk [vmem:[#allocation0] sm:$0x1] %vm57, %v56
    %s59 = scalar_lea.vmem %s0, 6
    %v60 = vld [vmem:[%s59] sm:$0x1]
    %61 = vrot.lane.b32.xlu0 %v60, 48
    %v62 = vpop.permute.xlu0 %61
    %vm63 = vcmask 458112
    %64 = vst.msk [vmem:[#allocation0] sm:$0x1] %vm63, %v62
    %s65 = scalar_lea.vmem %s0, 5
    %v66 = vld [vmem:[%s65] sm:$0x1]
    %67 = vrot.lane.b32.xlu0 %v66, 40
    %v68 = vpop.permute.xlu0 %67
    %vm69 = vcmask 392512
    %70 = vst.msk [vmem:[#allocation0] sm:$0x1] %vm69, %v68
    %s71 = scalar_lea.vmem %s0, 4
    %v72 = vld [vmem:[%s71] sm:$0x1]
    %73 = vrot.lane.b32.xlu0 %v72, 32
    %v74 = vpop.permute.xlu0 %73
    %vm75 = vcmask 326912
    %76 = vst.msk [vmem:[#allocation0] sm:$0x1] %vm75, %v74
    %s77 = scalar_lea.vmem %s0, 3
    %v78 = vld [vmem:[%s77] sm:$0x1]
    %79 = vrot.lane.b32.xlu0 %v78, 24
    %v80 = vpop.permute.xlu0 %79
    %vm81 = vcmask 261312
    %82 = vst.msk [vmem:[#allocation0] sm:$0x1] %vm81, %v80
    %s83 = scalar_lea.vmem %s0, 2
    %v84 = vld [vmem:[%s83] sm:$0x1]
    %85 = vrot.lane.b32.xlu0 %v84, 16
    %v86 = vpop.permute.xlu0 %85
    %vm87 = vcmask 195712
    %88 = vst.msk [vmem:[#allocation0] sm:$0x1] %vm87, %v86
    %s89 = scalar_lea.vmem %s0, 1
    %v90 = vld [vmem:[%s89] sm:$0x1]
    %91 = vrot.lane.b32.xlu0 %v90, 8
    %v92 = vpop.permute.xlu0 %91
    %vm93 = vcmask 130112
    %94 = vst.msk [vmem:[#allocation0] sm:$0x1] %vm93, %v92
    %s96 = ssub.s32 2, 1
    %v97 = vld [vmem:[#allocation0] sm:%s96]
    %s99 = ssub.s32 2, 1
    %100 = vst [vmem:[%s1] sm:%s99] %v97

// kernel: tile.39
$region0: #{tile.39}
  %s0 = inlined_call_operand.vmem [shape: f32[16,8], index: 0, kind: input, shape index: {}]
  %s1 = inlined_call_operand.vmem [shape: f32[1,128], index: 1, kind: output, shape index: {}]
  $region1: #{tile.39} parent=0
    #allocation0 [shape = 'u8[4096]{0}', space=vmem, size = 0x1000, scoped, tag = 'scoped mem for output reshape']
    %v2 = vld [vmem:[%s0] sm:$0x1]
    %vm3 = vcmask 64512
    %4 = vst.msk [vmem:[#allocation0] sm:$0x1] %vm3, %v2
    %s5 = scalar_lea.vmem %s0, 15
    %v6 = vld [vmem:[%s5] sm:$0x1]
    %7 = vrot.lane.b32.xlu0 %v6, 120
    %v8 = vpop.permute.xlu0 %7
    %vm9 = vcmask 1048512
    %10 = vst.msk [vmem:[#allocation0] sm:$0x1] %vm9, %v8
    %s11 = scalar_lea.vmem %s0, 14
    %v12 = vld [vmem:[%s11] sm:$0x1]
    %13 = vrot.lane.b32.xlu0 %v12, 112
    %v14 = vpop.permute.xlu0 %13
    %vm15 = vcmask 982912
    %16 = vst.msk [vmem:[#allocation0] sm:$0x1] %vm15, %v14
    %s17 = scalar_lea.vmem %s0, 13
    %v18 = vld [vmem:[%s17] sm:$0x1]
    %19 = vrot.lane.b32.xlu0 %v18, 104
    %v20 = vpop.permute.xlu0 %19
    %vm21 = vcmask 917312
    %22 = vst.msk [vmem:[#allocation0] sm:$0x1] %vm21, %v20
    %s23 = scalar_lea.vmem %s0, 12
    %v24 = vld [vmem:[%s23] sm:$0x1]
    %25 = vrot.lane.b32.xlu0 %v24, 96
    %v26 = vpop.permute.xlu0 %25
    %vm27 = vcmask 851712
    %28 = vst.msk [vmem:[#allocation0] sm:$0x1] %vm27, %v26
    %s29 = scalar_lea.vmem %s0, 11
    %v30 = vld [vmem:[%s29] sm:$0x1]
    %31 = vrot.lane.b32.xlu0 %v30, 88
    %v32 = vpop.permute.xlu0 %31
    %vm33 = vcmask 786112
    %34 = vst.msk [vmem:[#allocation0] sm:$0x1] %vm33, %v32
    %s35 = scalar_lea.vmem %s0, 10
    %v36 = vld [vmem:[%s35] sm:$0x1]
    %37 = vrot.lane.b32.xlu0 %v36, 80
    %v38 = vpop.permute.xlu0 %37
    %vm39 = vcmask 720512
    %40 = vst.msk [vmem:[#allocation0] sm:$0x1] %vm39, %v38
    %s41 = scalar_lea.vmem %s0, 9
    %v42 = vld [vmem:[%s41] sm:$0x1]
    %43 = vrot.lane.b32.xlu0 %v42, 72
    %v44 = vpop.permute.xlu0 %43
    %vm45 = vcmask 654912
    %46 = vst.msk [vmem:[#allocation0] sm:$0x1] %vm45, %v44
    %s47 = scalar_lea.vmem %s0, 8
    %v48 = vld [vmem:[%s47] sm:$0x1]
    %49 = vrot.lane.b32.xlu0 %v48, 64
    %v50 = vpop.permute.xlu0 %49
    %vm51 = vcmask 589312
    %52 = vst.msk [vmem:[#allocation0] sm:$0x1] %vm51, %v50
    %s53 = scalar_lea.vmem %s0, 7
    %v54 = vld [vmem:[%s53] sm:$0x1]
    %55 = vrot.lane.b32.xlu0 %v54, 56
    %v56 = vpop.permute.xlu0 %55
    %vm57 = vcmask 523712
    %58 = vst.msk [vmem:[#allocation0] sm:$0x1] %vm57, %v56
    %s59 = scalar_lea.vmem %s0, 6
    %v60 = vld [vmem:[%s59] sm:$0x1]
    %61 = vrot.lane.b32.xlu0 %v60, 48
    %v62 = vpop.permute.xlu0 %61
    %vm63 = vcmask 458112
    %64 = vst.msk [vmem:[#allocation0] sm:$0x1] %vm63, %v62
    %s65 = scalar_lea.vmem %s0, 5
    %v66 = vld [vmem:[%s65] sm:$0x1]
    %67 = vrot.lane.b32.xlu0 %v66, 40
    %v68 = vpop.permute.xlu0 %67
    %vm69 = vcmask 392512
    %70 = vst.msk [vmem:[#allocation0] sm:$0x1] %vm69, %v68
    %s71 = scalar_lea.vmem %s0, 4
    %v72 = vld [vmem:[%s71] sm:$0x1]
    %73 = vrot.lane.b32.xlu0 %v72, 32
    %v74 = vpop.permute.xlu0 %73
    %vm75 = vcmask 326912
    %76 = vst.msk [vmem:[#allocation0] sm:$0x1] %vm75, %v74
    %s77 = scalar_lea.vmem %s0, 3
    %v78 = vld [vmem:[%s77] sm:$0x1]
    %79 = vrot.lane.b32.xlu0 %v78, 24
    %v80 = vpop.permute.xlu0 %79
    %vm81 = vcmask 261312
    %82 = vst.msk [vmem:[#allocation0] sm:$0x1] %vm81, %v80
    %s83 = scalar_lea.vmem %s0, 2
    %v84 = vld [vmem:[%s83] sm:$0x1]
    %85 = vrot.lane.b32.xlu0 %v84, 16
    %v86 = vpop.permute.xlu0 %85
    %vm87 = vcmask 195712
    %88 = vst.msk [vmem:[#allocation0] sm:$0x1] %vm87, %v86
    %s89 = scalar_lea.vmem %s0, 1
    %v90 = vld [vmem:[%s89] sm:$0x1]
    %91 = vrot.lane.b32.xlu0 %v90, 8
    %v92 = vpop.permute.xlu0 %91
    %vm93 = vcmask 130112
    %94 = vst.msk [vmem:[#allocation0] sm:$0x1] %vm93, %v92
    %s96 = ssub.s32 2, 1
    %v97 = vld [vmem:[#allocation0] sm:%s96]
    %s99 = ssub.s32 2, 1
    %100 = vst [vmem:[%s1] sm:%s99] %v97

// kernel: acblock_pallas.1
$region0: #{acblock_pallas.1}
  #allocation0 [shape = 'u32[]', space=smem, size = 0x4, offset = 0x4, fixed_abs, tag = 'smem constant byte address 0x4 - core index']
  #allocation1 [shape = 'u32[72,128]{1,0:T(1,128)}', space=vmem, size = 0x9000, scoped, tag = 'internal scratch']
  %s0 = inlined_call_operand.vmem [shape: bf16[2,24,256], index: 0, kind: input, shape index: {}]
  %s1 = inlined_call_operand.vmem [shape: f32[2,16,128], index: 1, kind: input, shape index: {}, may-alias: {1,10}]
  %s2 = inlined_call_operand.vmem [shape: bf16[1,256,128], index: 2, kind: input, shape index: {}]
  %s3 = inlined_call_operand.vmem [shape: bf16[9,256,128], index: 3, kind: input, shape index: {}]
  %s4 = inlined_call_operand.vmem [shape: bf16[3,256,128], index: 4, kind: input, shape index: {}]
  %s5 = inlined_call_operand.vmem [shape: f32[3,1,128], index: 5, kind: input, shape index: {}]
  %s6 = inlined_call_operand.vmem [shape: f32[3,128,24], index: 6, kind: input, shape index: {}]
  %s7 = inlined_call_operand.vmem [shape: f32[3,24,128], index: 7, kind: input, shape index: {}]
  %s8 = inlined_call_operand.vmem [shape: bf16[3,128,128], index: 8, kind: input, shape index: {}]
  %s9 = inlined_call_operand.vmem [shape: f32[1,128], index: 9, kind: input, shape index: {}]
  %s10 = inlined_call_operand.vmem [shape: f32[2,16,128], index: 10, kind: output, shape index: {}, may-alias: {1,10}]
  %s11 = sld [smem:[#allocation0]]
  $region73: #{acblock_pallas.1} parent=0
    _
  %s13 = ssub.s32 1, %s11
  %s14 = scalar_select 0, %s13, %s11
  loop: start=0, step=1, limit=4
  $region2: #{acblock_pallas.1} parent=0 // loop_pre_header
    _
  $region3: #{acblock_pallas.1} parent=0 // loop_header
    %s16 = sphi 0, %s20
    %p17 = scmp.ge.s32.totalorder %s16, 4
    %s26 = sphi 0, %s28
    %s29 = sphi 0, %s26
    %s30 = sphi 0, %s29
    %s46 = sphi 0, %s30
    %s52 = sphi 0, %s54
    %s55 = sphi 0, %s52
    %s56 = sphi 0, %s55
    %s72 = sphi 0, %s56
    %s76 = sphi 0, %s76
    %s78 = sphi 0, %s76
    %s79 = sphi 0, %s78
    %s93 = sphi 0, %s79
    %s97 = sphi 0, %s97
    %s99 = sphi 0, %s97
    %s100 = sphi 0, %s99
    %s114 = sphi 0, %s100
    %s118 = sphi 0, %s118
    %s120 = sphi 0, %s118
    %s121 = sphi 0, %s120
    %s135 = sphi 0, %s121
    %s139 = sphi 0, %s139
    %s141 = sphi 0, %s139
    %s142 = sphi 0, %s141
    %s156 = sphi 0, %s142
    %s160 = sphi 0, %s160
    %s162 = sphi 0, %s160
    %s163 = sphi 0, %s162
    %s177 = sphi 0, %s163
    %s181 = sphi 0, %s181
    %s183 = sphi 0, %s181
    %s184 = sphi 0, %s183
    %s198 = sphi 0, %s184
    %s202 = sphi 0, %s202
    %s204 = sphi 0, %s202
    %s205 = sphi 0, %s204
    %s219 = sphi 0, %s205
    %s223 = sphi 0, %s223
    %s225 = sphi 0, %s223
    %s226 = sphi 0, %s225
    %s240 = sphi 0, %s226
    %s246 = sphi 0, %s248
    %s249 = sphi 0, %s246
    %s250 = sphi 0, %s249
    %s266 = sphi 0, %s250
  $region4: #{acblock_pallas.1} parent=0 // loop_header_branch
    %19 = sbr.rel (%p17) target = $region8
  $region5: #{acblock_pallas.1} parent=0 // loop_body
    %s21 = ssub.s32 %s16, 1
    %s22 = ssub.s32 %s16, 2
    %s23 = sadd.s32 %s16, 1
    %s24 = ssub.s32 %s16, %s23
    %p25 = scmp.eq.s32.totalorder %s24, 0
    %s27 = sadd.s32 %s26, 1
    %s28 = scalar_select %p25, %s26, %s27
    %p31 = pneg %p25
    %p32 = scmp.eq.s32.totalorder %s16, 1
    %p33 = por %p31, %p32
    %p34 = scmp.ne.s32.totalorder %s26, %s29
    %p35 = scmp.eq.s32.totalorder %s16, 0
    %p36 = por %p34, %p35
    %p37 = scmp.ne.s32.totalorder %s26, %s29
    %p38 = scmp.eq.s32.totalorder %s21, 1
    %p39 = por %p37, %p38
    %p40 = scmp.ne.s32.totalorder %s29, %s30
    %p41 = scmp.eq.s32.totalorder %s21, 0
    %p42 = por %p40, %p41
    %p43 = scmp.ne.s32.totalorder %s29, %s30
    %p44 = scmp.eq.s32.totalorder %s22, 1
    %p45 = por %p43, %p44
    %p47 = scmp.ne.s32.totalorder %s30, %s46
    %p48 = scmp.eq.s32.totalorder %s22, 0
    %p49 = por %p47, %p48
    %s50 = ssub.s32 %s16, %s23
    %p51 = scmp.eq.s32.totalorder %s50, 0
    %s53 = sadd.s32 %s52, 1
    %s54 = scalar_select %p51, %s52, %s53
    %p57 = pneg %p51
    %p58 = scmp.eq.s32.totalorder %s16, 1
    %p59 = por %p57, %p58
    %p60 = scmp.ne.s32.totalorder %s52, %s55
    %p61 = scmp.eq.s32.totalorder %s16, 0
    %p62 = por %p60, %p61
    %p63 = scmp.ne.s32.totalorder %s52, %s55
    %p64 = scmp.eq.s32.totalorder %s21, 1
    %p65 = por %p63, %p64
    %p66 = scmp.ne.s32.totalorder %s55, %s56
    %p67 = scmp.eq.s32.totalorder %s21, 0
    %p68 = por %p66, %p67
    %p69 = scmp.ne.s32.totalorder %s55, %s56
    %p70 = scmp.eq.s32.totalorder %s22, 1
    %p71 = por %p69, %p70
    %p73 = scmp.ne.s32.totalorder %s56, %s72
    %p74 = scmp.eq.s32.totalorder %s22, 0
    %p75 = por %p73, %p74
    %s77 = sadd.s32 %s76, 1
    %p80 = scmp.eq.s32.totalorder %s16, 1
    %p81 = scmp.ne.s32.totalorder %s76, %s78
    %p82 = scmp.eq.s32.totalorder %s16, 0
    %p83 = por %p81, %p82
    %p84 = scmp.ne.s32.totalorder %s76, %s78
    %p85 = scmp.eq.s32.totalorder %s21, 1
    %p86 = por %p84, %p85
    %p87 = scmp.ne.s32.totalorder %s78, %s79
    %p88 = scmp.eq.s32.totalorder %s21, 0
    %p89 = por %p87, %p88
    %p90 = scmp.ne.s32.totalorder %s78, %s79
    %p91 = scmp.eq.s32.totalorder %s22, 1
    %p92 = por %p90, %p91
    %p94 = scmp.ne.s32.totalorder %s79, %s93
    %p95 = scmp.eq.s32.totalorder %s22, 0
    %p96 = por %p94, %p95
    %s98 = sadd.s32 %s97, 1
    %p101 = scmp.eq.s32.totalorder %s16, 1
    %p102 = scmp.ne.s32.totalorder %s97, %s99
    %p103 = scmp.eq.s32.totalorder %s16, 0
    %p104 = por %p102, %p103
    %p105 = scmp.ne.s32.totalorder %s97, %s99
    %p106 = scmp.eq.s32.totalorder %s21, 1
    %p107 = por %p105, %p106
    %p108 = scmp.ne.s32.totalorder %s99, %s100
    %p109 = scmp.eq.s32.totalorder %s21, 0
    %p110 = por %p108, %p109
    %p111 = scmp.ne.s32.totalorder %s99, %s100
    %p112 = scmp.eq.s32.totalorder %s22, 1
    %p113 = por %p111, %p112
    %p115 = scmp.ne.s32.totalorder %s100, %s114
    %p116 = scmp.eq.s32.totalorder %s22, 0
    %p117 = por %p115, %p116
    %s119 = sadd.s32 %s118, 1
    %p122 = scmp.eq.s32.totalorder %s16, 1
    %p123 = scmp.ne.s32.totalorder %s118, %s120
    %p124 = scmp.eq.s32.totalorder %s16, 0
    %p125 = por %p123, %p124
    %p126 = scmp.ne.s32.totalorder %s118, %s120
    %p127 = scmp.eq.s32.totalorder %s21, 1
    %p128 = por %p126, %p127
    %p129 = scmp.ne.s32.totalorder %s120, %s121
    %p130 = scmp.eq.s32.totalorder %s21, 0
    %p131 = por %p129, %p130
    %p132 = scmp.ne.s32.totalorder %s120, %s121
    %p133 = scmp.eq.s32.totalorder %s22, 1
    %p134 = por %p132, %p133
    %p136 = scmp.ne.s32.totalorder %s121, %s135
    %p137 = scmp.eq.s32.totalorder %s22, 0
    %p138 = por %p136, %p137
    %s140 = sadd.s32 %s139, 1
    %p143 = scmp.eq.s32.totalorder %s16, 1
    %p144 = scmp.ne.s32.totalorder %s139, %s141
    %p145 = scmp.eq.s32.totalorder %s16, 0
    %p146 = por %p144, %p145
    %p147 = scmp.ne.s32.totalorder %s139, %s141
    %p148 = scmp.eq.s32.totalorder %s21, 1
    %p149 = por %p147, %p148
    %p150 = scmp.ne.s32.totalorder %s141, %s142
    %p151 = scmp.eq.s32.totalorder %s21, 0
    %p152 = por %p150, %p151
    %p153 = scmp.ne.s32.totalorder %s141, %s142
    %p154 = scmp.eq.s32.totalorder %s22, 1
    %p155 = por %p153, %p154
    %p157 = scmp.ne.s32.totalorder %s142, %s156
    %p158 = scmp.eq.s32.totalorder %s22, 0
    %p159 = por %p157, %p158
    %s161 = sadd.s32 %s160, 1
    %p164 = scmp.eq.s32.totalorder %s16, 1
    %p165 = scmp.ne.s32.totalorder %s160, %s162
    %p166 = scmp.eq.s32.totalorder %s16, 0
    %p167 = por %p165, %p166
    %p168 = scmp.ne.s32.totalorder %s160, %s162
    %p169 = scmp.eq.s32.totalorder %s21, 1
    %p170 = por %p168, %p169
    %p171 = scmp.ne.s32.totalorder %s162, %s163
    %p172 = scmp.eq.s32.totalorder %s21, 0
    %p173 = por %p171, %p172
    %p174 = scmp.ne.s32.totalorder %s162, %s163
    %p175 = scmp.eq.s32.totalorder %s22, 1
    %p176 = por %p174, %p175
    %p178 = scmp.ne.s32.totalorder %s163, %s177
    %p179 = scmp.eq.s32.totalorder %s22, 0
    %p180 = por %p178, %p179
    %s182 = sadd.s32 %s181, 1
    %p185 = scmp.eq.s32.totalorder %s16, 1
    %p186 = scmp.ne.s32.totalorder %s181, %s183
    %p187 = scmp.eq.s32.totalorder %s16, 0
    %p188 = por %p186, %p187
    %p189 = scmp.ne.s32.totalorder %s181, %s183
    %p190 = scmp.eq.s32.totalorder %s21, 1
    %p191 = por %p189, %p190
    %p192 = scmp.ne.s32.totalorder %s183, %s184
    %p193 = scmp.eq.s32.totalorder %s21, 0
    %p194 = por %p192, %p193
    %p195 = scmp.ne.s32.totalorder %s183, %s184
    %p196 = scmp.eq.s32.totalorder %s22, 1
    %p197 = por %p195, %p196
    %p199 = scmp.ne.s32.totalorder %s184, %s198
    %p200 = scmp.eq.s32.totalorder %s22, 0
    %p201 = por %p199, %p200
    %s203 = sadd.s32 %s202, 1
    %p206 = scmp.eq.s32.totalorder %s16, 1
    %p207 = scmp.ne.s32.totalorder %s202, %s204
    %p208 = scmp.eq.s32.totalorder %s16, 0
    %p209 = por %p207, %p208
    %p210 = scmp.ne.s32.totalorder %s202, %s204
    %p211 = scmp.eq.s32.totalorder %s21, 1
    %p212 = por %p210, %p211
    %p213 = scmp.ne.s32.totalorder %s204, %s205
    %p214 = scmp.eq.s32.totalorder %s21, 0
    %p215 = por %p213, %p214
    %p216 = scmp.ne.s32.totalorder %s204, %s205
    %p217 = scmp.eq.s32.totalorder %s22, 1
    %p218 = por %p216, %p217
    %p220 = scmp.ne.s32.totalorder %s205, %s219
    %p221 = scmp.eq.s32.totalorder %s22, 0
    %p222 = por %p220, %p221
    %s224 = sadd.s32 %s223, 1
    %p227 = scmp.eq.s32.totalorder %s16, 1
    %p228 = scmp.ne.s32.totalorder %s223, %s225
    %p229 = scmp.eq.s32.totalorder %s16, 0
    %p230 = por %p228, %p229
    %p231 = scmp.ne.s32.totalorder %s223, %s225
    %p232 = scmp.eq.s32.totalorder %s21, 1
    %p233 = por %p231, %p232
    %p234 = scmp.ne.s32.totalorder %s225, %s226
    %p235 = scmp.eq.s32.totalorder %s21, 0
    %p236 = por %p234, %p235
    %p237 = scmp.ne.s32.totalorder %s225, %s226
    %p238 = scmp.eq.s32.totalorder %s22, 1
    %p239 = por %p237, %p238
    %p241 = scmp.ne.s32.totalorder %s226, %s240
    %p242 = scmp.eq.s32.totalorder %s22, 0
    %p243 = por %p241, %p242
    %s244 = ssub.s32 %s16, %s23
    %p245 = scmp.eq.s32.totalorder %s244, 0
    %s247 = sadd.s32 %s246, 1
    %s248 = scalar_select %p245, %s246, %s247
    %p251 = pneg %p245
    %p252 = scmp.eq.s32.totalorder %s16, 1
    %p253 = por %p251, %p252
    %p254 = scmp.ne.s32.totalorder %s246, %s249
    %p255 = scmp.eq.s32.totalorder %s16, 0
    %p256 = por %p254, %p255
    %p257 = scmp.ne.s32.totalorder %s246, %s249
    %p258 = scmp.eq.s32.totalorder %s21, 1
    %p259 = por %p257, %p258
    %p260 = scmp.ne.s32.totalorder %s249, %s250
    %p261 = scmp.eq.s32.totalorder %s21, 0
    %p262 = por %p260, %p261
    %p263 = scmp.ne.s32.totalorder %s249, %s250
    %p264 = scmp.eq.s32.totalorder %s22, 1
    %p265 = por %p263, %p264
    %p267 = scmp.ne.s32.totalorder %s250, %s266
    %p268 = scmp.eq.s32.totalorder %s22, 0
    %p269 = por %p267, %p268
    %p270 = scmp.le.s32.totalorder 1, %s16
    %p271 = scmp.lt.s32.totalorder %s16, 3
    %p272 = pnand %p270, %p271
    %p273 = pneg %p272
    // Predicated region
    $region9: #{acblock_pallas.1} parent=5 // pred_check
      _
    $region10: #{acblock_pallas.1} parent=5 // pred_check_branch
      %275 = sbr.rel (%p272) target = $region12
    $region11: #{acblock_pallas.1} parent=5 // pred_region
      %s276 = ssub.s32 %s16, 1
      // Predicated region
      $region13: #{acblock_pallas.1} parent=11 // pred_check
        %p277 = pneg %p89
      $region14: #{acblock_pallas.1} parent=11 // pred_check_branch
        %279 = sbr.rel (%p277) target = $region16
      $region15: #{acblock_pallas.1} parent=11 // pred_region
        _
      $region16: #{acblock_pallas.1} parent=11 // pred_fallthru
        _
      // Predicated region
      $region17: #{acblock_pallas.1} parent=11 // pred_check
        %p280 = pneg %p110
      $region18: #{acblock_pallas.1} parent=11 // pred_check_branch
        %282 = sbr.rel (%p280) target = $region20
      $region19: #{acblock_pallas.1} parent=11 // pred_region
        _
      $region20: #{acblock_pallas.1} parent=11 // pred_fallthru
        _
      // Predicated region
      $region21: #{acblock_pallas.1} parent=11 // pred_check
        %p283 = pneg %p131
      $region22: #{acblock_pallas.1} parent=11 // pred_check_branch
        %285 = sbr.rel (%p283) target = $region24
      $region23: #{acblock_pallas.1} parent=11 // pred_region
        _
      $region24: #{acblock_pallas.1} parent=11 // pred_fallthru
        _
      // Predicated region
      $region25: #{acblock_pallas.1} parent=11 // pred_check
        %p286 = pneg %p152
      $region26: #{acblock_pallas.1} parent=11 // pred_check_branch
        %288 = sbr.rel (%p286) target = $region28
      $region27: #{acblock_pallas.1} parent=11 // pred_region
        _
      $region28: #{acblock_pallas.1} parent=11 // pred_fallthru
        _
      // Predicated region
      $region29: #{acblock_pallas.1} parent=11 // pred_check
        %p289 = pneg %p173
      $region30: #{acblock_pallas.1} parent=11 // pred_check_branch
        %291 = sbr.rel (%p289) target = $region32
      $region31: #{acblock_pallas.1} parent=11 // pred_region
        _
      $region32: #{acblock_pallas.1} parent=11 // pred_fallthru
        _
      // Predicated region
      $region33: #{acblock_pallas.1} parent=11 // pred_check
        %p292 = pneg %p194
      $region34: #{acblock_pallas.1} parent=11 // pred_check_branch
        %294 = sbr.rel (%p292) target = $region36
      $region35: #{acblock_pallas.1} parent=11 // pred_region
        _
      $region36: #{acblock_pallas.1} parent=11 // pred_fallthru
        _
      // Predicated region
      $region37: #{acblock_pallas.1} parent=11 // pred_check
        %p295 = pneg %p215
      $region38: #{acblock_pallas.1} parent=11 // pred_check_branch
        %297 = sbr.rel (%p295) target = $region40
      $region39: #{acblock_pallas.1} parent=11 // pred_region
        _
      $region40: #{acblock_pallas.1} parent=11 // pred_fallthru
        _
      // Predicated region
      $region41: #{acblock_pallas.1} parent=11 // pred_check
        %p298 = pneg %p236
      $region42: #{acblock_pallas.1} parent=11 // pred_check_branch
        %300 = sbr.rel (%p298) target = $region44
      $region43: #{acblock_pallas.1} parent=11 // pred_region
        _
      $region44: #{acblock_pallas.1} parent=11 // pred_fallthru
        _
    $region12: #{acblock_pallas.1} parent=5 // pred_fallthru
      _
    %p301 = scmp.lt.s32.totalorder %s16, 2
    // Predicated region
    $region45: #{acblock_pallas.1} parent=5 // pred_check
      %p302 = pneg %p301
    $region46: #{acblock_pallas.1} parent=5 // pred_check_branch
      %304 = sbr.rel (%p302) target = $region48
    $region47: #{acblock_pallas.1} parent=5 // pred_region
      // Predicated region
      $region49: #{acblock_pallas.1} parent=47 // pred_check
        %p305 = pneg %p36
      $region50: #{acblock_pallas.1} parent=47 // pred_check_branch
        %307 = sbr.rel (%p305) target = $region52
      $region51: #{acblock_pallas.1} parent=47 // pred_region
        %p308 = scmp.lt.s32.totalorder %s16, 1
        %s309 = scalar_select %p308, %s16, 1
        %s310 = smul.addr %s309, 6
        %s311 = smul.addr %s310, 4
        %s312 = scalar_lea.vmem %s0, %s311
      $region52: #{acblock_pallas.1} parent=47 // pred_fallthru
        _
      // Predicated region
      $region53: #{acblock_pallas.1} parent=47 // pred_check
        %p313 = pneg %p62
      $region54: #{acblock_pallas.1} parent=47 // pred_check_branch
        %315 = sbr.rel (%p313) target = $region56
      $region55: #{acblock_pallas.1} parent=47 // pred_region
        %p316 = scmp.lt.s32.totalorder %s16, 1
        %s317 = scalar_select %p316, %s16, 1
        %s318 = smul.addr %s317, 2
        %s319 = smul.addr %s318, 8
        %s320 = scalar_lea.vmem %s1, %s319
      $region56: #{acblock_pallas.1} parent=47 // pred_fallthru
        _
    $region48: #{acblock_pallas.1} parent=5 // pred_fallthru
      _
    %p321 = scmp.le.s32.totalorder 1, %s16
    %p322 = scmp.lt.s32.totalorder %s16, 3
    %p323 = pnand %p321, %p322
    %p324 = pneg %p323
    // Predicated region
    $region57: #{acblock_pallas.1} parent=5 // pred_check
      _
    $region58: #{acblock_pallas.1} parent=5 // pred_check_branch
      %326 = sbr.rel (%p323) target = $region60
    $region59: #{acblock_pallas.1} parent=5 // pred_region
      %s327 = ssub.s32 %s16, 1
      %p328 = scmp.lt.s32.totalorder %s21, 1
      %s329 = scalar_select %p328, %s21, 1
      %s330 = smul.addr %s329, 6
      %s331 = smul.addr %s330, 4
      %s332 = scalar_lea.vmem %s0, %s331
      %p333 = pneg %p42
      %p334 = pneg %p39
      %p335 = scmp.lt.s32.totalorder %s21, 1
      %s336 = scalar_select %p335, %s21, 1
      %s337 = smul.addr %s336, 2
      %s338 = smul.addr %s337, 8
      %s339 = scalar_lea.vmem %s1, %s338
      %p340 = pneg %p68
      %p341 = pneg %p65
      %p342 = pneg %p89
      %p343 = pneg %p86
      %p344 = pneg %p110
      %p345 = pneg %p107
      %p346 = pneg %p131
      %p347 = pneg %p128
      %p348 = pneg %p152
      %p349 = pneg %p149
      %p350 = pneg %p173
      %p351 = pneg %p170
      %p352 = pneg %p194
      %p353 = pneg %p191
      %p354 = pneg %p215
      %p355 = pneg %p212
      %p356 = pneg %p236
      %p357 = pneg %p233
      %p358 = pneg %p262
      %p359 = pneg %p259
      %p360 = scmp.lt.s32.totalorder %s21, 1
      %s361 = scalar_select %p360, %s21, 1
      %s362 = smul.addr %s361, 2
      %s363 = smul.addr %s362, 8
      %s364 = scalar_lea.vmem %s10, %s363
      %p365 = scmp.lt.s32.totalorder %s21, 1
      %s366 = scalar_select %p365, %s21, 1
      %s367 = smul.addr %s366, 6
      %s368 = smul.addr %s367, 4
      %s369 = scalar_lea.vmem %s0, %s368
      %p370 = scmp.lt.s32.totalorder %s21, 1
      %s371 = scalar_select %p370, %s21, 1
      %s372 = smul.addr %s371, 2
      %s373 = smul.addr %s372, 8
      %s374 = scalar_lea.vmem %s1, %s373
      %p375 = scmp.lt.s32.totalorder %s21, 1
      %s376 = scalar_select %p375, %s21, 1
      %s377 = smul.addr %s376, 2
      %s378 = smul.addr %s377, 8
      %s379 = scalar_lea.vmem %s10, %s378
      %v380 = vld [vmem:[%s369] sm:$0xcc]
      %v381 = vld [vmem:[%s369 + $0x8] sm:$0xff]
      %v382 = vld [vmem:[%s369 + $0x10] sm:$0x33]
      %v383 = vld [vmem:[%s2] sm:$0xf]
      %v384 = vld [vmem:[%s2 + $0x4] sm:$0xf]
      %v385 = vld [vmem:[%s2 + $0x8] sm:$0xf]
      %v386 = vld [vmem:[%s2 + $0xc] sm:$0xf]
      %v387 = vld [vmem:[%s2 + $0x10] sm:$0xf]
      %v388 = vld [vmem:[%s2 + $0x14] sm:$0xf]
      %v389 = vld [vmem:[%s2 + $0x18] sm:$0xf]
      %v390 = vld [vmem:[%s2 + $0x1c] sm:$0xf]
      %v391 = vld [vmem:[%s2 + $0x20] sm:$0xf]
      %v392 = vld [vmem:[%s2 + $0x24] sm:$0xf]
      %v393 = vld [vmem:[%s2 + $0x28] sm:$0xf]
      %v394 = vld [vmem:[%s2 + $0x2c] sm:$0xf]
      %v395 = vld [vmem:[%s2 + $0x30] sm:$0xf]
      %v396 = vld [vmem:[%s2 + $0x34] sm:$0xf]
      %v397 = vld [vmem:[%s2 + $0x38] sm:$0xf]
      %v398 = vld [vmem:[%s2 + $0x3c] sm:$0xf]
      %v399 = vld [vmem:[%s2 + $0x40] sm:$0xf]
      %v400 = vld [vmem:[%s2 + $0x44] sm:$0xf]
      %v401 = vld [vmem:[%s2 + $0x48] sm:$0xf]
      %v402 = vld [vmem:[%s2 + $0x4c] sm:$0xf]
      %v403 = vld [vmem:[%s2 + $0x50] sm:$0xf]
      %v404 = vld [vmem:[%s2 + $0x54] sm:$0xf]
      %v405 = vld [vmem:[%s2 + $0x58] sm:$0xf]
      %v406 = vld [vmem:[%s2 + $0x5c] sm:$0xf]
      %v407 = vld [vmem:[%s2 + $0x60] sm:$0xf]
      %v408 = vld [vmem:[%s2 + $0x64] sm:$0xf]
      %v409 = vld [vmem:[%s2 + $0x68] sm:$0xf]
      %v410 = vld [vmem:[%s2 + $0x6c] sm:$0xf]
      %v411 = vld [vmem:[%s2 + $0x70] sm:$0xf]
      %v412 = vld [vmem:[%s2 + $0x74] sm:$0xf]
      %v413 = vld [vmem:[%s2 + $0x78] sm:$0xf]
      %v414 = vld [vmem:[%s2 + $0x7c] sm:$0xf]
      %v415 = vld [vmem:[%s5] sm:$0x1]
      %v417 = vperm.slane %v415, 0
      %v422 = vunpack.c.l.b16 %v380
      %v423 = vunpack.c.h.b16 %v380
      %v424 = vunpack.c.l.b16 %v381
      %v425 = vunpack.c.h.b16 %v381
      %v426 = vunpack.c.l.b16 %v382
      %v427 = vunpack.c.h.b16 %v382
      %v428 = vpack.c.b16 %v424, %v422
      %v429 = vpack.c.b16 %v425, %v423
      %v430 = vpack.c.b16 %v426, %v426
      %v431 = vpack.c.b16 %v427, %v427
      %vm432 = vcmask 1045504
      %v433 = vrot.slane %v428, 2
      %v434 = vrot.slane %v430, 2
      %v435 = vsel %vm432, %v433, %v434
      %v436 = vrot.slane %v429, 2
      %v437 = vrot.slane %v431, 2
      %v438 = vsel %vm432, %v436, %v437
      %v473 = vunpack.c.l.b16 %v383
      %v474 = vunpack.c.l.b16 %v384
      %v475 = vunpack.c.l.b16 %v385
      %v476 = vunpack.c.l.b16 %v386
      %v477 = vunpack.c.l.b16 %v387
      %v478 = vunpack.c.l.b16 %v388
      %v479 = vunpack.c.l.b16 %v389
      %v480 = vunpack.c.l.b16 %v390
      %v481 = vunpack.c.l.b16 %v391
      %v482 = vunpack.c.l.b16 %v392
      %v483 = vunpack.c.l.b16 %v393
      %v484 = vunpack.c.l.b16 %v394
      %v485 = vunpack.c.l.b16 %v395
      %v486 = vunpack.c.l.b16 %v396
      %v487 = vunpack.c.l.b16 %v397
      %v488 = vunpack.c.l.b16 %v398
      %v489 = vunpack.c.l.b16 %v399
      %v490 = vunpack.c.l.b16 %v400
      %v491 = vunpack.c.l.b16 %v401
      %v492 = vunpack.c.l.b16 %v402
      %v493 = vunpack.c.l.b16 %v403
      %v494 = vunpack.c.l.b16 %v404
      %v495 = vunpack.c.l.b16 %v405
      %v496 = vunpack.c.l.b16 %v406
      %v497 = vunpack.c.l.b16 %v407
      %v498 = vunpack.c.l.b16 %v408
      %v499 = vunpack.c.l.b16 %v409
      %v500 = vunpack.c.l.b16 %v410
      %v501 = vunpack.c.l.b16 %v411
      %v502 = vunpack.c.l.b16 %v412
      %v503 = vunpack.c.l.b16 %v413
      %v504 = vunpack.c.l.b16 %v414
      %v505 = vpack.c.b16 %v474, %v473
      %v506 = vpack.c.b16 %v476, %v475
      %v507 = vpack.c.b16 %v478, %v477
      %v508 = vpack.c.b16 %v480, %v479
      %v509 = vpack.c.b16 %v482, %v481
      %v510 = vpack.c.b16 %v484, %v483
      %v511 = vpack.c.b16 %v486, %v485
      %v512 = vpack.c.b16 %v488, %v487
      %v513 = vpack.c.b16 %v490, %v489
      %v514 = vpack.c.b16 %v492, %v491
      %v515 = vpack.c.b16 %v494, %v493
      %v516 = vpack.c.b16 %v496, %v495
      %v517 = vpack.c.b16 %v498, %v497
      %v518 = vpack.c.b16 %v500, %v499
      %v519 = vpack.c.b16 %v502, %v501
      %v520 = vpack.c.b16 %v504, %v503
      %537 = vmatpush.bf16.msra.mxu0 %v512
      %538 = vmatpush.bf16.msra.mxu0 %v511
      %539 = vmatpush.bf16.msra.mxu0 %v510
      %540 = vmatpush.bf16.msra.mxu0 %v509
      %541 = vmatpush.bf16.msra.mxu0 %v508
      %542 = vmatpush.bf16.msra.mxu0 %v507
      %543 = vmatpush.bf16.msra.mxu0 %v506
      %544 = vmatpush.bf16.msra.mxu0 %v505
      %545 = vmatmul.bf16.gmra.mxu0 %v435
      %v546 = vpop.f32.mrf.mxu0
      %v547 = vadd.f32 %v417, %v546
      %v548 = vpop.f32.mrf.mxu0
      %v549 = vadd.f32 %v417, %v548
      %550 = vdwg.mxu0
      %551 = vmatpush.bf16.msra.mxu0 %v520
      %552 = vmatpush.bf16.msra.mxu0 %v519
      %553 = vmatpush.bf16.msra.mxu0 %v518
      %554 = vmatpush.bf16.msra.mxu0 %v517
      %555 = vmatpush.bf16.msra.mxu0 %v516
      %556 = vmatpush.bf16.msra.mxu0 %v515
      %557 = vmatpush.bf16.msra.mxu0 %v514
      %558 = vmatpush.bf16.msra.mxu0 %v513
      %559 = vmatmul.bf16.gmra.mxu0 %v438
      %v560 = vpop.f32.mrf.mxu0
      %v561 = vadd.f32 %v547, %v560
      %v562 = vpop.f32.mrf.mxu0
      %v563 = vadd.f32 %v549, %v562
      %564 = vdwg.mxu0
      %v565 = vld [vmem:[%s369] sm:$0xff]
      %v566 = vld [vmem:[%s369 + $0x8] sm:$0xff]
      %v567 = vld [vmem:[%s3] sm:$0xf]
      %v568 = vld [vmem:[%s3 + $0x4] sm:$0xf]
      %v569 = vld [vmem:[%s3 + $0x8] sm:$0xf]
      %v570 = vld [vmem:[%s3 + $0xc] sm:$0xf]
      %v571 = vld [vmem:[%s3 + $0x10] sm:$0xf]
      %v572 = vld [vmem:[%s3 + $0x14] sm:$0xf]
      %v573 = vld [vmem:[%s3 + $0x18] sm:$0xf]
      %v574 = vld [vmem:[%s3 + $0x1c] sm:$0xf]
      %v575 = vld [vmem:[%s3 + $0x20] sm:$0xf]
      %v576 = vld [vmem:[%s3 + $0x24] sm:$0xf]
      %v577 = vld [vmem:[%s3 + $0x28] sm:$0xf]
      %v578 = vld [vmem:[%s3 + $0x2c] sm:$0xf]
      %v579 = vld [vmem:[%s3 + $0x30] sm:$0xf]
      %v580 = vld [vmem:[%s3 + $0x34] sm:$0xf]
      %v581 = vld [vmem:[%s3 + $0x38] sm:$0xf]
      %v582 = vld [vmem:[%s3 + $0x3c] sm:$0xf]
      %v583 = vld [vmem:[%s3 + $0x40] sm:$0xf]
      %v584 = vld [vmem:[%s3 + $0x44] sm:$0xf]
      %v585 = vld [vmem:[%s3 + $0x48] sm:$0xf]
      %v586 = vld [vmem:[%s3 + $0x4c] sm:$0xf]
      %v587 = vld [vmem:[%s3 + $0x50] sm:$0xf]
      %v588 = vld [vmem:[%s3 + $0x54] sm:$0xf]
      %v589 = vld [vmem:[%s3 + $0x58] sm:$0xf]
      %v590 = vld [vmem:[%s3 + $0x5c] sm:$0xf]
      %v591 = vld [vmem:[%s3 + $0x60] sm:$0xf]
      %v592 = vld [vmem:[%s3 + $0x64] sm:$0xf]
      %v593 = vld [vmem:[%s3 + $0x68] sm:$0xf]
      %v594 = vld [vmem:[%s3 + $0x6c] sm:$0xf]
      %v595 = vld [vmem:[%s3 + $0x70] sm:$0xf]
      %v596 = vld [vmem:[%s3 + $0x74] sm:$0xf]
      %v597 = vld [vmem:[%s3 + $0x78] sm:$0xf]
      %v598 = vld [vmem:[%s3 + $0x7c] sm:$0xf]
      %v599 = vld [vmem:[%s369] sm:$0xff]
      %v600 = vld [vmem:[%s369 + $0x10] sm:$0x11]
      %s601 = scalar_lea.vmem %s3, 128
      %v602 = vld [vmem:[%s601] sm:$0xf]
      %v603 = vld [vmem:[%s601 + $0x4] sm:$0xf]
      %v604 = vld [vmem:[%s601 + $0x8] sm:$0xf]
      %v605 = vld [vmem:[%s601 + $0xc] sm:$0xf]
      %v606 = vld [vmem:[%s601 + $0x10] sm:$0xf]
      %v607 = vld [vmem:[%s601 + $0x14] sm:$0xf]
      %v608 = vld [vmem:[%s601 + $0x18] sm:$0xf]
      %v609 = vld [vmem:[%s601 + $0x1c] sm:$0xf]
      %v610 = vld [vmem:[%s601 + $0x20] sm:$0xf]
      %v611 = vld [vmem:[%s601 + $0x24] sm:$0xf]
      %v612 = vld [vmem:[%s601 + $0x28] sm:$0xf]
      %v613 = vld [vmem:[%s601 + $0x2c] sm:$0xf]
      %v614 = vld [vmem:[%s601 + $0x30] sm:$0xf]
      %v615 = vld [vmem:[%s601 + $0x34] sm:$0xf]
      %v616 = vld [vmem:[%s601 + $0x38] sm:$0xf]
      %v617 = vld [vmem:[%s601 + $0x3c] sm:$0xf]
      %v618 = vld [vmem:[%s601 + $0x40] sm:$0xf]
      %v619 = vld [vmem:[%s601 + $0x44] sm:$0xf]
      %v620 = vld [vmem:[%s601 + $0x48] sm:$0xf]
      %v621 = vld [vmem:[%s601 + $0x4c] sm:$0xf]
      %v622 = vld [vmem:[%s601 + $0x50] sm:$0xf]
      %v623 = vld [vmem:[%s601 + $0x54] sm:$0xf]
      %v624 = vld [vmem:[%s601 + $0x58] sm:$0xf]
      %v625 = vld [vmem:[%s601 + $0x5c] sm:$0xf]
      %v626 = vld [vmem:[%s601 + $0x60] sm:$0xf]
      %v627 = vld [vmem:[%s601 + $0x64] sm:$0xf]
      %v628 = vld [vmem:[%s601 + $0x68] sm:$0xf]
      %v629 = vld [vmem:[%s601 + $0x6c] sm:$0xf]
      %v630 = vld [vmem:[%s601 + $0x70] sm:$0xf]
      %v631 = vld [vmem:[%s601 + $0x74] sm:$0xf]
      %v632 = vld [vmem:[%s601 + $0x78] sm:$0xf]
      %v633 = vld [vmem:[%s601 + $0x7c] sm:$0xf]
      %v636 = vunpack.c.l.b16 %v599
      %v637 = vunpack.c.h.b16 %v599
      %v638 = vunpack.c.l.b16 %v600
      %v639 = vunpack.c.h.b16 %v600
      %v640 = vpack.c.b16 %v424, %v636
      %v641 = vpack.c.b16 %v425, %v637
      %v642 = vpack.c.b16 %v638, %v638
      %v643 = vpack.c.b16 %v639, %v639
      %vm644 = vsmask.f32 7424
      %v646 = vshrl.u32 %v640, 16
      %v648 = vshll.u32 %v640, 16
      %v650 = vrot.slane %v648, 1
      %v651 = vor.u32 %v646, %v650
      %v653 = vshll.u32 %v642, 16
      %v655 = vrot.slane %v653, 1
      %v656 = vsel %vm644, %v651, %v655
      %v658 = vshrl.u32 %v641, 16
      %v660 = vshll.u32 %v641, 16
      %v662 = vrot.slane %v660, 1
      %v663 = vor.u32 %v658, %v662
      %v665 = vshll.u32 %v643, 16
      %v667 = vrot.slane %v665, 1
      %v668 = vsel %vm644, %v663, %v667
      %v703 = vunpack.c.l.b16 %v602
      %v704 = vunpack.c.l.b16 %v603
      %v705 = vunpack.c.l.b16 %v604
      %v706 = vunpack.c.l.b16 %v605
      %v707 = vunpack.c.l.b16 %v606
      %v708 = vunpack.c.l.b16 %v607
      %v709 = vunpack.c.l.b16 %v608
      %v710 = vunpack.c.l.b16 %v609
      %v711 = vunpack.c.l.b16 %v610
      %v712 = vunpack.c.l.b16 %v611
      %v713 = vunpack.c.l.b16 %v612
      %v714 = vunpack.c.l.b16 %v613
      %v715 = vunpack.c.l.b16 %v614
      %v716 = vunpack.c.l.b16 %v615
      %v717 = vunpack.c.l.b16 %v616
      %v718 = vunpack.c.l.b16 %v617
      %v719 = vunpack.c.l.b16 %v618
      %v720 = vunpack.c.l.b16 %v619
      %v721 = vunpack.c.l.b16 %v620
      %v722 = vunpack.c.l.b16 %v621
      %v723 = vunpack.c.l.b16 %v622
      %v724 = vunpack.c.l.b16 %v623
      %v725 = vunpack.c.l.b16 %v624
      %v726 = vunpack.c.l.b16 %v625
      %v727 = vunpack.c.l.b16 %v626
      %v728 = vunpack.c.l.b16 %v627
      %v729 = vunpack.c.l.b16 %v628
      %v730 = vunpack.c.l.b16 %v629
      %v731 = vunpack.c.l.b16 %v630
      %v732 = vunpack.c.l.b16 %v631
      %v733 = vunpack.c.l.b16 %v632
      %v734 = vunpack.c.l.b16 %v633
      %v735 = vpack.c.b16 %v704, %v703
      %v736 = vpack.c.b16 %v706, %v705
      %v737 = vpack.c.b16 %v708, %v707
      %v738 = vpack.c.b16 %v710, %v709
      %v739 = vpack.c.b16 %v712, %v711
      %v740 = vpack.c.b16 %v714, %v713
      %v741 = vpack.c.b16 %v716, %v715
      %v742 = vpack.c.b16 %v718, %v717
      %v743 = vpack.c.b16 %v720, %v719
      %v744 = vpack.c.b16 %v722, %v721
      %v745 = vpack.c.b16 %v724, %v723
      %v746 = vpack.c.b16 %v726, %v725
      %v747 = vpack.c.b16 %v728, %v727
      %v748 = vpack.c.b16 %v730, %v729
      %v749 = vpack.c.b16 %v732, %v731
      %v750 = vpack.c.b16 %v734, %v733
      %767 = vmatpush.bf16.msra.mxu0 %v742
      %768 = vmatpush.bf16.msra.mxu0 %v741
      %769 = vmatpush.bf16.msra.mxu0 %v740
      %770 = vmatpush.bf16.msra.mxu0 %v739
      %771 = vmatpush.bf16.msra.mxu0 %v738
      %772 = vmatpush.bf16.msra.mxu0 %v737
      %773 = vmatpush.bf16.msra.mxu0 %v736
      %774 = vmatpush.bf16.msra.mxu0 %v735
      %775 = vmatmul.bf16.gmra.mxu0 %v656
      %v776 = vpop.f32.mrf.mxu0
      %v777 = vadd.f32 0.0, %v776
      %v778 = vpop.f32.mrf.mxu0
      %v779 = vadd.f32 0.0, %v778
      %780 = vdwg.mxu0
      %781 = vmatpush.bf16.msra.mxu0 %v750
      %782 = vmatpush.bf16.msra.mxu0 %v749
      %783 = vmatpush.bf16.msra.mxu0 %v748
      %784 = vmatpush.bf16.msra.mxu0 %v747
      %785 = vmatpush.bf16.msra.mxu0 %v746
      %786 = vmatpush.bf16.msra.mxu0 %v745
      %787 = vmatpush.bf16.msra.mxu0 %v744
      %788 = vmatpush.bf16.msra.mxu0 %v743
      %789 = vmatmul.bf16.gmra.mxu0 %v668
      %v790 = vpop.f32.mrf.mxu0
      %v791 = vadd.f32 %v777, %v790
      %v792 = vpop.f32.mrf.mxu0
      %v793 = vadd.f32 %v779, %v792
      %794 = vdwg.mxu0
      %v797 = vunpack.c.l.b16 %v565
      %v798 = vunpack.c.h.b16 %v565
      %v799 = vunpack.c.l.b16 %v566
      %v800 = vunpack.c.h.b16 %v566
      %v801 = vpack.c.b16 %v799, %v797
      %v802 = vpack.c.b16 %v800, %v798
      %v837 = vunpack.c.l.b16 %v567
      %v838 = vunpack.c.l.b16 %v568
      %v839 = vunpack.c.l.b16 %v569
      %v840 = vunpack.c.l.b16 %v570
      %v841 = vunpack.c.l.b16 %v571
      %v842 = vunpack.c.l.b16 %v572
      %v843 = vunpack.c.l.b16 %v573
      %v844 = vunpack.c.l.b16 %v574
      %v845 = vunpack.c.l.b16 %v575
      %v846 = vunpack.c.l.b16 %v576
      %v847 = vunpack.c.l.b16 %v577
      %v848 = vunpack.c.l.b16 %v578
      %v849 = vunpack.c.l.b16 %v579
      %v850 = vunpack.c.l.b16 %v580
      %v851 = vunpack.c.l.b16 %v581
      %v852 = vunpack.c.l.b16 %v582
      %v853 = vunpack.c.l.b16 %v583
      %v854 = vunpack.c.l.b16 %v584
      %v855 = vunpack.c.l.b16 %v585
      %v856 = vunpack.c.l.b16 %v586
      %v857 = vunpack.c.l.b16 %v587
      %v858 = vunpack.c.l.b16 %v588
      %v859 = vunpack.c.l.b16 %v589
      %v860 = vunpack.c.l.b16 %v590
      %v861 = vunpack.c.l.b16 %v591
      %v862 = vunpack.c.l.b16 %v592
      %v863 = vunpack.c.l.b16 %v593
      %v864 = vunpack.c.l.b16 %v594
      %v865 = vunpack.c.l.b16 %v595
      %v866 = vunpack.c.l.b16 %v596
      %v867 = vunpack.c.l.b16 %v597
      %v868 = vunpack.c.l.b16 %v598
      %v869 = vpack.c.b16 %v838, %v837
      %v870 = vpack.c.b16 %v840, %v839
      %v871 = vpack.c.b16 %v842, %v841
      %v872 = vpack.c.b16 %v844, %v843
      %v873 = vpack.c.b16 %v846, %v845
      %v874 = vpack.c.b16 %v848, %v847
      %v875 = vpack.c.b16 %v850, %v849
      %v876 = vpack.c.b16 %v852, %v851
      %v877 = vpack.c.b16 %v854, %v853
      %v878 = vpack.c.b16 %v856, %v855
      %v879 = vpack.c.b16 %v858, %v857
      %v880 = vpack.c.b16 %v860, %v859
      %v881 = vpack.c.b16 %v862, %v861
      %v882 = vpack.c.b16 %v864, %v863
      %v883 = vpack.c.b16 %v866, %v865
      %v884 = vpack.c.b16 %v868, %v867
      %901 = vmatpush.bf16.msra.mxu0 %v876
      %902 = vmatpush.bf16.msra.mxu0 %v875
      %903 = vmatpush.bf16.msra.mxu0 %v874
      %904 = vmatpush.bf16.msra.mxu0 %v873
      %905 = vmatpush.bf16.msra.mxu0 %v872
      %906 = vmatpush.bf16.msra.mxu0 %v871
      %907 = vmatpush.bf16.msra.mxu0 %v870
      %908 = vmatpush.bf16.msra.mxu0 %v869
      %909 = vmatmul.bf16.gmra.mxu0 %v801
      %v910 = vpop.f32.mrf.mxu0
      %v911 = vadd.f32 %v791, %v910
      %v912 = vpop.f32.mrf.mxu0
      %v913 = vadd.f32 %v793, %v912
      %914 = vdwg.mxu0
      %915 = vmatpush.bf16.msra.mxu0 %v884
      %916 = vmatpush.bf16.msra.mxu0 %v883
      %917 = vmatpush.bf16.msra.mxu0 %v882
      %918 = vmatpush.bf16.msra.mxu0 %v881
      %919 = vmatpush.bf16.msra.mxu0 %v880
      %920 = vmatpush.bf16.msra.mxu0 %v879
      %921 = vmatpush.bf16.msra.mxu0 %v878
      %922 = vmatpush.bf16.msra.mxu0 %v877
      %923 = vmatmul.bf16.gmra.mxu0 %v802
      %v924 = vpop.f32.mrf.mxu0
      %v925 = vadd.f32 %v911, %v924
      %v926 = vpop.f32.mrf.mxu0
      %v927 = vadd.f32 %v913, %v926
      %928 = vdwg.mxu0
      %v929 = vld [vmem:[%s369] sm:$0xee]
      %s930 = scalar_lea.vmem %s3, 256
      %v931 = vld [vmem:[%s930] sm:$0xf]
      %v932 = vld [vmem:[%s930 + $0x4] sm:$0xf]
      %v933 = vld [vmem:[%s930 + $0x8] sm:$0xf]
      %v934 = vld [vmem:[%s930 + $0xc] sm:$0xf]
      %v935 = vld [vmem:[%s930 + $0x10] sm:$0xf]
      %v936 = vld [vmem:[%s930 + $0x14] sm:$0xf]
      %v937 = vld [vmem:[%s930 + $0x18] sm:$0xf]
      %v938 = vld [vmem:[%s930 + $0x1c] sm:$0xf]
      %v939 = vld [vmem:[%s930 + $0x20] sm:$0xf]
      %v940 = vld [vmem:[%s930 + $0x24] sm:$0xf]
      %v941 = vld [vmem:[%s930 + $0x28] sm:$0xf]
      %v942 = vld [vmem:[%s930 + $0x2c] sm:$0xf]
      %v943 = vld [vmem:[%s930 + $0x30] sm:$0xf]
      %v944 = vld [vmem:[%s930 + $0x34] sm:$0xf]
      %v945 = vld [vmem:[%s930 + $0x38] sm:$0xf]
      %v946 = vld [vmem:[%s930 + $0x3c] sm:$0xf]
      %v947 = vld [vmem:[%s930 + $0x40] sm:$0xf]
      %v948 = vld [vmem:[%s930 + $0x44] sm:$0xf]
      %v949 = vld [vmem:[%s930 + $0x48] sm:$0xf]
      %v950 = vld [vmem:[%s930 + $0x4c] sm:$0xf]
      %v951 = vld [vmem:[%s930 + $0x50] sm:$0xf]
      %v952 = vld [vmem:[%s930 + $0x54] sm:$0xf]
      %v953 = vld [vmem:[%s930 + $0x58] sm:$0xf]
      %v954 = vld [vmem:[%s930 + $0x5c] sm:$0xf]
      %v955 = vld [vmem:[%s930 + $0x60] sm:$0xf]
      %v956 = vld [vmem:[%s930 + $0x64] sm:$0xf]
      %v957 = vld [vmem:[%s930 + $0x68] sm:$0xf]
      %v958 = vld [vmem:[%s930 + $0x6c] sm:$0xf]
      %v959 = vld [vmem:[%s930 + $0x70] sm:$0xf]
      %v960 = vld [vmem:[%s930 + $0x74] sm:$0xf]
      %v961 = vld [vmem:[%s930 + $0x78] sm:$0xf]
      %v962 = vld [vmem:[%s930 + $0x7c] sm:$0xf]
      %v964 = vunpack.c.l.b16 %v929
      %v965 = vunpack.c.h.b16 %v929
      %v966 = vpack.c.b16 %v424, %v964
      %v967 = vpack.c.b16 %v425, %v965
      %vm968 = vcmask 1046528
      %v969 = vrot.slane %v966, 1
      %v970 = vrot.slane %v642, 1
      %v971 = vsel %vm968, %v969, %v970
      %v972 = vrot.slane %v967, 1
      %v973 = vrot.slane %v643, 1
      %v974 = vsel %vm968, %v972, %v973
      %v1009 = vunpack.c.l.b16 %v931
      %v1010 = vunpack.c.l.b16 %v932
      %v1011 = vunpack.c.l.b16 %v933
      %v1012 = vunpack.c.l.b16 %v934
      %v1013 = vunpack.c.l.b16 %v935
      %v1014 = vunpack.c.l.b16 %v936
      %v1015 = vunpack.c.l.b16 %v937
      %v1016 = vunpack.c.l.b16 %v938
      %v1017 = vunpack.c.l.b16 %v939
      %v1018 = vunpack.c.l.b16 %v940
      %v1019 = vunpack.c.l.b16 %v941
      %v1020 = vunpack.c.l.b16 %v942
      %v1021 = vunpack.c.l.b16 %v943
      %v1022 = vunpack.c.l.b16 %v944
      %v1023 = vunpack.c.l.b16 %v945
      %v1024 = vunpack.c.l.b16 %v946
      %v1025 = vunpack.c.l.b16 %v947
      %v1026 = vunpack.c.l.b16 %v948
      %v1027 = vunpack.c.l.b16 %v949
      %v1028 = vunpack.c.l.b16 %v950
      %v1029 = vunpack.c.l.b16 %v951
      %v1030 = vunpack.c.l.b16 %v952
      %v1031 = vunpack.c.l.b16 %v953
      %v1032 = vunpack.c.l.b16 %v954
      %v1033 = vunpack.c.l.b16 %v955
      %v1034 = vunpack.c.l.b16 %v956
      %v1035 = vunpack.c.l.b16 %v957
      %v1036 = vunpack.c.l.b16 %v958
      %v1037 = vunpack.c.l.b16 %v959
      %v1038 = vunpack.c.l.b16 %v960
      %v1039 = vunpack.c.l.b16 %v961
      %v1040 = vunpack.c.l.b16 %v962
      %v1041 = vpack.c.b16 %v1010, %v1009
      %v1042 = vpack.c.b16 %v1012, %v1011
      %v1043 = vpack.c.b16 %v1014, %v1013
      %v1044 = vpack.c.b16 %v1016, %v1015
      %v1045 = vpack.c.b16 %v1018, %v1017
      %v1046 = vpack.c.b16 %v1020, %v1019
      %v1047 = vpack.c.b16 %v1022, %v1021
      %v1048 = vpack.c.b16 %v1024, %v1023
      %v1049 = vpack.c.b16 %v1026, %v1025
      %v1050 = vpack.c.b16 %v1028, %v1027
      %v1051 = vpack.c.b16 %v1030, %v1029
      %v1052 = vpack.c.b16 %v1032, %v1031
      %v1053 = vpack.c.b16 %v1034, %v1033
      %v1054 = vpack.c.b16 %v1036, %v1035
      %v1055 = vpack.c.b16 %v1038, %v1037
      %v1056 = vpack.c.b16 %v1040, %v1039
      %1073 = vmatpush.bf16.msra.mxu0 %v1048
      %1074 = vmatpush.bf16.msra.mxu0 %v1047
      %1075 = vmatpush.bf16.msra.mxu0 %v1046
      %1076 = vmatpush.bf16.msra.mxu0 %v1045
      %1077 = vmatpush.bf16.msra.mxu0 %v1044
      %1078 = vmatpush.bf16.msra.mxu0 %v1043
      %1079 = vmatpush.bf16.msra.mxu0 %v1042
      %1080 = vmatpush.bf16.msra.mxu0 %v1041
      %1081 = vmatmul.bf16.gmra.mxu0 %v971
      %v1082 = vpop.f32.mrf.mxu0
      %v1083 = vadd.f32 0.0, %v1082
      %v1084 = vpop.f32.mrf.mxu0
      %v1085 = vadd.f32 0.0, %v1084
      %1086 = vdwg.mxu0
      %1087 = vmatpush.bf16.msra.mxu0 %v1056
      %1088 = vmatpush.bf16.msra.mxu0 %v1055
      %1089 = vmatpush.bf16.msra.mxu0 %v1054
      %1090 = vmatpush.bf16.msra.mxu0 %v1053
      %1091 = vmatpush.bf16.msra.mxu0 %v1052
      %1092 = vmatpush.bf16.msra.mxu0 %v1051
      %1093 = vmatpush.bf16.msra.mxu0 %v1050
      %1094 = vmatpush.bf16.msra.mxu0 %v1049
      %1095 = vmatmul.bf16.gmra.mxu0 %v974
      %v1096 = vpop.f32.mrf.mxu0
      %v1097 = vadd.f32 %v1083, %v1096
      %v1098 = vpop.f32.mrf.mxu0
      %v1099 = vadd.f32 %v1085, %v1098
      %1100 = vdwg.mxu0
      %v1101 = vadd.f32 %v925, %v1097
      %v1102 = vadd.f32 %v927, %v1099
      %s1103 = scalar_lea.vmem %s3, 384
      %v1104 = vld [vmem:[%s1103] sm:$0xf]
      %v1105 = vld [vmem:[%s1103 + $0x4] sm:$0xf]
      %v1106 = vld [vmem:[%s1103 + $0x8] sm:$0xf]
      %v1107 = vld [vmem:[%s1103 + $0xc] sm:$0xf]
      %v1108 = vld [vmem:[%s1103 + $0x10] sm:$0xf]
      %v1109 = vld [vmem:[%s1103 + $0x14] sm:$0xf]
      %v1110 = vld [vmem:[%s1103 + $0x18] sm:$0xf]
      %v1111 = vld [vmem:[%s1103 + $0x1c] sm:$0xf]
      %v1112 = vld [vmem:[%s1103 + $0x20] sm:$0xf]
      %v1113 = vld [vmem:[%s1103 + $0x24] sm:$0xf]
      %v1114 = vld [vmem:[%s1103 + $0x28] sm:$0xf]
      %v1115 = vld [vmem:[%s1103 + $0x2c] sm:$0xf]
      %v1116 = vld [vmem:[%s1103 + $0x30] sm:$0xf]
      %v1117 = vld [vmem:[%s1103 + $0x34] sm:$0xf]
      %v1118 = vld [vmem:[%s1103 + $0x38] sm:$0xf]
      %v1119 = vld [vmem:[%s1103 + $0x3c] sm:$0xf]
      %v1120 = vld [vmem:[%s1103 + $0x40] sm:$0xf]
      %v1121 = vld [vmem:[%s1103 + $0x44] sm:$0xf]
      %v1122 = vld [vmem:[%s1103 + $0x48] sm:$0xf]
      %v1123 = vld [vmem:[%s1103 + $0x4c] sm:$0xf]
      %v1124 = vld [vmem:[%s1103 + $0x50] sm:$0xf]
      %v1125 = vld [vmem:[%s1103 + $0x54] sm:$0xf]
      %v1126 = vld [vmem:[%s1103 + $0x58] sm:$0xf]
      %v1127 = vld [vmem:[%s1103 + $0x5c] sm:$0xf]
      %v1128 = vld [vmem:[%s1103 + $0x60] sm:$0xf]
      %v1129 = vld [vmem:[%s1103 + $0x64] sm:$0xf]
      %v1130 = vld [vmem:[%s1103 + $0x68] sm:$0xf]
      %v1131 = vld [vmem:[%s1103 + $0x6c] sm:$0xf]
      %v1132 = vld [vmem:[%s1103 + $0x70] sm:$0xf]
      %v1133 = vld [vmem:[%s1103 + $0x74] sm:$0xf]
      %v1134 = vld [vmem:[%s1103 + $0x78] sm:$0xf]
      %v1135 = vld [vmem:[%s1103 + $0x7c] sm:$0xf]
      %vm1136 = vsmask.f32 6400
      %v1138 = vshrl.u32 %v966, 16
      %v1140 = vrot.slane %v1138, 1
      %v1141 = vshll.u32 %v966, 16
      %v1143 = vrot.slane %v1141, 2
      %v1144 = vor.u32 %v1140, %v1143
      %v1146 = vshrl.u32 %v430, 16
      %v1148 = vrot.slane %v1146, 1
      %v1149 = vshll.u32 %v430, 16
      %v1151 = vrot.slane %v1149, 2
      %v1152 = vor.u32 %v1148, %v1151
      %v1153 = vsel %vm1136, %v1144, %v1152
      %v1155 = vshrl.u32 %v967, 16
      %v1157 = vrot.slane %v1155, 1
      %v1158 = vshll.u32 %v967, 16
      %v1160 = vrot.slane %v1158, 2
      %v1161 = vor.u32 %v1157, %v1160
      %v1163 = vshrl.u32 %v431, 16
      %v1165 = vrot.slane %v1163, 1
      %v1166 = vshll.u32 %v431, 16
      %v1168 = vrot.slane %v1166, 2
      %v1169 = vor.u32 %v1165, %v1168
      %v1170 = vsel %vm1136, %v1161, %v1169
      %v1205 = vunpack.c.l.b16 %v1104
      %v1206 = vunpack.c.l.b16 %v1105
      %v1207 = vunpack.c.l.b16 %v1106
      %v1208 = vunpack.c.l.b16 %v1107
      %v1209 = vunpack.c.l.b16 %v1108
      %v1210 = vunpack.c.l.b16 %v1109
      %v1211 = vunpack.c.l.b16 %v1110
      %v1212 = vunpack.c.l.b16 %v1111
      %v1213 = vunpack.c.l.b16 %v1112
      %v1214 = vunpack.c.l.b16 %v1113
      %v1215 = vunpack.c.l.b16 %v1114
      %v1216 = vunpack.c.l.b16 %v1115
      %v1217 = vunpack.c.l.b16 %v1116
      %v1218 = vunpack.c.l.b16 %v1117
      %v1219 = vunpack.c.l.b16 %v1118
      %v1220 = vunpack.c.l.b16 %v1119
      %v1221 = vunpack.c.l.b16 %v1120
      %v1222 = vunpack.c.l.b16 %v1121
      %v1223 = vunpack.c.l.b16 %v1122
      %v1224 = vunpack.c.l.b16 %v1123
      %v1225 = vunpack.c.l.b16 %v1124
      %v1226 = vunpack.c.l.b16 %v1125
      %v1227 = vunpack.c.l.b16 %v1126
      %v1228 = vunpack.c.l.b16 %v1127
      %v1229 = vunpack.c.l.b16 %v1128
      %v1230 = vunpack.c.l.b16 %v1129
      %v1231 = vunpack.c.l.b16 %v1130
      %v1232 = vunpack.c.l.b16 %v1131
      %v1233 = vunpack.c.l.b16 %v1132
      %v1234 = vunpack.c.l.b16 %v1133
      %v1235 = vunpack.c.l.b16 %v1134
      %v1236 = vunpack.c.l.b16 %v1135
      %v1237 = vpack.c.b16 %v1206, %v1205
      %v1238 = vpack.c.b16 %v1208, %v1207
      %v1239 = vpack.c.b16 %v1210, %v1209
      %v1240 = vpack.c.b16 %v1212, %v1211
      %v1241 = vpack.c.b16 %v1214, %v1213
      %v1242 = vpack.c.b16 %v1216, %v1215
      %v1243 = vpack.c.b16 %v1218, %v1217
      %v1244 = vpack.c.b16 %v1220, %v1219
      %v1245 = vpack.c.b16 %v1222, %v1221
      %v1246 = vpack.c.b16 %v1224, %v1223
      %v1247 = vpack.c.b16 %v1226, %v1225
      %v1248 = vpack.c.b16 %v1228, %v1227
      %v1249 = vpack.c.b16 %v1230, %v1229
      %v1250 = vpack.c.b16 %v1232, %v1231
      %v1251 = vpack.c.b16 %v1234, %v1233
      %v1252 = vpack.c.b16 %v1236, %v1235
      %1269 = vmatpush.bf16.msra.mxu0 %v1244
      %1270 = vmatpush.bf16.msra.mxu0 %v1243
      %1271 = vmatpush.bf16.msra.mxu0 %v1242
      %1272 = vmatpush.bf16.msra.mxu0 %v1241
      %1273 = vmatpush.bf16.msra.mxu0 %v1240
      %1274 = vmatpush.bf16.msra.mxu0 %v1239
      %1275 = vmatpush.bf16.msra.mxu0 %v1238
      %1276 = vmatpush.bf16.msra.mxu0 %v1237
      %1277 = vmatmul.bf16.gmra.mxu0 %v1153
      %v1278 = vpop.f32.mrf.mxu0
      %v1279 = vadd.f32 0.0, %v1278
      %v1280 = vpop.f32.mrf.mxu0
      %v1281 = vadd.f32 0.0, %v1280
      %1282 = vdwg.mxu0
      %1283 = vmatpush.bf16.msra.mxu0 %v1252
      %1284 = vmatpush.bf16.msra.mxu0 %v1251
      %1285 = vmatpush.bf16.msra.mxu0 %v1250
      %1286 = vmatpush.bf16.msra.mxu0 %v1249
      %1287 = vmatpush.bf16.msra.mxu0 %v1248
      %1288 = vmatpush.bf16.msra.mxu0 %v1247
      %1289 = vmatpush.bf16.msra.mxu0 %v1246
      %1290 = vmatpush.bf16.msra.mxu0 %v1245
      %1291 = vmatmul.bf16.gmra.mxu0 %v1170
      %v1292 = vpop.f32.mrf.mxu0
      %v1293 = vadd.f32 %v1279, %v1292
      %v1294 = vpop.f32.mrf.mxu0
      %v1295 = vadd.f32 %v1281, %v1294
      %1296 = vdwg.mxu0
      %v1297 = vadd.f32 %v1101, %v1293
      %v1298 = vadd.f32 %v1102, %v1295
      %s1299 = scalar_lea.vmem %s3, 512
      %v1300 = vld [vmem:[%s1299] sm:$0xf]
      %v1301 = vld [vmem:[%s1299 + $0x4] sm:$0xf]
      %v1302 = vld [vmem:[%s1299 + $0x8] sm:$0xf]
      %v1303 = vld [vmem:[%s1299 + $0xc] sm:$0xf]
      %v1304 = vld [vmem:[%s1299 + $0x10] sm:$0xf]
      %v1305 = vld [vmem:[%s1299 + $0x14] sm:$0xf]
      %v1306 = vld [vmem:[%s1299 + $0x18] sm:$0xf]
      %v1307 = vld [vmem:[%s1299 + $0x1c] sm:$0xf]
      %v1308 = vld [vmem:[%s1299 + $0x20] sm:$0xf]
      %v1309 = vld [vmem:[%s1299 + $0x24] sm:$0xf]
      %v1310 = vld [vmem:[%s1299 + $0x28] sm:$0xf]
      %v1311 = vld [vmem:[%s1299 + $0x2c] sm:$0xf]
      %v1312 = vld [vmem:[%s1299 + $0x30] sm:$0xf]
      %v1313 = vld [vmem:[%s1299 + $0x34] sm:$0xf]
      %v1314 = vld [vmem:[%s1299 + $0x38] sm:$0xf]
      %v1315 = vld [vmem:[%s1299 + $0x3c] sm:$0xf]
      %v1316 = vld [vmem:[%s1299 + $0x40] sm:$0xf]
      %v1317 = vld [vmem:[%s1299 + $0x44] sm:$0xf]
      %v1318 = vld [vmem:[%s1299 + $0x48] sm:$0xf]
      %v1319 = vld [vmem:[%s1299 + $0x4c] sm:$0xf]
      %v1320 = vld [vmem:[%s1299 + $0x50] sm:$0xf]
      %v1321 = vld [vmem:[%s1299 + $0x54] sm:$0xf]
      %v1322 = vld [vmem:[%s1299 + $0x58] sm:$0xf]
      %v1323 = vld [vmem:[%s1299 + $0x5c] sm:$0xf]
      %v1324 = vld [vmem:[%s1299 + $0x60] sm:$0xf]
      %v1325 = vld [vmem:[%s1299 + $0x64] sm:$0xf]
      %v1326 = vld [vmem:[%s1299 + $0x68] sm:$0xf]
      %v1327 = vld [vmem:[%s1299 + $0x6c] sm:$0xf]
      %v1328 = vld [vmem:[%s1299 + $0x70] sm:$0xf]
      %v1329 = vld [vmem:[%s1299 + $0x74] sm:$0xf]
      %v1330 = vld [vmem:[%s1299 + $0x78] sm:$0xf]
      %v1331 = vld [vmem:[%s1299 + $0x7c] sm:$0xf]
      %v1364 = vunpack.c.l.b16 %v1300
      %v1365 = vunpack.c.l.b16 %v1301
      %v1366 = vunpack.c.l.b16 %v1302
      %v1367 = vunpack.c.l.b16 %v1303
      %v1368 = vunpack.c.l.b16 %v1304
      %v1369 = vunpack.c.l.b16 %v1305
      %v1370 = vunpack.c.l.b16 %v1306
      %v1371 = vunpack.c.l.b16 %v1307
      %v1372 = vunpack.c.l.b16 %v1308
      %v1373 = vunpack.c.l.b16 %v1309
      %v1374 = vunpack.c.l.b16 %v1310
      %v1375 = vunpack.c.l.b16 %v1311
      %v1376 = vunpack.c.l.b16 %v1312
      %v1377 = vunpack.c.l.b16 %v1313
      %v1378 = vunpack.c.l.b16 %v1314
      %v1379 = vunpack.c.l.b16 %v1315
      %v1380 = vunpack.c.l.b16 %v1316
      %v1381 = vunpack.c.l.b16 %v1317
      %v1382 = vunpack.c.l.b16 %v1318
      %v1383 = vunpack.c.l.b16 %v1319
      %v1384 = vunpack.c.l.b16 %v1320
      %v1385 = vunpack.c.l.b16 %v1321
      %v1386 = vunpack.c.l.b16 %v1322
      %v1387 = vunpack.c.l.b16 %v1323
      %v1388 = vunpack.c.l.b16 %v1324
      %v1389 = vunpack.c.l.b16 %v1325
      %v1390 = vunpack.c.l.b16 %v1326
      %v1391 = vunpack.c.l.b16 %v1327
      %v1392 = vunpack.c.l.b16 %v1328
      %v1393 = vunpack.c.l.b16 %v1329
      %v1394 = vunpack.c.l.b16 %v1330
      %v1395 = vunpack.c.l.b16 %v1331
      %v1396 = vpack.c.b16 %v1365, %v1364
      %v1397 = vpack.c.b16 %v1367, %v1366
      %v1398 = vpack.c.b16 %v1369, %v1368
      %v1399 = vpack.c.b16 %v1371, %v1370
      %v1400 = vpack.c.b16 %v1373, %v1372
      %v1401 = vpack.c.b16 %v1375, %v1374
      %v1402 = vpack.c.b16 %v1377, %v1376
      %v1403 = vpack.c.b16 %v1379, %v1378
      %v1404 = vpack.c.b16 %v1381, %v1380
      %v1405 = vpack.c.b16 %v1383, %v1382
      %v1406 = vpack.c.b16 %v1385, %v1384
      %v1407 = vpack.c.b16 %v1387, %v1386
      %v1408 = vpack.c.b16 %v1389, %v1388
      %v1409 = vpack.c.b16 %v1391, %v1390
      %v1410 = vpack.c.b16 %v1393, %v1392
      %v1411 = vpack.c.b16 %v1395, %v1394
      %1428 = vmatpush.bf16.msra.mxu0 %v1403
      %1429 = vmatpush.bf16.msra.mxu0 %v1402
      %1430 = vmatpush.bf16.msra.mxu0 %v1401
      %1431 = vmatpush.bf16.msra.mxu0 %v1400
      %1432 = vmatpush.bf16.msra.mxu0 %v1399
      %1433 = vmatpush.bf16.msra.mxu0 %v1398
      %1434 = vmatpush.bf16.msra.mxu0 %v1397
      %1435 = vmatpush.bf16.msra.mxu0 %v1396
      %1436 = vmatmul.bf16.gmra.mxu0 %v435
      %v1437 = vpop.f32.mrf.mxu0
      %v1438 = vadd.f32 0.0, %v1437
      %v1439 = vpop.f32.mrf.mxu0
      %v1440 = vadd.f32 0.0, %v1439
      %1441 = vdwg.mxu0
      %1442 = vmatpush.bf16.msra.mxu0 %v1411
      %1443 = vmatpush.bf16.msra.mxu0 %v1410
      %1444 = vmatpush.bf16.msra.mxu0 %v1409
      %1445 = vmatpush.bf16.msra.mxu0 %v1408
      %1446 = vmatpush.bf16.msra.mxu0 %v1407
      %1447 = vmatpush.bf16.msra.mxu0 %v1406
      %1448 = vmatpush.bf16.msra.mxu0 %v1405
      %1449 = vmatpush.bf16.msra.mxu0 %v1404
      %1450 = vmatmul.bf16.gmra.mxu0 %v438
      %v1451 = vpop.f32.mrf.mxu0
      %v1452 = vadd.f32 %v1438, %v1451
      %v1453 = vpop.f32.mrf.mxu0
      %v1454 = vadd.f32 %v1440, %v1453
      %1455 = vdwg.mxu0
      %v1456 = vadd.f32 %v1297, %v1452
      %v1457 = vadd.f32 %v1298, %v1454
      %v1458 = vld [vmem:[%s369 + $0x10] sm:$0x77]
      %s1459 = scalar_lea.vmem %s3, 640
      %v1460 = vld [vmem:[%s1459] sm:$0xf]
      %v1461 = vld [vmem:[%s1459 + $0x4] sm:$0xf]
      %v1462 = vld [vmem:[%s1459 + $0x8] sm:$0xf]
      %v1463 = vld [vmem:[%s1459 + $0xc] sm:$0xf]
      %v1464 = vld [vmem:[%s1459 + $0x10] sm:$0xf]
      %v1465 = vld [vmem:[%s1459 + $0x14] sm:$0xf]
      %v1466 = vld [vmem:[%s1459 + $0x18] sm:$0xf]
      %v1467 = vld [vmem:[%s1459 + $0x1c] sm:$0xf]
      %v1468 = vld [vmem:[%s1459 + $0x20] sm:$0xf]
      %v1469 = vld [vmem:[%s1459 + $0x24] sm:$0xf]
      %v1470 = vld [vmem:[%s1459 + $0x28] sm:$0xf]
      %v1471 = vld [vmem:[%s1459 + $0x2c] sm:$0xf]
      %v1472 = vld [vmem:[%s1459 + $0x30] sm:$0xf]
      %v1473 = vld [vmem:[%s1459 + $0x34] sm:$0xf]
      %v1474 = vld [vmem:[%s1459 + $0x38] sm:$0xf]
      %v1475 = vld [vmem:[%s1459 + $0x3c] sm:$0xf]
      %v1476 = vld [vmem:[%s1459 + $0x40] sm:$0xf]
      %v1477 = vld [vmem:[%s1459 + $0x44] sm:$0xf]
      %v1478 = vld [vmem:[%s1459 + $0x48] sm:$0xf]
      %v1479 = vld [vmem:[%s1459 + $0x4c] sm:$0xf]
      %v1480 = vld [vmem:[%s1459 + $0x50] sm:$0xf]
      %v1481 = vld [vmem:[%s1459 + $0x54] sm:$0xf]
      %v1482 = vld [vmem:[%s1459 + $0x58] sm:$0xf]
      %v1483 = vld [vmem:[%s1459 + $0x5c] sm:$0xf]
      %v1484 = vld [vmem:[%s1459 + $0x60] sm:$0xf]
      %v1485 = vld [vmem:[%s1459 + $0x64] sm:$0xf]
      %v1486 = vld [vmem:[%s1459 + $0x68] sm:$0xf]
      %v1487 = vld [vmem:[%s1459 + $0x6c] sm:$0xf]
      %v1488 = vld [vmem:[%s1459 + $0x70] sm:$0xf]
      %v1489 = vld [vmem:[%s1459 + $0x74] sm:$0xf]
      %v1490 = vld [vmem:[%s1459 + $0x78] sm:$0xf]
      %v1491 = vld [vmem:[%s1459 + $0x7c] sm:$0xf]
      %v1493 = vunpack.c.l.b16 %v1458
      %v1494 = vunpack.c.h.b16 %v1458
      %v1495 = vpack.c.b16 %v1493, %v1493
      %v1496 = vpack.c.b16 %v1494, %v1494
      %vm1497 = vsmask.f32 5376
      %v1499 = vshrl.u32 %v428, 16
      %v1501 = vrot.slane %v1499, 2
      %v1502 = vshll.u32 %v428, 16
      %v1504 = vrot.slane %v1502, 3
      %v1505 = vor.u32 %v1501, %v1504
      %v1507 = vshrl.u32 %v1495, 16
      %v1509 = vrot.slane %v1507, 2
      %v1510 = vshll.u32 %v1495, 16
      %v1512 = vrot.slane %v1510, 3
      %v1513 = vor.u32 %v1509, %v1512
      %v1514 = vsel %vm1497, %v1505, %v1513
      %v1516 = vshrl.u32 %v429, 16
      %v1518 = vrot.slane %v1516, 2
      %v1519 = vshll.u32 %v429, 16
      %v1521 = vrot.slane %v1519, 3
      %v1522 = vor.u32 %v1518, %v1521
      %v1524 = vshrl.u32 %v1496, 16
      %v1526 = vrot.slane %v1524, 2
      %v1527 = vshll.u32 %v1496, 16
      %v1529 = vrot.slane %v1527, 3
      %v1530 = vor.u32 %v1526, %v1529
      %v1531 = vsel %vm1497, %v1522, %v1530
      %v1566 = vunpack.c.l.b16 %v1460
      %v1567 = vunpack.c.l.b16 %v1461
      %v1568 = vunpack.c.l.b16 %v1462
      %v1569 = vunpack.c.l.b16 %v1463
      %v1570 = vunpack.c.l.b16 %v1464
      %v1571 = vunpack.c.l.b16 %v1465
      %v1572 = vunpack.c.l.b16 %v1466
      %v1573 = vunpack.c.l.b16 %v1467
      %v1574 = vunpack.c.l.b16 %v1468
      %v1575 = vunpack.c.l.b16 %v1469
      %v1576 = vunpack.c.l.b16 %v1470
      %v1577 = vunpack.c.l.b16 %v1471
      %v1578 = vunpack.c.l.b16 %v1472
      %v1579 = vunpack.c.l.b16 %v1473
      %v1580 = vunpack.c.l.b16 %v1474
      %v1581 = vunpack.c.l.b16 %v1475
      %v1582 = vunpack.c.l.b16 %v1476
      %v1583 = vunpack.c.l.b16 %v1477
      %v1584 = vunpack.c.l.b16 %v1478
      %v1585 = vunpack.c.l.b16 %v1479
      %v1586 = vunpack.c.l.b16 %v1480
      %v1587 = vunpack.c.l.b16 %v1481
      %v1588 = vunpack.c.l.b16 %v1482
      %v1589 = vunpack.c.l.b16 %v1483
      %v1590 = vunpack.c.l.b16 %v1484
      %v1591 = vunpack.c.l.b16 %v1485
      %v1592 = vunpack.c.l.b16 %v1486
      %v1593 = vunpack.c.l.b16 %v1487
      %v1594 = vunpack.c.l.b16 %v1488
      %v1595 = vunpack.c.l.b16 %v1489
      %v1596 = vunpack.c.l.b16 %v1490
      %v1597 = vunpack.c.l.b16 %v1491
      %v1598 = vpack.c.b16 %v1567, %v1566
      %v1599 = vpack.c.b16 %v1569, %v1568
      %v1600 = vpack.c.b16 %v1571, %v1570
      %v1601 = vpack.c.b16 %v1573, %v1572
      %v1602 = vpack.c.b16 %v1575, %v1574
      %v1603 = vpack.c.b16 %v1577, %v1576
      %v1604 = vpack.c.b16 %v1579, %v1578
      %v1605 = vpack.c.b16 %v1581, %v1580
      %v1606 = vpack.c.b16 %v1583, %v1582
      %v1607 = vpack.c.b16 %v1585, %v1584
      %v1608 = vpack.c.b16 %v1587, %v1586
      %v1609 = vpack.c.b16 %v1589, %v1588
      %v1610 = vpack.c.b16 %v1591, %v1590
      %v1611 = vpack.c.b16 %v1593, %v1592
      %v1612 = vpack.c.b16 %v1595, %v1594
      %v1613 = vpack.c.b16 %v1597, %v1596
      %1630 = vmatpush.bf16.msra.mxu0 %v1605
      %1631 = vmatpush.bf16.msra.mxu0 %v1604
      %1632 = vmatpush.bf16.msra.mxu0 %v1603
      %1633 = vmatpush.bf16.msra.mxu0 %v1602
      %1634 = vmatpush.bf16.msra.mxu0 %v1601
      %1635 = vmatpush.bf16.msra.mxu0 %v1600
      %1636 = vmatpush.bf16.msra.mxu0 %v1599
      %1637 = vmatpush.bf16.msra.mxu0 %v1598
      %1638 = vmatmul.bf16.gmra.mxu0 %v1514
      %v1639 = vpop.f32.mrf.mxu0
      %v1640 = vadd.f32 0.0, %v1639
      %v1641 = vpop.f32.mrf.mxu0
      %v1642 = vadd.f32 0.0, %v1641
      %1643 = vdwg.mxu0
      %1644 = vmatpush.bf16.msra.mxu0 %v1613
      %1645 = vmatpush.bf16.msra.mxu0 %v1612
      %1646 = vmatpush.bf16.msra.mxu0 %v1611
      %1647 = vmatpush.bf16.msra.mxu0 %v1610
      %1648 = vmatpush.bf16.msra.mxu0 %v1609
      %1649 = vmatpush.bf16.msra.mxu0 %v1608
      %1650 = vmatpush.bf16.msra.mxu0 %v1607
      %1651 = vmatpush.bf16.msra.mxu0 %v1606
      %1652 = vmatmul.bf16.gmra.mxu0 %v1531
      %v1653 = vpop.f32.mrf.mxu0
      %v1654 = vadd.f32 %v1640, %v1653
      %v1655 = vpop.f32.mrf.mxu0
      %v1656 = vadd.f32 %v1642, %v1655
      %1657 = vdwg.mxu0
      %v1658 = vadd.f32 %v1456, %v1654
      %v1659 = vadd.f32 %v1457, %v1656
      %v1660 = vld [vmem:[%s369] sm:$0x88]
      %s1661 = scalar_lea.vmem %s3, 768
      %v1662 = vld [vmem:[%s1661] sm:$0xf]
      %v1663 = vld [vmem:[%s1661 + $0x4] sm:$0xf]
      %v1664 = vld [vmem:[%s1661 + $0x8] sm:$0xf]
      %v1665 = vld [vmem:[%s1661 + $0xc] sm:$0xf]
      %v1666 = vld [vmem:[%s1661 + $0x10] sm:$0xf]
      %v1667 = vld [vmem:[%s1661 + $0x14] sm:$0xf]
      %v1668 = vld [vmem:[%s1661 + $0x18] sm:$0xf]
      %v1669 = vld [vmem:[%s1661 + $0x1c] sm:$0xf]
      %v1670 = vld [vmem:[%s1661 + $0x20] sm:$0xf]
      %v1671 = vld [vmem:[%s1661 + $0x24] sm:$0xf]
      %v1672 = vld [vmem:[%s1661 + $0x28] sm:$0xf]
      %v1673 = vld [vmem:[%s1661 + $0x2c] sm:$0xf]
      %v1674 = vld [vmem:[%s1661 + $0x30] sm:$0xf]
      %v1675 = vld [vmem:[%s1661 + $0x34] sm:$0xf]
      %v1676 = vld [vmem:[%s1661 + $0x38] sm:$0xf]
      %v1677 = vld [vmem:[%s1661 + $0x3c] sm:$0xf]
      %v1678 = vld [vmem:[%s1661 + $0x40] sm:$0xf]
      %v1679 = vld [vmem:[%s1661 + $0x44] sm:$0xf]
      %v1680 = vld [vmem:[%s1661 + $0x48] sm:$0xf]
      %v1681 = vld [vmem:[%s1661 + $0x4c] sm:$0xf]
      %v1682 = vld [vmem:[%s1661 + $0x50] sm:$0xf]
      %v1683 = vld [vmem:[%s1661 + $0x54] sm:$0xf]
      %v1684 = vld [vmem:[%s1661 + $0x58] sm:$0xf]
      %v1685 = vld [vmem:[%s1661 + $0x5c] sm:$0xf]
      %v1686 = vld [vmem:[%s1661 + $0x60] sm:$0xf]
      %v1687 = vld [vmem:[%s1661 + $0x64] sm:$0xf]
      %v1688 = vld [vmem:[%s1661 + $0x68] sm:$0xf]
      %v1689 = vld [vmem:[%s1661 + $0x6c] sm:$0xf]
      %v1690 = vld [vmem:[%s1661 + $0x70] sm:$0xf]
      %v1691 = vld [vmem:[%s1661 + $0x74] sm:$0xf]
      %v1692 = vld [vmem:[%s1661 + $0x78] sm:$0xf]
      %v1693 = vld [vmem:[%s1661 + $0x7c] sm:$0xf]
      %v1695 = vunpack.c.l.b16 %v1660
      %v1696 = vunpack.c.h.b16 %v1660
      %v1697 = vpack.c.b16 %v424, %v1695
      %v1698 = vpack.c.b16 %v425, %v1696
      %vm1699 = vcmask 1044480
      %v1700 = vrot.slane %v1697, 3
      %v1701 = vrot.slane %v1495, 3
      %v1702 = vsel %vm1699, %v1700, %v1701
      %v1703 = vrot.slane %v1698, 3
      %v1704 = vrot.slane %v1496, 3
      %v1705 = vsel %vm1699, %v1703, %v1704
      %v1740 = vunpack.c.l.b16 %v1662
      %v1741 = vunpack.c.l.b16 %v1663
      %v1742 = vunpack.c.l.b16 %v1664
      %v1743 = vunpack.c.l.b16 %v1665
      %v1744 = vunpack.c.l.b16 %v1666
      %v1745 = vunpack.c.l.b16 %v1667
      %v1746 = vunpack.c.l.b16 %v1668
      %v1747 = vunpack.c.l.b16 %v1669
      %v1748 = vunpack.c.l.b16 %v1670
      %v1749 = vunpack.c.l.b16 %v1671
      %v1750 = vunpack.c.l.b16 %v1672
      %v1751 = vunpack.c.l.b16 %v1673
      %v1752 = vunpack.c.l.b16 %v1674
      %v1753 = vunpack.c.l.b16 %v1675
      %v1754 = vunpack.c.l.b16 %v1676
      %v1755 = vunpack.c.l.b16 %v1677
      %v1756 = vunpack.c.l.b16 %v1678
      %v1757 = vunpack.c.l.b16 %v1679
      %v1758 = vunpack.c.l.b16 %v1680
      %v1759 = vunpack.c.l.b16 %v1681
      %v1760 = vunpack.c.l.b16 %v1682
      %v1761 = vunpack.c.l.b16 %v1683
      %v1762 = vunpack.c.l.b16 %v1684
      %v1763 = vunpack.c.l.b16 %v1685
      %v1764 = vunpack.c.l.b16 %v1686
      %v1765 = vunpack.c.l.b16 %v1687
      %v1766 = vunpack.c.l.b16 %v1688
      %v1767 = vunpack.c.l.b16 %v1689
      %v1768 = vunpack.c.l.b16 %v1690
      %v1769 = vunpack.c.l.b16 %v1691
      %v1770 = vunpack.c.l.b16 %v1692
      %v1771 = vunpack.c.l.b16 %v1693
      %v1772 = vpack.c.b16 %v1741, %v1740
      %v1773 = vpack.c.b16 %v1743, %v1742
      %v1774 = vpack.c.b16 %v1745, %v1744
      %v1775 = vpack.c.b16 %v1747, %v1746
      %v1776 = vpack.c.b16 %v1749, %v1748
      %v1777 = vpack.c.b16 %v1751, %v1750
      %v1778 = vpack.c.b16 %v1753, %v1752
      %v1779 = vpack.c.b16 %v1755, %v1754
      %v1780 = vpack.c.b16 %v1757, %v1756
      %v1781 = vpack.c.b16 %v1759, %v1758
      %v1782 = vpack.c.b16 %v1761, %v1760
      %v1783 = vpack.c.b16 %v1763, %v1762
      %v1784 = vpack.c.b16 %v1765, %v1764
      %v1785 = vpack.c.b16 %v1767, %v1766
      %v1786 = vpack.c.b16 %v1769, %v1768
      %v1787 = vpack.c.b16 %v1771, %v1770
      %1804 = vmatpush.bf16.msra.mxu0 %v1779
      %1805 = vmatpush.bf16.msra.mxu0 %v1778
      %1806 = vmatpush.bf16.msra.mxu0 %v1777
      %1807 = vmatpush.bf16.msra.mxu0 %v1776
      %1808 = vmatpush.bf16.msra.mxu0 %v1775
      %1809 = vmatpush.bf16.msra.mxu0 %v1774
      %1810 = vmatpush.bf16.msra.mxu0 %v1773
      %1811 = vmatpush.bf16.msra.mxu0 %v1772
      %1812 = vmatmul.bf16.gmra.mxu0 %v1702
      %v1813 = vpop.f32.mrf.mxu0
      %v1814 = vadd.f32 0.0, %v1813
      %v1815 = vpop.f32.mrf.mxu0
      %v1816 = vadd.f32 0.0, %v1815
      %1817 = vdwg.mxu0
      %1818 = vmatpush.bf16.msra.mxu0 %v1787
      %1819 = vmatpush.bf16.msra.mxu0 %v1786
      %1820 = vmatpush.bf16.msra.mxu0 %v1785
      %1821 = vmatpush.bf16.msra.mxu0 %v1784
      %1822 = vmatpush.bf16.msra.mxu0 %v1783
      %1823 = vmatpush.bf16.msra.mxu0 %v1782
      %1824 = vmatpush.bf16.msra.mxu0 %v1781
      %1825 = vmatpush.bf16.msra.mxu0 %v1780
      %1826 = vmatmul.bf16.gmra.mxu0 %v1705
      %v1827 = vpop.f32.mrf.mxu0
      %v1828 = vadd.f32 %v1814, %v1827
      %v1829 = vpop.f32.mrf.mxu0
      %v1830 = vadd.f32 %v1816, %v1829
      %1831 = vdwg.mxu0
      %v1832 = vadd.f32 %v1658, %v1828
      %v1833 = vadd.f32 %v1659, %v1830
      %v1834 = vld [vmem:[%s369 + $0x10] sm:$0xff]
      %s1835 = scalar_lea.vmem %s3, 896
      %v1836 = vld [vmem:[%s1835] sm:$0xf]
      %v1837 = vld [vmem:[%s1835 + $0x4] sm:$0xf]
      %v1838 = vld [vmem:[%s1835 + $0x8] sm:$0xf]
      %v1839 = vld [vmem:[%s1835 + $0xc] sm:$0xf]
      %v1840 = vld [vmem:[%s1835 + $0x10] sm:$0xf]
      %v1841 = vld [vmem:[%s1835 + $0x14] sm:$0xf]
      %v1842 = vld [vmem:[%s1835 + $0x18] sm:$0xf]
      %v1843 = vld [vmem:[%s1835 + $0x1c] sm:$0xf]
      %v1844 = vld [vmem:[%s1835 + $0x20] sm:$0xf]
      %v1845 = vld [vmem:[%s1835 + $0x24] sm:$0xf]
      %v1846 = vld [vmem:[%s1835 + $0x28] sm:$0xf]
      %v1847 = vld [vmem:[%s1835 + $0x2c] sm:$0xf]
      %v1848 = vld [vmem:[%s1835 + $0x30] sm:$0xf]
      %v1849 = vld [vmem:[%s1835 + $0x34] sm:$0xf]
      %v1850 = vld [vmem:[%s1835 + $0x38] sm:$0xf]
      %v1851 = vld [vmem:[%s1835 + $0x3c] sm:$0xf]
      %v1852 = vld [vmem:[%s1835 + $0x40] sm:$0xf]
      %v1853 = vld [vmem:[%s1835 + $0x44] sm:$0xf]
      %v1854 = vld [vmem:[%s1835 + $0x48] sm:$0xf]
      %v1855 = vld [vmem:[%s1835 + $0x4c] sm:$0xf]
      %v1856 = vld [vmem:[%s1835 + $0x50] sm:$0xf]
      %v1857 = vld [vmem:[%s1835 + $0x54] sm:$0xf]
      %v1858 = vld [vmem:[%s1835 + $0x58] sm:$0xf]
      %v1859 = vld [vmem:[%s1835 + $0x5c] sm:$0xf]
      %v1860 = vld [vmem:[%s1835 + $0x60] sm:$0xf]
      %v1861 = vld [vmem:[%s1835 + $0x64] sm:$0xf]
      %v1862 = vld [vmem:[%s1835 + $0x68] sm:$0xf]
      %v1863 = vld [vmem:[%s1835 + $0x6c] sm:$0xf]
      %v1864 = vld [vmem:[%s1835 + $0x70] sm:$0xf]
      %v1865 = vld [vmem:[%s1835 + $0x74] sm:$0xf]
      %v1866 = vld [vmem:[%s1835 + $0x78] sm:$0xf]
      %v1867 = vld [vmem:[%s1835 + $0x7c] sm:$0xf]
      %v1869 = vunpack.c.l.b16 %v1834
      %v1870 = vunpack.c.h.b16 %v1834
      %v1871 = vpack.c.b16 %v1869, %v1869
      %v1872 = vpack.c.b16 %v1870, %v1870
      %vm1873 = vsmask.f32 4352
      %v1875 = vshrl.u32 %v1697, 16
      %v1877 = vrot.slane %v1875, 3
      %v1878 = vshll.u32 %v1697, 16
      %v1880 = vrot.slane %v1878, 4
      %v1881 = vor.u32 %v1877, %v1880
      %v1883 = vshrl.u32 %v1871, 16
      %v1885 = vrot.slane %v1883, 3
      %v1886 = vshll.u32 %v1871, 16
      %v1888 = vrot.slane %v1886, 4
      %v1889 = vor.u32 %v1885, %v1888
      %v1890 = vsel %vm1873, %v1881, %v1889
      %v1892 = vshrl.u32 %v1698, 16
      %v1894 = vrot.slane %v1892, 3
      %v1895 = vshll.u32 %v1698, 16
      %v1897 = vrot.slane %v1895, 4
      %v1898 = vor.u32 %v1894, %v1897
      %v1900 = vshrl.u32 %v1872, 16
      %v1902 = vrot.slane %v1900, 3
      %v1903 = vshll.u32 %v1872, 16
      %v1905 = vrot.slane %v1903, 4
      %v1906 = vor.u32 %v1902, %v1905
      %v1907 = vsel %vm1873, %v1898, %v1906
      %v1942 = vunpack.c.l.b16 %v1836
      %v1943 = vunpack.c.l.b16 %v1837
      %v1944 = vunpack.c.l.b16 %v1838
      %v1945 = vunpack.c.l.b16 %v1839
      %v1946 = vunpack.c.l.b16 %v1840
      %v1947 = vunpack.c.l.b16 %v1841
      %v1948 = vunpack.c.l.b16 %v1842
      %v1949 = vunpack.c.l.b16 %v1843
      %v1950 = vunpack.c.l.b16 %v1844
      %v1951 = vunpack.c.l.b16 %v1845
      %v1952 = vunpack.c.l.b16 %v1846
      %v1953 = vunpack.c.l.b16 %v1847
      %v1954 = vunpack.c.l.b16 %v1848
      %v1955 = vunpack.c.l.b16 %v1849
      %v1956 = vunpack.c.l.b16 %v1850
      %v1957 = vunpack.c.l.b16 %v1851
      %v1958 = vunpack.c.l.b16 %v1852
      %v1959 = vunpack.c.l.b16 %v1853
      %v1960 = vunpack.c.l.b16 %v1854
      %v1961 = vunpack.c.l.b16 %v1855
      %v1962 = vunpack.c.l.b16 %v1856
      %v1963 = vunpack.c.l.b16 %v1857
      %v1964 = vunpack.c.l.b16 %v1858
      %v1965 = vunpack.c.l.b16 %v1859
      %v1966 = vunpack.c.l.b16 %v1860
      %v1967 = vunpack.c.l.b16 %v1861
      %v1968 = vunpack.c.l.b16 %v1862
      %v1969 = vunpack.c.l.b16 %v1863
      %v1970 = vunpack.c.l.b16 %v1864
      %v1971 = vunpack.c.l.b16 %v1865
      %v1972 = vunpack.c.l.b16 %v1866
      %v1973 = vunpack.c.l.b16 %v1867
      %v1974 = vpack.c.b16 %v1943, %v1942
      %v1975 = vpack.c.b16 %v1945, %v1944
      %v1976 = vpack.c.b16 %v1947, %v1946
      %v1977 = vpack.c.b16 %v1949, %v1948
      %v1978 = vpack.c.b16 %v1951, %v1950
      %v1979 = vpack.c.b16 %v1953, %v1952
      %v1980 = vpack.c.b16 %v1955, %v1954
      %v1981 = vpack.c.b16 %v1957, %v1956
      %v1982 = vpack.c.b16 %v1959, %v1958
      %v1983 = vpack.c.b16 %v1961, %v1960
      %v1984 = vpack.c.b16 %v1963, %v1962
      %v1985 = vpack.c.b16 %v1965, %v1964
      %v1986 = vpack.c.b16 %v1967, %v1966
      %v1987 = vpack.c.b16 %v1969, %v1968
      %v1988 = vpack.c.b16 %v1971, %v1970
      %v1989 = vpack.c.b16 %v1973, %v1972
      %2006 = vmatpush.bf16.msra.mxu0 %v1981
      %2007 = vmatpush.bf16.msra.mxu0 %v1980
      %2008 = vmatpush.bf16.msra.mxu0 %v1979
      %2009 = vmatpush.bf16.msra.mxu0 %v1978
      %2010 = vmatpush.bf16.msra.mxu0 %v1977
      %2011 = vmatpush.bf16.msra.mxu0 %v1976
      %2012 = vmatpush.bf16.msra.mxu0 %v1975
      %2013 = vmatpush.bf16.msra.mxu0 %v1974
      %2014 = vmatmul.bf16.gmra.mxu0 %v1890
      %v2015 = vpop.f32.mrf.mxu0
      %v2016 = vadd.f32 0.0, %v2015
      %v2017 = vpop.f32.mrf.mxu0
      %v2018 = vadd.f32 0.0, %v2017
      %2019 = vdwg.mxu0
      %2020 = vmatpush.bf16.msra.mxu0 %v1989
      %2021 = vmatpush.bf16.msra.mxu0 %v1988
      %2022 = vmatpush.bf16.msra.mxu0 %v1987
      %2023 = vmatpush.bf16.msra.mxu0 %v1986
      %2024 = vmatpush.bf16.msra.mxu0 %v1985
      %2025 = vmatpush.bf16.msra.mxu0 %v1984
      %2026 = vmatpush.bf16.msra.mxu0 %v1983
      %2027 = vmatpush.bf16.msra.mxu0 %v1982
      %2028 = vmatmul.bf16.gmra.mxu0 %v1907
      %v2029 = vpop.f32.mrf.mxu0
      %v2030 = vadd.f32 %v2016, %v2029
      %v2031 = vpop.f32.mrf.mxu0
      %v2032 = vadd.f32 %v2018, %v2031
      %2033 = vdwg.mxu0
      %v2034 = vadd.f32 %v1832, %v2030
      %v2035 = vadd.f32 %v1833, %v2032
      %s2036 = scalar_lea.vmem %s3, 1024
      %v2037 = vld [vmem:[%s2036] sm:$0xf]
      %v2038 = vld [vmem:[%s2036 + $0x4] sm:$0xf]
      %v2039 = vld [vmem:[%s2036 + $0x8] sm:$0xf]
      %v2040 = vld [vmem:[%s2036 + $0xc] sm:$0xf]
      %v2041 = vld [vmem:[%s2036 + $0x10] sm:$0xf]
      %v2042 = vld [vmem:[%s2036 + $0x14] sm:$0xf]
      %v2043 = vld [vmem:[%s2036 + $0x18] sm:$0xf]
      %v2044 = vld [vmem:[%s2036 + $0x1c] sm:$0xf]
      %v2045 = vld [vmem:[%s2036 + $0x20] sm:$0xf]
      %v2046 = vld [vmem:[%s2036 + $0x24] sm:$0xf]
      %v2047 = vld [vmem:[%s2036 + $0x28] sm:$0xf]
      %v2048 = vld [vmem:[%s2036 + $0x2c] sm:$0xf]
      %v2049 = vld [vmem:[%s2036 + $0x30] sm:$0xf]
      %v2050 = vld [vmem:[%s2036 + $0x34] sm:$0xf]
      %v2051 = vld [vmem:[%s2036 + $0x38] sm:$0xf]
      %v2052 = vld [vmem:[%s2036 + $0x3c] sm:$0xf]
      %v2053 = vld [vmem:[%s2036 + $0x40] sm:$0xf]
      %v2054 = vld [vmem:[%s2036 + $0x44] sm:$0xf]
      %v2055 = vld [vmem:[%s2036 + $0x48] sm:$0xf]
      %v2056 = vld [vmem:[%s2036 + $0x4c] sm:$0xf]
      %v2057 = vld [vmem:[%s2036 + $0x50] sm:$0xf]
      %v2058 = vld [vmem:[%s2036 + $0x54] sm:$0xf]
      %v2059 = vld [vmem:[%s2036 + $0x58] sm:$0xf]
      %v2060 = vld [vmem:[%s2036 + $0x5c] sm:$0xf]
      %v2061 = vld [vmem:[%s2036 + $0x60] sm:$0xf]
      %v2062 = vld [vmem:[%s2036 + $0x64] sm:$0xf]
      %v2063 = vld [vmem:[%s2036 + $0x68] sm:$0xf]
      %v2064 = vld [vmem:[%s2036 + $0x6c] sm:$0xf]
      %v2065 = vld [vmem:[%s2036 + $0x70] sm:$0xf]
      %v2066 = vld [vmem:[%s2036 + $0x74] sm:$0xf]
      %v2067 = vld [vmem:[%s2036 + $0x78] sm:$0xf]
      %v2068 = vld [vmem:[%s2036 + $0x7c] sm:$0xf]
      %v2069 = vpack.c.b16 %v1869, %v424
      %v2070 = vpack.c.b16 %v1870, %v425
      %v2105 = vunpack.c.l.b16 %v2037
      %v2106 = vunpack.c.l.b16 %v2038
      %v2107 = vunpack.c.l.b16 %v2039
      %v2108 = vunpack.c.l.b16 %v2040
      %v2109 = vunpack.c.l.b16 %v2041
      %v2110 = vunpack.c.l.b16 %v2042
      %v2111 = vunpack.c.l.b16 %v2043
      %v2112 = vunpack.c.l.b16 %v2044
      %v2113 = vunpack.c.l.b16 %v2045
      %v2114 = vunpack.c.l.b16 %v2046
      %v2115 = vunpack.c.l.b16 %v2047
      %v2116 = vunpack.c.l.b16 %v2048
      %v2117 = vunpack.c.l.b16 %v2049
      %v2118 = vunpack.c.l.b16 %v2050
      %v2119 = vunpack.c.l.b16 %v2051
      %v2120 = vunpack.c.l.b16 %v2052
      %v2121 = vunpack.c.l.b16 %v2053
      %v2122 = vunpack.c.l.b16 %v2054
      %v2123 = vunpack.c.l.b16 %v2055
      %v2124 = vunpack.c.l.b16 %v2056
      %v2125 = vunpack.c.l.b16 %v2057
      %v2126 = vunpack.c.l.b16 %v2058
      %v2127 = vunpack.c.l.b16 %v2059
      %v2128 = vunpack.c.l.b16 %v2060
      %v2129 = vunpack.c.l.b16 %v2061
      %v2130 = vunpack.c.l.b16 %v2062
      %v2131 = vunpack.c.l.b16 %v2063
      %v2132 = vunpack.c.l.b16 %v2064
      %v2133 = vunpack.c.l.b16 %v2065
      %v2134 = vunpack.c.l.b16 %v2066
      %v2135 = vunpack.c.l.b16 %v2067
      %v2136 = vunpack.c.l.b16 %v2068
      %v2137 = vpack.c.b16 %v2106, %v2105
      %v2138 = vpack.c.b16 %v2108, %v2107
      %v2139 = vpack.c.b16 %v2110, %v2109
      %v2140 = vpack.c.b16 %v2112, %v2111
      %v2141 = vpack.c.b16 %v2114, %v2113
      %v2142 = vpack.c.b16 %v2116, %v2115
      %v2143 = vpack.c.b16 %v2118, %v2117
      %v2144 = vpack.c.b16 %v2120, %v2119
      %v2145 = vpack.c.b16 %v2122, %v2121
      %v2146 = vpack.c.b16 %v2124, %v2123
      %v2147 = vpack.c.b16 %v2126, %v2125
      %v2148 = vpack.c.b16 %v2128, %v2127
      %v2149 = vpack.c.b16 %v2130, %v2129
      %v2150 = vpack.c.b16 %v2132, %v2131
      %v2151 = vpack.c.b16 %v2134, %v2133
      %v2152 = vpack.c.b16 %v2136, %v2135
      %2169 = vmatpush.bf16.msra.mxu0 %v2144
      %2170 = vmatpush.bf16.msra.mxu0 %v2143
      %2171 = vmatpush.bf16.msra.mxu0 %v2142
      %2172 = vmatpush.bf16.msra.mxu0 %v2141
      %2173 = vmatpush.bf16.msra.mxu0 %v2140
      %2174 = vmatpush.bf16.msra.mxu0 %v2139
      %2175 = vmatpush.bf16.msra.mxu0 %v2138
      %2176 = vmatpush.bf16.msra.mxu0 %v2137
      %2177 = vmatmul.bf16.gmra.mxu0 %v2069
      %v2178 = vpop.f32.mrf.mxu0
      %v2179 = vadd.f32 0.0, %v2178
      %v2180 = vpop.f32.mrf.mxu0
      %v2181 = vadd.f32 0.0, %v2180
      %2182 = vdwg.mxu0
      %2183 = vmatpush.bf16.msra.mxu0 %v2152
      %2184 = vmatpush.bf16.msra.mxu0 %v2151
      %2185 = vmatpush.bf16.msra.mxu0 %v2150
      %2186 = vmatpush.bf16.msra.mxu0 %v2149
      %2187 = vmatpush.bf16.msra.mxu0 %v2148
      %2188 = vmatpush.bf16.msra.mxu0 %v2147
      %2189 = vmatpush.bf16.msra.mxu0 %v2146
      %2190 = vmatpush.bf16.msra.mxu0 %v2145
      %2191 = vmatmul.bf16.gmra.mxu0 %v2070
      %v2192 = vpop.f32.mrf.mxu0
      %v2193 = vadd.f32 %v2179, %v2192
      %v2194 = vpop.f32.mrf.mxu0
      %v2195 = vadd.f32 %v2181, %v2194
      %2196 = vdwg.mxu0
      %v2197 = vadd.f32 %v2034, %v2193
      %v2198 = vadd.f32 %v2035, %v2195
      %s2199 = scalar_lea.vmem %s5, 1
      %v2200 = vld [vmem:[%s2199] sm:$0x1]
      %v2202 = vperm.slane %v2200, 0
      %v2204 = vadd.f32 %v2197, %v2202
      %v2205 = vadd.f32 %v2198, %v2202
      %v2206 = vld [vmem:[%s4] sm:$0xf]
      %v2207 = vld [vmem:[%s4 + $0x4] sm:$0xf]
      %v2208 = vld [vmem:[%s4 + $0x8] sm:$0xf]
      %v2209 = vld [vmem:[%s4 + $0xc] sm:$0xf]
      %v2210 = vld [vmem:[%s4 + $0x10] sm:$0xf]
      %v2211 = vld [vmem:[%s4 + $0x14] sm:$0xf]
      %v2212 = vld [vmem:[%s4 + $0x18] sm:$0xf]
      %v2213 = vld [vmem:[%s4 + $0x1c] sm:$0xf]
      %v2214 = vld [vmem:[%s4 + $0x20] sm:$0xf]
      %v2215 = vld [vmem:[%s4 + $0x24] sm:$0xf]
      %v2216 = vld [vmem:[%s4 + $0x28] sm:$0xf]
      %v2217 = vld [vmem:[%s4 + $0x2c] sm:$0xf]
      %v2218 = vld [vmem:[%s4 + $0x30] sm:$0xf]
      %v2219 = vld [vmem:[%s4 + $0x34] sm:$0xf]
      %v2220 = vld [vmem:[%s4 + $0x38] sm:$0xf]
      %v2221 = vld [vmem:[%s4 + $0x3c] sm:$0xf]
      %v2222 = vld [vmem:[%s4 + $0x40] sm:$0xf]
      %v2223 = vld [vmem:[%s4 + $0x44] sm:$0xf]
      %v2224 = vld [vmem:[%s4 + $0x48] sm:$0xf]
      %v2225 = vld [vmem:[%s4 + $0x4c] sm:$0xf]
      %v2226 = vld [vmem:[%s4 + $0x50] sm:$0xf]
      %v2227 = vld [vmem:[%s4 + $0x54] sm:$0xf]
      %v2228 = vld [vmem:[%s4 + $0x58] sm:$0xf]
      %v2229 = vld [vmem:[%s4 + $0x5c] sm:$0xf]
      %v2230 = vld [vmem:[%s4 + $0x60] sm:$0xf]
      %v2231 = vld [vmem:[%s4 + $0x64] sm:$0xf]
      %v2232 = vld [vmem:[%s4 + $0x68] sm:$0xf]
      %v2233 = vld [vmem:[%s4 + $0x6c] sm:$0xf]
      %v2234 = vld [vmem:[%s4 + $0x70] sm:$0xf]
      %v2235 = vld [vmem:[%s4 + $0x74] sm:$0xf]
      %v2236 = vld [vmem:[%s4 + $0x78] sm:$0xf]
      %v2237 = vld [vmem:[%s4 + $0x7c] sm:$0xf]
      %s2238 = scalar_lea.vmem %s4, 128
      %v2239 = vld [vmem:[%s2238] sm:$0xf]
      %v2240 = vld [vmem:[%s2238 + $0x4] sm:$0xf]
      %v2241 = vld [vmem:[%s2238 + $0x8] sm:$0xf]
      %v2242 = vld [vmem:[%s2238 + $0xc] sm:$0xf]
      %v2243 = vld [vmem:[%s2238 + $0x10] sm:$0xf]
      %v2244 = vld [vmem:[%s2238 + $0x14] sm:$0xf]
      %v2245 = vld [vmem:[%s2238 + $0x18] sm:$0xf]
      %v2246 = vld [vmem:[%s2238 + $0x1c] sm:$0xf]
      %v2247 = vld [vmem:[%s2238 + $0x20] sm:$0xf]
      %v2248 = vld [vmem:[%s2238 + $0x24] sm:$0xf]
      %v2249 = vld [vmem:[%s2238 + $0x28] sm:$0xf]
      %v2250 = vld [vmem:[%s2238 + $0x2c] sm:$0xf]
      %v2251 = vld [vmem:[%s2238 + $0x30] sm:$0xf]
      %v2252 = vld [vmem:[%s2238 + $0x34] sm:$0xf]
      %v2253 = vld [vmem:[%s2238 + $0x38] sm:$0xf]
      %v2254 = vld [vmem:[%s2238 + $0x3c] sm:$0xf]
      %v2255 = vld [vmem:[%s2238 + $0x40] sm:$0xf]
      %v2256 = vld [vmem:[%s2238 + $0x44] sm:$0xf]
      %v2257 = vld [vmem:[%s2238 + $0x48] sm:$0xf]
      %v2258 = vld [vmem:[%s2238 + $0x4c] sm:$0xf]
      %v2259 = vld [vmem:[%s2238 + $0x50] sm:$0xf]
      %v2260 = vld [vmem:[%s2238 + $0x54] sm:$0xf]
      %v2261 = vld [vmem:[%s2238 + $0x58] sm:$0xf]
      %v2262 = vld [vmem:[%s2238 + $0x5c] sm:$0xf]
      %v2263 = vld [vmem:[%s2238 + $0x60] sm:$0xf]
      %v2264 = vld [vmem:[%s2238 + $0x64] sm:$0xf]
      %v2265 = vld [vmem:[%s2238 + $0x68] sm:$0xf]
      %v2266 = vld [vmem:[%s2238 + $0x6c] sm:$0xf]
      %v2267 = vld [vmem:[%s2238 + $0x70] sm:$0xf]
      %v2268 = vld [vmem:[%s2238 + $0x74] sm:$0xf]
      %v2269 = vld [vmem:[%s2238 + $0x78] sm:$0xf]
      %v2270 = vld [vmem:[%s2238 + $0x7c] sm:$0xf]
      %v2303 = vunpack.c.l.b16 %v2239
      %v2304 = vunpack.c.l.b16 %v2240
      %v2305 = vunpack.c.l.b16 %v2241
      %v2306 = vunpack.c.l.b16 %v2242
      %v2307 = vunpack.c.l.b16 %v2243
      %v2308 = vunpack.c.l.b16 %v2244
      %v2309 = vunpack.c.l.b16 %v2245
      %v2310 = vunpack.c.l.b16 %v2246
      %v2311 = vunpack.c.l.b16 %v2247
      %v2312 = vunpack.c.l.b16 %v2248
      %v2313 = vunpack.c.l.b16 %v2249
      %v2314 = vunpack.c.l.b16 %v2250
      %v2315 = vunpack.c.l.b16 %v2251
      %v2316 = vunpack.c.l.b16 %v2252
      %v2317 = vunpack.c.l.b16 %v2253
      %v2318 = vunpack.c.l.b16 %v2254
      %v2319 = vunpack.c.l.b16 %v2255
      %v2320 = vunpack.c.l.b16 %v2256
      %v2321 = vunpack.c.l.b16 %v2257
      %v2322 = vunpack.c.l.b16 %v2258
      %v2323 = vunpack.c.l.b16 %v2259
      %v2324 = vunpack.c.l.b16 %v2260
      %v2325 = vunpack.c.l.b16 %v2261
      %v2326 = vunpack.c.l.b16 %v2262
      %v2327 = vunpack.c.l.b16 %v2263
      %v2328 = vunpack.c.l.b16 %v2264
      %v2329 = vunpack.c.l.b16 %v2265
      %v2330 = vunpack.c.l.b16 %v2266
      %v2331 = vunpack.c.l.b16 %v2267
      %v2332 = vunpack.c.l.b16 %v2268
      %v2333 = vunpack.c.l.b16 %v2269
      %v2334 = vunpack.c.l.b16 %v2270
      %v2335 = vpack.c.b16 %v2304, %v2303
      %v2336 = vpack.c.b16 %v2306, %v2305
      %v2337 = vpack.c.b16 %v2308, %v2307
      %v2338 = vpack.c.b16 %v2310, %v2309
      %v2339 = vpack.c.b16 %v2312, %v2311
      %v2340 = vpack.c.b16 %v2314, %v2313
      %v2341 = vpack.c.b16 %v2316, %v2315
      %v2342 = vpack.c.b16 %v2318, %v2317
      %v2343 = vpack.c.b16 %v2320, %v2319
      %v2344 = vpack.c.b16 %v2322, %v2321
      %v2345 = vpack.c.b16 %v2324, %v2323
      %v2346 = vpack.c.b16 %v2326, %v2325
      %v2347 = vpack.c.b16 %v2328, %v2327
      %v2348 = vpack.c.b16 %v2330, %v2329
      %v2349 = vpack.c.b16 %v2332, %v2331
      %v2350 = vpack.c.b16 %v2334, %v2333
      %2367 = vmatpush.bf16.msra.mxu0 %v2342
      %2368 = vmatpush.bf16.msra.mxu0 %v2341
      %2369 = vmatpush.bf16.msra.mxu0 %v2340
      %2370 = vmatpush.bf16.msra.mxu0 %v2339
      %2371 = vmatpush.bf16.msra.mxu0 %v2338
      %2372 = vmatpush.bf16.msra.mxu0 %v2337
      %2373 = vmatpush.bf16.msra.mxu0 %v2336
      %2374 = vmatpush.bf16.msra.mxu0 %v2335
      %2375 = vmatmul.bf16.gmra.mxu0 %v435
      %v2376 = vpop.f32.mrf.mxu0
      %v2377 = vadd.f32 0.0, %v2376
      %v2378 = vpop.f32.mrf.mxu0
      %v2379 = vadd.f32 0.0, %v2378
      %2380 = vdwg.mxu0
      %2381 = vmatpush.bf16.msra.mxu0 %v2350
      %2382 = vmatpush.bf16.msra.mxu0 %v2349
      %2383 = vmatpush.bf16.msra.mxu0 %v2348
      %2384 = vmatpush.bf16.msra.mxu0 %v2347
      %2385 = vmatpush.bf16.msra.mxu0 %v2346
      %2386 = vmatpush.bf16.msra.mxu0 %v2345
      %2387 = vmatpush.bf16.msra.mxu0 %v2344
      %2388 = vmatpush.bf16.msra.mxu0 %v2343
      %2389 = vmatmul.bf16.gmra.mxu0 %v438
      %v2390 = vpop.f32.mrf.mxu0
      %v2391 = vadd.f32 %v2377, %v2390
      %v2392 = vpop.f32.mrf.mxu0
      %v2393 = vadd.f32 %v2379, %v2392
      %2394 = vdwg.mxu0
      %v2427 = vunpack.c.l.b16 %v2206
      %v2428 = vunpack.c.l.b16 %v2207
      %v2429 = vunpack.c.l.b16 %v2208
      %v2430 = vunpack.c.l.b16 %v2209
      %v2431 = vunpack.c.l.b16 %v2210
      %v2432 = vunpack.c.l.b16 %v2211
      %v2433 = vunpack.c.l.b16 %v2212
      %v2434 = vunpack.c.l.b16 %v2213
      %v2435 = vunpack.c.l.b16 %v2214
      %v2436 = vunpack.c.l.b16 %v2215
      %v2437 = vunpack.c.l.b16 %v2216
      %v2438 = vunpack.c.l.b16 %v2217
      %v2439 = vunpack.c.l.b16 %v2218
      %v2440 = vunpack.c.l.b16 %v2219
      %v2441 = vunpack.c.l.b16 %v2220
      %v2442 = vunpack.c.l.b16 %v2221
      %v2443 = vunpack.c.l.b16 %v2222
      %v2444 = vunpack.c.l.b16 %v2223
      %v2445 = vunpack.c.l.b16 %v2224
      %v2446 = vunpack.c.l.b16 %v2225
      %v2447 = vunpack.c.l.b16 %v2226
      %v2448 = vunpack.c.l.b16 %v2227
      %v2449 = vunpack.c.l.b16 %v2228
      %v2450 = vunpack.c.l.b16 %v2229
      %v2451 = vunpack.c.l.b16 %v2230
      %v2452 = vunpack.c.l.b16 %v2231
      %v2453 = vunpack.c.l.b16 %v2232
      %v2454 = vunpack.c.l.b16 %v2233
      %v2455 = vunpack.c.l.b16 %v2234
      %v2456 = vunpack.c.l.b16 %v2235
      %v2457 = vunpack.c.l.b16 %v2236
      %v2458 = vunpack.c.l.b16 %v2237
      %v2459 = vpack.c.b16 %v2428, %v2427
      %v2460 = vpack.c.b16 %v2430, %v2429
      %v2461 = vpack.c.b16 %v2432, %v2431
      %v2462 = vpack.c.b16 %v2434, %v2433
      %v2463 = vpack.c.b16 %v2436, %v2435
      %v2464 = vpack.c.b16 %v2438, %v2437
      %v2465 = vpack.c.b16 %v2440, %v2439
      %v2466 = vpack.c.b16 %v2442, %v2441
      %v2467 = vpack.c.b16 %v2444, %v2443
      %v2468 = vpack.c.b16 %v2446, %v2445
      %v2469 = vpack.c.b16 %v2448, %v2447
      %v2470 = vpack.c.b16 %v2450, %v2449
      %v2471 = vpack.c.b16 %v2452, %v2451
      %v2472 = vpack.c.b16 %v2454, %v2453
      %v2473 = vpack.c.b16 %v2456, %v2455
      %v2474 = vpack.c.b16 %v2458, %v2457
      %2491 = vmatpush.bf16.msra.mxu0 %v2466
      %2492 = vmatpush.bf16.msra.mxu0 %v2465
      %2493 = vmatpush.bf16.msra.mxu0 %v2464
      %2494 = vmatpush.bf16.msra.mxu0 %v2463
      %2495 = vmatpush.bf16.msra.mxu0 %v2462
      %2496 = vmatpush.bf16.msra.mxu0 %v2461
      %2497 = vmatpush.bf16.msra.mxu0 %v2460
      %2498 = vmatpush.bf16.msra.mxu0 %v2459
      %2499 = vmatmul.bf16.gmra.mxu0 %v1153
      %v2500 = vpop.f32.mrf.mxu0
      %v2501 = vadd.f32 %v2391, %v2500
      %v2502 = vpop.f32.mrf.mxu0
      %v2503 = vadd.f32 %v2393, %v2502
      %2504 = vdwg.mxu0
      %2505 = vmatpush.bf16.msra.mxu0 %v2474
      %2506 = vmatpush.bf16.msra.mxu0 %v2473
      %2507 = vmatpush.bf16.msra.mxu0 %v2472
      %2508 = vmatpush.bf16.msra.mxu0 %v2471
      %2509 = vmatpush.bf16.msra.mxu0 %v2470
      %2510 = vmatpush.bf16.msra.mxu0 %v2469
      %2511 = vmatpush.bf16.msra.mxu0 %v2468
      %2512 = vmatpush.bf16.msra.mxu0 %v2467
      %2513 = vmatmul.bf16.gmra.mxu0 %v1170
      %v2514 = vpop.f32.mrf.mxu0
      %v2515 = vadd.f32 %v2501, %v2514
      %v2516 = vpop.f32.mrf.mxu0
      %v2517 = vadd.f32 %v2503, %v2516
      %2518 = vdwg.mxu0
      %s2519 = scalar_lea.vmem %s4, 256
      %v2520 = vld [vmem:[%s2519] sm:$0xf]
      %v2521 = vld [vmem:[%s2519 + $0x4] sm:$0xf]
      %v2522 = vld [vmem:[%s2519 + $0x8] sm:$0xf]
      %v2523 = vld [vmem:[%s2519 + $0xc] sm:$0xf]
      %v2524 = vld [vmem:[%s2519 + $0x10] sm:$0xf]
      %v2525 = vld [vmem:[%s2519 + $0x14] sm:$0xf]
      %v2526 = vld [vmem:[%s2519 + $0x18] sm:$0xf]
      %v2527 = vld [vmem:[%s2519 + $0x1c] sm:$0xf]
      %v2528 = vld [vmem:[%s2519 + $0x20] sm:$0xf]
      %v2529 = vld [vmem:[%s2519 + $0x24] sm:$0xf]
      %v2530 = vld [vmem:[%s2519 + $0x28] sm:$0xf]
      %v2531 = vld [vmem:[%s2519 + $0x2c] sm:$0xf]
      %v2532 = vld [vmem:[%s2519 + $0x30] sm:$0xf]
      %v2533 = vld [vmem:[%s2519 + $0x34] sm:$0xf]
      %v2534 = vld [vmem:[%s2519 + $0x38] sm:$0xf]
      %v2535 = vld [vmem:[%s2519 + $0x3c] sm:$0xf]
      %v2536 = vld [vmem:[%s2519 + $0x40] sm:$0xf]
      %v2537 = vld [vmem:[%s2519 + $0x44] sm:$0xf]
      %v2538 = vld [vmem:[%s2519 + $0x48] sm:$0xf]
      %v2539 = vld [vmem:[%s2519 + $0x4c] sm:$0xf]
      %v2540 = vld [vmem:[%s2519 + $0x50] sm:$0xf]
      %v2541 = vld [vmem:[%s2519 + $0x54] sm:$0xf]
      %v2542 = vld [vmem:[%s2519 + $0x58] sm:$0xf]
      %v2543 = vld [vmem:[%s2519 + $0x5c] sm:$0xf]
      %v2544 = vld [vmem:[%s2519 + $0x60] sm:$0xf]
      %v2545 = vld [vmem:[%s2519 + $0x64] sm:$0xf]
      %v2546 = vld [vmem:[%s2519 + $0x68] sm:$0xf]
      %v2547 = vld [vmem:[%s2519 + $0x6c] sm:$0xf]
      %v2548 = vld [vmem:[%s2519 + $0x70] sm:$0xf]
      %v2549 = vld [vmem:[%s2519 + $0x74] sm:$0xf]
      %v2550 = vld [vmem:[%s2519 + $0x78] sm:$0xf]
      %v2551 = vld [vmem:[%s2519 + $0x7c] sm:$0xf]
      %v2584 = vunpack.c.l.b16 %v2520
      %v2585 = vunpack.c.l.b16 %v2521
      %v2586 = vunpack.c.l.b16 %v2522
      %v2587 = vunpack.c.l.b16 %v2523
      %v2588 = vunpack.c.l.b16 %v2524
      %v2589 = vunpack.c.l.b16 %v2525
      %v2590 = vunpack.c.l.b16 %v2526
      %v2591 = vunpack.c.l.b16 %v2527
      %v2592 = vunpack.c.l.b16 %v2528
      %v2593 = vunpack.c.l.b16 %v2529
      %v2594 = vunpack.c.l.b16 %v2530
      %v2595 = vunpack.c.l.b16 %v2531
      %v2596 = vunpack.c.l.b16 %v2532
      %v2597 = vunpack.c.l.b16 %v2533
      %v2598 = vunpack.c.l.b16 %v2534
      %v2599 = vunpack.c.l.b16 %v2535
      %v2600 = vunpack.c.l.b16 %v2536
      %v2601 = vunpack.c.l.b16 %v2537
      %v2602 = vunpack.c.l.b16 %v2538
      %v2603 = vunpack.c.l.b16 %v2539
      %v2604 = vunpack.c.l.b16 %v2540
      %v2605 = vunpack.c.l.b16 %v2541
      %v2606 = vunpack.c.l.b16 %v2542
      %v2607 = vunpack.c.l.b16 %v2543
      %v2608 = vunpack.c.l.b16 %v2544
      %v2609 = vunpack.c.l.b16 %v2545
      %v2610 = vunpack.c.l.b16 %v2546
      %v2611 = vunpack.c.l.b16 %v2547
      %v2612 = vunpack.c.l.b16 %v2548
      %v2613 = vunpack.c.l.b16 %v2549
      %v2614 = vunpack.c.l.b16 %v2550
      %v2615 = vunpack.c.l.b16 %v2551
      %v2616 = vpack.c.b16 %v2585, %v2584
      %v2617 = vpack.c.b16 %v2587, %v2586
      %v2618 = vpack.c.b16 %v2589, %v2588
      %v2619 = vpack.c.b16 %v2591, %v2590
      %v2620 = vpack.c.b16 %v2593, %v2592
      %v2621 = vpack.c.b16 %v2595, %v2594
      %v2622 = vpack.c.b16 %v2597, %v2596
      %v2623 = vpack.c.b16 %v2599, %v2598
      %v2624 = vpack.c.b16 %v2601, %v2600
      %v2625 = vpack.c.b16 %v2603, %v2602
      %v2626 = vpack.c.b16 %v2605, %v2604
      %v2627 = vpack.c.b16 %v2607, %v2606
      %v2628 = vpack.c.b16 %v2609, %v2608
      %v2629 = vpack.c.b16 %v2611, %v2610
      %v2630 = vpack.c.b16 %v2613, %v2612
      %v2631 = vpack.c.b16 %v2615, %v2614
      %2648 = vmatpush.bf16.msra.mxu0 %v2623
      %2649 = vmatpush.bf16.msra.mxu0 %v2622
      %2650 = vmatpush.bf16.msra.mxu0 %v2621
      %2651 = vmatpush.bf16.msra.mxu0 %v2620
      %2652 = vmatpush.bf16.msra.mxu0 %v2619
      %2653 = vmatpush.bf16.msra.mxu0 %v2618
      %2654 = vmatpush.bf16.msra.mxu0 %v2617
      %2655 = vmatpush.bf16.msra.mxu0 %v2616
      %2656 = vmatmul.bf16.gmra.mxu0 %v1514
      %v2657 = vpop.f32.mrf.mxu0
      %v2658 = vadd.f32 0.0, %v2657
      %v2659 = vpop.f32.mrf.mxu0
      %v2660 = vadd.f32 0.0, %v2659
      %2661 = vdwg.mxu0
      %2662 = vmatpush.bf16.msra.mxu0 %v2631
      %2663 = vmatpush.bf16.msra.mxu0 %v2630
      %2664 = vmatpush.bf16.msra.mxu0 %v2629
      %2665 = vmatpush.bf16.msra.mxu0 %v2628
      %2666 = vmatpush.bf16.msra.mxu0 %v2627
      %2667 = vmatpush.bf16.msra.mxu0 %v2626
      %2668 = vmatpush.bf16.msra.mxu0 %v2625
      %2669 = vmatpush.bf16.msra.mxu0 %v2624
      %2670 = vmatmul.bf16.gmra.mxu0 %v1531
      %v2671 = vpop.f32.mrf.mxu0
      %v2672 = vadd.f32 %v2658, %v2671
      %v2673 = vpop.f32.mrf.mxu0
      %v2674 = vadd.f32 %v2660, %v2673
      %2675 = vdwg.mxu0
      %v2676 = vadd.f32 %v2515, %v2672
      %v2677 = vadd.f32 %v2517, %v2674
      %s2678 = scalar_lea.vmem %s5, 2
      %v2679 = vld [vmem:[%s2678] sm:$0x1]
      %v2681 = vperm.slane %v2679, 0
      %v2683 = vadd.f32 %v2676, %v2681
      %v2684 = vadd.f32 %v2677, %v2681
      %v2685 = vadd.f32 %v561, %v563
      %v2686 = vrot.slane %v2685, 4
      %v2687 = vadd.f32 %v2685, %v2686
      %v2688 = vrot.slane %v2687, 2
      %v2689 = vadd.f32 %v2687, %v2688
      %v2690 = vrot.slane %v2689, 1
      %v2691 = vadd.f32 %v2689, %v2690
      %v2692 = vld [vmem:[%s6] sm:$0xff]
      %v2693 = vld [vmem:[%s6 + $0x8] sm:$0xff]
      %v2694 = vld [vmem:[%s6 + $0x10] sm:$0xff]
      %v2695 = vld [vmem:[%s6 + $0x18] sm:$0xff]
      %v2696 = vld [vmem:[%s6 + $0x20] sm:$0xff]
      %v2697 = vld [vmem:[%s6 + $0x28] sm:$0xff]
      %v2698 = vld [vmem:[%s6 + $0x30] sm:$0xff]
      %v2699 = vld [vmem:[%s6 + $0x38] sm:$0xff]
      %v2700 = vld [vmem:[%s6 + $0x40] sm:$0xff]
      %v2701 = vld [vmem:[%s6 + $0x48] sm:$0xff]
      %v2702 = vld [vmem:[%s6 + $0x50] sm:$0xff]
      %v2703 = vld [vmem:[%s6 + $0x58] sm:$0xff]
      %v2704 = vld [vmem:[%s6 + $0x60] sm:$0xff]
      %v2705 = vld [vmem:[%s6 + $0x68] sm:$0xff]
      %v2706 = vld [vmem:[%s6 + $0x70] sm:$0xff]
      %v2707 = vld [vmem:[%s6 + $0x78] sm:$0xff]
      %v2708 = vadd.f32 %v2204, %v2205
      %v2709 = vrot.slane %v2708, 4
      %v2710 = vadd.f32 %v2708, %v2709
      %v2711 = vrot.slane %v2710, 2
      %v2712 = vadd.f32 %v2710, %v2711
      %v2713 = vrot.slane %v2712, 1
      %v2714 = vadd.f32 %v2712, %v2713
      %s2715 = scalar_lea.vmem %s6, 128
      %v2716 = vld [vmem:[%s2715] sm:$0xff]
      %v2717 = vld [vmem:[%s2715 + $0x8] sm:$0xff]
      %v2718 = vld [vmem:[%s2715 + $0x10] sm:$0xff]
      %v2719 = vld [vmem:[%s2715 + $0x18] sm:$0xff]
      %v2720 = vld [vmem:[%s2715 + $0x20] sm:$0xff]
      %v2721 = vld [vmem:[%s2715 + $0x28] sm:$0xff]
      %v2722 = vld [vmem:[%s2715 + $0x30] sm:$0xff]
      %v2723 = vld [vmem:[%s2715 + $0x38] sm:$0xff]
      %v2724 = vld [vmem:[%s2715 + $0x40] sm:$0xff]
      %v2725 = vld [vmem:[%s2715 + $0x48] sm:$0xff]
      %v2726 = vld [vmem:[%s2715 + $0x50] sm:$0xff]
      %v2727 = vld [vmem:[%s2715 + $0x58] sm:$0xff]
      %v2728 = vld [vmem:[%s2715 + $0x60] sm:$0xff]
      %v2729 = vld [vmem:[%s2715 + $0x68] sm:$0xff]
      %v2730 = vld [vmem:[%s2715 + $0x70] sm:$0xff]
      %v2731 = vld [vmem:[%s2715 + $0x78] sm:$0xff]
      %2732 = vmatpush.msra.mxu0 %v2731
      %2733 = vmatpush.msra.mxu0 %v2730
      %2734 = vmatpush.msra.mxu0 %v2729
      %2735 = vmatpush.msra.mxu0 %v2728
      %2736 = vmatpush.msra.mxu0 %v2727
      %2737 = vmatpush.msra.mxu0 %v2726
      %2738 = vmatpush.msra.mxu0 %v2725
      %2739 = vmatpush.msra.mxu0 %v2724
      %2740 = vmatpush.msra.mxu0 %v2723
      %2741 = vmatpush.msra.mxu0 %v2722
      %2742 = vmatpush.msra.mxu0 %v2721
      %2743 = vmatpush.msra.mxu0 %v2720
      %2744 = vmatpush.msra.mxu0 %v2719
      %2745 = vmatpush.msra.mxu0 %v2718
      %2746 = vmatpush.msra.mxu0 %v2717
      %2747 = vmatpush.msra.mxu0 %v2716
      %2748 = vmatmul.f32.gmra.mxu0 %v2714
      %v2749 = vpop.f32.mrf.mxu0
      %v2750 = vadd.f32 0.0, %v2749
      %2751 = vdwg.mxu0
      %2752 = vmatpush.msra.mxu0 %v2707
      %2753 = vmatpush.msra.mxu0 %v2706
      %2754 = vmatpush.msra.mxu0 %v2705
      %2755 = vmatpush.msra.mxu0 %v2704
      %2756 = vmatpush.msra.mxu0 %v2703
      %2757 = vmatpush.msra.mxu0 %v2702
      %2758 = vmatpush.msra.mxu0 %v2701
      %2759 = vmatpush.msra.mxu0 %v2700
      %2760 = vmatpush.msra.mxu0 %v2699
      %2761 = vmatpush.msra.mxu0 %v2698
      %2762 = vmatpush.msra.mxu0 %v2697
      %2763 = vmatpush.msra.mxu0 %v2696
      %2764 = vmatpush.msra.mxu0 %v2695
      %2765 = vmatpush.msra.mxu0 %v2694
      %2766 = vmatpush.msra.mxu0 %v2693
      %2767 = vmatpush.msra.mxu0 %v2692
      %2768 = vmatmul.f32.gmra.mxu0 %v2691
      %v2769 = vpop.f32.mrf.mxu0
      %v2770 = vadd.f32 %v2750, %v2769
      %2771 = vdwg.mxu0
      %v2772 = vadd.f32 %v2683, %v2684
      %v2773 = vrot.slane %v2772, 4
      %v2774 = vadd.f32 %v2772, %v2773
      %v2775 = vrot.slane %v2774, 2
      %v2776 = vadd.f32 %v2774, %v2775
      %v2777 = vrot.slane %v2776, 1
      %v2778 = vadd.f32 %v2776, %v2777
      %s2779 = scalar_lea.vmem %s6, 256
      %v2780 = vld [vmem:[%s2779] sm:$0xff]
      %v2781 = vld [vmem:[%s2779 + $0x8] sm:$0xff]
      %v2782 = vld [vmem:[%s2779 + $0x10] sm:$0xff]
      %v2783 = vld [vmem:[%s2779 + $0x18] sm:$0xff]
      %v2784 = vld [vmem:[%s2779 + $0x20] sm:$0xff]
      %v2785 = vld [vmem:[%s2779 + $0x28] sm:$0xff]
      %v2786 = vld [vmem:[%s2779 + $0x30] sm:$0xff]
      %v2787 = vld [vmem:[%s2779 + $0x38] sm:$0xff]
      %v2788 = vld [vmem:[%s2779 + $0x40] sm:$0xff]
      %v2789 = vld [vmem:[%s2779 + $0x48] sm:$0xff]
      %v2790 = vld [vmem:[%s2779 + $0x50] sm:$0xff]
      %v2791 = vld [vmem:[%s2779 + $0x58] sm:$0xff]
      %v2792 = vld [vmem:[%s2779 + $0x60] sm:$0xff]
      %v2793 = vld [vmem:[%s2779 + $0x68] sm:$0xff]
      %v2794 = vld [vmem:[%s2779 + $0x70] sm:$0xff]
      %v2795 = vld [vmem:[%s2779 + $0x78] sm:$0xff]
      %2796 = vmatpush.msra.mxu0 %v2795
      %2797 = vmatpush.msra.mxu0 %v2794
      %2798 = vmatpush.msra.mxu0 %v2793
      %2799 = vmatpush.msra.mxu0 %v2792
      %2800 = vmatpush.msra.mxu0 %v2791
      %2801 = vmatpush.msra.mxu0 %v2790
      %2802 = vmatpush.msra.mxu0 %v2789
      %2803 = vmatpush.msra.mxu0 %v2788
      %2804 = vmatpush.msra.mxu0 %v2787
      %2805 = vmatpush.msra.mxu0 %v2786
      %2806 = vmatpush.msra.mxu0 %v2785
      %2807 = vmatpush.msra.mxu0 %v2784
      %2808 = vmatpush.msra.mxu0 %v2783
      %2809 = vmatpush.msra.mxu0 %v2782
      %2810 = vmatpush.msra.mxu0 %v2781
      %2811 = vmatpush.msra.mxu0 %v2780
      %2812 = vmatmul.f32.gmra.mxu0 %v2778
      %v2813 = vpop.f32.mrf.mxu0
      %v2814 = vadd.f32 0.0, %v2813
      %2815 = vdwg.mxu0
      %v2816 = vadd.f32 %v2770, %v2814
      %v2817 = vxor.u32 %v2816, 2147483648
      %v2818 = vmul.f32 %v2817, 1.442695
      %v2819 = vpow.pop %v2818
      %v2820 = vadd.f32 %v2819, 1.0
      %v2821 = vrcp.pop %v2820
      %v2822 = vmul.f32 %v2820, %v2821
      %v2823 = vsub.f32 1.0, %v2822
      %v2824 = vmul.f32 %v2821, %v2823
      %v2825 = vadd.f32 %v2821, %v2824
      %vm2826 = vweird.f32 %v2820
      %vm2827 = vweird.f32 %v2821
      %vm2828 = vmor %vm2826, %vm2827
      %v2829 = vsel %vm2828, %v2821, %v2825
      %v2830 = vand.u32 2147483647, %v2820
      %vm2831 = vcmp.eq.f32.partialorder %v2830, 8.507059e+37
      %v2832 = vand.u32 %v2820, 2147483648
      %v2833 = vor.u32 1.1754944e-38, %v2832
      %v2834 = vsel %vm2831, %v2833, %v2829
      %v2835 = vmul.f32 1.0, %v2834
      %v2836 = vld [vmem:[%s7] sm:$0xff]
      %v2837 = vld [vmem:[%s7 + $0x8] sm:$0xff]
      %v2838 = vld [vmem:[%s7 + $0x10] sm:$0xff]
      %vm2839 = vcmask 195584
      %v2841 = vsel %vm2839, %v2835, 0
      %2843 = vmatpush.msra.mxu0 0.0
      %2844 = vmatpush.msra.mxu0 0.0
      %2845 = vmatpush.msra.mxu0 0.0
      %2846 = vmatpush.msra.mxu0 0.0
      %2847 = vmatpush.msra.mxu0 0.0
      %2848 = vmatpush.msra.mxu0 0.0
      %2849 = vmatpush.msra.mxu0 0.0
      %2850 = vmatpush.msra.mxu0 0.0
      %2851 = vmatpush.msra.mxu0 0.0
      %2852 = vmatpush.msra.mxu0 0.0
      %2853 = vmatpush.msra.mxu0 0.0
      %2854 = vmatpush.msra.mxu0 0.0
      %2855 = vmatpush.msra.mxu0 0.0
      %2856 = vmatpush.msra.mxu0 %v2838
      %2857 = vmatpush.msra.mxu0 %v2837
      %2858 = vmatpush.msra.mxu0 %v2836
      %2859 = vmatmul.f32.gmra.mxu0 %v2841
      %v2860 = vpop.f32.mrf.mxu0
      %v2861 = vadd.f32 0.0, %v2860
      %2862 = vdwg.mxu0
      %v2863 = vperm.slane %v2861, 0
      %v2864 = vmul.f32 %v561, %v2863
      %v2865 = vmul.f32 %v563, %v2863
      %v2866 = vpack.c.bf16 %v2865, %v2864
      %v2867 = vld [vmem:[%s8] sm:$0xf]
      %v2868 = vld [vmem:[%s8 + $0x4] sm:$0xf]
      %v2869 = vld [vmem:[%s8 + $0x8] sm:$0xf]
      %v2870 = vld [vmem:[%s8 + $0xc] sm:$0xf]
      %v2871 = vld [vmem:[%s8 + $0x10] sm:$0xf]
      %v2872 = vld [vmem:[%s8 + $0x14] sm:$0xf]
      %v2873 = vld [vmem:[%s8 + $0x18] sm:$0xf]
      %v2874 = vld [vmem:[%s8 + $0x1c] sm:$0xf]
      %v2875 = vld [vmem:[%s8 + $0x20] sm:$0xf]
      %v2876 = vld [vmem:[%s8 + $0x24] sm:$0xf]
      %v2877 = vld [vmem:[%s8 + $0x28] sm:$0xf]
      %v2878 = vld [vmem:[%s8 + $0x2c] sm:$0xf]
      %v2879 = vld [vmem:[%s8 + $0x30] sm:$0xf]
      %v2880 = vld [vmem:[%s8 + $0x34] sm:$0xf]
      %v2881 = vld [vmem:[%s8 + $0x38] sm:$0xf]
      %v2882 = vld [vmem:[%s8 + $0x3c] sm:$0xf]
      %s2883 = scalar_lea.vmem %s7, 24
      %v2884 = vld [vmem:[%s2883] sm:$0xff]
      %v2885 = vld [vmem:[%s2883 + $0x8] sm:$0xff]
      %v2886 = vld [vmem:[%s2883 + $0x10] sm:$0xff]
      %2887 = vmatpush.msra.mxu0 0.0
      %2888 = vmatpush.msra.mxu0 0.0
      %2889 = vmatpush.msra.mxu0 0.0
      %2890 = vmatpush.msra.mxu0 0.0
      %2891 = vmatpush.msra.mxu0 0.0
      %2892 = vmatpush.msra.mxu0 0.0
      %2893 = vmatpush.msra.mxu0 0.0
      %2894 = vmatpush.msra.mxu0 0.0
      %2895 = vmatpush.msra.mxu0 0.0
      %2896 = vmatpush.msra.mxu0 0.0
      %2897 = vmatpush.msra.mxu0 0.0
      %2898 = vmatpush.msra.mxu0 0.0
      %2899 = vmatpush.msra.mxu0 0.0
      %2900 = vmatpush.msra.mxu0 %v2886
      %2901 = vmatpush.msra.mxu0 %v2885
      %2902 = vmatpush.msra.mxu0 %v2884
      %2903 = vmatmul.f32.gmra.mxu0 %v2841
      %v2904 = vpop.f32.mrf.mxu0
      %v2905 = vadd.f32 0.0, %v2904
      %2906 = vdwg.mxu0
      %v2907 = vperm.slane %v2905, 0
      %v2908 = vmul.f32 %v2204, %v2907
      %v2909 = vmul.f32 %v2205, %v2907
      %v2910 = vpack.c.bf16 %v2909, %v2908
      %s2911 = scalar_lea.vmem %s8, 64
      %v2912 = vld [vmem:[%s2911] sm:$0xf]
      %v2913 = vld [vmem:[%s2911 + $0x4] sm:$0xf]
      %v2914 = vld [vmem:[%s2911 + $0x8] sm:$0xf]
      %v2915 = vld [vmem:[%s2911 + $0xc] sm:$0xf]
      %v2916 = vld [vmem:[%s2911 + $0x10] sm:$0xf]
      %v2917 = vld [vmem:[%s2911 + $0x14] sm:$0xf]
      %v2918 = vld [vmem:[%s2911 + $0x18] sm:$0xf]
      %v2919 = vld [vmem:[%s2911 + $0x1c] sm:$0xf]
      %v2920 = vld [vmem:[%s2911 + $0x20] sm:$0xf]
      %v2921 = vld [vmem:[%s2911 + $0x24] sm:$0xf]
      %v2922 = vld [vmem:[%s2911 + $0x28] sm:$0xf]
      %v2923 = vld [vmem:[%s2911 + $0x2c] sm:$0xf]
      %v2924 = vld [vmem:[%s2911 + $0x30] sm:$0xf]
      %v2925 = vld [vmem:[%s2911 + $0x34] sm:$0xf]
      %v2926 = vld [vmem:[%s2911 + $0x38] sm:$0xf]
      %v2927 = vld [vmem:[%s2911 + $0x3c] sm:$0xf]
      %v2944 = vunpack.c.l.b16 %v2912
      %v2945 = vunpack.c.l.b16 %v2913
      %v2946 = vunpack.c.l.b16 %v2914
      %v2947 = vunpack.c.l.b16 %v2915
      %v2948 = vunpack.c.l.b16 %v2916
      %v2949 = vunpack.c.l.b16 %v2917
      %v2950 = vunpack.c.l.b16 %v2918
      %v2951 = vunpack.c.l.b16 %v2919
      %v2952 = vunpack.c.l.b16 %v2920
      %v2953 = vunpack.c.l.b16 %v2921
      %v2954 = vunpack.c.l.b16 %v2922
      %v2955 = vunpack.c.l.b16 %v2923
      %v2956 = vunpack.c.l.b16 %v2924
      %v2957 = vunpack.c.l.b16 %v2925
      %v2958 = vunpack.c.l.b16 %v2926
      %v2959 = vunpack.c.l.b16 %v2927
      %v2960 = vpack.c.b16 %v2945, %v2944
      %v2961 = vpack.c.b16 %v2947, %v2946
      %v2962 = vpack.c.b16 %v2949, %v2948
      %v2963 = vpack.c.b16 %v2951, %v2950
      %v2964 = vpack.c.b16 %v2953, %v2952
      %v2965 = vpack.c.b16 %v2955, %v2954
      %v2966 = vpack.c.b16 %v2957, %v2956
      %v2967 = vpack.c.b16 %v2959, %v2958
      %2976 = vmatpush.bf16.msra.mxu0 %v2967
      %2977 = vmatpush.bf16.msra.mxu0 %v2966
      %2978 = vmatpush.bf16.msra.mxu0 %v2965
      %2979 = vmatpush.bf16.msra.mxu0 %v2964
      %2980 = vmatpush.bf16.msra.mxu0 %v2963
      %2981 = vmatpush.bf16.msra.mxu0 %v2962
      %2982 = vmatpush.bf16.msra.mxu0 %v2961
      %2983 = vmatpush.bf16.msra.mxu0 %v2960
      %2984 = vmatmul.bf16.gmra.mxu0 %v2910
      %v2985 = vpop.f32.mrf.mxu0
      %v2986 = vadd.f32 0.0, %v2985
      %v2987 = vpop.f32.mrf.mxu0
      %v2988 = vadd.f32 0.0, %v2987
      %2989 = vdwg.mxu0
      %v3006 = vunpack.c.l.b16 %v2867
      %v3007 = vunpack.c.l.b16 %v2868
      %v3008 = vunpack.c.l.b16 %v2869
      %v3009 = vunpack.c.l.b16 %v2870
      %v3010 = vunpack.c.l.b16 %v2871
      %v3011 = vunpack.c.l.b16 %v2872
      %v3012 = vunpack.c.l.b16 %v2873
      %v3013 = vunpack.c.l.b16 %v2874
      %v3014 = vunpack.c.l.b16 %v2875
      %v3015 = vunpack.c.l.b16 %v2876
      %v3016 = vunpack.c.l.b16 %v2877
      %v3017 = vunpack.c.l.b16 %v2878
      %v3018 = vunpack.c.l.b16 %v2879
      %v3019 = vunpack.c.l.b16 %v2880
      %v3020 = vunpack.c.l.b16 %v2881
      %v3021 = vunpack.c.l.b16 %v2882
      %v3022 = vpack.c.b16 %v3007, %v3006
      %v3023 = vpack.c.b16 %v3009, %v3008
      %v3024 = vpack.c.b16 %v3011, %v3010
      %v3025 = vpack.c.b16 %v3013, %v3012
      %v3026 = vpack.c.b16 %v3015, %v3014
      %v3027 = vpack.c.b16 %v3017, %v3016
      %v3028 = vpack.c.b16 %v3019, %v3018
      %v3029 = vpack.c.b16 %v3021, %v3020
      %3038 = vmatpush.bf16.msra.mxu0 %v3029
      %3039 = vmatpush.bf16.msra.mxu0 %v3028
      %3040 = vmatpush.bf16.msra.mxu0 %v3027
      %3041 = vmatpush.bf16.msra.mxu0 %v3026
      %3042 = vmatpush.bf16.msra.mxu0 %v3025
      %3043 = vmatpush.bf16.msra.mxu0 %v3024
      %3044 = vmatpush.bf16.msra.mxu0 %v3023
      %3045 = vmatpush.bf16.msra.mxu0 %v3022
      %3046 = vmatmul.bf16.gmra.mxu0 %v2866
      %v3047 = vpop.f32.mrf.mxu0
      %v3048 = vadd.f32 %v2986, %v3047
      %v3049 = vpop.f32.mrf.mxu0
      %v3050 = vadd.f32 %v2988, %v3049
      %3051 = vdwg.mxu0
      %s3052 = scalar_lea.vmem %s7, 48
      %v3053 = vld [vmem:[%s3052] sm:$0xff]
      %v3054 = vld [vmem:[%s3052 + $0x8] sm:$0xff]
      %v3055 = vld [vmem:[%s3052 + $0x10] sm:$0xff]
      %3056 = vmatpush.msra.mxu0 0.0
      %3057 = vmatpush.msra.mxu0 0.0
      %3058 = vmatpush.msra.mxu0 0.0
      %3059 = vmatpush.msra.mxu0 0.0
      %3060 = vmatpush.msra.mxu0 0.0
      %3061 = vmatpush.msra.mxu0 0.0
      %3062 = vmatpush.msra.mxu0 0.0
      %3063 = vmatpush.msra.mxu0 0.0
      %3064 = vmatpush.msra.mxu0 0.0
      %3065 = vmatpush.msra.mxu0 0.0
      %3066 = vmatpush.msra.mxu0 0.0
      %3067 = vmatpush.msra.mxu0 0.0
      %3068 = vmatpush.msra.mxu0 0.0
      %3069 = vmatpush.msra.mxu0 %v3055
      %3070 = vmatpush.msra.mxu0 %v3054
      %3071 = vmatpush.msra.mxu0 %v3053
      %3072 = vmatmul.f32.gmra.mxu0 %v2841
      %v3073 = vpop.f32.mrf.mxu0
      %v3074 = vadd.f32 0.0, %v3073
      %3075 = vdwg.mxu0
      %v3076 = vperm.slane %v3074, 0
      %v3077 = vmul.f32 %v2683, %v3076
      %v3078 = vmul.f32 %v2684, %v3076
      %v3079 = vpack.c.bf16 %v3078, %v3077
      %s3080 = scalar_lea.vmem %s8, 128
      %v3081 = vld [vmem:[%s3080] sm:$0xf]
      %v3082 = vld [vmem:[%s3080 + $0x4] sm:$0xf]
      %v3083 = vld [vmem:[%s3080 + $0x8] sm:$0xf]
      %v3084 = vld [vmem:[%s3080 + $0xc] sm:$0xf]
      %v3085 = vld [vmem:[%s3080 + $0x10] sm:$0xf]
      %v3086 = vld [vmem:[%s3080 + $0x14] sm:$0xf]
      %v3087 = vld [vmem:[%s3080 + $0x18] sm:$0xf]
      %v3088 = vld [vmem:[%s3080 + $0x1c] sm:$0xf]
      %v3089 = vld [vmem:[%s3080 + $0x20] sm:$0xf]
      %v3090 = vld [vmem:[%s3080 + $0x24] sm:$0xf]
      %v3091 = vld [vmem:[%s3080 + $0x28] sm:$0xf]
      %v3092 = vld [vmem:[%s3080 + $0x2c] sm:$0xf]
      %v3093 = vld [vmem:[%s3080 + $0x30] sm:$0xf]
      %v3094 = vld [vmem:[%s3080 + $0x34] sm:$0xf]
      %v3095 = vld [vmem:[%s3080 + $0x38] sm:$0xf]
      %v3096 = vld [vmem:[%s3080 + $0x3c] sm:$0xf]
      %v3113 = vunpack.c.l.b16 %v3081
      %v3114 = vunpack.c.l.b16 %v3082
      %v3115 = vunpack.c.l.b16 %v3083
      %v3116 = vunpack.c.l.b16 %v3084
      %v3117 = vunpack.c.l.b16 %v3085
      %v3118 = vunpack.c.l.b16 %v3086
      %v3119 = vunpack.c.l.b16 %v3087
      %v3120 = vunpack.c.l.b16 %v3088
      %v3121 = vunpack.c.l.b16 %v3089
      %v3122 = vunpack.c.l.b16 %v3090
      %v3123 = vunpack.c.l.b16 %v3091
      %v3124 = vunpack.c.l.b16 %v3092
      %v3125 = vunpack.c.l.b16 %v3093
      %v3126 = vunpack.c.l.b16 %v3094
      %v3127 = vunpack.c.l.b16 %v3095
      %v3128 = vunpack.c.l.b16 %v3096
      %v3129 = vpack.c.b16 %v3114, %v3113
      %v3130 = vpack.c.b16 %v3116, %v3115
      %v3131 = vpack.c.b16 %v3118, %v3117
      %v3132 = vpack.c.b16 %v3120, %v3119
      %v3133 = vpack.c.b16 %v3122, %v3121
      %v3134 = vpack.c.b16 %v3124, %v3123
      %v3135 = vpack.c.b16 %v3126, %v3125
      %v3136 = vpack.c.b16 %v3128, %v3127
      %3145 = vmatpush.bf16.msra.mxu0 %v3136
      %3146 = vmatpush.bf16.msra.mxu0 %v3135
      %3147 = vmatpush.bf16.msra.mxu0 %v3134
      %3148 = vmatpush.bf16.msra.mxu0 %v3133
      %3149 = vmatpush.bf16.msra.mxu0 %v3132
      %3150 = vmatpush.bf16.msra.mxu0 %v3131
      %3151 = vmatpush.bf16.msra.mxu0 %v3130
      %3152 = vmatpush.bf16.msra.mxu0 %v3129
      %3153 = vmatmul.bf16.gmra.mxu0 %v3079
      %v3154 = vpop.f32.mrf.mxu0
      %v3155 = vadd.f32 0.0, %v3154
      %v3156 = vpop.f32.mrf.mxu0
      %v3157 = vadd.f32 0.0, %v3156
      %3158 = vdwg.mxu0
      %v3159 = vadd.f32 %v3048, %v3155
      %v3160 = vadd.f32 %v3050, %v3157
      %v3161 = vld [vmem:[%s9] sm:$0x1]
      %v3163 = vperm.slane %v3161, 0
      %v3165 = vadd.f32 %v3159, %v3163
      %v3166 = vadd.f32 %v3160, %v3163
      %v3167 = vld [vmem:[%s374] sm:$0xff]
      %v3168 = vld [vmem:[%s374 + $0x8] sm:$0xff]
      %v3169 = vadd.f32 %v3167, %v3165
      %v3170 = vadd.f32 %v3168, %v3166
      %3171 = vst [vmem:[%s379] sm:$0xff] %v3169
      %3172 = vst [vmem:[%s379 + $0x8] sm:$0xff] %v3170
      %p3173 = scmp.lt.s32.totalorder %s21, 1
      %s3174 = scalar_select %p3173, %s21, 1
      %s3175 = smul.addr %s3174, 2
      %s3176 = smul.addr %s3175, 8
      %s3177 = scalar_lea.vmem %s10, %s3176
      // Predicated region
      $region61: #{acblock_pallas.1} parent=59 // pred_check
        %p3178 = pneg %p259
      $region62: #{acblock_pallas.1} parent=59 // pred_check_branch
        %3180 = sbr.rel (%p3178) target = $region64
      $region63: #{acblock_pallas.1} parent=59 // pred_region
        _
      $region64: #{acblock_pallas.1} parent=59 // pred_fallthru
        _
    $region60: #{acblock_pallas.1} parent=5 // pred_fallthru
      _
    %p3181 = scmp.le.s32.totalorder 2, %s16
    // Predicated region
    $region65: #{acblock_pallas.1} parent=5 // pred_check
      %p3182 = pneg %p3181
    $region66: #{acblock_pallas.1} parent=5 // pred_check_branch
      %3184 = sbr.rel (%p3182) target = $region68
    $region67: #{acblock_pallas.1} parent=5 // pred_region
      %s3185 = ssub.s32 %s16, 2
      // Predicated region
      $region69: #{acblock_pallas.1} parent=67 // pred_check
        %p3186 = pneg %p265
      $region70: #{acblock_pallas.1} parent=67 // pred_check_branch
        %3188 = sbr.rel (%p3186) target = $region72
      $region71: #{acblock_pallas.1} parent=67 // pred_region
        %p3189 = scmp.lt.s32.totalorder %s22, 1
        %s3190 = scalar_select %p3189, %s22, 1
        %s3191 = smul.addr %s3190, 2
        %s3192 = smul.addr %s3191, 8
        %s3193 = scalar_lea.vmem %s10, %s3192
      $region72: #{acblock_pallas.1} parent=67 // pred_fallthru
        _
    $region68: #{acblock_pallas.1} parent=5 // pred_fallthru
      _
  $region6: #{acblock_pallas.1} parent=0 // loop_footer
    %s20 = sadd.s32 1, %s16
  $region7: #{acblock_pallas.1} parent=0 // loop_footer_branch
    %15 = sbr.rel target = $region3
  $region8: #{acblock_pallas.1} parent=0 // loop_exit
    _

</llo_original>
